<compile_context>
chip_gen: v5e
topology: v5e:2x2
jax: 0.10.0
libtpu: 0.0.40
codegen_flags: <defaults>
</compile_context>

<pallas_src>
import jax
import jax.numpy as jnp
from jax import lax
from jax.experimental import pallas as pl
from jax.experimental.pallas import tpu as pltpu


def _round_up(x, m):
    return ((x + m - 1) // m) * m


# ----------------------------------------------------------------------------
# Fused decoder forward kernel: embedding gather + L LSTM layers + projection.
# Single grid step; time loop is an in-kernel fori_loop.
# ----------------------------------------------------------------------------
def _decoder_fwd_kernel(tok_ref,                      # SMEM (Bp*T,) int32 (scalar prefetch)
                        wih0_ref,                     # (V, 1, 4Hp) layer-0 gate rows, blank row = 0
                        wih_ref,                      # (max(L-1,1), Hp, 4Hp) layer>=1 input weights
                        whh_ref,                      # (L, Hp, 4Hp)
                        b_ref,                        # (L, 1, 4Hp) combined bias
                        h0_ref, c0_ref,               # (L, Bp, Hp)
                        pw_ref, pb_ref,               # (Hp, Op), (1, Op)
                        logits_ref,                   # out (T, Bp, Op)
                        hN_ref, cN_ref,               # out (L, Bp, Hp)
                        x_scr,                        # (T, Bp, Hp)  inter-layer activations
                        gx_scr,                       # (T, Bp, 4Hp) hoisted input gates
                        h_scr, c_scr):                # (Bp, Hp)     recurrent carry
    T, Bp, Hp = x_scr.shape
    L = whh_ref.shape[0]
    H4 = 4 * Hp
    Op = pw_ref.shape[1]
    small_t = T <= 32                                 # unroll short time loops

    # ---- Layer-0 input gates via SMEM-indexed gather (one-hot @ W_ih0 == row select)
    def gather_body(t, carry):
        for b in range(Bp):                           # static unroll over (padded) batch
            tok = tok_ref[b * T + t]                  # SMEM scalar read
            gx_scr[t, pl.ds(b, 1), :] = wih0_ref[tok] # (1, 4Hp) row copy; blank row is zeros
        return carry
    lax.fori_loop(0, T, gather_body, 0, unroll=small_t)

    # ---- Stacked LSTM layers, time recurrence fully in-kernel -----------------
    for l in range(L):
        if l > 0:
            # Hoist the input-side matmul out of the serial recurrence:
            # one large-M MXU call over the whole sequence.
            x2d = x_scr[...].reshape(T * Bp, Hp)
            gx = jnp.dot(x2d, wih_ref[l - 1], preferred_element_type=jnp.float32)
            gx_scr[...] = gx.reshape(T, Bp, H4)

        h_scr[...] = h0_ref[l]
        c_scr[...] = c0_ref[l]
        w_hh = whh_ref[l]                             # (Hp, 4Hp), loop-invariant
        bias = b_ref[l]                               # (1, 4Hp)

        def step(t, carry):
            h_prev = h_scr[...]
            c_prev = c_scr[...]
            gates = (gx_scr[t]
                     + jnp.dot(h_prev, w_hh, preferred_element_type=jnp.float32)
                     + bias)
            # Hp is a multiple of 128 -> gate slices are whole lane-aligned vregs.
            i_g = jax.nn.sigmoid(gates[:, 0 * Hp:1 * Hp])
            f_g = jax.nn.sigmoid(gates[:, 1 * Hp:2 * Hp])
            g_g = jnp.tanh(gates[:, 2 * Hp:3 * Hp])
            o_g = jax.nn.sigmoid(gates[:, 3 * Hp:4 * Hp])
            c_new = f_g * c_prev + i_g * g_g
            h_new = o_g * jnp.tanh(c_new)
            h_scr[...] = h_new
            c_scr[...] = c_new
            x_scr[t] = h_new
            return carry

        lax.fori_loop(0, T, step, 0, unroll=small_t)

        hN_ref[l] = h_scr[...]                        # written once per layer
        cN_ref[l] = c_scr[...]
        # NOTE: inter-layer dropout of nn.LSTM is a no-op at inference time.

    # ---- Fused, lane-dense output projection ----------------------------------
    y2d = x_scr[...].reshape(T * Bp, Hp)
    logits = (jnp.dot(y2d, pw_ref[...], preferred_element_type=jnp.float32)
              + pb_ref[...])
    logits_ref[...] = logits.reshape(T, Bp, Op)


# ----------------------------------------------------------------------------
# Decoder module (forward only, length=None path)
# ----------------------------------------------------------------------------
class DecoderPallas:
    def __init__(self, hidden_size, vocab_size, output_size, num_layers, key,
                 dropout=0.0):
        self.hidden_size = hidden_size
        self.vocab_size = vocab_size
        self.output_size = output_size
        self.num_layers = num_layers
        self.one_hot_size = vocab_size - 1
        self.dropout = dropout                        # inference no-op

        H = hidden_size
        bound = 1.0 / jnp.sqrt(jnp.float32(H))
        keys = jax.random.split(key, num_layers * 4 + 2)
        ki = iter(range(len(keys)))

        # --- unpadded (reference) parameters, PyTorch gate order [i,f,g,o] ---
        self.layers = []
        for l in range(num_layers):
            in_size = self.one_hot_size if l == 0 else H
            w_ih = jax.random.uniform(keys[next(ki)], (in_size, 4 * H),
                                      jnp.float32, -bound, bound)
            w_hh = jax.random.uniform(keys[next(ki)], (H, 4 * H),
                                      jnp.float32, -bound, bound)
            b_ih = jax.random.uniform(keys[next(ki)], (1, 4 * H),
                                      jnp.float32, -bound, bound)
            b_hh = jax.random.uniform(keys[next(ki)], (1, 4 * H),
                                      jnp.float32, -bound, bound)
            self.layers.append((w_ih, w_hh, b_ih + b_hh))

        self.proj_w = jax.random.uniform(keys[next(ki)], (H, output_size),
                                         jnp.float32, -bound, bound)
        self.proj_b = jax.random.uniform(keys[next(ki)], (1, output_size),
                                         jnp.float32, -bound, bound)

        # --- padded kernel parameters (zero padding is mathematically inert) ---
        Hp = _round_up(H, 128)                        # lane-aligned gate blocks
        Op = _round_up(output_size, 128)              # lane-dense logits store
        self.H_pad, self.O_pad = Hp, Op

        def pad_gate_cols(w):
            # w: (In, 4H) -> (In, 4Hp); each of the 4 gate blocks placed at stride Hp.
            In = w.shape[0]
            out = jnp.zeros((In, 4 * Hp), jnp.float32)
            for g in range(4):
                out = out.at[:, g * Hp:g * Hp + H].set(w[:, g * H:(g + 1) * H])
            return out

        # Layer-0 "embedding" table: row v = one_hot(v) @ W_ih0 = W_ih0[v];
        # blank row (v == vocab_size-1) is all zeros.
        w0 = pad_gate_cols(self.layers[0][0])                        # (V-1, 4Hp)
        w0 = jnp.concatenate([w0, jnp.zeros((1, 4 * Hp), jnp.float32)], axis=0)
        self.wih0_p = w0[:, None, :]                                 # (V, 1, 4Hp)

        wih_rest, whh_all, b_all = [], [], []
        for l, (w_ih, w_hh, b) in enumerate(self.layers):
            if l > 0:
                wp = jnp.zeros((Hp, 4 * Hp), jnp.float32)
                wp = wp.at[:H, :].set(pad_gate_cols(w_ih))
                wih_rest.append(wp)
            hp = jnp.zeros((Hp, 4 * Hp), jnp.float32)
            hp = hp.at[:H, :].set(pad_gate_cols(w_hh))
            whh_all.append(hp)
            b_all.append(pad_gate_cols(b))
        if not wih_rest:                               # num_layers == 1 dummy
            wih_rest.append(jnp.zeros((Hp, 4 * Hp), jnp.float32))
        self.wih_rest_p = jnp.stack(wih_rest)          # (max(L-1,1), Hp, 4Hp)
        self.whh_p = jnp.stack(whh_all)                # (L, Hp, 4Hp)
        self.b_p = jnp.stack(b_all)                    # (L, 1, 4Hp)

        self.pw_p = (jnp.zeros((Hp, Op), jnp.float32)
                     .at[:H, :output_size].set(self.proj_w))
        self.pb_p = (jnp.zeros((1, Op), jnp.float32)
                     .at[:, :output_size].set(self.proj_b))

    # kept for the pure-JAX reference (mirrors the PyTorch module's embedding)
    def indices2onehot(self, indices):
        mask = indices == self.one_hot_size
        adjusted = jnp.where(mask, jnp.zeros_like(indices), indices)
        one_hot = jax.nn.one_hot(adjusted, self.one_hot_size, dtype=jnp.float32)
        one_hot = jnp.where(mask[..., None], 0.0, one_hot)
        return one_hot

    def forward(self, inputs, hidden=None):
        # inputs: (B, T) int32 token indices (batch_first, like the PyTorch module).
        B, T = inputs.shape
        H, Hp, Op = self.hidden_size, self.H_pad, self.O_pad
        L = self.num_layers
        Bp = _round_up(max(B, 1), 8)                   # f32 sublane quantum
        blank = self.one_hot_size

        # Token indices -> flat SMEM table; padded batch rows use the blank token
        # (whose embedding-gate row is all zeros).
        tok_p = jnp.full((Bp, T), blank, jnp.int32)
        tok_p = tok_p.at[:B, :].set(inputs.astype(jnp.int32))
        tok_flat = tok_p.reshape(-1)

        if hidden is None:
            h0_p = jnp.zeros((L, Bp, Hp), jnp.float32)
            c0_p = jnp.zeros((L, Bp, Hp), jnp.float32)
        else:
            h0, c0 = hidden
            h0_p = jnp.zeros((L, Bp, Hp), jnp.float32).at[:, :B, :H].set(h0)
            c0_p = jnp.zeros((L, Bp, Hp), jnp.float32).at[:, :B, :H].set(c0)

        V = self.wih0_p.shape[0]
        Lm1 = self.wih_rest_p.shape[0]

        grid_spec = pltpu.PrefetchScalarGridSpec(
            num_scalar_prefetch=1,                     # token indices -> SMEM
            grid=(1,),
            in_specs=[
                pl.BlockSpec((V, 1, 4 * Hp), lambda i, tok: (0, 0, 0)),
                pl.BlockSpec((Lm1, Hp, 4 * Hp), lambda i, tok: (0, 0, 0)),
                pl.BlockSpec((L, Hp, 4 * Hp), lambda i, tok: (0, 0, 0)),
                pl.BlockSpec((L, 1, 4 * Hp), lambda i, tok: (0, 0, 0)),
                pl.BlockSpec((L, Bp, Hp), lambda i, tok: (0, 0, 0)),
                pl.BlockSpec((L, Bp, Hp), lambda i, tok: (0, 0, 0)),
                pl.BlockSpec((Hp, Op), lambda i, tok: (0, 0)),
                pl.BlockSpec((1, Op), lambda i, tok: (0, 0)),
            ],
            out_specs=[
                pl.BlockSpec((T, Bp, Op), lambda i, tok: (0, 0, 0)),
                pl.BlockSpec((L, Bp, Hp), lambda i, tok: (0, 0, 0)),
                pl.BlockSpec((L, Bp, Hp), lambda i, tok: (0, 0, 0)),
            ],
            scratch_shapes=[
                pltpu.VMEM((T, Bp, Hp), jnp.float32),        # inter-layer activations
                pltpu.VMEM((T, Bp, 4 * Hp), jnp.float32),    # hoisted input gates
                pltpu.VMEM((Bp, Hp), jnp.float32),           # h carry
                pltpu.VMEM((Bp, Hp), jnp.float32),           # c carry
            ],
        )

        logits_p, hN_p, cN_p = pl.pallas_call(
            _decoder_fwd_kernel,
            grid_spec=grid_spec,
            out_shape=(
                jax.ShapeDtypeStruct((T, Bp, Op), jnp.float32),
                jax.ShapeDtypeStruct((L, Bp, Hp), jnp.float32),
                jax.ShapeDtypeStruct((L, Bp, Hp), jnp.float32),
            ),
            compiler_params=pltpu.CompilerParams(
                dimension_semantics=("arbitrary",)),
        )(tok_flat, self.wih0_p, self.wih_rest_p, self.whh_p, self.b_p,
          h0_p, c0_p, self.pw_p, self.pb_p)

        # slice away batch/hidden/output padding; back to batch_first
        logits = jnp.transpose(logits_p[:, :B, :self.output_size], (1, 0, 2))
        h_n = hN_p[:, :B, :H]
        c_n = cN_p[:, :B, :H]
        return logits, (h_n, c_n)


# ----------------------------------------------------------------------------
# Pure-JAX reference (one-hot embedding + lax.scan LSTM) for correctness check
# ----------------------------------------------------------------------------
def reference_forward(dec, inputs):
    B, T = inputs.shape
    H = dec.hidden_size
    embed = dec.indices2onehot(inputs)                 # (B, T, V-1)
    x = jnp.transpose(embed, (1, 0, 2))                # (T, B, V-1)
    h_fs, c_fs = [], []
    for (w_ih, w_hh, b) in dec.layers:
        def step(carry, xt):
            h, c = carry
            gates = xt @ w_ih + h @ w_hh + b
            i = jax.nn.sigmoid(gates[:, 0 * H:1 * H])
            f = jax.nn.sigmoid(gates[:, 1 * H:2 * H])
            g = jnp.tanh(gates[:, 2 * H:3 * H])
            o = jax.nn.sigmoid(gates[:, 3 * H:4 * H])
            c_new = f * c + i * g
            h_new = o * jnp.tanh(c_new)
            return (h_new, c_new), h_new
        init = (jnp.zeros((B, H), jnp.float32), jnp.zeros((B, H), jnp.float32))
        (h_n, c_n), y = jax.lax.scan(step, init, x)
        x = y
        h_fs.append(h_n); c_fs.append(c_n)
    logits = jnp.einsum('tbh,ho->tbo', x, dec.proj_w) + dec.proj_b[0]
    return (jnp.transpose(logits, (1, 0, 2)),
            (jnp.stack(h_fs), jnp.stack(c_fs)))


if __name__ == "__main__":
    batch = 2
    seq = 8
    vocab_size = 9          # one_hot_size = 8
    hidden_size = 32
    output_size = 16
    num_layers = 2

    key = jax.random.PRNGKey(0)
    k_param, k_inp = jax.random.split(key)

    dec = DecoderPallas(hidden_size, vocab_size, output_size, num_layers, k_param)

    # Token indices in [0, vocab_size-1]; includes the blank (= vocab_size-1)
    inputs = jax.random.randint(k_inp, (batch, seq), 0, vocab_size, dtype=jnp.int32)

    logits, (h_n, c_n) = dec.forward(inputs)
    jax.block_until_ready(logits)
    jax.block_until_ready(h_n)
    jax.block_until_ready(c_n)

    # correctness check vs. pure-JAX reference
    ref_logits, (ref_h, ref_c) = reference_forward(dec, inputs)
    assert logits.shape == (batch, seq, output_size)
    assert h_n.shape == (num_layers, batch, hidden_size)
    assert c_n.shape == (num_layers, batch, hidden_size)
    assert jnp.allclose(logits, ref_logits, atol=1e-4, rtol=1e-4)
    assert jnp.allclose(h_n, ref_h, atol=1e-4, rtol=1e-4)
    assert jnp.allclose(c_n, ref_c, atol=1e-4, rtol=1e-4)

    print("KERNEL_OK")
</pallas_src>

<mosaic_0001>
module attributes {stable_mosaic.version = 11 : i64} {
  func.func @_decoder_fwd_kernel(%arg0: i32, %arg1: memref<64xi32, #tpu.memory_space<smem>>, %arg2: memref<9x1x512xf32, #tpu.memory_space<vmem>>, %arg3: memref<1x128x512xf32, #tpu.memory_space<vmem>>, %arg4: memref<2x128x512xf32, #tpu.memory_space<vmem>>, %arg5: memref<2x1x512xf32, #tpu.memory_space<vmem>>, %arg6: memref<2x8x128xf32, #tpu.memory_space<vmem>>, %arg7: memref<2x8x128xf32, #tpu.memory_space<vmem>>, %arg8: memref<128x128xf32, #tpu.memory_space<vmem>>, %arg9: memref<1x128xf32, #tpu.memory_space<vmem>>, %arg10: memref<8x8x128xf32, #tpu.memory_space<vmem>>, %arg11: memref<2x8x128xf32, #tpu.memory_space<vmem>>, %arg12: memref<2x8x128xf32, #tpu.memory_space<vmem>>, %arg13: memref<8x8x128xf32, #tpu.memory_space<vmem>>, %arg14: memref<8x8x512xf32, #tpu.memory_space<vmem>>, %arg15: memref<8x128xf32, #tpu.memory_space<vmem>>, %arg16: memref<8x128xf32, #tpu.memory_space<vmem>>) attributes {dimension_semantics = [#tpu.dimension_semantics<arbitrary>], iteration_bounds = array<i64: 1>, scalar_prefetch = 1 : i64, scratch_operands = 4 : i64, tpu.core_type = #tpu.core_type<tc>, window_params = [{pipeline_mode = #tpu.pipeline_mode<synchronous>, transform_indices = @transform_0, window_bounds = array<i64: 9, 1, 512>}, {pipeline_mode = #tpu.pipeline_mode<synchronous>, transform_indices = @transform_1, window_bounds = array<i64: 1, 128, 512>}, {pipeline_mode = #tpu.pipeline_mode<synchronous>, transform_indices = @transform_2, window_bounds = array<i64: 2, 128, 512>}, {pipeline_mode = #tpu.pipeline_mode<synchronous>, transform_indices = @transform_3, window_bounds = array<i64: 2, 1, 512>}, {pipeline_mode = #tpu.pipeline_mode<synchronous>, transform_indices = @transform_4, window_bounds = array<i64: 2, 8, 128>}, {pipeline_mode = #tpu.pipeline_mode<synchronous>, transform_indices = @transform_5, window_bounds = array<i64: 2, 8, 128>}, {pipeline_mode = #tpu.pipeline_mode<synchronous>, transform_indices = @transform_6, window_bounds = array<i64: 128, 128>}, {pipeline_mode = #tpu.pipeline_mode<synchronous>, transform_indices = @transform_7, window_bounds = array<i64: 1, 128>}, {pipeline_mode = #tpu.pipeline_mode<synchronous>, transform_indices = @transform_8, window_bounds = array<i64: 8, 8, 128>}, {pipeline_mode = #tpu.pipeline_mode<synchronous>, transform_indices = @transform_9, window_bounds = array<i64: 2, 8, 128>}, {pipeline_mode = #tpu.pipeline_mode<synchronous>, transform_indices = @transform_10, window_bounds = array<i64: 2, 8, 128>}]} {
    %c0_i32 = arith.constant 0 : i32
    %c0_i32_0 = arith.constant 0 : i32
    %0 = arith.addi %c0_i32_0, %c0_i32 : i32
    %1 = arith.index_cast %0 : i32 to index
    %2 = memref.load %arg1[%1] : memref<64xi32, #tpu.memory_space<smem>>
    %3 = arith.index_cast %2 : i32 to index
    %c0 = arith.constant 0 : index
    %c0_1 = arith.constant 0 : index
    %4 = vector.load %arg2[%3, %c0, %c0_1] : memref<9x1x512xf32, #tpu.memory_space<vmem>>, vector<1x1x512xf32>
    %5 = vector.shape_cast %4 : vector<1x1x512xf32> to vector<1x512xf32>
    %6 = arith.index_cast %c0_i32 : i32 to index
    %c0_2 = arith.constant 0 : index
    %c0_3 = arith.constant 0 : index
    %7 = vector.load %arg14[%6, %c0_2, %c0_3] : memref<8x8x512xf32, #tpu.memory_space<vmem>>, vector<1x1x512xf32>
    %8 = vector.shape_cast %7 : vector<1x1x512xf32> to vector<1x512xf32>
    %9 = vector.shape_cast %5 : vector<1x512xf32> to vector<1x1x512xf32>
    tpu.vector_store %arg14[%6, %c0_2, %c0_3], %9 {strides = array<i32>} : memref<8x8x512xf32, #tpu.memory_space<vmem>>, vector<1x1x512xf32>,
    %c8_i32 = arith.constant 8 : i32
    %10 = arith.addi %c8_i32, %c0_i32 : i32
    %11 = arith.index_cast %10 : i32 to index
    %12 = memref.load %arg1[%11] : memref<64xi32, #tpu.memory_space<smem>>
    %13 = arith.index_cast %12 : i32 to index
    %c0_4 = arith.constant 0 : index
    %c0_5 = arith.constant 0 : index
    %14 = vector.load %arg2[%13, %c0_4, %c0_5] : memref<9x1x512xf32, #tpu.memory_space<vmem>>, vector<1x1x512xf32>
    %15 = vector.shape_cast %14 : vector<1x1x512xf32> to vector<1x512xf32>
    %16 = arith.index_cast %c0_i32 : i32 to index
    %c1 = arith.constant 1 : index
    %c0_6 = arith.constant 0 : index
    %17 = vector.load %arg14[%16, %c1, %c0_6] : memref<8x8x512xf32, #tpu.memory_space<vmem>>, vector<1x1x512xf32>
    %18 = vector.shape_cast %17 : vector<1x1x512xf32> to vector<1x512xf32>
    %19 = vector.shape_cast %15 : vector<1x512xf32> to vector<1x1x512xf32>
    tpu.vector_store %arg14[%16, %c1, %c0_6], %19 {strides = array<i32>} : memref<8x8x512xf32, #tpu.memory_space<vmem>>, vector<1x1x512xf32>,
    %c16_i32 = arith.constant 16 : i32
    %20 = arith.addi %c16_i32, %c0_i32 : i32
    %21 = arith.index_cast %20 : i32 to index
    %22 = memref.load %arg1[%21] : memref<64xi32, #tpu.memory_space<smem>>
    %23 = arith.index_cast %22 : i32 to index
    %c0_7 = arith.constant 0 : index
    %c0_8 = arith.constant 0 : index
    %24 = vector.load %arg2[%23, %c0_7, %c0_8] : memref<9x1x512xf32, #tpu.memory_space<vmem>>, vector<1x1x512xf32>
    %25 = vector.shape_cast %24 : vector<1x1x512xf32> to vector<1x512xf32>
    %26 = arith.index_cast %c0_i32 : i32 to index
    %c2 = arith.constant 2 : index
    %c0_9 = arith.constant 0 : index
    %27 = vector.load %arg14[%26, %c2, %c0_9] : memref<8x8x512xf32, #tpu.memory_space<vmem>>, vector<1x1x512xf32>
    %28 = vector.shape_cast %27 : vector<1x1x512xf32> to vector<1x512xf32>
    %29 = vector.shape_cast %25 : vector<1x512xf32> to vector<1x1x512xf32>
    tpu.vector_store %arg14[%26, %c2, %c0_9], %29 {strides = array<i32>} : memref<8x8x512xf32, #tpu.memory_space<vmem>>, vector<1x1x512xf32>,
    %c24_i32 = arith.constant 24 : i32
    %30 = arith.addi %c24_i32, %c0_i32 : i32
    %31 = arith.index_cast %30 : i32 to index
    %32 = memref.load %arg1[%31] : memref<64xi32, #tpu.memory_space<smem>>
    %33 = arith.index_cast %32 : i32 to index
    %c0_10 = arith.constant 0 : index
    %c0_11 = arith.constant 0 : index
    %34 = vector.load %arg2[%33, %c0_10, %c0_11] : memref<9x1x512xf32, #tpu.memory_space<vmem>>, vector<1x1x512xf32>
    %35 = vector.shape_cast %34 : vector<1x1x512xf32> to vector<1x512xf32>
    %36 = arith.index_cast %c0_i32 : i32 to index
    %c3 = arith.constant 3 : index
    %c0_12 = arith.constant 0 : index
    %37 = vector.load %arg14[%36, %c3, %c0_12] : memref<8x8x512xf32, #tpu.memory_space<vmem>>, vector<1x1x512xf32>
    %38 = vector.shape_cast %37 : vector<1x1x512xf32> to vector<1x512xf32>
    %39 = vector.shape_cast %35 : vector<1x512xf32> to vector<1x1x512xf32>
    tpu.vector_store %arg14[%36, %c3, %c0_12], %39 {strides = array<i32>} : memref<8x8x512xf32, #tpu.memory_space<vmem>>, vector<1x1x512xf32>,
    %c32_i32 = arith.constant 32 : i32
    %40 = arith.addi %c32_i32, %c0_i32 : i32
    %41 = arith.index_cast %40 : i32 to index
    %42 = memref.load %arg1[%41] : memref<64xi32, #tpu.memory_space<smem>>
    %43 = arith.index_cast %42 : i32 to index
    %c0_13 = arith.constant 0 : index
    %c0_14 = arith.constant 0 : index
    %44 = vector.load %arg2[%43, %c0_13, %c0_14] : memref<9x1x512xf32, #tpu.memory_space<vmem>>, vector<1x1x512xf32>
    %45 = vector.shape_cast %44 : vector<1x1x512xf32> to vector<1x512xf32>
    %46 = arith.index_cast %c0_i32 : i32 to index
    %c4 = arith.constant 4 : index
    %c0_15 = arith.constant 0 : index
    %47 = vector.load %arg14[%46, %c4, %c0_15] : memref<8x8x512xf32, #tpu.memory_space<vmem>>, vector<1x1x512xf32>
    %48 = vector.shape_cast %47 : vector<1x1x512xf32> to vector<1x512xf32>
    %49 = vector.shape_cast %45 : vector<1x512xf32> to vector<1x1x512xf32>
    tpu.vector_store %arg14[%46, %c4, %c0_15], %49 {strides = array<i32>} : memref<8x8x512xf32, #tpu.memory_space<vmem>>, vector<1x1x512xf32>,
    %c40_i32 = arith.constant 40 : i32
    %50 = arith.addi %c40_i32, %c0_i32 : i32
    %51 = arith.index_cast %50 : i32 to index
    %52 = memref.load %arg1[%51] : memref<64xi32, #tpu.memory_space<smem>>
    %53 = arith.index_cast %52 : i32 to index
    %c0_16 = arith.constant 0 : index
    %c0_17 = arith.constant 0 : index
    %54 = vector.load %arg2[%53, %c0_16, %c0_17] : memref<9x1x512xf32, #tpu.memory_space<vmem>>, vector<1x1x512xf32>
    %55 = vector.shape_cast %54 : vector<1x1x512xf32> to vector<1x512xf32>
    %56 = arith.index_cast %c0_i32 : i32 to index
    %c5 = arith.constant 5 : index
    %c0_18 = arith.constant 0 : index
    %57 = vector.load %arg14[%56, %c5, %c0_18] : memref<8x8x512xf32, #tpu.memory_space<vmem>>, vector<1x1x512xf32>
    %58 = vector.shape_cast %57 : vector<1x1x512xf32> to vector<1x512xf32>
    %59 = vector.shape_cast %55 : vector<1x512xf32> to vector<1x1x512xf32>
    tpu.vector_store %arg14[%56, %c5, %c0_18], %59 {strides = array<i32>} : memref<8x8x512xf32, #tpu.memory_space<vmem>>, vector<1x1x512xf32>,
    %c48_i32 = arith.constant 48 : i32
    %60 = arith.addi %c48_i32, %c0_i32 : i32
    %61 = arith.index_cast %60 : i32 to index
    %62 = memref.load %arg1[%61] : memref<64xi32, #tpu.memory_space<smem>>
    %63 = arith.index_cast %62 : i32 to index
    %c0_19 = arith.constant 0 : index
    %c0_20 = arith.constant 0 : index
    %64 = vector.load %arg2[%63, %c0_19, %c0_20] : memref<9x1x512xf32, #tpu.memory_space<vmem>>, vector<1x1x512xf32>
    %65 = vector.shape_cast %64 : vector<1x1x512xf32> to vector<1x512xf32>
    %66 = arith.index_cast %c0_i32 : i32 to index
    %c6 = arith.constant 6 : index
    %c0_21 = arith.constant 0 : index
    %67 = vector.load %arg14[%66, %c6, %c0_21] : memref<8x8x512xf32, #tpu.memory_space<vmem>>, vector<1x1x512xf32>
    %68 = vector.shape_cast %67 : vector<1x1x512xf32> to vector<1x512xf32>
    %69 = vector.shape_cast %65 : vector<1x512xf32> to vector<1x1x512xf32>
    tpu.vector_store %arg14[%66, %c6, %c0_21], %69 {strides = array<i32>} : memref<8x8x512xf32, #tpu.memory_space<vmem>>, vector<1x1x512xf32>,
    %c56_i32 = arith.constant 56 : i32
    %70 = arith.addi %c56_i32, %c0_i32 : i32
    %71 = arith.index_cast %70 : i32 to index
    %72 = memref.load %arg1[%71] : memref<64xi32, #tpu.memory_space<smem>>
    %73 = arith.index_cast %72 : i32 to index
    %c0_22 = arith.constant 0 : index
    %c0_23 = arith.constant 0 : index
    %74 = vector.load %arg2[%73, %c0_22, %c0_23] : memref<9x1x512xf32, #tpu.memory_space<vmem>>, vector<1x1x512xf32>
    %75 = vector.shape_cast %74 : vector<1x1x512xf32> to vector<1x512xf32>
    %76 = arith.index_cast %c0_i32 : i32 to index
    %c7 = arith.constant 7 : index
    %c0_24 = arith.constant 0 : index
    %77 = vector.load %arg14[%76, %c7, %c0_24] : memref<8x8x512xf32, #tpu.memory_space<vmem>>, vector<1x1x512xf32>
    %78 = vector.shape_cast %77 : vector<1x1x512xf32> to vector<1x512xf32>
    %79 = vector.shape_cast %75 : vector<1x512xf32> to vector<1x1x512xf32>
    tpu.vector_store %arg14[%76, %c7, %c0_24], %79 {strides = array<i32>} : memref<8x8x512xf32, #tpu.memory_space<vmem>>, vector<1x1x512xf32>,
    %c1_i32 = arith.constant 1 : i32
    %c0_i32_25 = arith.constant 0 : i32
    %80 = arith.addi %c0_i32_25, %c1_i32 : i32
    %81 = arith.index_cast %80 : i32 to index
    %82 = memref.load %arg1[%81] : memref<64xi32, #tpu.memory_space<smem>>
    %83 = arith.index_cast %82 : i32 to index
    %c0_26 = arith.constant 0 : index
    %c0_27 = arith.constant 0 : index
    %84 = vector.load %arg2[%83, %c0_26, %c0_27] : memref<9x1x512xf32, #tpu.memory_space<vmem>>, vector<1x1x512xf32>
    %85 = vector.shape_cast %84 : vector<1x1x512xf32> to vector<1x512xf32>
    %86 = arith.index_cast %c1_i32 : i32 to index
    %c0_28 = arith.constant 0 : index
    %c0_29 = arith.constant 0 : index
    %87 = vector.load %arg14[%86, %c0_28, %c0_29] : memref<8x8x512xf32, #tpu.memory_space<vmem>>, vector<1x1x512xf32>
    %88 = vector.shape_cast %87 : vector<1x1x512xf32> to vector<1x512xf32>
    %89 = vector.shape_cast %85 : vector<1x512xf32> to vector<1x1x512xf32>
    tpu.vector_store %arg14[%86, %c0_28, %c0_29], %89 {strides = array<i32>} : memref<8x8x512xf32, #tpu.memory_space<vmem>>, vector<1x1x512xf32>,
    %c8_i32_30 = arith.constant 8 : i32
    %90 = arith.addi %c8_i32_30, %c1_i32 : i32
    %91 = arith.index_cast %90 : i32 to index
    %92 = memref.load %arg1[%91] : memref<64xi32, #tpu.memory_space<smem>>
    %93 = arith.index_cast %92 : i32 to index
    %c0_31 = arith.constant 0 : index
    %c0_32 = arith.constant 0 : index
    %94 = vector.load %arg2[%93, %c0_31, %c0_32] : memref<9x1x512xf32, #tpu.memory_space<vmem>>, vector<1x1x512xf32>
    %95 = vector.shape_cast %94 : vector<1x1x512xf32> to vector<1x512xf32>
    %96 = arith.index_cast %c1_i32 : i32 to index
    %c1_33 = arith.constant 1 : index
    %c0_34 = arith.constant 0 : index
    %97 = vector.load %arg14[%96, %c1_33, %c0_34] : memref<8x8x512xf32, #tpu.memory_space<vmem>>, vector<1x1x512xf32>
    %98 = vector.shape_cast %97 : vector<1x1x512xf32> to vector<1x512xf32>
    %99 = vector.shape_cast %95 : vector<1x512xf32> to vector<1x1x512xf32>
    tpu.vector_store %arg14[%96, %c1_33, %c0_34], %99 {strides = array<i32>} : memref<8x8x512xf32, #tpu.memory_space<vmem>>, vector<1x1x512xf32>,
    %c16_i32_35 = arith.constant 16 : i32
    %100 = arith.addi %c16_i32_35, %c1_i32 : i32
    %101 = arith.index_cast %100 : i32 to index
    %102 = memref.load %arg1[%101] : memref<64xi32, #tpu.memory_space<smem>>
    %103 = arith.index_cast %102 : i32 to index
    %c0_36 = arith.constant 0 : index
    %c0_37 = arith.constant 0 : index
    %104 = vector.load %arg2[%103, %c0_36, %c0_37] : memref<9x1x512xf32, #tpu.memory_space<vmem>>, vector<1x1x512xf32>
    %105 = vector.shape_cast %104 : vector<1x1x512xf32> to vector<1x512xf32>
    %106 = arith.index_cast %c1_i32 : i32 to index
    %c2_38 = arith.constant 2 : index
    %c0_39 = arith.constant 0 : index
    %107 = vector.load %arg14[%106, %c2_38, %c0_39] : memref<8x8x512xf32, #tpu.memory_space<vmem>>, vector<1x1x512xf32>
    %108 = vector.shape_cast %107 : vector<1x1x512xf32> to vector<1x512xf32>
    %109 = vector.shape_cast %105 : vector<1x512xf32> to vector<1x1x512xf32>
    tpu.vector_store %arg14[%106, %c2_38, %c0_39], %109 {strides = array<i32>} : memref<8x8x512xf32, #tpu.memory_space<vmem>>, vector<1x1x512xf32>,
    %c24_i32_40 = arith.constant 24 : i32
    %110 = arith.addi %c24_i32_40, %c1_i32 : i32
    %111 = arith.index_cast %110 : i32 to index
    %112 = memref.load %arg1[%111] : memref<64xi32, #tpu.memory_space<smem>>
    %113 = arith.index_cast %112 : i32 to index
    %c0_41 = arith.constant 0 : index
    %c0_42 = arith.constant 0 : index
    %114 = vector.load %arg2[%113, %c0_41, %c0_42] : memref<9x1x512xf32, #tpu.memory_space<vmem>>, vector<1x1x512xf32>
    %115 = vector.shape_cast %114 : vector<1x1x512xf32> to vector<1x512xf32>
    %116 = arith.index_cast %c1_i32 : i32 to index
    %c3_43 = arith.constant 3 : index
    %c0_44 = arith.constant 0 : index
    %117 = vector.load %arg14[%116, %c3_43, %c0_44] : memref<8x8x512xf32, #tpu.memory_space<vmem>>, vector<1x1x512xf32>
    %118 = vector.shape_cast %117 : vector<1x1x512xf32> to vector<1x512xf32>
    %119 = vector.shape_cast %115 : vector<1x512xf32> to vector<1x1x512xf32>
    tpu.vector_store %arg14[%116, %c3_43, %c0_44], %119 {strides = array<i32>} : memref<8x8x512xf32, #tpu.memory_space<vmem>>, vector<1x1x512xf32>,
    %c32_i32_45 = arith.constant 32 : i32
    %120 = arith.addi %c32_i32_45, %c1_i32 : i32
    %121 = arith.index_cast %120 : i32 to index
    %122 = memref.load %arg1[%121] : memref<64xi32, #tpu.memory_space<smem>>
    %123 = arith.index_cast %122 : i32 to index
    %c0_46 = arith.constant 0 : index
    %c0_47 = arith.constant 0 : index
    %124 = vector.load %arg2[%123, %c0_46, %c0_47] : memref<9x1x512xf32, #tpu.memory_space<vmem>>, vector<1x1x512xf32>
    %125 = vector.shape_cast %124 : vector<1x1x512xf32> to vector<1x512xf32>
    %126 = arith.index_cast %c1_i32 : i32 to index
    %c4_48 = arith.constant 4 : index
    %c0_49 = arith.constant 0 : index
    %127 = vector.load %arg14[%126, %c4_48, %c0_49] : memref<8x8x512xf32, #tpu.memory_space<vmem>>, vector<1x1x512xf32>
    %128 = vector.shape_cast %127 : vector<1x1x512xf32> to vector<1x512xf32>
    %129 = vector.shape_cast %125 : vector<1x512xf32> to vector<1x1x512xf32>
    tpu.vector_store %arg14[%126, %c4_48, %c0_49], %129 {strides = array<i32>} : memref<8x8x512xf32, #tpu.memory_space<vmem>>, vector<1x1x512xf32>,
    %c40_i32_50 = arith.constant 40 : i32
    %130 = arith.addi %c40_i32_50, %c1_i32 : i32
    %131 = arith.index_cast %130 : i32 to index
    %132 = memref.load %arg1[%131] : memref<64xi32, #tpu.memory_space<smem>>
    %133 = arith.index_cast %132 : i32 to index
    %c0_51 = arith.constant 0 : index
    %c0_52 = arith.constant 0 : index
    %134 = vector.load %arg2[%133, %c0_51, %c0_52] : memref<9x1x512xf32, #tpu.memory_space<vmem>>, vector<1x1x512xf32>
    %135 = vector.shape_cast %134 : vector<1x1x512xf32> to vector<1x512xf32>
    %136 = arith.index_cast %c1_i32 : i32 to index
    %c5_53 = arith.constant 5 : index
    %c0_54 = arith.constant 0 : index
    %137 = vector.load %arg14[%136, %c5_53, %c0_54] : memref<8x8x512xf32, #tpu.memory_space<vmem>>, vector<1x1x512xf32>
    %138 = vector.shape_cast %137 : vector<1x1x512xf32> to vector<1x512xf32>
    %139 = vector.shape_cast %135 : vector<1x512xf32> to vector<1x1x512xf32>
    tpu.vector_store %arg14[%136, %c5_53, %c0_54], %139 {strides = array<i32>} : memref<8x8x512xf32, #tpu.memory_space<vmem>>, vector<1x1x512xf32>,
    %c48_i32_55 = arith.constant 48 : i32
    %140 = arith.addi %c48_i32_55, %c1_i32 : i32
    %141 = arith.index_cast %140 : i32 to index
    %142 = memref.load %arg1[%141] : memref<64xi32, #tpu.memory_space<smem>>
    %143 = arith.index_cast %142 : i32 to index
    %c0_56 = arith.constant 0 : index
    %c0_57 = arith.constant 0 : index
    %144 = vector.load %arg2[%143, %c0_56, %c0_57] : memref<9x1x512xf32, #tpu.memory_space<vmem>>, vector<1x1x512xf32>
    %145 = vector.shape_cast %144 : vector<1x1x512xf32> to vector<1x512xf32>
    %146 = arith.index_cast %c1_i32 : i32 to index
    %c6_58 = arith.constant 6 : index
    %c0_59 = arith.constant 0 : index
    %147 = vector.load %arg14[%146, %c6_58, %c0_59] : memref<8x8x512xf32, #tpu.memory_space<vmem>>, vector<1x1x512xf32>
    %148 = vector.shape_cast %147 : vector<1x1x512xf32> to vector<1x512xf32>
    %149 = vector.shape_cast %145 : vector<1x512xf32> to vector<1x1x512xf32>
    tpu.vector_store %arg14[%146, %c6_58, %c0_59], %149 {strides = array<i32>} : memref<8x8x512xf32, #tpu.memory_space<vmem>>, vector<1x1x512xf32>,
    %c56_i32_60 = arith.constant 56 : i32
    %150 = arith.addi %c56_i32_60, %c1_i32 : i32
    %151 = arith.index_cast %150 : i32 to index
    %152 = memref.load %arg1[%151] : memref<64xi32, #tpu.memory_space<smem>>
    %153 = arith.index_cast %152 : i32 to index
    %c0_61 = arith.constant 0 : index
    %c0_62 = arith.constant 0 : index
    %154 = vector.load %arg2[%153, %c0_61, %c0_62] : memref<9x1x512xf32, #tpu.memory_space<vmem>>, vector<1x1x512xf32>
    %155 = vector.shape_cast %154 : vector<1x1x512xf32> to vector<1x512xf32>
    %156 = arith.index_cast %c1_i32 : i32 to index
    %c7_63 = arith.constant 7 : index
    %c0_64 = arith.constant 0 : index
    %157 = vector.load %arg14[%156, %c7_63, %c0_64] : memref<8x8x512xf32, #tpu.memory_space<vmem>>, vector<1x1x512xf32>
    %158 = vector.shape_cast %157 : vector<1x1x512xf32> to vector<1x512xf32>
    %159 = vector.shape_cast %155 : vector<1x512xf32> to vector<1x1x512xf32>
    tpu.vector_store %arg14[%156, %c7_63, %c0_64], %159 {strides = array<i32>} : memref<8x8x512xf32, #tpu.memory_space<vmem>>, vector<1x1x512xf32>,
    %c2_i32 = arith.constant 2 : i32
    %c0_i32_65 = arith.constant 0 : i32
    %160 = arith.addi %c0_i32_65, %c2_i32 : i32
    %161 = arith.index_cast %160 : i32 to index
    %162 = memref.load %arg1[%161] : memref<64xi32, #tpu.memory_space<smem>>
    %163 = arith.index_cast %162 : i32 to index
    %c0_66 = arith.constant 0 : index
    %c0_67 = arith.constant 0 : index
    %164 = vector.load %arg2[%163, %c0_66, %c0_67] : memref<9x1x512xf32, #tpu.memory_space<vmem>>, vector<1x1x512xf32>
    %165 = vector.shape_cast %164 : vector<1x1x512xf32> to vector<1x512xf32>
    %166 = arith.index_cast %c2_i32 : i32 to index
    %c0_68 = arith.constant 0 : index
    %c0_69 = arith.constant 0 : index
    %167 = vector.load %arg14[%166, %c0_68, %c0_69] : memref<8x8x512xf32, #tpu.memory_space<vmem>>, vector<1x1x512xf32>
    %168 = vector.shape_cast %167 : vector<1x1x512xf32> to vector<1x512xf32>
    %169 = vector.shape_cast %165 : vector<1x512xf32> to vector<1x1x512xf32>
    tpu.vector_store %arg14[%166, %c0_68, %c0_69], %169 {strides = array<i32>} : memref<8x8x512xf32, #tpu.memory_space<vmem>>, vector<1x1x512xf32>,
    %c8_i32_70 = arith.constant 8 : i32
    %170 = arith.addi %c8_i32_70, %c2_i32 : i32
    %171 = arith.index_cast %170 : i32 to index
    %172 = memref.load %arg1[%171] : memref<64xi32, #tpu.memory_space<smem>>
    %173 = arith.index_cast %172 : i32 to index
    %c0_71 = arith.constant 0 : index
    %c0_72 = arith.constant 0 : index
    %174 = vector.load %arg2[%173, %c0_71, %c0_72] : memref<9x1x512xf32, #tpu.memory_space<vmem>>, vector<1x1x512xf32>
    %175 = vector.shape_cast %174 : vector<1x1x512xf32> to vector<1x512xf32>
    %176 = arith.index_cast %c2_i32 : i32 to index
    %c1_73 = arith.constant 1 : index
    %c0_74 = arith.constant 0 : index
    %177 = vector.load %arg14[%176, %c1_73, %c0_74] : memref<8x8x512xf32, #tpu.memory_space<vmem>>, vector<1x1x512xf32>
    %178 = vector.shape_cast %177 : vector<1x1x512xf32> to vector<1x512xf32>
    %179 = vector.shape_cast %175 : vector<1x512xf32> to vector<1x1x512xf32>
    tpu.vector_store %arg14[%176, %c1_73, %c0_74], %179 {strides = array<i32>} : memref<8x8x512xf32, #tpu.memory_space<vmem>>, vector<1x1x512xf32>,
    %c16_i32_75 = arith.constant 16 : i32
    %180 = arith.addi %c16_i32_75, %c2_i32 : i32
    %181 = arith.index_cast %180 : i32 to index
    %182 = memref.load %arg1[%181] : memref<64xi32, #tpu.memory_space<smem>>
    %183 = arith.index_cast %182 : i32 to index
    %c0_76 = arith.constant 0 : index
    %c0_77 = arith.constant 0 : index
    %184 = vector.load %arg2[%183, %c0_76, %c0_77] : memref<9x1x512xf32, #tpu.memory_space<vmem>>, vector<1x1x512xf32>
    %185 = vector.shape_cast %184 : vector<1x1x512xf32> to vector<1x512xf32>
    %186 = arith.index_cast %c2_i32 : i32 to index
    %c2_78 = arith.constant 2 : index
    %c0_79 = arith.constant 0 : index
    %187 = vector.load %arg14[%186, %c2_78, %c0_79] : memref<8x8x512xf32, #tpu.memory_space<vmem>>, vector<1x1x512xf32>
    %188 = vector.shape_cast %187 : vector<1x1x512xf32> to vector<1x512xf32>
    %189 = vector.shape_cast %185 : vector<1x512xf32> to vector<1x1x512xf32>
    tpu.vector_store %arg14[%186, %c2_78, %c0_79], %189 {strides = array<i32>} : memref<8x8x512xf32, #tpu.memory_space<vmem>>, vector<1x1x512xf32>,
    %c24_i32_80 = arith.constant 24 : i32
    %190 = arith.addi %c24_i32_80, %c2_i32 : i32
    %191 = arith.index_cast %190 : i32 to index
    %192 = memref.load %arg1[%191] : memref<64xi32, #tpu.memory_space<smem>>
    %193 = arith.index_cast %192 : i32 to index
    %c0_81 = arith.constant 0 : index
    %c0_82 = arith.constant 0 : index
    %194 = vector.load %arg2[%193, %c0_81, %c0_82] : memref<9x1x512xf32, #tpu.memory_space<vmem>>, vector<1x1x512xf32>
    %195 = vector.shape_cast %194 : vector<1x1x512xf32> to vector<1x512xf32>
    %196 = arith.index_cast %c2_i32 : i32 to index
    %c3_83 = arith.constant 3 : index
    %c0_84 = arith.constant 0 : index
    %197 = vector.load %arg14[%196, %c3_83, %c0_84] : memref<8x8x512xf32, #tpu.memory_space<vmem>>, vector<1x1x512xf32>
    %198 = vector.shape_cast %197 : vector<1x1x512xf32> to vector<1x512xf32>
    %199 = vector.shape_cast %195 : vector<1x512xf32> to vector<1x1x512xf32>
    tpu.vector_store %arg14[%196, %c3_83, %c0_84], %199 {strides = array<i32>} : memref<8x8x512xf32, #tpu.memory_space<vmem>>, vector<1x1x512xf32>,
    %c32_i32_85 = arith.constant 32 : i32
    %200 = arith.addi %c32_i32_85, %c2_i32 : i32
    %201 = arith.index_cast %200 : i32 to index
    %202 = memref.load %arg1[%201] : memref<64xi32, #tpu.memory_space<smem>>
    %203 = arith.index_cast %202 : i32 to index
    %c0_86 = arith.constant 0 : index
    %c0_87 = arith.constant 0 : index
    %204 = vector.load %arg2[%203, %c0_86, %c0_87] : memref<9x1x512xf32, #tpu.memory_space<vmem>>, vector<1x1x512xf32>
    %205 = vector.shape_cast %204 : vector<1x1x512xf32> to vector<1x512xf32>
    %206 = arith.index_cast %c2_i32 : i32 to index
    %c4_88 = arith.constant 4 : index
    %c0_89 = arith.constant 0 : index
    %207 = vector.load %arg14[%206, %c4_88, %c0_89] : memref<8x8x512xf32, #tpu.memory_space<vmem>>, vector<1x1x512xf32>
    %208 = vector.shape_cast %207 : vector<1x1x512xf32> to vector<1x512xf32>
    %209 = vector.shape_cast %205 : vector<1x512xf32> to vector<1x1x512xf32>
    tpu.vector_store %arg14[%206, %c4_88, %c0_89], %209 {strides = array<i32>} : memref<8x8x512xf32, #tpu.memory_space<vmem>>, vector<1x1x512xf32>,
    %c40_i32_90 = arith.constant 40 : i32
    %210 = arith.addi %c40_i32_90, %c2_i32 : i32
    %211 = arith.index_cast %210 : i32 to index
    %212 = memref.load %arg1[%211] : memref<64xi32, #tpu.memory_space<smem>>
    %213 = arith.index_cast %212 : i32 to index
    %c0_91 = arith.constant 0 : index
    %c0_92 = arith.constant 0 : index
    %214 = vector.load %arg2[%213, %c0_91, %c0_92] : memref<9x1x512xf32, #tpu.memory_space<vmem>>, vector<1x1x512xf32>
    %215 = vector.shape_cast %214 : vector<1x1x512xf32> to vector<1x512xf32>
    %216 = arith.index_cast %c2_i32 : i32 to index
    %c5_93 = arith.constant 5 : index
    %c0_94 = arith.constant 0 : index
    %217 = vector.load %arg14[%216, %c5_93, %c0_94] : memref<8x8x512xf32, #tpu.memory_space<vmem>>, vector<1x1x512xf32>
    %218 = vector.shape_cast %217 : vector<1x1x512xf32> to vector<1x512xf32>
    %219 = vector.shape_cast %215 : vector<1x512xf32> to vector<1x1x512xf32>
    tpu.vector_store %arg14[%216, %c5_93, %c0_94], %219 {strides = array<i32>} : memref<8x8x512xf32, #tpu.memory_space<vmem>>, vector<1x1x512xf32>,
    %c48_i32_95 = arith.constant 48 : i32
    %220 = arith.addi %c48_i32_95, %c2_i32 : i32
    %221 = arith.index_cast %220 : i32 to index
    %222 = memref.load %arg1[%221] : memref<64xi32, #tpu.memory_space<smem>>
    %223 = arith.index_cast %222 : i32 to index
    %c0_96 = arith.constant 0 : index
    %c0_97 = arith.constant 0 : index
    %224 = vector.load %arg2[%223, %c0_96, %c0_97] : memref<9x1x512xf32, #tpu.memory_space<vmem>>, vector<1x1x512xf32>
    %225 = vector.shape_cast %224 : vector<1x1x512xf32> to vector<1x512xf32>
    %226 = arith.index_cast %c2_i32 : i32 to index
    %c6_98 = arith.constant 6 : index
    %c0_99 = arith.constant 0 : index
    %227 = vector.load %arg14[%226, %c6_98, %c0_99] : memref<8x8x512xf32, #tpu.memory_space<vmem>>, vector<1x1x512xf32>
    %228 = vector.shape_cast %227 : vector<1x1x512xf32> to vector<1x512xf32>
    %229 = vector.shape_cast %225 : vector<1x512xf32> to vector<1x1x512xf32>
    tpu.vector_store %arg14[%226, %c6_98, %c0_99], %229 {strides = array<i32>} : memref<8x8x512xf32, #tpu.memory_space<vmem>>, vector<1x1x512xf32>,
    %c56_i32_100 = arith.constant 56 : i32
    %230 = arith.addi %c56_i32_100, %c2_i32 : i32
    %231 = arith.index_cast %230 : i32 to index
    %232 = memref.load %arg1[%231] : memref<64xi32, #tpu.memory_space<smem>>
    %233 = arith.index_cast %232 : i32 to index
    %c0_101 = arith.constant 0 : index
    %c0_102 = arith.constant 0 : index
    %234 = vector.load %arg2[%233, %c0_101, %c0_102] : memref<9x1x512xf32, #tpu.memory_space<vmem>>, vector<1x1x512xf32>
    %235 = vector.shape_cast %234 : vector<1x1x512xf32> to vector<1x512xf32>
    %236 = arith.index_cast %c2_i32 : i32 to index
    %c7_103 = arith.constant 7 : index
    %c0_104 = arith.constant 0 : index
    %237 = vector.load %arg14[%236, %c7_103, %c0_104] : memref<8x8x512xf32, #tpu.memory_space<vmem>>, vector<1x1x512xf32>
    %238 = vector.shape_cast %237 : vector<1x1x512xf32> to vector<1x512xf32>
    %239 = vector.shape_cast %235 : vector<1x512xf32> to vector<1x1x512xf32>
    tpu.vector_store %arg14[%236, %c7_103, %c0_104], %239 {strides = array<i32>} : memref<8x8x512xf32, #tpu.memory_space<vmem>>, vector<1x1x512xf32>,
    %c3_i32 = arith.constant 3 : i32
    %c0_i32_105 = arith.constant 0 : i32
    %240 = arith.addi %c0_i32_105, %c3_i32 : i32
    %241 = arith.index_cast %240 : i32 to index
    %242 = memref.load %arg1[%241] : memref<64xi32, #tpu.memory_space<smem>>
    %243 = arith.index_cast %242 : i32 to index
    %c0_106 = arith.constant 0 : index
    %c0_107 = arith.constant 0 : index
    %244 = vector.load %arg2[%243, %c0_106, %c0_107] : memref<9x1x512xf32, #tpu.memory_space<vmem>>, vector<1x1x512xf32>
    %245 = vector.shape_cast %244 : vector<1x1x512xf32> to vector<1x512xf32>
    %246 = arith.index_cast %c3_i32 : i32 to index
    %c0_108 = arith.constant 0 : index
    %c0_109 = arith.constant 0 : index
    %247 = vector.load %arg14[%246, %c0_108, %c0_109] : memref<8x8x512xf32, #tpu.memory_space<vmem>>, vector<1x1x512xf32>
    %248 = vector.shape_cast %247 : vector<1x1x512xf32> to vector<1x512xf32>
    %249 = vector.shape_cast %245 : vector<1x512xf32> to vector<1x1x512xf32>
    tpu.vector_store %arg14[%246, %c0_108, %c0_109], %249 {strides = array<i32>} : memref<8x8x512xf32, #tpu.memory_space<vmem>>, vector<1x1x512xf32>,
    %c8_i32_110 = arith.constant 8 : i32
    %250 = arith.addi %c8_i32_110, %c3_i32 : i32
    %251 = arith.index_cast %250 : i32 to index
    %252 = memref.load %arg1[%251] : memref<64xi32, #tpu.memory_space<smem>>
    %253 = arith.index_cast %252 : i32 to index
    %c0_111 = arith.constant 0 : index
    %c0_112 = arith.constant 0 : index
    %254 = vector.load %arg2[%253, %c0_111, %c0_112] : memref<9x1x512xf32, #tpu.memory_space<vmem>>, vector<1x1x512xf32>
    %255 = vector.shape_cast %254 : vector<1x1x512xf32> to vector<1x512xf32>
    %256 = arith.index_cast %c3_i32 : i32 to index
    %c1_113 = arith.constant 1 : index
    %c0_114 = arith.constant 0 : index
    %257 = vector.load %arg14[%256, %c1_113, %c0_114] : memref<8x8x512xf32, #tpu.memory_space<vmem>>, vector<1x1x512xf32>
    %258 = vector.shape_cast %257 : vector<1x1x512xf32> to vector<1x512xf32>
    %259 = vector.shape_cast %255 : vector<1x512xf32> to vector<1x1x512xf32>
    tpu.vector_store %arg14[%256, %c1_113, %c0_114], %259 {strides = array<i32>} : memref<8x8x512xf32, #tpu.memory_space<vmem>>, vector<1x1x512xf32>,
    %c16_i32_115 = arith.constant 16 : i32
    %260 = arith.addi %c16_i32_115, %c3_i32 : i32
    %261 = arith.index_cast %260 : i32 to index
    %262 = memref.load %arg1[%261] : memref<64xi32, #tpu.memory_space<smem>>
    %263 = arith.index_cast %262 : i32 to index
    %c0_116 = arith.constant 0 : index
    %c0_117 = arith.constant 0 : index
    %264 = vector.load %arg2[%263, %c0_116, %c0_117] : memref<9x1x512xf32, #tpu.memory_space<vmem>>, vector<1x1x512xf32>
    %265 = vector.shape_cast %264 : vector<1x1x512xf32> to vector<1x512xf32>
    %266 = arith.index_cast %c3_i32 : i32 to index
    %c2_118 = arith.constant 2 : index
    %c0_119 = arith.constant 0 : index
    %267 = vector.load %arg14[%266, %c2_118, %c0_119] : memref<8x8x512xf32, #tpu.memory_space<vmem>>, vector<1x1x512xf32>
    %268 = vector.shape_cast %267 : vector<1x1x512xf32> to vector<1x512xf32>
    %269 = vector.shape_cast %265 : vector<1x512xf32> to vector<1x1x512xf32>
    tpu.vector_store %arg14[%266, %c2_118, %c0_119], %269 {strides = array<i32>} : memref<8x8x512xf32, #tpu.memory_space<vmem>>, vector<1x1x512xf32>,
    %c24_i32_120 = arith.constant 24 : i32
    %270 = arith.addi %c24_i32_120, %c3_i32 : i32
    %271 = arith.index_cast %270 : i32 to index
    %272 = memref.load %arg1[%271] : memref<64xi32, #tpu.memory_space<smem>>
    %273 = arith.index_cast %272 : i32 to index
    %c0_121 = arith.constant 0 : index
    %c0_122 = arith.constant 0 : index
    %274 = vector.load %arg2[%273, %c0_121, %c0_122] : memref<9x1x512xf32, #tpu.memory_space<vmem>>, vector<1x1x512xf32>
    %275 = vector.shape_cast %274 : vector<1x1x512xf32> to vector<1x512xf32>
    %276 = arith.index_cast %c3_i32 : i32 to index
    %c3_123 = arith.constant 3 : index
    %c0_124 = arith.constant 0 : index
    %277 = vector.load %arg14[%276, %c3_123, %c0_124] : memref<8x8x512xf32, #tpu.memory_space<vmem>>, vector<1x1x512xf32>
    %278 = vector.shape_cast %277 : vector<1x1x512xf32> to vector<1x512xf32>
    %279 = vector.shape_cast %275 : vector<1x512xf32> to vector<1x1x512xf32>
    tpu.vector_store %arg14[%276, %c3_123, %c0_124], %279 {strides = array<i32>} : memref<8x8x512xf32, #tpu.memory_space<vmem>>, vector<1x1x512xf32>,
    %c32_i32_125 = arith.constant 32 : i32
    %280 = arith.addi %c32_i32_125, %c3_i32 : i32
    %281 = arith.index_cast %280 : i32 to index
    %282 = memref.load %arg1[%281] : memref<64xi32, #tpu.memory_space<smem>>
    %283 = arith.index_cast %282 : i32 to index
    %c0_126 = arith.constant 0 : index
    %c0_127 = arith.constant 0 : index
    %284 = vector.load %arg2[%283, %c0_126, %c0_127] : memref<9x1x512xf32, #tpu.memory_space<vmem>>, vector<1x1x512xf32>
    %285 = vector.shape_cast %284 : vector<1x1x512xf32> to vector<1x512xf32>
    %286 = arith.index_cast %c3_i32 : i32 to index
    %c4_128 = arith.constant 4 : index
    %c0_129 = arith.constant 0 : index
    %287 = vector.load %arg14[%286, %c4_128, %c0_129] : memref<8x8x512xf32, #tpu.memory_space<vmem>>, vector<1x1x512xf32>
    %288 = vector.shape_cast %287 : vector<1x1x512xf32> to vector<1x512xf32>
    %289 = vector.shape_cast %285 : vector<1x512xf32> to vector<1x1x512xf32>
    tpu.vector_store %arg14[%286, %c4_128, %c0_129], %289 {strides = array<i32>} : memref<8x8x512xf32, #tpu.memory_space<vmem>>, vector<1x1x512xf32>,
    %c40_i32_130 = arith.constant 40 : i32
    %290 = arith.addi %c40_i32_130, %c3_i32 : i32
    %291 = arith.index_cast %290 : i32 to index
    %292 = memref.load %arg1[%291] : memref<64xi32, #tpu.memory_space<smem>>
    %293 = arith.index_cast %292 : i32 to index
    %c0_131 = arith.constant 0 : index
    %c0_132 = arith.constant 0 : index
    %294 = vector.load %arg2[%293, %c0_131, %c0_132] : memref<9x1x512xf32, #tpu.memory_space<vmem>>, vector<1x1x512xf32>
    %295 = vector.shape_cast %294 : vector<1x1x512xf32> to vector<1x512xf32>
    %296 = arith.index_cast %c3_i32 : i32 to index
    %c5_133 = arith.constant 5 : index
    %c0_134 = arith.constant 0 : index
    %297 = vector.load %arg14[%296, %c5_133, %c0_134] : memref<8x8x512xf32, #tpu.memory_space<vmem>>, vector<1x1x512xf32>
    %298 = vector.shape_cast %297 : vector<1x1x512xf32> to vector<1x512xf32>
    %299 = vector.shape_cast %295 : vector<1x512xf32> to vector<1x1x512xf32>
    tpu.vector_store %arg14[%296, %c5_133, %c0_134], %299 {strides = array<i32>} : memref<8x8x512xf32, #tpu.memory_space<vmem>>, vector<1x1x512xf32>,
    %c48_i32_135 = arith.constant 48 : i32
    %300 = arith.addi %c48_i32_135, %c3_i32 : i32
    %301 = arith.index_cast %300 : i32 to index
    %302 = memref.load %arg1[%301] : memref<64xi32, #tpu.memory_space<smem>>
    %303 = arith.index_cast %302 : i32 to index
    %c0_136 = arith.constant 0 : index
    %c0_137 = arith.constant 0 : index
    %304 = vector.load %arg2[%303, %c0_136, %c0_137] : memref<9x1x512xf32, #tpu.memory_space<vmem>>, vector<1x1x512xf32>
    %305 = vector.shape_cast %304 : vector<1x1x512xf32> to vector<1x512xf32>
    %306 = arith.index_cast %c3_i32 : i32 to index
    %c6_138 = arith.constant 6 : index
    %c0_139 = arith.constant 0 : index
    %307 = vector.load %arg14[%306, %c6_138, %c0_139] : memref<8x8x512xf32, #tpu.memory_space<vmem>>, vector<1x1x512xf32>
    %308 = vector.shape_cast %307 : vector<1x1x512xf32> to vector<1x512xf32>
    %309 = vector.shape_cast %305 : vector<1x512xf32> to vector<1x1x512xf32>
    tpu.vector_store %arg14[%306, %c6_138, %c0_139], %309 {strides = array<i32>} : memref<8x8x512xf32, #tpu.memory_space<vmem>>, vector<1x1x512xf32>,
    %c56_i32_140 = arith.constant 56 : i32
    %310 = arith.addi %c56_i32_140, %c3_i32 : i32
    %311 = arith.index_cast %310 : i32 to index
    %312 = memref.load %arg1[%311] : memref<64xi32, #tpu.memory_space<smem>>
    %313 = arith.index_cast %312 : i32 to index
    %c0_141 = arith.constant 0 : index
    %c0_142 = arith.constant 0 : index
    %314 = vector.load %arg2[%313, %c0_141, %c0_142] : memref<9x1x512xf32, #tpu.memory_space<vmem>>, vector<1x1x512xf32>
    %315 = vector.shape_cast %314 : vector<1x1x512xf32> to vector<1x512xf32>
    %316 = arith.index_cast %c3_i32 : i32 to index
    %c7_143 = arith.constant 7 : index
    %c0_144 = arith.constant 0 : index
    %317 = vector.load %arg14[%316, %c7_143, %c0_144] : memref<8x8x512xf32, #tpu.memory_space<vmem>>, vector<1x1x512xf32>
    %318 = vector.shape_cast %317 : vector<1x1x512xf32> to vector<1x512xf32>
    %319 = vector.shape_cast %315 : vector<1x512xf32> to vector<1x1x512xf32>
    tpu.vector_store %arg14[%316, %c7_143, %c0_144], %319 {strides = array<i32>} : memref<8x8x512xf32, #tpu.memory_space<vmem>>, vector<1x1x512xf32>,
    %c4_i32 = arith.constant 4 : i32
    %c0_i32_145 = arith.constant 0 : i32
    %320 = arith.addi %c0_i32_145, %c4_i32 : i32
    %321 = arith.index_cast %320 : i32 to index
    %322 = memref.load %arg1[%321] : memref<64xi32, #tpu.memory_space<smem>>
    %323 = arith.index_cast %322 : i32 to index
    %c0_146 = arith.constant 0 : index
    %c0_147 = arith.constant 0 : index
    %324 = vector.load %arg2[%323, %c0_146, %c0_147] : memref<9x1x512xf32, #tpu.memory_space<vmem>>, vector<1x1x512xf32>
    %325 = vector.shape_cast %324 : vector<1x1x512xf32> to vector<1x512xf32>
    %326 = arith.index_cast %c4_i32 : i32 to index
    %c0_148 = arith.constant 0 : index
    %c0_149 = arith.constant 0 : index
    %327 = vector.load %arg14[%326, %c0_148, %c0_149] : memref<8x8x512xf32, #tpu.memory_space<vmem>>, vector<1x1x512xf32>
    %328 = vector.shape_cast %327 : vector<1x1x512xf32> to vector<1x512xf32>
    %329 = vector.shape_cast %325 : vector<1x512xf32> to vector<1x1x512xf32>
    tpu.vector_store %arg14[%326, %c0_148, %c0_149], %329 {strides = array<i32>} : memref<8x8x512xf32, #tpu.memory_space<vmem>>, vector<1x1x512xf32>,
    %c8_i32_150 = arith.constant 8 : i32
    %330 = arith.addi %c8_i32_150, %c4_i32 : i32
    %331 = arith.index_cast %330 : i32 to index
    %332 = memref.load %arg1[%331] : memref<64xi32, #tpu.memory_space<smem>>
    %333 = arith.index_cast %332 : i32 to index
    %c0_151 = arith.constant 0 : index
    %c0_152 = arith.constant 0 : index
    %334 = vector.load %arg2[%333, %c0_151, %c0_152] : memref<9x1x512xf32, #tpu.memory_space<vmem>>, vector<1x1x512xf32>
    %335 = vector.shape_cast %334 : vector<1x1x512xf32> to vector<1x512xf32>
    %336 = arith.index_cast %c4_i32 : i32 to index
    %c1_153 = arith.constant 1 : index
    %c0_154 = arith.constant 0 : index
    %337 = vector.load %arg14[%336, %c1_153, %c0_154] : memref<8x8x512xf32, #tpu.memory_space<vmem>>, vector<1x1x512xf32>
    %338 = vector.shape_cast %337 : vector<1x1x512xf32> to vector<1x512xf32>
    %339 = vector.shape_cast %335 : vector<1x512xf32> to vector<1x1x512xf32>
    tpu.vector_store %arg14[%336, %c1_153, %c0_154], %339 {strides = array<i32>} : memref<8x8x512xf32, #tpu.memory_space<vmem>>, vector<1x1x512xf32>,
    %c16_i32_155 = arith.constant 16 : i32
    %340 = arith.addi %c16_i32_155, %c4_i32 : i32
    %341 = arith.index_cast %340 : i32 to index
    %342 = memref.load %arg1[%341] : memref<64xi32, #tpu.memory_space<smem>>
    %343 = arith.index_cast %342 : i32 to index
    %c0_156 = arith.constant 0 : index
    %c0_157 = arith.constant 0 : index
    %344 = vector.load %arg2[%343, %c0_156, %c0_157] : memref<9x1x512xf32, #tpu.memory_space<vmem>>, vector<1x1x512xf32>
    %345 = vector.shape_cast %344 : vector<1x1x512xf32> to vector<1x512xf32>
    %346 = arith.index_cast %c4_i32 : i32 to index
    %c2_158 = arith.constant 2 : index
    %c0_159 = arith.constant 0 : index
    %347 = vector.load %arg14[%346, %c2_158, %c0_159] : memref<8x8x512xf32, #tpu.memory_space<vmem>>, vector<1x1x512xf32>
    %348 = vector.shape_cast %347 : vector<1x1x512xf32> to vector<1x512xf32>
    %349 = vector.shape_cast %345 : vector<1x512xf32> to vector<1x1x512xf32>
    tpu.vector_store %arg14[%346, %c2_158, %c0_159], %349 {strides = array<i32>} : memref<8x8x512xf32, #tpu.memory_space<vmem>>, vector<1x1x512xf32>,
    %c24_i32_160 = arith.constant 24 : i32
    %350 = arith.addi %c24_i32_160, %c4_i32 : i32
    %351 = arith.index_cast %350 : i32 to index
    %352 = memref.load %arg1[%351] : memref<64xi32, #tpu.memory_space<smem>>
    %353 = arith.index_cast %352 : i32 to index
    %c0_161 = arith.constant 0 : index
    %c0_162 = arith.constant 0 : index
    %354 = vector.load %arg2[%353, %c0_161, %c0_162] : memref<9x1x512xf32, #tpu.memory_space<vmem>>, vector<1x1x512xf32>
    %355 = vector.shape_cast %354 : vector<1x1x512xf32> to vector<1x512xf32>
    %356 = arith.index_cast %c4_i32 : i32 to index
    %c3_163 = arith.constant 3 : index
    %c0_164 = arith.constant 0 : index
    %357 = vector.load %arg14[%356, %c3_163, %c0_164] : memref<8x8x512xf32, #tpu.memory_space<vmem>>, vector<1x1x512xf32>
    %358 = vector.shape_cast %357 : vector<1x1x512xf32> to vector<1x512xf32>
    %359 = vector.shape_cast %355 : vector<1x512xf32> to vector<1x1x512xf32>
    tpu.vector_store %arg14[%356, %c3_163, %c0_164], %359 {strides = array<i32>} : memref<8x8x512xf32, #tpu.memory_space<vmem>>, vector<1x1x512xf32>,
    %c32_i32_165 = arith.constant 32 : i32
    %360 = arith.addi %c32_i32_165, %c4_i32 : i32
    %361 = arith.index_cast %360 : i32 to index
    %362 = memref.load %arg1[%361] : memref<64xi32, #tpu.memory_space<smem>>
    %363 = arith.index_cast %362 : i32 to index
    %c0_166 = arith.constant 0 : index
    %c0_167 = arith.constant 0 : index
    %364 = vector.load %arg2[%363, %c0_166, %c0_167] : memref<9x1x512xf32, #tpu.memory_space<vmem>>, vector<1x1x512xf32>
    %365 = vector.shape_cast %364 : vector<1x1x512xf32> to vector<1x512xf32>
    %366 = arith.index_cast %c4_i32 : i32 to index
    %c4_168 = arith.constant 4 : index
    %c0_169 = arith.constant 0 : index
    %367 = vector.load %arg14[%366, %c4_168, %c0_169] : memref<8x8x512xf32, #tpu.memory_space<vmem>>, vector<1x1x512xf32>
    %368 = vector.shape_cast %367 : vector<1x1x512xf32> to vector<1x512xf32>
    %369 = vector.shape_cast %365 : vector<1x512xf32> to vector<1x1x512xf32>
    tpu.vector_store %arg14[%366, %c4_168, %c0_169], %369 {strides = array<i32>} : memref<8x8x512xf32, #tpu.memory_space<vmem>>, vector<1x1x512xf32>,
    %c40_i32_170 = arith.constant 40 : i32
    %370 = arith.addi %c40_i32_170, %c4_i32 : i32
    %371 = arith.index_cast %370 : i32 to index
    %372 = memref.load %arg1[%371] : memref<64xi32, #tpu.memory_space<smem>>
    %373 = arith.index_cast %372 : i32 to index
    %c0_171 = arith.constant 0 : index
    %c0_172 = arith.constant 0 : index
    %374 = vector.load %arg2[%373, %c0_171, %c0_172] : memref<9x1x512xf32, #tpu.memory_space<vmem>>, vector<1x1x512xf32>
    %375 = vector.shape_cast %374 : vector<1x1x512xf32> to vector<1x512xf32>
    %376 = arith.index_cast %c4_i32 : i32 to index
    %c5_173 = arith.constant 5 : index
    %c0_174 = arith.constant 0 : index
    %377 = vector.load %arg14[%376, %c5_173, %c0_174] : memref<8x8x512xf32, #tpu.memory_space<vmem>>, vector<1x1x512xf32>
    %378 = vector.shape_cast %377 : vector<1x1x512xf32> to vector<1x512xf32>
    %379 = vector.shape_cast %375 : vector<1x512xf32> to vector<1x1x512xf32>
    tpu.vector_store %arg14[%376, %c5_173, %c0_174], %379 {strides = array<i32>} : memref<8x8x512xf32, #tpu.memory_space<vmem>>, vector<1x1x512xf32>,
    %c48_i32_175 = arith.constant 48 : i32
    %380 = arith.addi %c48_i32_175, %c4_i32 : i32
    %381 = arith.index_cast %380 : i32 to index
    %382 = memref.load %arg1[%381] : memref<64xi32, #tpu.memory_space<smem>>
    %383 = arith.index_cast %382 : i32 to index
    %c0_176 = arith.constant 0 : index
    %c0_177 = arith.constant 0 : index
    %384 = vector.load %arg2[%383, %c0_176, %c0_177] : memref<9x1x512xf32, #tpu.memory_space<vmem>>, vector<1x1x512xf32>
    %385 = vector.shape_cast %384 : vector<1x1x512xf32> to vector<1x512xf32>
    %386 = arith.index_cast %c4_i32 : i32 to index
    %c6_178 = arith.constant 6 : index
    %c0_179 = arith.constant 0 : index
    %387 = vector.load %arg14[%386, %c6_178, %c0_179] : memref<8x8x512xf32, #tpu.memory_space<vmem>>, vector<1x1x512xf32>
    %388 = vector.shape_cast %387 : vector<1x1x512xf32> to vector<1x512xf32>
    %389 = vector.shape_cast %385 : vector<1x512xf32> to vector<1x1x512xf32>
    tpu.vector_store %arg14[%386, %c6_178, %c0_179], %389 {strides = array<i32>} : memref<8x8x512xf32, #tpu.memory_space<vmem>>, vector<1x1x512xf32>,
    %c56_i32_180 = arith.constant 56 : i32
    %390 = arith.addi %c56_i32_180, %c4_i32 : i32
    %391 = arith.index_cast %390 : i32 to index
    %392 = memref.load %arg1[%391] : memref<64xi32, #tpu.memory_space<smem>>
    %393 = arith.index_cast %392 : i32 to index
    %c0_181 = arith.constant 0 : index
    %c0_182 = arith.constant 0 : index
    %394 = vector.load %arg2[%393, %c0_181, %c0_182] : memref<9x1x512xf32, #tpu.memory_space<vmem>>, vector<1x1x512xf32>
    %395 = vector.shape_cast %394 : vector<1x1x512xf32> to vector<1x512xf32>
    %396 = arith.index_cast %c4_i32 : i32 to index
    %c7_183 = arith.constant 7 : index
    %c0_184 = arith.constant 0 : index
    %397 = vector.load %arg14[%396, %c7_183, %c0_184] : memref<8x8x512xf32, #tpu.memory_space<vmem>>, vector<1x1x512xf32>
    %398 = vector.shape_cast %397 : vector<1x1x512xf32> to vector<1x512xf32>
    %399 = vector.shape_cast %395 : vector<1x512xf32> to vector<1x1x512xf32>
    tpu.vector_store %arg14[%396, %c7_183, %c0_184], %399 {strides = array<i32>} : memref<8x8x512xf32, #tpu.memory_space<vmem>>, vector<1x1x512xf32>,
    %c5_i32 = arith.constant 5 : i32
    %c0_i32_185 = arith.constant 0 : i32
    %400 = arith.addi %c0_i32_185, %c5_i32 : i32
    %401 = arith.index_cast %400 : i32 to index
    %402 = memref.load %arg1[%401] : memref<64xi32, #tpu.memory_space<smem>>
    %403 = arith.index_cast %402 : i32 to index
    %c0_186 = arith.constant 0 : index
    %c0_187 = arith.constant 0 : index
    %404 = vector.load %arg2[%403, %c0_186, %c0_187] : memref<9x1x512xf32, #tpu.memory_space<vmem>>, vector<1x1x512xf32>
    %405 = vector.shape_cast %404 : vector<1x1x512xf32> to vector<1x512xf32>
    %406 = arith.index_cast %c5_i32 : i32 to index
    %c0_188 = arith.constant 0 : index
    %c0_189 = arith.constant 0 : index
    %407 = vector.load %arg14[%406, %c0_188, %c0_189] : memref<8x8x512xf32, #tpu.memory_space<vmem>>, vector<1x1x512xf32>
    %408 = vector.shape_cast %407 : vector<1x1x512xf32> to vector<1x512xf32>
    %409 = vector.shape_cast %405 : vector<1x512xf32> to vector<1x1x512xf32>
    tpu.vector_store %arg14[%406, %c0_188, %c0_189], %409 {strides = array<i32>} : memref<8x8x512xf32, #tpu.memory_space<vmem>>, vector<1x1x512xf32>,
    %c8_i32_190 = arith.constant 8 : i32
    %410 = arith.addi %c8_i32_190, %c5_i32 : i32
    %411 = arith.index_cast %410 : i32 to index
    %412 = memref.load %arg1[%411] : memref<64xi32, #tpu.memory_space<smem>>
    %413 = arith.index_cast %412 : i32 to index
    %c0_191 = arith.constant 0 : index
    %c0_192 = arith.constant 0 : index
    %414 = vector.load %arg2[%413, %c0_191, %c0_192] : memref<9x1x512xf32, #tpu.memory_space<vmem>>, vector<1x1x512xf32>
    %415 = vector.shape_cast %414 : vector<1x1x512xf32> to vector<1x512xf32>
    %416 = arith.index_cast %c5_i32 : i32 to index
    %c1_193 = arith.constant 1 : index
    %c0_194 = arith.constant 0 : index
    %417 = vector.load %arg14[%416, %c1_193, %c0_194] : memref<8x8x512xf32, #tpu.memory_space<vmem>>, vector<1x1x512xf32>
    %418 = vector.shape_cast %417 : vector<1x1x512xf32> to vector<1x512xf32>
    %419 = vector.shape_cast %415 : vector<1x512xf32> to vector<1x1x512xf32>
    tpu.vector_store %arg14[%416, %c1_193, %c0_194], %419 {strides = array<i32>} : memref<8x8x512xf32, #tpu.memory_space<vmem>>, vector<1x1x512xf32>,
    %c16_i32_195 = arith.constant 16 : i32
    %420 = arith.addi %c16_i32_195, %c5_i32 : i32
    %421 = arith.index_cast %420 : i32 to index
    %422 = memref.load %arg1[%421] : memref<64xi32, #tpu.memory_space<smem>>
    %423 = arith.index_cast %422 : i32 to index
    %c0_196 = arith.constant 0 : index
    %c0_197 = arith.constant 0 : index
    %424 = vector.load %arg2[%423, %c0_196, %c0_197] : memref<9x1x512xf32, #tpu.memory_space<vmem>>, vector<1x1x512xf32>
    %425 = vector.shape_cast %424 : vector<1x1x512xf32> to vector<1x512xf32>
    %426 = arith.index_cast %c5_i32 : i32 to index
    %c2_198 = arith.constant 2 : index
    %c0_199 = arith.constant 0 : index
    %427 = vector.load %arg14[%426, %c2_198, %c0_199] : memref<8x8x512xf32, #tpu.memory_space<vmem>>, vector<1x1x512xf32>
    %428 = vector.shape_cast %427 : vector<1x1x512xf32> to vector<1x512xf32>
    %429 = vector.shape_cast %425 : vector<1x512xf32> to vector<1x1x512xf32>
    tpu.vector_store %arg14[%426, %c2_198, %c0_199], %429 {strides = array<i32>} : memref<8x8x512xf32, #tpu.memory_space<vmem>>, vector<1x1x512xf32>,
    %c24_i32_200 = arith.constant 24 : i32
    %430 = arith.addi %c24_i32_200, %c5_i32 : i32
    %431 = arith.index_cast %430 : i32 to index
    %432 = memref.load %arg1[%431] : memref<64xi32, #tpu.memory_space<smem>>
    %433 = arith.index_cast %432 : i32 to index
    %c0_201 = arith.constant 0 : index
    %c0_202 = arith.constant 0 : index
    %434 = vector.load %arg2[%433, %c0_201, %c0_202] : memref<9x1x512xf32, #tpu.memory_space<vmem>>, vector<1x1x512xf32>
    %435 = vector.shape_cast %434 : vector<1x1x512xf32> to vector<1x512xf32>
    %436 = arith.index_cast %c5_i32 : i32 to index
    %c3_203 = arith.constant 3 : index
    %c0_204 = arith.constant 0 : index
    %437 = vector.load %arg14[%436, %c3_203, %c0_204] : memref<8x8x512xf32, #tpu.memory_space<vmem>>, vector<1x1x512xf32>
    %438 = vector.shape_cast %437 : vector<1x1x512xf32> to vector<1x512xf32>
    %439 = vector.shape_cast %435 : vector<1x512xf32> to vector<1x1x512xf32>
    tpu.vector_store %arg14[%436, %c3_203, %c0_204], %439 {strides = array<i32>} : memref<8x8x512xf32, #tpu.memory_space<vmem>>, vector<1x1x512xf32>,
    %c32_i32_205 = arith.constant 32 : i32
    %440 = arith.addi %c32_i32_205, %c5_i32 : i32
    %441 = arith.index_cast %440 : i32 to index
    %442 = memref.load %arg1[%441] : memref<64xi32, #tpu.memory_space<smem>>
    %443 = arith.index_cast %442 : i32 to index
    %c0_206 = arith.constant 0 : index
    %c0_207 = arith.constant 0 : index
    %444 = vector.load %arg2[%443, %c0_206, %c0_207] : memref<9x1x512xf32, #tpu.memory_space<vmem>>, vector<1x1x512xf32>
    %445 = vector.shape_cast %444 : vector<1x1x512xf32> to vector<1x512xf32>
    %446 = arith.index_cast %c5_i32 : i32 to index
    %c4_208 = arith.constant 4 : index
    %c0_209 = arith.constant 0 : index
    %447 = vector.load %arg14[%446, %c4_208, %c0_209] : memref<8x8x512xf32, #tpu.memory_space<vmem>>, vector<1x1x512xf32>
    %448 = vector.shape_cast %447 : vector<1x1x512xf32> to vector<1x512xf32>
    %449 = vector.shape_cast %445 : vector<1x512xf32> to vector<1x1x512xf32>
    tpu.vector_store %arg14[%446, %c4_208, %c0_209], %449 {strides = array<i32>} : memref<8x8x512xf32, #tpu.memory_space<vmem>>, vector<1x1x512xf32>,
    %c40_i32_210 = arith.constant 40 : i32
    %450 = arith.addi %c40_i32_210, %c5_i32 : i32
    %451 = arith.index_cast %450 : i32 to index
    %452 = memref.load %arg1[%451] : memref<64xi32, #tpu.memory_space<smem>>
    %453 = arith.index_cast %452 : i32 to index
    %c0_211 = arith.constant 0 : index
    %c0_212 = arith.constant 0 : index
    %454 = vector.load %arg2[%453, %c0_211, %c0_212] : memref<9x1x512xf32, #tpu.memory_space<vmem>>, vector<1x1x512xf32>
    %455 = vector.shape_cast %454 : vector<1x1x512xf32> to vector<1x512xf32>
    %456 = arith.index_cast %c5_i32 : i32 to index
    %c5_213 = arith.constant 5 : index
    %c0_214 = arith.constant 0 : index
    %457 = vector.load %arg14[%456, %c5_213, %c0_214] : memref<8x8x512xf32, #tpu.memory_space<vmem>>, vector<1x1x512xf32>
    %458 = vector.shape_cast %457 : vector<1x1x512xf32> to vector<1x512xf32>
    %459 = vector.shape_cast %455 : vector<1x512xf32> to vector<1x1x512xf32>
    tpu.vector_store %arg14[%456, %c5_213, %c0_214], %459 {strides = array<i32>} : memref<8x8x512xf32, #tpu.memory_space<vmem>>, vector<1x1x512xf32>,
    %c48_i32_215 = arith.constant 48 : i32
    %460 = arith.addi %c48_i32_215, %c5_i32 : i32
    %461 = arith.index_cast %460 : i32 to index
    %462 = memref.load %arg1[%461] : memref<64xi32, #tpu.memory_space<smem>>
    %463 = arith.index_cast %462 : i32 to index
    %c0_216 = arith.constant 0 : index
    %c0_217 = arith.constant 0 : index
    %464 = vector.load %arg2[%463, %c0_216, %c0_217] : memref<9x1x512xf32, #tpu.memory_space<vmem>>, vector<1x1x512xf32>
    %465 = vector.shape_cast %464 : vector<1x1x512xf32> to vector<1x512xf32>
    %466 = arith.index_cast %c5_i32 : i32 to index
    %c6_218 = arith.constant 6 : index
    %c0_219 = arith.constant 0 : index
    %467 = vector.load %arg14[%466, %c6_218, %c0_219] : memref<8x8x512xf32, #tpu.memory_space<vmem>>, vector<1x1x512xf32>
    %468 = vector.shape_cast %467 : vector<1x1x512xf32> to vector<1x512xf32>
    %469 = vector.shape_cast %465 : vector<1x512xf32> to vector<1x1x512xf32>
    tpu.vector_store %arg14[%466, %c6_218, %c0_219], %469 {strides = array<i32>} : memref<8x8x512xf32, #tpu.memory_space<vmem>>, vector<1x1x512xf32>,
    %c56_i32_220 = arith.constant 56 : i32
    %470 = arith.addi %c56_i32_220, %c5_i32 : i32
    %471 = arith.index_cast %470 : i32 to index
    %472 = memref.load %arg1[%471] : memref<64xi32, #tpu.memory_space<smem>>
    %473 = arith.index_cast %472 : i32 to index
    %c0_221 = arith.constant 0 : index
    %c0_222 = arith.constant 0 : index
    %474 = vector.load %arg2[%473, %c0_221, %c0_222] : memref<9x1x512xf32, #tpu.memory_space<vmem>>, vector<1x1x512xf32>
    %475 = vector.shape_cast %474 : vector<1x1x512xf32> to vector<1x512xf32>
    %476 = arith.index_cast %c5_i32 : i32 to index
    %c7_223 = arith.constant 7 : index
    %c0_224 = arith.constant 0 : index
    %477 = vector.load %arg14[%476, %c7_223, %c0_224] : memref<8x8x512xf32, #tpu.memory_space<vmem>>, vector<1x1x512xf32>
    %478 = vector.shape_cast %477 : vector<1x1x512xf32> to vector<1x512xf32>
    %479 = vector.shape_cast %475 : vector<1x512xf32> to vector<1x1x512xf32>
    tpu.vector_store %arg14[%476, %c7_223, %c0_224], %479 {strides = array<i32>} : memref<8x8x512xf32, #tpu.memory_space<vmem>>, vector<1x1x512xf32>,
    %c6_i32 = arith.constant 6 : i32
    %c0_i32_225 = arith.constant 0 : i32
    %480 = arith.addi %c0_i32_225, %c6_i32 : i32
    %481 = arith.index_cast %480 : i32 to index
    %482 = memref.load %arg1[%481] : memref<64xi32, #tpu.memory_space<smem>>
    %483 = arith.index_cast %482 : i32 to index
    %c0_226 = arith.constant 0 : index
    %c0_227 = arith.constant 0 : index
    %484 = vector.load %arg2[%483, %c0_226, %c0_227] : memref<9x1x512xf32, #tpu.memory_space<vmem>>, vector<1x1x512xf32>
    %485 = vector.shape_cast %484 : vector<1x1x512xf32> to vector<1x512xf32>
    %486 = arith.index_cast %c6_i32 : i32 to index
    %c0_228 = arith.constant 0 : index
    %c0_229 = arith.constant 0 : index
    %487 = vector.load %arg14[%486, %c0_228, %c0_229] : memref<8x8x512xf32, #tpu.memory_space<vmem>>, vector<1x1x512xf32>
    %488 = vector.shape_cast %487 : vector<1x1x512xf32> to vector<1x512xf32>
    %489 = vector.shape_cast %485 : vector<1x512xf32> to vector<1x1x512xf32>
    tpu.vector_store %arg14[%486, %c0_228, %c0_229], %489 {strides = array<i32>} : memref<8x8x512xf32, #tpu.memory_space<vmem>>, vector<1x1x512xf32>,
    %c8_i32_230 = arith.constant 8 : i32
    %490 = arith.addi %c8_i32_230, %c6_i32 : i32
    %491 = arith.index_cast %490 : i32 to index
    %492 = memref.load %arg1[%491] : memref<64xi32, #tpu.memory_space<smem>>
    %493 = arith.index_cast %492 : i32 to index
    %c0_231 = arith.constant 0 : index
    %c0_232 = arith.constant 0 : index
    %494 = vector.load %arg2[%493, %c0_231, %c0_232] : memref<9x1x512xf32, #tpu.memory_space<vmem>>, vector<1x1x512xf32>
    %495 = vector.shape_cast %494 : vector<1x1x512xf32> to vector<1x512xf32>
    %496 = arith.index_cast %c6_i32 : i32 to index
    %c1_233 = arith.constant 1 : index
    %c0_234 = arith.constant 0 : index
    %497 = vector.load %arg14[%496, %c1_233, %c0_234] : memref<8x8x512xf32, #tpu.memory_space<vmem>>, vector<1x1x512xf32>
    %498 = vector.shape_cast %497 : vector<1x1x512xf32> to vector<1x512xf32>
    %499 = vector.shape_cast %495 : vector<1x512xf32> to vector<1x1x512xf32>
    tpu.vector_store %arg14[%496, %c1_233, %c0_234], %499 {strides = array<i32>} : memref<8x8x512xf32, #tpu.memory_space<vmem>>, vector<1x1x512xf32>,
    %c16_i32_235 = arith.constant 16 : i32
    %500 = arith.addi %c16_i32_235, %c6_i32 : i32
    %501 = arith.index_cast %500 : i32 to index
    %502 = memref.load %arg1[%501] : memref<64xi32, #tpu.memory_space<smem>>
    %503 = arith.index_cast %502 : i32 to index
    %c0_236 = arith.constant 0 : index
    %c0_237 = arith.constant 0 : index
    %504 = vector.load %arg2[%503, %c0_236, %c0_237] : memref<9x1x512xf32, #tpu.memory_space<vmem>>, vector<1x1x512xf32>
    %505 = vector.shape_cast %504 : vector<1x1x512xf32> to vector<1x512xf32>
    %506 = arith.index_cast %c6_i32 : i32 to index
    %c2_238 = arith.constant 2 : index
    %c0_239 = arith.constant 0 : index
    %507 = vector.load %arg14[%506, %c2_238, %c0_239] : memref<8x8x512xf32, #tpu.memory_space<vmem>>, vector<1x1x512xf32>
    %508 = vector.shape_cast %507 : vector<1x1x512xf32> to vector<1x512xf32>
    %509 = vector.shape_cast %505 : vector<1x512xf32> to vector<1x1x512xf32>
    tpu.vector_store %arg14[%506, %c2_238, %c0_239], %509 {strides = array<i32>} : memref<8x8x512xf32, #tpu.memory_space<vmem>>, vector<1x1x512xf32>,
    %c24_i32_240 = arith.constant 24 : i32
    %510 = arith.addi %c24_i32_240, %c6_i32 : i32
    %511 = arith.index_cast %510 : i32 to index
    %512 = memref.load %arg1[%511] : memref<64xi32, #tpu.memory_space<smem>>
    %513 = arith.index_cast %512 : i32 to index
    %c0_241 = arith.constant 0 : index
    %c0_242 = arith.constant 0 : index
    %514 = vector.load %arg2[%513, %c0_241, %c0_242] : memref<9x1x512xf32, #tpu.memory_space<vmem>>, vector<1x1x512xf32>
    %515 = vector.shape_cast %514 : vector<1x1x512xf32> to vector<1x512xf32>
    %516 = arith.index_cast %c6_i32 : i32 to index
    %c3_243 = arith.constant 3 : index
    %c0_244 = arith.constant 0 : index
    %517 = vector.load %arg14[%516, %c3_243, %c0_244] : memref<8x8x512xf32, #tpu.memory_space<vmem>>, vector<1x1x512xf32>
    %518 = vector.shape_cast %517 : vector<1x1x512xf32> to vector<1x512xf32>
    %519 = vector.shape_cast %515 : vector<1x512xf32> to vector<1x1x512xf32>
    tpu.vector_store %arg14[%516, %c3_243, %c0_244], %519 {strides = array<i32>} : memref<8x8x512xf32, #tpu.memory_space<vmem>>, vector<1x1x512xf32>,
    %c32_i32_245 = arith.constant 32 : i32
    %520 = arith.addi %c32_i32_245, %c6_i32 : i32
    %521 = arith.index_cast %520 : i32 to index
    %522 = memref.load %arg1[%521] : memref<64xi32, #tpu.memory_space<smem>>
    %523 = arith.index_cast %522 : i32 to index
    %c0_246 = arith.constant 0 : index
    %c0_247 = arith.constant 0 : index
    %524 = vector.load %arg2[%523, %c0_246, %c0_247] : memref<9x1x512xf32, #tpu.memory_space<vmem>>, vector<1x1x512xf32>
    %525 = vector.shape_cast %524 : vector<1x1x512xf32> to vector<1x512xf32>
    %526 = arith.index_cast %c6_i32 : i32 to index
    %c4_248 = arith.constant 4 : index
    %c0_249 = arith.constant 0 : index
    %527 = vector.load %arg14[%526, %c4_248, %c0_249] : memref<8x8x512xf32, #tpu.memory_space<vmem>>, vector<1x1x512xf32>
    %528 = vector.shape_cast %527 : vector<1x1x512xf32> to vector<1x512xf32>
    %529 = vector.shape_cast %525 : vector<1x512xf32> to vector<1x1x512xf32>
    tpu.vector_store %arg14[%526, %c4_248, %c0_249], %529 {strides = array<i32>} : memref<8x8x512xf32, #tpu.memory_space<vmem>>, vector<1x1x512xf32>,
    %c40_i32_250 = arith.constant 40 : i32
    %530 = arith.addi %c40_i32_250, %c6_i32 : i32
    %531 = arith.index_cast %530 : i32 to index
    %532 = memref.load %arg1[%531] : memref<64xi32, #tpu.memory_space<smem>>
    %533 = arith.index_cast %532 : i32 to index
    %c0_251 = arith.constant 0 : index
    %c0_252 = arith.constant 0 : index
    %534 = vector.load %arg2[%533, %c0_251, %c0_252] : memref<9x1x512xf32, #tpu.memory_space<vmem>>, vector<1x1x512xf32>
    %535 = vector.shape_cast %534 : vector<1x1x512xf32> to vector<1x512xf32>
    %536 = arith.index_cast %c6_i32 : i32 to index
    %c5_253 = arith.constant 5 : index
    %c0_254 = arith.constant 0 : index
    %537 = vector.load %arg14[%536, %c5_253, %c0_254] : memref<8x8x512xf32, #tpu.memory_space<vmem>>, vector<1x1x512xf32>
    %538 = vector.shape_cast %537 : vector<1x1x512xf32> to vector<1x512xf32>
    %539 = vector.shape_cast %535 : vector<1x512xf32> to vector<1x1x512xf32>
    tpu.vector_store %arg14[%536, %c5_253, %c0_254], %539 {strides = array<i32>} : memref<8x8x512xf32, #tpu.memory_space<vmem>>, vector<1x1x512xf32>,
    %c48_i32_255 = arith.constant 48 : i32
    %540 = arith.addi %c48_i32_255, %c6_i32 : i32
    %541 = arith.index_cast %540 : i32 to index
    %542 = memref.load %arg1[%541] : memref<64xi32, #tpu.memory_space<smem>>
    %543 = arith.index_cast %542 : i32 to index
    %c0_256 = arith.constant 0 : index
    %c0_257 = arith.constant 0 : index
    %544 = vector.load %arg2[%543, %c0_256, %c0_257] : memref<9x1x512xf32, #tpu.memory_space<vmem>>, vector<1x1x512xf32>
    %545 = vector.shape_cast %544 : vector<1x1x512xf32> to vector<1x512xf32>
    %546 = arith.index_cast %c6_i32 : i32 to index
    %c6_258 = arith.constant 6 : index
    %c0_259 = arith.constant 0 : index
    %547 = vector.load %arg14[%546, %c6_258, %c0_259] : memref<8x8x512xf32, #tpu.memory_space<vmem>>, vector<1x1x512xf32>
    %548 = vector.shape_cast %547 : vector<1x1x512xf32> to vector<1x512xf32>
    %549 = vector.shape_cast %545 : vector<1x512xf32> to vector<1x1x512xf32>
    tpu.vector_store %arg14[%546, %c6_258, %c0_259], %549 {strides = array<i32>} : memref<8x8x512xf32, #tpu.memory_space<vmem>>, vector<1x1x512xf32>,
    %c56_i32_260 = arith.constant 56 : i32
    %550 = arith.addi %c56_i32_260, %c6_i32 : i32
    %551 = arith.index_cast %550 : i32 to index
    %552 = memref.load %arg1[%551] : memref<64xi32, #tpu.memory_space<smem>>
    %553 = arith.index_cast %552 : i32 to index
    %c0_261 = arith.constant 0 : index
    %c0_262 = arith.constant 0 : index
    %554 = vector.load %arg2[%553, %c0_261, %c0_262] : memref<9x1x512xf32, #tpu.memory_space<vmem>>, vector<1x1x512xf32>
    %555 = vector.shape_cast %554 : vector<1x1x512xf32> to vector<1x512xf32>
    %556 = arith.index_cast %c6_i32 : i32 to index
    %c7_263 = arith.constant 7 : index
    %c0_264 = arith.constant 0 : index
    %557 = vector.load %arg14[%556, %c7_263, %c0_264] : memref<8x8x512xf32, #tpu.memory_space<vmem>>, vector<1x1x512xf32>
    %558 = vector.shape_cast %557 : vector<1x1x512xf32> to vector<1x512xf32>
    %559 = vector.shape_cast %555 : vector<1x512xf32> to vector<1x1x512xf32>
    tpu.vector_store %arg14[%556, %c7_263, %c0_264], %559 {strides = array<i32>} : memref<8x8x512xf32, #tpu.memory_space<vmem>>, vector<1x1x512xf32>,
    %c7_i32 = arith.constant 7 : i32
    %c0_i32_265 = arith.constant 0 : i32
    %560 = arith.addi %c0_i32_265, %c7_i32 : i32
    %561 = arith.index_cast %560 : i32 to index
    %562 = memref.load %arg1[%561] : memref<64xi32, #tpu.memory_space<smem>>
    %563 = arith.index_cast %562 : i32 to index
    %c0_266 = arith.constant 0 : index
    %c0_267 = arith.constant 0 : index
    %564 = vector.load %arg2[%563, %c0_266, %c0_267] : memref<9x1x512xf32, #tpu.memory_space<vmem>>, vector<1x1x512xf32>
    %565 = vector.shape_cast %564 : vector<1x1x512xf32> to vector<1x512xf32>
    %566 = arith.index_cast %c7_i32 : i32 to index
    %c0_268 = arith.constant 0 : index
    %c0_269 = arith.constant 0 : index
    %567 = vector.load %arg14[%566, %c0_268, %c0_269] : memref<8x8x512xf32, #tpu.memory_space<vmem>>, vector<1x1x512xf32>
    %568 = vector.shape_cast %567 : vector<1x1x512xf32> to vector<1x512xf32>
    %569 = vector.shape_cast %565 : vector<1x512xf32> to vector<1x1x512xf32>
    tpu.vector_store %arg14[%566, %c0_268, %c0_269], %569 {strides = array<i32>} : memref<8x8x512xf32, #tpu.memory_space<vmem>>, vector<1x1x512xf32>,
    %c8_i32_270 = arith.constant 8 : i32
    %570 = arith.addi %c8_i32_270, %c7_i32 : i32
    %571 = arith.index_cast %570 : i32 to index
    %572 = memref.load %arg1[%571] : memref<64xi32, #tpu.memory_space<smem>>
    %573 = arith.index_cast %572 : i32 to index
    %c0_271 = arith.constant 0 : index
    %c0_272 = arith.constant 0 : index
    %574 = vector.load %arg2[%573, %c0_271, %c0_272] : memref<9x1x512xf32, #tpu.memory_space<vmem>>, vector<1x1x512xf32>
    %575 = vector.shape_cast %574 : vector<1x1x512xf32> to vector<1x512xf32>
    %576 = arith.index_cast %c7_i32 : i32 to index
    %c1_273 = arith.constant 1 : index
    %c0_274 = arith.constant 0 : index
    %577 = vector.load %arg14[%576, %c1_273, %c0_274] : memref<8x8x512xf32, #tpu.memory_space<vmem>>, vector<1x1x512xf32>
    %578 = vector.shape_cast %577 : vector<1x1x512xf32> to vector<1x512xf32>
    %579 = vector.shape_cast %575 : vector<1x512xf32> to vector<1x1x512xf32>
    tpu.vector_store %arg14[%576, %c1_273, %c0_274], %579 {strides = array<i32>} : memref<8x8x512xf32, #tpu.memory_space<vmem>>, vector<1x1x512xf32>,
    %c16_i32_275 = arith.constant 16 : i32
    %580 = arith.addi %c16_i32_275, %c7_i32 : i32
    %581 = arith.index_cast %580 : i32 to index
    %582 = memref.load %arg1[%581] : memref<64xi32, #tpu.memory_space<smem>>
    %583 = arith.index_cast %582 : i32 to index
    %c0_276 = arith.constant 0 : index
    %c0_277 = arith.constant 0 : index
    %584 = vector.load %arg2[%583, %c0_276, %c0_277] : memref<9x1x512xf32, #tpu.memory_space<vmem>>, vector<1x1x512xf32>
    %585 = vector.shape_cast %584 : vector<1x1x512xf32> to vector<1x512xf32>
    %586 = arith.index_cast %c7_i32 : i32 to index
    %c2_278 = arith.constant 2 : index
    %c0_279 = arith.constant 0 : index
    %587 = vector.load %arg14[%586, %c2_278, %c0_279] : memref<8x8x512xf32, #tpu.memory_space<vmem>>, vector<1x1x512xf32>
    %588 = vector.shape_cast %587 : vector<1x1x512xf32> to vector<1x512xf32>
    %589 = vector.shape_cast %585 : vector<1x512xf32> to vector<1x1x512xf32>
    tpu.vector_store %arg14[%586, %c2_278, %c0_279], %589 {strides = array<i32>} : memref<8x8x512xf32, #tpu.memory_space<vmem>>, vector<1x1x512xf32>,
    %c24_i32_280 = arith.constant 24 : i32
    %590 = arith.addi %c24_i32_280, %c7_i32 : i32
    %591 = arith.index_cast %590 : i32 to index
    %592 = memref.load %arg1[%591] : memref<64xi32, #tpu.memory_space<smem>>
    %593 = arith.index_cast %592 : i32 to index
    %c0_281 = arith.constant 0 : index
    %c0_282 = arith.constant 0 : index
    %594 = vector.load %arg2[%593, %c0_281, %c0_282] : memref<9x1x512xf32, #tpu.memory_space<vmem>>, vector<1x1x512xf32>
    %595 = vector.shape_cast %594 : vector<1x1x512xf32> to vector<1x512xf32>
    %596 = arith.index_cast %c7_i32 : i32 to index
    %c3_283 = arith.constant 3 : index
    %c0_284 = arith.constant 0 : index
    %597 = vector.load %arg14[%596, %c3_283, %c0_284] : memref<8x8x512xf32, #tpu.memory_space<vmem>>, vector<1x1x512xf32>
    %598 = vector.shape_cast %597 : vector<1x1x512xf32> to vector<1x512xf32>
    %599 = vector.shape_cast %595 : vector<1x512xf32> to vector<1x1x512xf32>
    tpu.vector_store %arg14[%596, %c3_283, %c0_284], %599 {strides = array<i32>} : memref<8x8x512xf32, #tpu.memory_space<vmem>>, vector<1x1x512xf32>,
    %c32_i32_285 = arith.constant 32 : i32
    %600 = arith.addi %c32_i32_285, %c7_i32 : i32
    %601 = arith.index_cast %600 : i32 to index
    %602 = memref.load %arg1[%601] : memref<64xi32, #tpu.memory_space<smem>>
    %603 = arith.index_cast %602 : i32 to index
    %c0_286 = arith.constant 0 : index
    %c0_287 = arith.constant 0 : index
    %604 = vector.load %arg2[%603, %c0_286, %c0_287] : memref<9x1x512xf32, #tpu.memory_space<vmem>>, vector<1x1x512xf32>
    %605 = vector.shape_cast %604 : vector<1x1x512xf32> to vector<1x512xf32>
    %606 = arith.index_cast %c7_i32 : i32 to index
    %c4_288 = arith.constant 4 : index
    %c0_289 = arith.constant 0 : index
    %607 = vector.load %arg14[%606, %c4_288, %c0_289] : memref<8x8x512xf32, #tpu.memory_space<vmem>>, vector<1x1x512xf32>
    %608 = vector.shape_cast %607 : vector<1x1x512xf32> to vector<1x512xf32>
    %609 = vector.shape_cast %605 : vector<1x512xf32> to vector<1x1x512xf32>
    tpu.vector_store %arg14[%606, %c4_288, %c0_289], %609 {strides = array<i32>} : memref<8x8x512xf32, #tpu.memory_space<vmem>>, vector<1x1x512xf32>,
    %c40_i32_290 = arith.constant 40 : i32
    %610 = arith.addi %c40_i32_290, %c7_i32 : i32
    %611 = arith.index_cast %610 : i32 to index
    %612 = memref.load %arg1[%611] : memref<64xi32, #tpu.memory_space<smem>>
    %613 = arith.index_cast %612 : i32 to index
    %c0_291 = arith.constant 0 : index
    %c0_292 = arith.constant 0 : index
    %614 = vector.load %arg2[%613, %c0_291, %c0_292] : memref<9x1x512xf32, #tpu.memory_space<vmem>>, vector<1x1x512xf32>
    %615 = vector.shape_cast %614 : vector<1x1x512xf32> to vector<1x512xf32>
    %616 = arith.index_cast %c7_i32 : i32 to index
    %c5_293 = arith.constant 5 : index
    %c0_294 = arith.constant 0 : index
    %617 = vector.load %arg14[%616, %c5_293, %c0_294] : memref<8x8x512xf32, #tpu.memory_space<vmem>>, vector<1x1x512xf32>
    %618 = vector.shape_cast %617 : vector<1x1x512xf32> to vector<1x512xf32>
    %619 = vector.shape_cast %615 : vector<1x512xf32> to vector<1x1x512xf32>
    tpu.vector_store %arg14[%616, %c5_293, %c0_294], %619 {strides = array<i32>} : memref<8x8x512xf32, #tpu.memory_space<vmem>>, vector<1x1x512xf32>,
    %c48_i32_295 = arith.constant 48 : i32
    %620 = arith.addi %c48_i32_295, %c7_i32 : i32
    %621 = arith.index_cast %620 : i32 to index
    %622 = memref.load %arg1[%621] : memref<64xi32, #tpu.memory_space<smem>>
    %623 = arith.index_cast %622 : i32 to index
    %c0_296 = arith.constant 0 : index
    %c0_297 = arith.constant 0 : index
    %624 = vector.load %arg2[%623, %c0_296, %c0_297] : memref<9x1x512xf32, #tpu.memory_space<vmem>>, vector<1x1x512xf32>
    %625 = vector.shape_cast %624 : vector<1x1x512xf32> to vector<1x512xf32>
    %626 = arith.index_cast %c7_i32 : i32 to index
    %c6_298 = arith.constant 6 : index
    %c0_299 = arith.constant 0 : index
    %627 = vector.load %arg14[%626, %c6_298, %c0_299] : memref<8x8x512xf32, #tpu.memory_space<vmem>>, vector<1x1x512xf32>
    %628 = vector.shape_cast %627 : vector<1x1x512xf32> to vector<1x512xf32>
    %629 = vector.shape_cast %625 : vector<1x512xf32> to vector<1x1x512xf32>
    tpu.vector_store %arg14[%626, %c6_298, %c0_299], %629 {strides = array<i32>} : memref<8x8x512xf32, #tpu.memory_space<vmem>>, vector<1x1x512xf32>,
    %c56_i32_300 = arith.constant 56 : i32
    %630 = arith.addi %c56_i32_300, %c7_i32 : i32
    %631 = arith.index_cast %630 : i32 to index
    %632 = memref.load %arg1[%631] : memref<64xi32, #tpu.memory_space<smem>>
    %633 = arith.index_cast %632 : i32 to index
    %c0_301 = arith.constant 0 : index
    %c0_302 = arith.constant 0 : index
    %634 = vector.load %arg2[%633, %c0_301, %c0_302] : memref<9x1x512xf32, #tpu.memory_space<vmem>>, vector<1x1x512xf32>
    %635 = vector.shape_cast %634 : vector<1x1x512xf32> to vector<1x512xf32>
    %636 = arith.index_cast %c7_i32 : i32 to index
    %c7_303 = arith.constant 7 : index
    %c0_304 = arith.constant 0 : index
    %637 = vector.load %arg14[%636, %c7_303, %c0_304] : memref<8x8x512xf32, #tpu.memory_space<vmem>>, vector<1x1x512xf32>
    %638 = vector.shape_cast %637 : vector<1x1x512xf32> to vector<1x512xf32>
    %639 = vector.shape_cast %635 : vector<1x512xf32> to vector<1x1x512xf32>
    tpu.vector_store %arg14[%636, %c7_303, %c0_304], %639 {strides = array<i32>} : memref<8x8x512xf32, #tpu.memory_space<vmem>>, vector<1x1x512xf32>,
    %c8_i32_305 = arith.constant 8 : i32
    %c0_306 = arith.constant 0 : index
    %c0_307 = arith.constant 0 : index
    %c0_308 = arith.constant 0 : index
    %640 = vector.load %arg6[%c0_306, %c0_307, %c0_308] : memref<2x8x128xf32, #tpu.memory_space<vmem>>, vector<1x8x128xf32>
    %641 = vector.shape_cast %640 : vector<1x8x128xf32> to vector<8x128xf32>
    %c0_309 = arith.constant 0 : index
    %c0_310 = arith.constant 0 : index
    %642 = vector.load %arg15[%c0_309, %c0_310] : memref<8x128xf32, #tpu.memory_space<vmem>>, vector<8x128xf32>
    tpu.vector_store %arg15[%c0_309, %c0_310], %641 {strides = array<i32>} : memref<8x128xf32, #tpu.memory_space<vmem>>, vector<8x128xf32>,
    %c0_311 = arith.constant 0 : index
    %c0_312 = arith.constant 0 : index
    %c0_313 = arith.constant 0 : index
    %643 = vector.load %arg7[%c0_311, %c0_312, %c0_313] : memref<2x8x128xf32, #tpu.memory_space<vmem>>, vector<1x8x128xf32>
    %644 = vector.shape_cast %643 : vector<1x8x128xf32> to vector<8x128xf32>
    %c0_314 = arith.constant 0 : index
    %c0_315 = arith.constant 0 : index
    %645 = vector.load %arg16[%c0_314, %c0_315] : memref<8x128xf32, #tpu.memory_space<vmem>>, vector<8x128xf32>
    tpu.vector_store %arg16[%c0_314, %c0_315], %644 {strides = array<i32>} : memref<8x128xf32, #tpu.memory_space<vmem>>, vector<8x128xf32>,
    %c0_316 = arith.constant 0 : index
    %c0_317 = arith.constant 0 : index
    %c0_318 = arith.constant 0 : index
    %646 = vector.load %arg4[%c0_316, %c0_317, %c0_318] : memref<2x128x512xf32, #tpu.memory_space<vmem>>, vector<1x128x512xf32>
    %647 = vector.shape_cast %646 : vector<1x128x512xf32> to vector<128x512xf32>
    %c0_319 = arith.constant 0 : index
    %c0_320 = arith.constant 0 : index
    %c0_321 = arith.constant 0 : index
    %648 = vector.load %arg5[%c0_319, %c0_320, %c0_321] : memref<2x1x512xf32, #tpu.memory_space<vmem>>, vector<1x1x512xf32>
    %649 = vector.shape_cast %648 : vector<1x1x512xf32> to vector<1x512xf32>
    %c0_i32_322 = arith.constant 0 : i32
    %c0_323 = arith.constant 0 : index
    %c0_324 = arith.constant 0 : index
    %650 = vector.load %arg15[%c0_323, %c0_324] : memref<8x128xf32, #tpu.memory_space<vmem>>, vector<8x128xf32>
    %c0_325 = arith.constant 0 : index
    %c0_326 = arith.constant 0 : index
    %651 = vector.load %arg16[%c0_325, %c0_326] : memref<8x128xf32, #tpu.memory_space<vmem>>, vector<8x128xf32>
    %652 = arith.index_cast %c0_i32_322 : i32 to index
    %c0_327 = arith.constant 0 : index
    %c0_328 = arith.constant 0 : index
    %653 = vector.load %arg14[%652, %c0_327, %c0_328] : memref<8x8x512xf32, #tpu.memory_space<vmem>>, vector<1x8x512xf32>
    %654 = vector.shape_cast %653 : vector<1x8x512xf32> to vector<8x512xf32>
    %cst = arith.constant dense<0.000000e+00> : vector<8x512xf32>
    %655 = tpu.matmul %650, %647, %cst {dimension_numbers = #tpu.dot_dimension_numbers<[1], [0], [0], [1], [0, 0, 1, 1], [], []>} : vector<8x128xf32>, vector<128x512xf32>, vector<8x512xf32> -> vector<8x512xf32>
    %656 = arith.addf %654, %655 : vector<8x512xf32>
    %657 = vector.broadcast %649 : vector<1x512xf32> to vector<8x512xf32>
    %658 = arith.addf %656, %657 : vector<8x512xf32>
    %659 = vector.extract_strided_slice %658 {offsets = [0, 0], sizes = [8, 128], strides = [1, 1]} : vector<8x512xf32> to vector<8x128xf32>
    %660 = arith.negf %659 : vector<8x128xf32>
    %661 = math.exp %660 : vector<8x128xf32>
    %cst_329 = arith.constant 1.000000e+00 : f32
    %662 = vector.broadcast %cst_329 : f32 to vector<8x128xf32>
    %663 = arith.addf %662, %661 : vector<8x128xf32>
    %664 = arith.divf %662, %663 : vector<8x128xf32>
    %665 = vector.extract_strided_slice %658 {offsets = [0, 128], sizes = [8, 128], strides = [1, 1]} : vector<8x512xf32> to vector<8x128xf32>
    %666 = arith.negf %665 : vector<8x128xf32>
    %667 = math.exp %666 : vector<8x128xf32>
    %cst_330 = arith.constant 1.000000e+00 : f32
    %668 = vector.broadcast %cst_330 : f32 to vector<8x128xf32>
    %669 = arith.addf %668, %667 : vector<8x128xf32>
    %670 = arith.divf %668, %669 : vector<8x128xf32>
    %671 = vector.extract_strided_slice %658 {offsets = [0, 256], sizes = [8, 128], strides = [1, 1]} : vector<8x512xf32> to vector<8x128xf32>
    %672 = math.tanh %671 : vector<8x128xf32>
    %673 = vector.extract_strided_slice %658 {offsets = [0, 384], sizes = [8, 128], strides = [1, 1]} : vector<8x512xf32> to vector<8x128xf32>
    %674 = arith.negf %673 : vector<8x128xf32>
    %675 = math.exp %674 : vector<8x128xf32>
    %cst_331 = arith.constant 1.000000e+00 : f32
    %676 = vector.broadcast %cst_331 : f32 to vector<8x128xf32>
    %677 = arith.addf %676, %675 : vector<8x128xf32>
    %678 = arith.divf %676, %677 : vector<8x128xf32>
    %679 = arith.mulf %670, %651 : vector<8x128xf32>
    %680 = arith.mulf %664, %672 : vector<8x128xf32>
    %681 = arith.addf %679, %680 : vector<8x128xf32>
    %682 = math.tanh %681 : vector<8x128xf32>
    %683 = arith.mulf %678, %682 : vector<8x128xf32>
    %c0_332 = arith.constant 0 : index
    %c0_333 = arith.constant 0 : index
    %684 = vector.load %arg15[%c0_332, %c0_333] : memref<8x128xf32, #tpu.memory_space<vmem>>, vector<8x128xf32>
    tpu.vector_store %arg15[%c0_332, %c0_333], %683 {strides = array<i32>} : memref<8x128xf32, #tpu.memory_space<vmem>>, vector<8x128xf32>,
    %c0_334 = arith.constant 0 : index
    %c0_335 = arith.constant 0 : index
    %685 = vector.load %arg16[%c0_334, %c0_335] : memref<8x128xf32, #tpu.memory_space<vmem>>, vector<8x128xf32>
    tpu.vector_store %arg16[%c0_334, %c0_335], %681 {strides = array<i32>} : memref<8x128xf32, #tpu.memory_space<vmem>>, vector<8x128xf32>,
    %686 = arith.index_cast %c0_i32_322 : i32 to index
    %c0_336 = arith.constant 0 : index
    %c0_337 = arith.constant 0 : index
    %687 = vector.load %arg13[%686, %c0_336, %c0_337] : memref<8x8x128xf32, #tpu.memory_space<vmem>>, vector<1x8x128xf32>
    %688 = vector.shape_cast %687 : vector<1x8x128xf32> to vector<8x128xf32>
    %689 = vector.shape_cast %683 : vector<8x128xf32> to vector<1x8x128xf32>
    tpu.vector_store %arg13[%686, %c0_336, %c0_337], %689 {strides = array<i32>} : memref<8x8x128xf32, #tpu.memory_space<vmem>>, vector<1x8x128xf32>,
    %c1_i32_338 = arith.constant 1 : i32
    %c0_339 = arith.constant 0 : index
    %c0_340 = arith.constant 0 : index
    %690 = vector.load %arg15[%c0_339, %c0_340] : memref<8x128xf32, #tpu.memory_space<vmem>>, vector<8x128xf32>
    %c0_341 = arith.constant 0 : index
    %c0_342 = arith.constant 0 : index
    %691 = vector.load %arg16[%c0_341, %c0_342] : memref<8x128xf32, #tpu.memory_space<vmem>>, vector<8x128xf32>
    %692 = arith.index_cast %c1_i32_338 : i32 to index
    %c0_343 = arith.constant 0 : index
    %c0_344 = arith.constant 0 : index
    %693 = vector.load %arg14[%692, %c0_343, %c0_344] : memref<8x8x512xf32, #tpu.memory_space<vmem>>, vector<1x8x512xf32>
    %694 = vector.shape_cast %693 : vector<1x8x512xf32> to vector<8x512xf32>
    %cst_345 = arith.constant dense<0.000000e+00> : vector<8x512xf32>
    %695 = tpu.matmul %690, %647, %cst_345 {dimension_numbers = #tpu.dot_dimension_numbers<[1], [0], [0], [1], [0, 0, 1, 1], [], []>} : vector<8x128xf32>, vector<128x512xf32>, vector<8x512xf32> -> vector<8x512xf32>
    %696 = arith.addf %694, %695 : vector<8x512xf32>
    %697 = vector.broadcast %649 : vector<1x512xf32> to vector<8x512xf32>
    %698 = arith.addf %696, %697 : vector<8x512xf32>
    %699 = vector.extract_strided_slice %698 {offsets = [0, 0], sizes = [8, 128], strides = [1, 1]} : vector<8x512xf32> to vector<8x128xf32>
    %700 = arith.negf %699 : vector<8x128xf32>
    %701 = math.exp %700 : vector<8x128xf32>
    %cst_346 = arith.constant 1.000000e+00 : f32
    %702 = vector.broadcast %cst_346 : f32 to vector<8x128xf32>
    %703 = arith.addf %702, %701 : vector<8x128xf32>
    %704 = arith.divf %702, %703 : vector<8x128xf32>
    %705 = vector.extract_strided_slice %698 {offsets = [0, 128], sizes = [8, 128], strides = [1, 1]} : vector<8x512xf32> to vector<8x128xf32>
    %706 = arith.negf %705 : vector<8x128xf32>
    %707 = math.exp %706 : vector<8x128xf32>
    %cst_347 = arith.constant 1.000000e+00 : f32
    %708 = vector.broadcast %cst_347 : f32 to vector<8x128xf32>
    %709 = arith.addf %708, %707 : vector<8x128xf32>
    %710 = arith.divf %708, %709 : vector<8x128xf32>
    %711 = vector.extract_strided_slice %698 {offsets = [0, 256], sizes = [8, 128], strides = [1, 1]} : vector<8x512xf32> to vector<8x128xf32>
    %712 = math.tanh %711 : vector<8x128xf32>
    %713 = vector.extract_strided_slice %698 {offsets = [0, 384], sizes = [8, 128], strides = [1, 1]} : vector<8x512xf32> to vector<8x128xf32>
    %714 = arith.negf %713 : vector<8x128xf32>
    %715 = math.exp %714 : vector<8x128xf32>
    %cst_348 = arith.constant 1.000000e+00 : f32
    %716 = vector.broadcast %cst_348 : f32 to vector<8x128xf32>
    %717 = arith.addf %716, %715 : vector<8x128xf32>
    %718 = arith.divf %716, %717 : vector<8x128xf32>
    %719 = arith.mulf %710, %691 : vector<8x128xf32>
    %720 = arith.mulf %704, %712 : vector<8x128xf32>
    %721 = arith.addf %719, %720 : vector<8x128xf32>
    %722 = math.tanh %721 : vector<8x128xf32>
    %723 = arith.mulf %718, %722 : vector<8x128xf32>
    %c0_349 = arith.constant 0 : index
    %c0_350 = arith.constant 0 : index
    %724 = vector.load %arg15[%c0_349, %c0_350] : memref<8x128xf32, #tpu.memory_space<vmem>>, vector<8x128xf32>
    tpu.vector_store %arg15[%c0_349, %c0_350], %723 {strides = array<i32>} : memref<8x128xf32, #tpu.memory_space<vmem>>, vector<8x128xf32>,
    %c0_351 = arith.constant 0 : index
    %c0_352 = arith.constant 0 : index
    %725 = vector.load %arg16[%c0_351, %c0_352] : memref<8x128xf32, #tpu.memory_space<vmem>>, vector<8x128xf32>
    tpu.vector_store %arg16[%c0_351, %c0_352], %721 {strides = array<i32>} : memref<8x128xf32, #tpu.memory_space<vmem>>, vector<8x128xf32>,
    %726 = arith.index_cast %c1_i32_338 : i32 to index
    %c0_353 = arith.constant 0 : index
    %c0_354 = arith.constant 0 : index
    %727 = vector.load %arg13[%726, %c0_353, %c0_354] : memref<8x8x128xf32, #tpu.memory_space<vmem>>, vector<1x8x128xf32>
    %728 = vector.shape_cast %727 : vector<1x8x128xf32> to vector<8x128xf32>
    %729 = vector.shape_cast %723 : vector<8x128xf32> to vector<1x8x128xf32>
    tpu.vector_store %arg13[%726, %c0_353, %c0_354], %729 {strides = array<i32>} : memref<8x8x128xf32, #tpu.memory_space<vmem>>, vector<1x8x128xf32>,
    %c2_i32_355 = arith.constant 2 : i32
    %c0_356 = arith.constant 0 : index
    %c0_357 = arith.constant 0 : index
    %730 = vector.load %arg15[%c0_356, %c0_357] : memref<8x128xf32, #tpu.memory_space<vmem>>, vector<8x128xf32>
    %c0_358 = arith.constant 0 : index
    %c0_359 = arith.constant 0 : index
    %731 = vector.load %arg16[%c0_358, %c0_359] : memref<8x128xf32, #tpu.memory_space<vmem>>, vector<8x128xf32>
    %732 = arith.index_cast %c2_i32_355 : i32 to index
    %c0_360 = arith.constant 0 : index
    %c0_361 = arith.constant 0 : index
    %733 = vector.load %arg14[%732, %c0_360, %c0_361] : memref<8x8x512xf32, #tpu.memory_space<vmem>>, vector<1x8x512xf32>
    %734 = vector.shape_cast %733 : vector<1x8x512xf32> to vector<8x512xf32>
    %cst_362 = arith.constant dense<0.000000e+00> : vector<8x512xf32>
    %735 = tpu.matmul %730, %647, %cst_362 {dimension_numbers = #tpu.dot_dimension_numbers<[1], [0], [0], [1], [0, 0, 1, 1], [], []>} : vector<8x128xf32>, vector<128x512xf32>, vector<8x512xf32> -> vector<8x512xf32>
    %736 = arith.addf %734, %735 : vector<8x512xf32>
    %737 = vector.broadcast %649 : vector<1x512xf32> to vector<8x512xf32>
    %738 = arith.addf %736, %737 : vector<8x512xf32>
    %739 = vector.extract_strided_slice %738 {offsets = [0, 0], sizes = [8, 128], strides = [1, 1]} : vector<8x512xf32> to vector<8x128xf32>
    %740 = arith.negf %739 : vector<8x128xf32>
    %741 = math.exp %740 : vector<8x128xf32>
    %cst_363 = arith.constant 1.000000e+00 : f32
    %742 = vector.broadcast %cst_363 : f32 to vector<8x128xf32>
    %743 = arith.addf %742, %741 : vector<8x128xf32>
    %744 = arith.divf %742, %743 : vector<8x128xf32>
    %745 = vector.extract_strided_slice %738 {offsets = [0, 128], sizes = [8, 128], strides = [1, 1]} : vector<8x512xf32> to vector<8x128xf32>
    %746 = arith.negf %745 : vector<8x128xf32>
    %747 = math.exp %746 : vector<8x128xf32>
    %cst_364 = arith.constant 1.000000e+00 : f32
    %748 = vector.broadcast %cst_364 : f32 to vector<8x128xf32>
    %749 = arith.addf %748, %747 : vector<8x128xf32>
    %750 = arith.divf %748, %749 : vector<8x128xf32>
    %751 = vector.extract_strided_slice %738 {offsets = [0, 256], sizes = [8, 128], strides = [1, 1]} : vector<8x512xf32> to vector<8x128xf32>
    %752 = math.tanh %751 : vector<8x128xf32>
    %753 = vector.extract_strided_slice %738 {offsets = [0, 384], sizes = [8, 128], strides = [1, 1]} : vector<8x512xf32> to vector<8x128xf32>
    %754 = arith.negf %753 : vector<8x128xf32>
    %755 = math.exp %754 : vector<8x128xf32>
    %cst_365 = arith.constant 1.000000e+00 : f32
    %756 = vector.broadcast %cst_365 : f32 to vector<8x128xf32>
    %757 = arith.addf %756, %755 : vector<8x128xf32>
    %758 = arith.divf %756, %757 : vector<8x128xf32>
    %759 = arith.mulf %750, %731 : vector<8x128xf32>
    %760 = arith.mulf %744, %752 : vector<8x128xf32>
    %761 = arith.addf %759, %760 : vector<8x128xf32>
    %762 = math.tanh %761 : vector<8x128xf32>
    %763 = arith.mulf %758, %762 : vector<8x128xf32>
    %c0_366 = arith.constant 0 : index
    %c0_367 = arith.constant 0 : index
    %764 = vector.load %arg15[%c0_366, %c0_367] : memref<8x128xf32, #tpu.memory_space<vmem>>, vector<8x128xf32>
    tpu.vector_store %arg15[%c0_366, %c0_367], %763 {strides = array<i32>} : memref<8x128xf32, #tpu.memory_space<vmem>>, vector<8x128xf32>,
    %c0_368 = arith.constant 0 : index
    %c0_369 = arith.constant 0 : index
    %765 = vector.load %arg16[%c0_368, %c0_369] : memref<8x128xf32, #tpu.memory_space<vmem>>, vector<8x128xf32>
    tpu.vector_store %arg16[%c0_368, %c0_369], %761 {strides = array<i32>} : memref<8x128xf32, #tpu.memory_space<vmem>>, vector<8x128xf32>,
    %766 = arith.index_cast %c2_i32_355 : i32 to index
    %c0_370 = arith.constant 0 : index
    %c0_371 = arith.constant 0 : index
    %767 = vector.load %arg13[%766, %c0_370, %c0_371] : memref<8x8x128xf32, #tpu.memory_space<vmem>>, vector<1x8x128xf32>
    %768 = vector.shape_cast %767 : vector<1x8x128xf32> to vector<8x128xf32>
    %769 = vector.shape_cast %763 : vector<8x128xf32> to vector<1x8x128xf32>
    tpu.vector_store %arg13[%766, %c0_370, %c0_371], %769 {strides = array<i32>} : memref<8x8x128xf32, #tpu.memory_space<vmem>>, vector<1x8x128xf32>,
    %c3_i32_372 = arith.constant 3 : i32
    %c0_373 = arith.constant 0 : index
    %c0_374 = arith.constant 0 : index
    %770 = vector.load %arg15[%c0_373, %c0_374] : memref<8x128xf32, #tpu.memory_space<vmem>>, vector<8x128xf32>
    %c0_375 = arith.constant 0 : index
    %c0_376 = arith.constant 0 : index
    %771 = vector.load %arg16[%c0_375, %c0_376] : memref<8x128xf32, #tpu.memory_space<vmem>>, vector<8x128xf32>
    %772 = arith.index_cast %c3_i32_372 : i32 to index
    %c0_377 = arith.constant 0 : index
    %c0_378 = arith.constant 0 : index
    %773 = vector.load %arg14[%772, %c0_377, %c0_378] : memref<8x8x512xf32, #tpu.memory_space<vmem>>, vector<1x8x512xf32>
    %774 = vector.shape_cast %773 : vector<1x8x512xf32> to vector<8x512xf32>
    %cst_379 = arith.constant dense<0.000000e+00> : vector<8x512xf32>
    %775 = tpu.matmul %770, %647, %cst_379 {dimension_numbers = #tpu.dot_dimension_numbers<[1], [0], [0], [1], [0, 0, 1, 1], [], []>} : vector<8x128xf32>, vector<128x512xf32>, vector<8x512xf32> -> vector<8x512xf32>
    %776 = arith.addf %774, %775 : vector<8x512xf32>
    %777 = vector.broadcast %649 : vector<1x512xf32> to vector<8x512xf32>
    %778 = arith.addf %776, %777 : vector<8x512xf32>
    %779 = vector.extract_strided_slice %778 {offsets = [0, 0], sizes = [8, 128], strides = [1, 1]} : vector<8x512xf32> to vector<8x128xf32>
    %780 = arith.negf %779 : vector<8x128xf32>
    %781 = math.exp %780 : vector<8x128xf32>
    %cst_380 = arith.constant 1.000000e+00 : f32
    %782 = vector.broadcast %cst_380 : f32 to vector<8x128xf32>
    %783 = arith.addf %782, %781 : vector<8x128xf32>
    %784 = arith.divf %782, %783 : vector<8x128xf32>
    %785 = vector.extract_strided_slice %778 {offsets = [0, 128], sizes = [8, 128], strides = [1, 1]} : vector<8x512xf32> to vector<8x128xf32>
    %786 = arith.negf %785 : vector<8x128xf32>
    %787 = math.exp %786 : vector<8x128xf32>
    %cst_381 = arith.constant 1.000000e+00 : f32
    %788 = vector.broadcast %cst_381 : f32 to vector<8x128xf32>
    %789 = arith.addf %788, %787 : vector<8x128xf32>
    %790 = arith.divf %788, %789 : vector<8x128xf32>
    %791 = vector.extract_strided_slice %778 {offsets = [0, 256], sizes = [8, 128], strides = [1, 1]} : vector<8x512xf32> to vector<8x128xf32>
    %792 = math.tanh %791 : vector<8x128xf32>
    %793 = vector.extract_strided_slice %778 {offsets = [0, 384], sizes = [8, 128], strides = [1, 1]} : vector<8x512xf32> to vector<8x128xf32>
    %794 = arith.negf %793 : vector<8x128xf32>
    %795 = math.exp %794 : vector<8x128xf32>
    %cst_382 = arith.constant 1.000000e+00 : f32
    %796 = vector.broadcast %cst_382 : f32 to vector<8x128xf32>
    %797 = arith.addf %796, %795 : vector<8x128xf32>
    %798 = arith.divf %796, %797 : vector<8x128xf32>
    %799 = arith.mulf %790, %771 : vector<8x128xf32>
    %800 = arith.mulf %784, %792 : vector<8x128xf32>
    %801 = arith.addf %799, %800 : vector<8x128xf32>
    %802 = math.tanh %801 : vector<8x128xf32>
    %803 = arith.mulf %798, %802 : vector<8x128xf32>
    %c0_383 = arith.constant 0 : index
    %c0_384 = arith.constant 0 : index
    %804 = vector.load %arg15[%c0_383, %c0_384] : memref<8x128xf32, #tpu.memory_space<vmem>>, vector<8x128xf32>
    tpu.vector_store %arg15[%c0_383, %c0_384], %803 {strides = array<i32>} : memref<8x128xf32, #tpu.memory_space<vmem>>, vector<8x128xf32>,
    %c0_385 = arith.constant 0 : index
    %c0_386 = arith.constant 0 : index
    %805 = vector.load %arg16[%c0_385, %c0_386] : memref<8x128xf32, #tpu.memory_space<vmem>>, vector<8x128xf32>
    tpu.vector_store %arg16[%c0_385, %c0_386], %801 {strides = array<i32>} : memref<8x128xf32, #tpu.memory_space<vmem>>, vector<8x128xf32>,
    %806 = arith.index_cast %c3_i32_372 : i32 to index
    %c0_387 = arith.constant 0 : index
    %c0_388 = arith.constant 0 : index
    %807 = vector.load %arg13[%806, %c0_387, %c0_388] : memref<8x8x128xf32, #tpu.memory_space<vmem>>, vector<1x8x128xf32>
    %808 = vector.shape_cast %807 : vector<1x8x128xf32> to vector<8x128xf32>
    %809 = vector.shape_cast %803 : vector<8x128xf32> to vector<1x8x128xf32>
    tpu.vector_store %arg13[%806, %c0_387, %c0_388], %809 {strides = array<i32>} : memref<8x8x128xf32, #tpu.memory_space<vmem>>, vector<1x8x128xf32>,
    %c4_i32_389 = arith.constant 4 : i32
    %c0_390 = arith.constant 0 : index
    %c0_391 = arith.constant 0 : index
    %810 = vector.load %arg15[%c0_390, %c0_391] : memref<8x128xf32, #tpu.memory_space<vmem>>, vector<8x128xf32>
    %c0_392 = arith.constant 0 : index
    %c0_393 = arith.constant 0 : index
    %811 = vector.load %arg16[%c0_392, %c0_393] : memref<8x128xf32, #tpu.memory_space<vmem>>, vector<8x128xf32>
    %812 = arith.index_cast %c4_i32_389 : i32 to index
    %c0_394 = arith.constant 0 : index
    %c0_395 = arith.constant 0 : index
    %813 = vector.load %arg14[%812, %c0_394, %c0_395] : memref<8x8x512xf32, #tpu.memory_space<vmem>>, vector<1x8x512xf32>
    %814 = vector.shape_cast %813 : vector<1x8x512xf32> to vector<8x512xf32>
    %cst_396 = arith.constant dense<0.000000e+00> : vector<8x512xf32>
    %815 = tpu.matmul %810, %647, %cst_396 {dimension_numbers = #tpu.dot_dimension_numbers<[1], [0], [0], [1], [0, 0, 1, 1], [], []>} : vector<8x128xf32>, vector<128x512xf32>, vector<8x512xf32> -> vector<8x512xf32>
    %816 = arith.addf %814, %815 : vector<8x512xf32>
    %817 = vector.broadcast %649 : vector<1x512xf32> to vector<8x512xf32>
    %818 = arith.addf %816, %817 : vector<8x512xf32>
    %819 = vector.extract_strided_slice %818 {offsets = [0, 0], sizes = [8, 128], strides = [1, 1]} : vector<8x512xf32> to vector<8x128xf32>
    %820 = arith.negf %819 : vector<8x128xf32>
    %821 = math.exp %820 : vector<8x128xf32>
    %cst_397 = arith.constant 1.000000e+00 : f32
    %822 = vector.broadcast %cst_397 : f32 to vector<8x128xf32>
    %823 = arith.addf %822, %821 : vector<8x128xf32>
    %824 = arith.divf %822, %823 : vector<8x128xf32>
    %825 = vector.extract_strided_slice %818 {offsets = [0, 128], sizes = [8, 128], strides = [1, 1]} : vector<8x512xf32> to vector<8x128xf32>
    %826 = arith.negf %825 : vector<8x128xf32>
    %827 = math.exp %826 : vector<8x128xf32>
    %cst_398 = arith.constant 1.000000e+00 : f32
    %828 = vector.broadcast %cst_398 : f32 to vector<8x128xf32>
    %829 = arith.addf %828, %827 : vector<8x128xf32>
    %830 = arith.divf %828, %829 : vector<8x128xf32>
    %831 = vector.extract_strided_slice %818 {offsets = [0, 256], sizes = [8, 128], strides = [1, 1]} : vector<8x512xf32> to vector<8x128xf32>
    %832 = math.tanh %831 : vector<8x128xf32>
    %833 = vector.extract_strided_slice %818 {offsets = [0, 384], sizes = [8, 128], strides = [1, 1]} : vector<8x512xf32> to vector<8x128xf32>
    %834 = arith.negf %833 : vector<8x128xf32>
    %835 = math.exp %834 : vector<8x128xf32>
    %cst_399 = arith.constant 1.000000e+00 : f32
    %836 = vector.broadcast %cst_399 : f32 to vector<8x128xf32>
    %837 = arith.addf %836, %835 : vector<8x128xf32>
    %838 = arith.divf %836, %837 : vector<8x128xf32>
    %839 = arith.mulf %830, %811 : vector<8x128xf32>
    %840 = arith.mulf %824, %832 : vector<8x128xf32>
    %841 = arith.addf %839, %840 : vector<8x128xf32>
    %842 = math.tanh %841 : vector<8x128xf32>
    %843 = arith.mulf %838, %842 : vector<8x128xf32>
    %c0_400 = arith.constant 0 : index
    %c0_401 = arith.constant 0 : index
    %844 = vector.load %arg15[%c0_400, %c0_401] : memref<8x128xf32, #tpu.memory_space<vmem>>, vector<8x128xf32>
    tpu.vector_store %arg15[%c0_400, %c0_401], %843 {strides = array<i32>} : memref<8x128xf32, #tpu.memory_space<vmem>>, vector<8x128xf32>,
    %c0_402 = arith.constant 0 : index
    %c0_403 = arith.constant 0 : index
    %845 = vector.load %arg16[%c0_402, %c0_403] : memref<8x128xf32, #tpu.memory_space<vmem>>, vector<8x128xf32>
    tpu.vector_store %arg16[%c0_402, %c0_403], %841 {strides = array<i32>} : memref<8x128xf32, #tpu.memory_space<vmem>>, vector<8x128xf32>,
    %846 = arith.index_cast %c4_i32_389 : i32 to index
    %c0_404 = arith.constant 0 : index
    %c0_405 = arith.constant 0 : index
    %847 = vector.load %arg13[%846, %c0_404, %c0_405] : memref<8x8x128xf32, #tpu.memory_space<vmem>>, vector<1x8x128xf32>
    %848 = vector.shape_cast %847 : vector<1x8x128xf32> to vector<8x128xf32>
    %849 = vector.shape_cast %843 : vector<8x128xf32> to vector<1x8x128xf32>
    tpu.vector_store %arg13[%846, %c0_404, %c0_405], %849 {strides = array<i32>} : memref<8x8x128xf32, #tpu.memory_space<vmem>>, vector<1x8x128xf32>,
    %c5_i32_406 = arith.constant 5 : i32
    %c0_407 = arith.constant 0 : index
    %c0_408 = arith.constant 0 : index
    %850 = vector.load %arg15[%c0_407, %c0_408] : memref<8x128xf32, #tpu.memory_space<vmem>>, vector<8x128xf32>
    %c0_409 = arith.constant 0 : index
    %c0_410 = arith.constant 0 : index
    %851 = vector.load %arg16[%c0_409, %c0_410] : memref<8x128xf32, #tpu.memory_space<vmem>>, vector<8x128xf32>
    %852 = arith.index_cast %c5_i32_406 : i32 to index
    %c0_411 = arith.constant 0 : index
    %c0_412 = arith.constant 0 : index
    %853 = vector.load %arg14[%852, %c0_411, %c0_412] : memref<8x8x512xf32, #tpu.memory_space<vmem>>, vector<1x8x512xf32>
    %854 = vector.shape_cast %853 : vector<1x8x512xf32> to vector<8x512xf32>
    %cst_413 = arith.constant dense<0.000000e+00> : vector<8x512xf32>
    %855 = tpu.matmul %850, %647, %cst_413 {dimension_numbers = #tpu.dot_dimension_numbers<[1], [0], [0], [1], [0, 0, 1, 1], [], []>} : vector<8x128xf32>, vector<128x512xf32>, vector<8x512xf32> -> vector<8x512xf32>
    %856 = arith.addf %854, %855 : vector<8x512xf32>
    %857 = vector.broadcast %649 : vector<1x512xf32> to vector<8x512xf32>
    %858 = arith.addf %856, %857 : vector<8x512xf32>
    %859 = vector.extract_strided_slice %858 {offsets = [0, 0], sizes = [8, 128], strides = [1, 1]} : vector<8x512xf32> to vector<8x128xf32>
    %860 = arith.negf %859 : vector<8x128xf32>
    %861 = math.exp %860 : vector<8x128xf32>
    %cst_414 = arith.constant 1.000000e+00 : f32
    %862 = vector.broadcast %cst_414 : f32 to vector<8x128xf32>
    %863 = arith.addf %862, %861 : vector<8x128xf32>
    %864 = arith.divf %862, %863 : vector<8x128xf32>
    %865 = vector.extract_strided_slice %858 {offsets = [0, 128], sizes = [8, 128], strides = [1, 1]} : vector<8x512xf32> to vector<8x128xf32>
    %866 = arith.negf %865 : vector<8x128xf32>
    %867 = math.exp %866 : vector<8x128xf32>
    %cst_415 = arith.constant 1.000000e+00 : f32
    %868 = vector.broadcast %cst_415 : f32 to vector<8x128xf32>
    %869 = arith.addf %868, %867 : vector<8x128xf32>
    %870 = arith.divf %868, %869 : vector<8x128xf32>
    %871 = vector.extract_strided_slice %858 {offsets = [0, 256], sizes = [8, 128], strides = [1, 1]} : vector<8x512xf32> to vector<8x128xf32>
    %872 = math.tanh %871 : vector<8x128xf32>
    %873 = vector.extract_strided_slice %858 {offsets = [0, 384], sizes = [8, 128], strides = [1, 1]} : vector<8x512xf32> to vector<8x128xf32>
    %874 = arith.negf %873 : vector<8x128xf32>
    %875 = math.exp %874 : vector<8x128xf32>
    %cst_416 = arith.constant 1.000000e+00 : f32
    %876 = vector.broadcast %cst_416 : f32 to vector<8x128xf32>
    %877 = arith.addf %876, %875 : vector<8x128xf32>
    %878 = arith.divf %876, %877 : vector<8x128xf32>
    %879 = arith.mulf %870, %851 : vector<8x128xf32>
    %880 = arith.mulf %864, %872 : vector<8x128xf32>
    %881 = arith.addf %879, %880 : vector<8x128xf32>
    %882 = math.tanh %881 : vector<8x128xf32>
    %883 = arith.mulf %878, %882 : vector<8x128xf32>
    %c0_417 = arith.constant 0 : index
    %c0_418 = arith.constant 0 : index
    %884 = vector.load %arg15[%c0_417, %c0_418] : memref<8x128xf32, #tpu.memory_space<vmem>>, vector<8x128xf32>
    tpu.vector_store %arg15[%c0_417, %c0_418], %883 {strides = array<i32>} : memref<8x128xf32, #tpu.memory_space<vmem>>, vector<8x128xf32>,
    %c0_419 = arith.constant 0 : index
    %c0_420 = arith.constant 0 : index
    %885 = vector.load %arg16[%c0_419, %c0_420] : memref<8x128xf32, #tpu.memory_space<vmem>>, vector<8x128xf32>
    tpu.vector_store %arg16[%c0_419, %c0_420], %881 {strides = array<i32>} : memref<8x128xf32, #tpu.memory_space<vmem>>, vector<8x128xf32>,
    %886 = arith.index_cast %c5_i32_406 : i32 to index
    %c0_421 = arith.constant 0 : index
    %c0_422 = arith.constant 0 : index
    %887 = vector.load %arg13[%886, %c0_421, %c0_422] : memref<8x8x128xf32, #tpu.memory_space<vmem>>, vector<1x8x128xf32>
    %888 = vector.shape_cast %887 : vector<1x8x128xf32> to vector<8x128xf32>
    %889 = vector.shape_cast %883 : vector<8x128xf32> to vector<1x8x128xf32>
    tpu.vector_store %arg13[%886, %c0_421, %c0_422], %889 {strides = array<i32>} : memref<8x8x128xf32, #tpu.memory_space<vmem>>, vector<1x8x128xf32>,
    %c6_i32_423 = arith.constant 6 : i32
    %c0_424 = arith.constant 0 : index
    %c0_425 = arith.constant 0 : index
    %890 = vector.load %arg15[%c0_424, %c0_425] : memref<8x128xf32, #tpu.memory_space<vmem>>, vector<8x128xf32>
    %c0_426 = arith.constant 0 : index
    %c0_427 = arith.constant 0 : index
    %891 = vector.load %arg16[%c0_426, %c0_427] : memref<8x128xf32, #tpu.memory_space<vmem>>, vector<8x128xf32>
    %892 = arith.index_cast %c6_i32_423 : i32 to index
    %c0_428 = arith.constant 0 : index
    %c0_429 = arith.constant 0 : index
    %893 = vector.load %arg14[%892, %c0_428, %c0_429] : memref<8x8x512xf32, #tpu.memory_space<vmem>>, vector<1x8x512xf32>
    %894 = vector.shape_cast %893 : vector<1x8x512xf32> to vector<8x512xf32>
    %cst_430 = arith.constant dense<0.000000e+00> : vector<8x512xf32>
    %895 = tpu.matmul %890, %647, %cst_430 {dimension_numbers = #tpu.dot_dimension_numbers<[1], [0], [0], [1], [0, 0, 1, 1], [], []>} : vector<8x128xf32>, vector<128x512xf32>, vector<8x512xf32> -> vector<8x512xf32>
    %896 = arith.addf %894, %895 : vector<8x512xf32>
    %897 = vector.broadcast %649 : vector<1x512xf32> to vector<8x512xf32>
    %898 = arith.addf %896, %897 : vector<8x512xf32>
    %899 = vector.extract_strided_slice %898 {offsets = [0, 0], sizes = [8, 128], strides = [1, 1]} : vector<8x512xf32> to vector<8x128xf32>
    %900 = arith.negf %899 : vector<8x128xf32>
    %901 = math.exp %900 : vector<8x128xf32>
    %cst_431 = arith.constant 1.000000e+00 : f32
    %902 = vector.broadcast %cst_431 : f32 to vector<8x128xf32>
    %903 = arith.addf %902, %901 : vector<8x128xf32>
    %904 = arith.divf %902, %903 : vector<8x128xf32>
    %905 = vector.extract_strided_slice %898 {offsets = [0, 128], sizes = [8, 128], strides = [1, 1]} : vector<8x512xf32> to vector<8x128xf32>
    %906 = arith.negf %905 : vector<8x128xf32>
    %907 = math.exp %906 : vector<8x128xf32>
    %cst_432 = arith.constant 1.000000e+00 : f32
    %908 = vector.broadcast %cst_432 : f32 to vector<8x128xf32>
    %909 = arith.addf %908, %907 : vector<8x128xf32>
    %910 = arith.divf %908, %909 : vector<8x128xf32>
    %911 = vector.extract_strided_slice %898 {offsets = [0, 256], sizes = [8, 128], strides = [1, 1]} : vector<8x512xf32> to vector<8x128xf32>
    %912 = math.tanh %911 : vector<8x128xf32>
    %913 = vector.extract_strided_slice %898 {offsets = [0, 384], sizes = [8, 128], strides = [1, 1]} : vector<8x512xf32> to vector<8x128xf32>
    %914 = arith.negf %913 : vector<8x128xf32>
    %915 = math.exp %914 : vector<8x128xf32>
    %cst_433 = arith.constant 1.000000e+00 : f32
    %916 = vector.broadcast %cst_433 : f32 to vector<8x128xf32>
    %917 = arith.addf %916, %915 : vector<8x128xf32>
    %918 = arith.divf %916, %917 : vector<8x128xf32>
    %919 = arith.mulf %910, %891 : vector<8x128xf32>
    %920 = arith.mulf %904, %912 : vector<8x128xf32>
    %921 = arith.addf %919, %920 : vector<8x128xf32>
    %922 = math.tanh %921 : vector<8x128xf32>
    %923 = arith.mulf %918, %922 : vector<8x128xf32>
    %c0_434 = arith.constant 0 : index
    %c0_435 = arith.constant 0 : index
    %924 = vector.load %arg15[%c0_434, %c0_435] : memref<8x128xf32, #tpu.memory_space<vmem>>, vector<8x128xf32>
    tpu.vector_store %arg15[%c0_434, %c0_435], %923 {strides = array<i32>} : memref<8x128xf32, #tpu.memory_space<vmem>>, vector<8x128xf32>,
    %c0_436 = arith.constant 0 : index
    %c0_437 = arith.constant 0 : index
    %925 = vector.load %arg16[%c0_436, %c0_437] : memref<8x128xf32, #tpu.memory_space<vmem>>, vector<8x128xf32>
    tpu.vector_store %arg16[%c0_436, %c0_437], %921 {strides = array<i32>} : memref<8x128xf32, #tpu.memory_space<vmem>>, vector<8x128xf32>,
    %926 = arith.index_cast %c6_i32_423 : i32 to index
    %c0_438 = arith.constant 0 : index
    %c0_439 = arith.constant 0 : index
    %927 = vector.load %arg13[%926, %c0_438, %c0_439] : memref<8x8x128xf32, #tpu.memory_space<vmem>>, vector<1x8x128xf32>
    %928 = vector.shape_cast %927 : vector<1x8x128xf32> to vector<8x128xf32>
    %929 = vector.shape_cast %923 : vector<8x128xf32> to vector<1x8x128xf32>
    tpu.vector_store %arg13[%926, %c0_438, %c0_439], %929 {strides = array<i32>} : memref<8x8x128xf32, #tpu.memory_space<vmem>>, vector<1x8x128xf32>,
    %c7_i32_440 = arith.constant 7 : i32
    %c0_441 = arith.constant 0 : index
    %c0_442 = arith.constant 0 : index
    %930 = vector.load %arg15[%c0_441, %c0_442] : memref<8x128xf32, #tpu.memory_space<vmem>>, vector<8x128xf32>
    %c0_443 = arith.constant 0 : index
    %c0_444 = arith.constant 0 : index
    %931 = vector.load %arg16[%c0_443, %c0_444] : memref<8x128xf32, #tpu.memory_space<vmem>>, vector<8x128xf32>
    %932 = arith.index_cast %c7_i32_440 : i32 to index
    %c0_445 = arith.constant 0 : index
    %c0_446 = arith.constant 0 : index
    %933 = vector.load %arg14[%932, %c0_445, %c0_446] : memref<8x8x512xf32, #tpu.memory_space<vmem>>, vector<1x8x512xf32>
    %934 = vector.shape_cast %933 : vector<1x8x512xf32> to vector<8x512xf32>
    %cst_447 = arith.constant dense<0.000000e+00> : vector<8x512xf32>
    %935 = tpu.matmul %930, %647, %cst_447 {dimension_numbers = #tpu.dot_dimension_numbers<[1], [0], [0], [1], [0, 0, 1, 1], [], []>} : vector<8x128xf32>, vector<128x512xf32>, vector<8x512xf32> -> vector<8x512xf32>
    %936 = arith.addf %934, %935 : vector<8x512xf32>
    %937 = vector.broadcast %649 : vector<1x512xf32> to vector<8x512xf32>
    %938 = arith.addf %936, %937 : vector<8x512xf32>
    %939 = vector.extract_strided_slice %938 {offsets = [0, 0], sizes = [8, 128], strides = [1, 1]} : vector<8x512xf32> to vector<8x128xf32>
    %940 = arith.negf %939 : vector<8x128xf32>
    %941 = math.exp %940 : vector<8x128xf32>
    %cst_448 = arith.constant 1.000000e+00 : f32
    %942 = vector.broadcast %cst_448 : f32 to vector<8x128xf32>
    %943 = arith.addf %942, %941 : vector<8x128xf32>
    %944 = arith.divf %942, %943 : vector<8x128xf32>
    %945 = vector.extract_strided_slice %938 {offsets = [0, 128], sizes = [8, 128], strides = [1, 1]} : vector<8x512xf32> to vector<8x128xf32>
    %946 = arith.negf %945 : vector<8x128xf32>
    %947 = math.exp %946 : vector<8x128xf32>
    %cst_449 = arith.constant 1.000000e+00 : f32
    %948 = vector.broadcast %cst_449 : f32 to vector<8x128xf32>
    %949 = arith.addf %948, %947 : vector<8x128xf32>
    %950 = arith.divf %948, %949 : vector<8x128xf32>
    %951 = vector.extract_strided_slice %938 {offsets = [0, 256], sizes = [8, 128], strides = [1, 1]} : vector<8x512xf32> to vector<8x128xf32>
    %952 = math.tanh %951 : vector<8x128xf32>
    %953 = vector.extract_strided_slice %938 {offsets = [0, 384], sizes = [8, 128], strides = [1, 1]} : vector<8x512xf32> to vector<8x128xf32>
    %954 = arith.negf %953 : vector<8x128xf32>
    %955 = math.exp %954 : vector<8x128xf32>
    %cst_450 = arith.constant 1.000000e+00 : f32
    %956 = vector.broadcast %cst_450 : f32 to vector<8x128xf32>
    %957 = arith.addf %956, %955 : vector<8x128xf32>
    %958 = arith.divf %956, %957 : vector<8x128xf32>
    %959 = arith.mulf %950, %931 : vector<8x128xf32>
    %960 = arith.mulf %944, %952 : vector<8x128xf32>
    %961 = arith.addf %959, %960 : vector<8x128xf32>
    %962 = math.tanh %961 : vector<8x128xf32>
    %963 = arith.mulf %958, %962 : vector<8x128xf32>
    %c0_451 = arith.constant 0 : index
    %c0_452 = arith.constant 0 : index
    %964 = vector.load %arg15[%c0_451, %c0_452] : memref<8x128xf32, #tpu.memory_space<vmem>>, vector<8x128xf32>
    tpu.vector_store %arg15[%c0_451, %c0_452], %963 {strides = array<i32>} : memref<8x128xf32, #tpu.memory_space<vmem>>, vector<8x128xf32>,
    %c0_453 = arith.constant 0 : index
    %c0_454 = arith.constant 0 : index
    %965 = vector.load %arg16[%c0_453, %c0_454] : memref<8x128xf32, #tpu.memory_space<vmem>>, vector<8x128xf32>
    tpu.vector_store %arg16[%c0_453, %c0_454], %961 {strides = array<i32>} : memref<8x128xf32, #tpu.memory_space<vmem>>, vector<8x128xf32>,
    %966 = arith.index_cast %c7_i32_440 : i32 to index
    %c0_455 = arith.constant 0 : index
    %c0_456 = arith.constant 0 : index
    %967 = vector.load %arg13[%966, %c0_455, %c0_456] : memref<8x8x128xf32, #tpu.memory_space<vmem>>, vector<1x8x128xf32>
    %968 = vector.shape_cast %967 : vector<1x8x128xf32> to vector<8x128xf32>
    %969 = vector.shape_cast %963 : vector<8x128xf32> to vector<1x8x128xf32>
    tpu.vector_store %arg13[%966, %c0_455, %c0_456], %969 {strides = array<i32>} : memref<8x8x128xf32, #tpu.memory_space<vmem>>, vector<1x8x128xf32>,
    %c8_i32_457 = arith.constant 8 : i32
    %c0_458 = arith.constant 0 : index
    %c0_459 = arith.constant 0 : index
    %970 = vector.load %arg15[%c0_458, %c0_459] : memref<8x128xf32, #tpu.memory_space<vmem>>, vector<8x128xf32>
    %c0_460 = arith.constant 0 : index
    %c0_461 = arith.constant 0 : index
    %c0_462 = arith.constant 0 : index
    %971 = vector.load %arg11[%c0_460, %c0_461, %c0_462] : memref<2x8x128xf32, #tpu.memory_space<vmem>>, vector<1x8x128xf32>
    %972 = vector.shape_cast %971 : vector<1x8x128xf32> to vector<8x128xf32>
    %973 = vector.shape_cast %970 : vector<8x128xf32> to vector<1x8x128xf32>
    tpu.vector_store %arg11[%c0_460, %c0_461, %c0_462], %973 {strides = array<i32>} : memref<2x8x128xf32, #tpu.memory_space<vmem>>, vector<1x8x128xf32>,
    %c0_463 = arith.constant 0 : index
    %c0_464 = arith.constant 0 : index
    %974 = vector.load %arg16[%c0_463, %c0_464] : memref<8x128xf32, #tpu.memory_space<vmem>>, vector<8x128xf32>
    %c0_465 = arith.constant 0 : index
    %c0_466 = arith.constant 0 : index
    %c0_467 = arith.constant 0 : index
    %975 = vector.load %arg12[%c0_465, %c0_466, %c0_467] : memref<2x8x128xf32, #tpu.memory_space<vmem>>, vector<1x8x128xf32>
    %976 = vector.shape_cast %975 : vector<1x8x128xf32> to vector<8x128xf32>
    %977 = vector.shape_cast %974 : vector<8x128xf32> to vector<1x8x128xf32>
    tpu.vector_store %arg12[%c0_465, %c0_466, %c0_467], %977 {strides = array<i32>} : memref<2x8x128xf32, #tpu.memory_space<vmem>>, vector<1x8x128xf32>,
    %c0_468 = arith.constant 0 : index
    %c0_469 = arith.constant 0 : index
    %c0_470 = arith.constant 0 : index
    %978 = vector.load %arg13[%c0_468, %c0_469, %c0_470] : memref<8x8x128xf32, #tpu.memory_space<vmem>>, vector<8x8x128xf32>
    %979 = vector.shape_cast %978 : vector<8x8x128xf32> to vector<64x128xf32>
    %c0_471 = arith.constant 0 : index
    %c0_472 = arith.constant 0 : index
    %c0_473 = arith.constant 0 : index
    %980 = vector.load %arg3[%c0_471, %c0_472, %c0_473] : memref<1x128x512xf32, #tpu.memory_space<vmem>>, vector<1x128x512xf32>
    %981 = vector.shape_cast %980 : vector<1x128x512xf32> to vector<128x512xf32>
    %cst_474 = arith.constant dense<0.000000e+00> : vector<64x512xf32>
    %982 = tpu.matmul %979, %981, %cst_474 {dimension_numbers = #tpu.dot_dimension_numbers<[1], [0], [0], [1], [0, 0, 1, 1], [], []>} : vector<64x128xf32>, vector<128x512xf32>, vector<64x512xf32> -> vector<64x512xf32>
    %983 = vector.shape_cast %982 : vector<64x512xf32> to vector<8x8x512xf32>
    %c0_475 = arith.constant 0 : index
    %c0_476 = arith.constant 0 : index
    %c0_477 = arith.constant 0 : index
    %984 = vector.load %arg14[%c0_475, %c0_476, %c0_477] : memref<8x8x512xf32, #tpu.memory_space<vmem>>, vector<8x8x512xf32>
    tpu.vector_store %arg14[%c0_475, %c0_476, %c0_477], %983 {strides = array<i32>} : memref<8x8x512xf32, #tpu.memory_space<vmem>>, vector<8x8x512xf32>,
    %c1_478 = arith.constant 1 : index
    %c0_479 = arith.constant 0 : index
    %c0_480 = arith.constant 0 : index
    %985 = vector.load %arg6[%c1_478, %c0_479, %c0_480] : memref<2x8x128xf32, #tpu.memory_space<vmem>>, vector<1x8x128xf32>
    %986 = vector.shape_cast %985 : vector<1x8x128xf32> to vector<8x128xf32>
    %c0_481 = arith.constant 0 : index
    %c0_482 = arith.constant 0 : index
    %987 = vector.load %arg15[%c0_481, %c0_482] : memref<8x128xf32, #tpu.memory_space<vmem>>, vector<8x128xf32>
    tpu.vector_store %arg15[%c0_481, %c0_482], %986 {strides = array<i32>} : memref<8x128xf32, #tpu.memory_space<vmem>>, vector<8x128xf32>,
    %c1_483 = arith.constant 1 : index
    %c0_484 = arith.constant 0 : index
    %c0_485 = arith.constant 0 : index
    %988 = vector.load %arg7[%c1_483, %c0_484, %c0_485] : memref<2x8x128xf32, #tpu.memory_space<vmem>>, vector<1x8x128xf32>
    %989 = vector.shape_cast %988 : vector<1x8x128xf32> to vector<8x128xf32>
    %c0_486 = arith.constant 0 : index
    %c0_487 = arith.constant 0 : index
    %990 = vector.load %arg16[%c0_486, %c0_487] : memref<8x128xf32, #tpu.memory_space<vmem>>, vector<8x128xf32>
    tpu.vector_store %arg16[%c0_486, %c0_487], %989 {strides = array<i32>} : memref<8x128xf32, #tpu.memory_space<vmem>>, vector<8x128xf32>,
    %c1_488 = arith.constant 1 : index
    %c0_489 = arith.constant 0 : index
    %c0_490 = arith.constant 0 : index
    %991 = vector.load %arg4[%c1_488, %c0_489, %c0_490] : memref<2x128x512xf32, #tpu.memory_space<vmem>>, vector<1x128x512xf32>
    %992 = vector.shape_cast %991 : vector<1x128x512xf32> to vector<128x512xf32>
    %c1_491 = arith.constant 1 : index
    %c0_492 = arith.constant 0 : index
    %c0_493 = arith.constant 0 : index
    %993 = vector.load %arg5[%c1_491, %c0_492, %c0_493] : memref<2x1x512xf32, #tpu.memory_space<vmem>>, vector<1x1x512xf32>
    %994 = vector.shape_cast %993 : vector<1x1x512xf32> to vector<1x512xf32>
    %c0_i32_494 = arith.constant 0 : i32
    %c0_495 = arith.constant 0 : index
    %c0_496 = arith.constant 0 : index
    %995 = vector.load %arg15[%c0_495, %c0_496] : memref<8x128xf32, #tpu.memory_space<vmem>>, vector<8x128xf32>
    %c0_497 = arith.constant 0 : index
    %c0_498 = arith.constant 0 : index
    %996 = vector.load %arg16[%c0_497, %c0_498] : memref<8x128xf32, #tpu.memory_space<vmem>>, vector<8x128xf32>
    %997 = arith.index_cast %c0_i32_494 : i32 to index
    %c0_499 = arith.constant 0 : index
    %c0_500 = arith.constant 0 : index
    %998 = vector.load %arg14[%997, %c0_499, %c0_500] : memref<8x8x512xf32, #tpu.memory_space<vmem>>, vector<1x8x512xf32>
    %999 = vector.shape_cast %998 : vector<1x8x512xf32> to vector<8x512xf32>
    %cst_501 = arith.constant dense<0.000000e+00> : vector<8x512xf32>
    %1000 = tpu.matmul %995, %992, %cst_501 {dimension_numbers = #tpu.dot_dimension_numbers<[1], [0], [0], [1], [0, 0, 1, 1], [], []>} : vector<8x128xf32>, vector<128x512xf32>, vector<8x512xf32> -> vector<8x512xf32>
    %1001 = arith.addf %999, %1000 : vector<8x512xf32>
    %1002 = vector.broadcast %994 : vector<1x512xf32> to vector<8x512xf32>
    %1003 = arith.addf %1001, %1002 : vector<8x512xf32>
    %1004 = vector.extract_strided_slice %1003 {offsets = [0, 0], sizes = [8, 128], strides = [1, 1]} : vector<8x512xf32> to vector<8x128xf32>
    %1005 = arith.negf %1004 : vector<8x128xf32>
    %1006 = math.exp %1005 : vector<8x128xf32>
    %cst_502 = arith.constant 1.000000e+00 : f32
    %1007 = vector.broadcast %cst_502 : f32 to vector<8x128xf32>
    %1008 = arith.addf %1007, %1006 : vector<8x128xf32>
    %1009 = arith.divf %1007, %1008 : vector<8x128xf32>
    %1010 = vector.extract_strided_slice %1003 {offsets = [0, 128], sizes = [8, 128], strides = [1, 1]} : vector<8x512xf32> to vector<8x128xf32>
    %1011 = arith.negf %1010 : vector<8x128xf32>
    %1012 = math.exp %1011 : vector<8x128xf32>
    %cst_503 = arith.constant 1.000000e+00 : f32
    %1013 = vector.broadcast %cst_503 : f32 to vector<8x128xf32>
    %1014 = arith.addf %1013, %1012 : vector<8x128xf32>
    %1015 = arith.divf %1013, %1014 : vector<8x128xf32>
    %1016 = vector.extract_strided_slice %1003 {offsets = [0, 256], sizes = [8, 128], strides = [1, 1]} : vector<8x512xf32> to vector<8x128xf32>
    %1017 = math.tanh %1016 : vector<8x128xf32>
    %1018 = vector.extract_strided_slice %1003 {offsets = [0, 384], sizes = [8, 128], strides = [1, 1]} : vector<8x512xf32> to vector<8x128xf32>
    %1019 = arith.negf %1018 : vector<8x128xf32>
    %1020 = math.exp %1019 : vector<8x128xf32>
    %cst_504 = arith.constant 1.000000e+00 : f32
    %1021 = vector.broadcast %cst_504 : f32 to vector<8x128xf32>
    %1022 = arith.addf %1021, %1020 : vector<8x128xf32>
    %1023 = arith.divf %1021, %1022 : vector<8x128xf32>
    %1024 = arith.mulf %1015, %996 : vector<8x128xf32>
    %1025 = arith.mulf %1009, %1017 : vector<8x128xf32>
    %1026 = arith.addf %1024, %1025 : vector<8x128xf32>
    %1027 = math.tanh %1026 : vector<8x128xf32>
    %1028 = arith.mulf %1023, %1027 : vector<8x128xf32>
    %c0_505 = arith.constant 0 : index
    %c0_506 = arith.constant 0 : index
    %1029 = vector.load %arg15[%c0_505, %c0_506] : memref<8x128xf32, #tpu.memory_space<vmem>>, vector<8x128xf32>
    tpu.vector_store %arg15[%c0_505, %c0_506], %1028 {strides = array<i32>} : memref<8x128xf32, #tpu.memory_space<vmem>>, vector<8x128xf32>,
    %c0_507 = arith.constant 0 : index
    %c0_508 = arith.constant 0 : index
    %1030 = vector.load %arg16[%c0_507, %c0_508] : memref<8x128xf32, #tpu.memory_space<vmem>>, vector<8x128xf32>
    tpu.vector_store %arg16[%c0_507, %c0_508], %1026 {strides = array<i32>} : memref<8x128xf32, #tpu.memory_space<vmem>>, vector<8x128xf32>,
    %1031 = arith.index_cast %c0_i32_494 : i32 to index
    %c0_509 = arith.constant 0 : index
    %c0_510 = arith.constant 0 : index
    %1032 = vector.load %arg13[%1031, %c0_509, %c0_510] : memref<8x8x128xf32, #tpu.memory_space<vmem>>, vector<1x8x128xf32>
    %1033 = vector.shape_cast %1032 : vector<1x8x128xf32> to vector<8x128xf32>
    %1034 = vector.shape_cast %1028 : vector<8x128xf32> to vector<1x8x128xf32>
    tpu.vector_store %arg13[%1031, %c0_509, %c0_510], %1034 {strides = array<i32>} : memref<8x8x128xf32, #tpu.memory_space<vmem>>, vector<1x8x128xf32>,
    %c1_i32_511 = arith.constant 1 : i32
    %c0_512 = arith.constant 0 : index
    %c0_513 = arith.constant 0 : index
    %1035 = vector.load %arg15[%c0_512, %c0_513] : memref<8x128xf32, #tpu.memory_space<vmem>>, vector<8x128xf32>
    %c0_514 = arith.constant 0 : index
    %c0_515 = arith.constant 0 : index
    %1036 = vector.load %arg16[%c0_514, %c0_515] : memref<8x128xf32, #tpu.memory_space<vmem>>, vector<8x128xf32>
    %1037 = arith.index_cast %c1_i32_511 : i32 to index
    %c0_516 = arith.constant 0 : index
    %c0_517 = arith.constant 0 : index
    %1038 = vector.load %arg14[%1037, %c0_516, %c0_517] : memref<8x8x512xf32, #tpu.memory_space<vmem>>, vector<1x8x512xf32>
    %1039 = vector.shape_cast %1038 : vector<1x8x512xf32> to vector<8x512xf32>
    %cst_518 = arith.constant dense<0.000000e+00> : vector<8x512xf32>
    %1040 = tpu.matmul %1035, %992, %cst_518 {dimension_numbers = #tpu.dot_dimension_numbers<[1], [0], [0], [1], [0, 0, 1, 1], [], []>} : vector<8x128xf32>, vector<128x512xf32>, vector<8x512xf32> -> vector<8x512xf32>
    %1041 = arith.addf %1039, %1040 : vector<8x512xf32>
    %1042 = vector.broadcast %994 : vector<1x512xf32> to vector<8x512xf32>
    %1043 = arith.addf %1041, %1042 : vector<8x512xf32>
    %1044 = vector.extract_strided_slice %1043 {offsets = [0, 0], sizes = [8, 128], strides = [1, 1]} : vector<8x512xf32> to vector<8x128xf32>
    %1045 = arith.negf %1044 : vector<8x128xf32>
    %1046 = math.exp %1045 : vector<8x128xf32>
    %cst_519 = arith.constant 1.000000e+00 : f32
    %1047 = vector.broadcast %cst_519 : f32 to vector<8x128xf32>
    %1048 = arith.addf %1047, %1046 : vector<8x128xf32>
    %1049 = arith.divf %1047, %1048 : vector<8x128xf32>
    %1050 = vector.extract_strided_slice %1043 {offsets = [0, 128], sizes = [8, 128], strides = [1, 1]} : vector<8x512xf32> to vector<8x128xf32>
    %1051 = arith.negf %1050 : vector<8x128xf32>
    %1052 = math.exp %1051 : vector<8x128xf32>
    %cst_520 = arith.constant 1.000000e+00 : f32
    %1053 = vector.broadcast %cst_520 : f32 to vector<8x128xf32>
    %1054 = arith.addf %1053, %1052 : vector<8x128xf32>
    %1055 = arith.divf %1053, %1054 : vector<8x128xf32>
    %1056 = vector.extract_strided_slice %1043 {offsets = [0, 256], sizes = [8, 128], strides = [1, 1]} : vector<8x512xf32> to vector<8x128xf32>
    %1057 = math.tanh %1056 : vector<8x128xf32>
    %1058 = vector.extract_strided_slice %1043 {offsets = [0, 384], sizes = [8, 128], strides = [1, 1]} : vector<8x512xf32> to vector<8x128xf32>
    %1059 = arith.negf %1058 : vector<8x128xf32>
    %1060 = math.exp %1059 : vector<8x128xf32>
    %cst_521 = arith.constant 1.000000e+00 : f32
    %1061 = vector.broadcast %cst_521 : f32 to vector<8x128xf32>
    %1062 = arith.addf %1061, %1060 : vector<8x128xf32>
    %1063 = arith.divf %1061, %1062 : vector<8x128xf32>
    %1064 = arith.mulf %1055, %1036 : vector<8x128xf32>
    %1065 = arith.mulf %1049, %1057 : vector<8x128xf32>
    %1066 = arith.addf %1064, %1065 : vector<8x128xf32>
    %1067 = math.tanh %1066 : vector<8x128xf32>
    %1068 = arith.mulf %1063, %1067 : vector<8x128xf32>
    %c0_522 = arith.constant 0 : index
    %c0_523 = arith.constant 0 : index
    %1069 = vector.load %arg15[%c0_522, %c0_523] : memref<8x128xf32, #tpu.memory_space<vmem>>, vector<8x128xf32>
    tpu.vector_store %arg15[%c0_522, %c0_523], %1068 {strides = array<i32>} : memref<8x128xf32, #tpu.memory_space<vmem>>, vector<8x128xf32>,
    %c0_524 = arith.constant 0 : index
    %c0_525 = arith.constant 0 : index
    %1070 = vector.load %arg16[%c0_524, %c0_525] : memref<8x128xf32, #tpu.memory_space<vmem>>, vector<8x128xf32>
    tpu.vector_store %arg16[%c0_524, %c0_525], %1066 {strides = array<i32>} : memref<8x128xf32, #tpu.memory_space<vmem>>, vector<8x128xf32>,
    %1071 = arith.index_cast %c1_i32_511 : i32 to index
    %c0_526 = arith.constant 0 : index
    %c0_527 = arith.constant 0 : index
    %1072 = vector.load %arg13[%1071, %c0_526, %c0_527] : memref<8x8x128xf32, #tpu.memory_space<vmem>>, vector<1x8x128xf32>
    %1073 = vector.shape_cast %1072 : vector<1x8x128xf32> to vector<8x128xf32>
    %1074 = vector.shape_cast %1068 : vector<8x128xf32> to vector<1x8x128xf32>
    tpu.vector_store %arg13[%1071, %c0_526, %c0_527], %1074 {strides = array<i32>} : memref<8x8x128xf32, #tpu.memory_space<vmem>>, vector<1x8x128xf32>,
    %c2_i32_528 = arith.constant 2 : i32
    %c0_529 = arith.constant 0 : index
    %c0_530 = arith.constant 0 : index
    %1075 = vector.load %arg15[%c0_529, %c0_530] : memref<8x128xf32, #tpu.memory_space<vmem>>, vector<8x128xf32>
    %c0_531 = arith.constant 0 : index
    %c0_532 = arith.constant 0 : index
    %1076 = vector.load %arg16[%c0_531, %c0_532] : memref<8x128xf32, #tpu.memory_space<vmem>>, vector<8x128xf32>
    %1077 = arith.index_cast %c2_i32_528 : i32 to index
    %c0_533 = arith.constant 0 : index
    %c0_534 = arith.constant 0 : index
    %1078 = vector.load %arg14[%1077, %c0_533, %c0_534] : memref<8x8x512xf32, #tpu.memory_space<vmem>>, vector<1x8x512xf32>
    %1079 = vector.shape_cast %1078 : vector<1x8x512xf32> to vector<8x512xf32>
    %cst_535 = arith.constant dense<0.000000e+00> : vector<8x512xf32>
    %1080 = tpu.matmul %1075, %992, %cst_535 {dimension_numbers = #tpu.dot_dimension_numbers<[1], [0], [0], [1], [0, 0, 1, 1], [], []>} : vector<8x128xf32>, vector<128x512xf32>, vector<8x512xf32> -> vector<8x512xf32>
    %1081 = arith.addf %1079, %1080 : vector<8x512xf32>
    %1082 = vector.broadcast %994 : vector<1x512xf32> to vector<8x512xf32>
    %1083 = arith.addf %1081, %1082 : vector<8x512xf32>
    %1084 = vector.extract_strided_slice %1083 {offsets = [0, 0], sizes = [8, 128], strides = [1, 1]} : vector<8x512xf32> to vector<8x128xf32>
    %1085 = arith.negf %1084 : vector<8x128xf32>
    %1086 = math.exp %1085 : vector<8x128xf32>
    %cst_536 = arith.constant 1.000000e+00 : f32
    %1087 = vector.broadcast %cst_536 : f32 to vector<8x128xf32>
    %1088 = arith.addf %1087, %1086 : vector<8x128xf32>
    %1089 = arith.divf %1087, %1088 : vector<8x128xf32>
    %1090 = vector.extract_strided_slice %1083 {offsets = [0, 128], sizes = [8, 128], strides = [1, 1]} : vector<8x512xf32> to vector<8x128xf32>
    %1091 = arith.negf %1090 : vector<8x128xf32>
    %1092 = math.exp %1091 : vector<8x128xf32>
    %cst_537 = arith.constant 1.000000e+00 : f32
    %1093 = vector.broadcast %cst_537 : f32 to vector<8x128xf32>
    %1094 = arith.addf %1093, %1092 : vector<8x128xf32>
    %1095 = arith.divf %1093, %1094 : vector<8x128xf32>
    %1096 = vector.extract_strided_slice %1083 {offsets = [0, 256], sizes = [8, 128], strides = [1, 1]} : vector<8x512xf32> to vector<8x128xf32>
    %1097 = math.tanh %1096 : vector<8x128xf32>
    %1098 = vector.extract_strided_slice %1083 {offsets = [0, 384], sizes = [8, 128], strides = [1, 1]} : vector<8x512xf32> to vector<8x128xf32>
    %1099 = arith.negf %1098 : vector<8x128xf32>
    %1100 = math.exp %1099 : vector<8x128xf32>
    %cst_538 = arith.constant 1.000000e+00 : f32
    %1101 = vector.broadcast %cst_538 : f32 to vector<8x128xf32>
    %1102 = arith.addf %1101, %1100 : vector<8x128xf32>
    %1103 = arith.divf %1101, %1102 : vector<8x128xf32>
    %1104 = arith.mulf %1095, %1076 : vector<8x128xf32>
    %1105 = arith.mulf %1089, %1097 : vector<8x128xf32>
    %1106 = arith.addf %1104, %1105 : vector<8x128xf32>
    %1107 = math.tanh %1106 : vector<8x128xf32>
    %1108 = arith.mulf %1103, %1107 : vector<8x128xf32>
    %c0_539 = arith.constant 0 : index
    %c0_540 = arith.constant 0 : index
    %1109 = vector.load %arg15[%c0_539, %c0_540] : memref<8x128xf32, #tpu.memory_space<vmem>>, vector<8x128xf32>
    tpu.vector_store %arg15[%c0_539, %c0_540], %1108 {strides = array<i32>} : memref<8x128xf32, #tpu.memory_space<vmem>>, vector<8x128xf32>,
    %c0_541 = arith.constant 0 : index
    %c0_542 = arith.constant 0 : index
    %1110 = vector.load %arg16[%c0_541, %c0_542] : memref<8x128xf32, #tpu.memory_space<vmem>>, vector<8x128xf32>
    tpu.vector_store %arg16[%c0_541, %c0_542], %1106 {strides = array<i32>} : memref<8x128xf32, #tpu.memory_space<vmem>>, vector<8x128xf32>,
    %1111 = arith.index_cast %c2_i32_528 : i32 to index
    %c0_543 = arith.constant 0 : index
    %c0_544 = arith.constant 0 : index
    %1112 = vector.load %arg13[%1111, %c0_543, %c0_544] : memref<8x8x128xf32, #tpu.memory_space<vmem>>, vector<1x8x128xf32>
    %1113 = vector.shape_cast %1112 : vector<1x8x128xf32> to vector<8x128xf32>
    %1114 = vector.shape_cast %1108 : vector<8x128xf32> to vector<1x8x128xf32>
    tpu.vector_store %arg13[%1111, %c0_543, %c0_544], %1114 {strides = array<i32>} : memref<8x8x128xf32, #tpu.memory_space<vmem>>, vector<1x8x128xf32>,
    %c3_i32_545 = arith.constant 3 : i32
    %c0_546 = arith.constant 0 : index
    %c0_547 = arith.constant 0 : index
    %1115 = vector.load %arg15[%c0_546, %c0_547] : memref<8x128xf32, #tpu.memory_space<vmem>>, vector<8x128xf32>
    %c0_548 = arith.constant 0 : index
    %c0_549 = arith.constant 0 : index
    %1116 = vector.load %arg16[%c0_548, %c0_549] : memref<8x128xf32, #tpu.memory_space<vmem>>, vector<8x128xf32>
    %1117 = arith.index_cast %c3_i32_545 : i32 to index
    %c0_550 = arith.constant 0 : index
    %c0_551 = arith.constant 0 : index
    %1118 = vector.load %arg14[%1117, %c0_550, %c0_551] : memref<8x8x512xf32, #tpu.memory_space<vmem>>, vector<1x8x512xf32>
    %1119 = vector.shape_cast %1118 : vector<1x8x512xf32> to vector<8x512xf32>
    %cst_552 = arith.constant dense<0.000000e+00> : vector<8x512xf32>
    %1120 = tpu.matmul %1115, %992, %cst_552 {dimension_numbers = #tpu.dot_dimension_numbers<[1], [0], [0], [1], [0, 0, 1, 1], [], []>} : vector<8x128xf32>, vector<128x512xf32>, vector<8x512xf32> -> vector<8x512xf32>
    %1121 = arith.addf %1119, %1120 : vector<8x512xf32>
    %1122 = vector.broadcast %994 : vector<1x512xf32> to vector<8x512xf32>
    %1123 = arith.addf %1121, %1122 : vector<8x512xf32>
    %1124 = vector.extract_strided_slice %1123 {offsets = [0, 0], sizes = [8, 128], strides = [1, 1]} : vector<8x512xf32> to vector<8x128xf32>
    %1125 = arith.negf %1124 : vector<8x128xf32>
    %1126 = math.exp %1125 : vector<8x128xf32>
    %cst_553 = arith.constant 1.000000e+00 : f32
    %1127 = vector.broadcast %cst_553 : f32 to vector<8x128xf32>
    %1128 = arith.addf %1127, %1126 : vector<8x128xf32>
    %1129 = arith.divf %1127, %1128 : vector<8x128xf32>
    %1130 = vector.extract_strided_slice %1123 {offsets = [0, 128], sizes = [8, 128], strides = [1, 1]} : vector<8x512xf32> to vector<8x128xf32>
    %1131 = arith.negf %1130 : vector<8x128xf32>
    %1132 = math.exp %1131 : vector<8x128xf32>
    %cst_554 = arith.constant 1.000000e+00 : f32
    %1133 = vector.broadcast %cst_554 : f32 to vector<8x128xf32>
    %1134 = arith.addf %1133, %1132 : vector<8x128xf32>
    %1135 = arith.divf %1133, %1134 : vector<8x128xf32>
    %1136 = vector.extract_strided_slice %1123 {offsets = [0, 256], sizes = [8, 128], strides = [1, 1]} : vector<8x512xf32> to vector<8x128xf32>
    %1137 = math.tanh %1136 : vector<8x128xf32>
    %1138 = vector.extract_strided_slice %1123 {offsets = [0, 384], sizes = [8, 128], strides = [1, 1]} : vector<8x512xf32> to vector<8x128xf32>
    %1139 = arith.negf %1138 : vector<8x128xf32>
    %1140 = math.exp %1139 : vector<8x128xf32>
    %cst_555 = arith.constant 1.000000e+00 : f32
    %1141 = vector.broadcast %cst_555 : f32 to vector<8x128xf32>
    %1142 = arith.addf %1141, %1140 : vector<8x128xf32>
    %1143 = arith.divf %1141, %1142 : vector<8x128xf32>
    %1144 = arith.mulf %1135, %1116 : vector<8x128xf32>
    %1145 = arith.mulf %1129, %1137 : vector<8x128xf32>
    %1146 = arith.addf %1144, %1145 : vector<8x128xf32>
    %1147 = math.tanh %1146 : vector<8x128xf32>
    %1148 = arith.mulf %1143, %1147 : vector<8x128xf32>
    %c0_556 = arith.constant 0 : index
    %c0_557 = arith.constant 0 : index
    %1149 = vector.load %arg15[%c0_556, %c0_557] : memref<8x128xf32, #tpu.memory_space<vmem>>, vector<8x128xf32>
    tpu.vector_store %arg15[%c0_556, %c0_557], %1148 {strides = array<i32>} : memref<8x128xf32, #tpu.memory_space<vmem>>, vector<8x128xf32>,
    %c0_558 = arith.constant 0 : index
    %c0_559 = arith.constant 0 : index
    %1150 = vector.load %arg16[%c0_558, %c0_559] : memref<8x128xf32, #tpu.memory_space<vmem>>, vector<8x128xf32>
    tpu.vector_store %arg16[%c0_558, %c0_559], %1146 {strides = array<i32>} : memref<8x128xf32, #tpu.memory_space<vmem>>, vector<8x128xf32>,
    %1151 = arith.index_cast %c3_i32_545 : i32 to index
    %c0_560 = arith.constant 0 : index
    %c0_561 = arith.constant 0 : index
    %1152 = vector.load %arg13[%1151, %c0_560, %c0_561] : memref<8x8x128xf32, #tpu.memory_space<vmem>>, vector<1x8x128xf32>
    %1153 = vector.shape_cast %1152 : vector<1x8x128xf32> to vector<8x128xf32>
    %1154 = vector.shape_cast %1148 : vector<8x128xf32> to vector<1x8x128xf32>
    tpu.vector_store %arg13[%1151, %c0_560, %c0_561], %1154 {strides = array<i32>} : memref<8x8x128xf32, #tpu.memory_space<vmem>>, vector<1x8x128xf32>,
    %c4_i32_562 = arith.constant 4 : i32
    %c0_563 = arith.constant 0 : index
    %c0_564 = arith.constant 0 : index
    %1155 = vector.load %arg15[%c0_563, %c0_564] : memref<8x128xf32, #tpu.memory_space<vmem>>, vector<8x128xf32>
    %c0_565 = arith.constant 0 : index
    %c0_566 = arith.constant 0 : index
    %1156 = vector.load %arg16[%c0_565, %c0_566] : memref<8x128xf32, #tpu.memory_space<vmem>>, vector<8x128xf32>
    %1157 = arith.index_cast %c4_i32_562 : i32 to index
    %c0_567 = arith.constant 0 : index
    %c0_568 = arith.constant 0 : index
    %1158 = vector.load %arg14[%1157, %c0_567, %c0_568] : memref<8x8x512xf32, #tpu.memory_space<vmem>>, vector<1x8x512xf32>
    %1159 = vector.shape_cast %1158 : vector<1x8x512xf32> to vector<8x512xf32>
    %cst_569 = arith.constant dense<0.000000e+00> : vector<8x512xf32>
    %1160 = tpu.matmul %1155, %992, %cst_569 {dimension_numbers = #tpu.dot_dimension_numbers<[1], [0], [0], [1], [0, 0, 1, 1], [], []>} : vector<8x128xf32>, vector<128x512xf32>, vector<8x512xf32> -> vector<8x512xf32>
    %1161 = arith.addf %1159, %1160 : vector<8x512xf32>
    %1162 = vector.broadcast %994 : vector<1x512xf32> to vector<8x512xf32>
    %1163 = arith.addf %1161, %1162 : vector<8x512xf32>
    %1164 = vector.extract_strided_slice %1163 {offsets = [0, 0], sizes = [8, 128], strides = [1, 1]} : vector<8x512xf32> to vector<8x128xf32>
    %1165 = arith.negf %1164 : vector<8x128xf32>
    %1166 = math.exp %1165 : vector<8x128xf32>
    %cst_570 = arith.constant 1.000000e+00 : f32
    %1167 = vector.broadcast %cst_570 : f32 to vector<8x128xf32>
    %1168 = arith.addf %1167, %1166 : vector<8x128xf32>
    %1169 = arith.divf %1167, %1168 : vector<8x128xf32>
    %1170 = vector.extract_strided_slice %1163 {offsets = [0, 128], sizes = [8, 128], strides = [1, 1]} : vector<8x512xf32> to vector<8x128xf32>
    %1171 = arith.negf %1170 : vector<8x128xf32>
    %1172 = math.exp %1171 : vector<8x128xf32>
    %cst_571 = arith.constant 1.000000e+00 : f32
    %1173 = vector.broadcast %cst_571 : f32 to vector<8x128xf32>
    %1174 = arith.addf %1173, %1172 : vector<8x128xf32>
    %1175 = arith.divf %1173, %1174 : vector<8x128xf32>
    %1176 = vector.extract_strided_slice %1163 {offsets = [0, 256], sizes = [8, 128], strides = [1, 1]} : vector<8x512xf32> to vector<8x128xf32>
    %1177 = math.tanh %1176 : vector<8x128xf32>
    %1178 = vector.extract_strided_slice %1163 {offsets = [0, 384], sizes = [8, 128], strides = [1, 1]} : vector<8x512xf32> to vector<8x128xf32>
    %1179 = arith.negf %1178 : vector<8x128xf32>
    %1180 = math.exp %1179 : vector<8x128xf32>
    %cst_572 = arith.constant 1.000000e+00 : f32
    %1181 = vector.broadcast %cst_572 : f32 to vector<8x128xf32>
    %1182 = arith.addf %1181, %1180 : vector<8x128xf32>
    %1183 = arith.divf %1181, %1182 : vector<8x128xf32>
    %1184 = arith.mulf %1175, %1156 : vector<8x128xf32>
    %1185 = arith.mulf %1169, %1177 : vector<8x128xf32>
    %1186 = arith.addf %1184, %1185 : vector<8x128xf32>
    %1187 = math.tanh %1186 : vector<8x128xf32>
    %1188 = arith.mulf %1183, %1187 : vector<8x128xf32>
    %c0_573 = arith.constant 0 : index
    %c0_574 = arith.constant 0 : index
    %1189 = vector.load %arg15[%c0_573, %c0_574] : memref<8x128xf32, #tpu.memory_space<vmem>>, vector<8x128xf32>
    tpu.vector_store %arg15[%c0_573, %c0_574], %1188 {strides = array<i32>} : memref<8x128xf32, #tpu.memory_space<vmem>>, vector<8x128xf32>,
    %c0_575 = arith.constant 0 : index
    %c0_576 = arith.constant 0 : index
    %1190 = vector.load %arg16[%c0_575, %c0_576] : memref<8x128xf32, #tpu.memory_space<vmem>>, vector<8x128xf32>
    tpu.vector_store %arg16[%c0_575, %c0_576], %1186 {strides = array<i32>} : memref<8x128xf32, #tpu.memory_space<vmem>>, vector<8x128xf32>,
    %1191 = arith.index_cast %c4_i32_562 : i32 to index
    %c0_577 = arith.constant 0 : index
    %c0_578 = arith.constant 0 : index
    %1192 = vector.load %arg13[%1191, %c0_577, %c0_578] : memref<8x8x128xf32, #tpu.memory_space<vmem>>, vector<1x8x128xf32>
    %1193 = vector.shape_cast %1192 : vector<1x8x128xf32> to vector<8x128xf32>
    %1194 = vector.shape_cast %1188 : vector<8x128xf32> to vector<1x8x128xf32>
    tpu.vector_store %arg13[%1191, %c0_577, %c0_578], %1194 {strides = array<i32>} : memref<8x8x128xf32, #tpu.memory_space<vmem>>, vector<1x8x128xf32>,
    %c5_i32_579 = arith.constant 5 : i32
    %c0_580 = arith.constant 0 : index
    %c0_581 = arith.constant 0 : index
    %1195 = vector.load %arg15[%c0_580, %c0_581] : memref<8x128xf32, #tpu.memory_space<vmem>>, vector<8x128xf32>
    %c0_582 = arith.constant 0 : index
    %c0_583 = arith.constant 0 : index
    %1196 = vector.load %arg16[%c0_582, %c0_583] : memref<8x128xf32, #tpu.memory_space<vmem>>, vector<8x128xf32>
    %1197 = arith.index_cast %c5_i32_579 : i32 to index
    %c0_584 = arith.constant 0 : index
    %c0_585 = arith.constant 0 : index
    %1198 = vector.load %arg14[%1197, %c0_584, %c0_585] : memref<8x8x512xf32, #tpu.memory_space<vmem>>, vector<1x8x512xf32>
    %1199 = vector.shape_cast %1198 : vector<1x8x512xf32> to vector<8x512xf32>
    %cst_586 = arith.constant dense<0.000000e+00> : vector<8x512xf32>
    %1200 = tpu.matmul %1195, %992, %cst_586 {dimension_numbers = #tpu.dot_dimension_numbers<[1], [0], [0], [1], [0, 0, 1, 1], [], []>} : vector<8x128xf32>, vector<128x512xf32>, vector<8x512xf32> -> vector<8x512xf32>
    %1201 = arith.addf %1199, %1200 : vector<8x512xf32>
    %1202 = vector.broadcast %994 : vector<1x512xf32> to vector<8x512xf32>
    %1203 = arith.addf %1201, %1202 : vector<8x512xf32>
    %1204 = vector.extract_strided_slice %1203 {offsets = [0, 0], sizes = [8, 128], strides = [1, 1]} : vector<8x512xf32> to vector<8x128xf32>
    %1205 = arith.negf %1204 : vector<8x128xf32>
    %1206 = math.exp %1205 : vector<8x128xf32>
    %cst_587 = arith.constant 1.000000e+00 : f32
    %1207 = vector.broadcast %cst_587 : f32 to vector<8x128xf32>
    %1208 = arith.addf %1207, %1206 : vector<8x128xf32>
    %1209 = arith.divf %1207, %1208 : vector<8x128xf32>
    %1210 = vector.extract_strided_slice %1203 {offsets = [0, 128], sizes = [8, 128], strides = [1, 1]} : vector<8x512xf32> to vector<8x128xf32>
    %1211 = arith.negf %1210 : vector<8x128xf32>
    %1212 = math.exp %1211 : vector<8x128xf32>
    %cst_588 = arith.constant 1.000000e+00 : f32
    %1213 = vector.broadcast %cst_588 : f32 to vector<8x128xf32>
    %1214 = arith.addf %1213, %1212 : vector<8x128xf32>
    %1215 = arith.divf %1213, %1214 : vector<8x128xf32>
    %1216 = vector.extract_strided_slice %1203 {offsets = [0, 256], sizes = [8, 128], strides = [1, 1]} : vector<8x512xf32> to vector<8x128xf32>
    %1217 = math.tanh %1216 : vector<8x128xf32>
    %1218 = vector.extract_strided_slice %1203 {offsets = [0, 384], sizes = [8, 128], strides = [1, 1]} : vector<8x512xf32> to vector<8x128xf32>
    %1219 = arith.negf %1218 : vector<8x128xf32>
    %1220 = math.exp %1219 : vector<8x128xf32>
    %cst_589 = arith.constant 1.000000e+00 : f32
    %1221 = vector.broadcast %cst_589 : f32 to vector<8x128xf32>
    %1222 = arith.addf %1221, %1220 : vector<8x128xf32>
    %1223 = arith.divf %1221, %1222 : vector<8x128xf32>
    %1224 = arith.mulf %1215, %1196 : vector<8x128xf32>
    %1225 = arith.mulf %1209, %1217 : vector<8x128xf32>
    %1226 = arith.addf %1224, %1225 : vector<8x128xf32>
    %1227 = math.tanh %1226 : vector<8x128xf32>
    %1228 = arith.mulf %1223, %1227 : vector<8x128xf32>
    %c0_590 = arith.constant 0 : index
    %c0_591 = arith.constant 0 : index
    %1229 = vector.load %arg15[%c0_590, %c0_591] : memref<8x128xf32, #tpu.memory_space<vmem>>, vector<8x128xf32>
    tpu.vector_store %arg15[%c0_590, %c0_591], %1228 {strides = array<i32>} : memref<8x128xf32, #tpu.memory_space<vmem>>, vector<8x128xf32>,
    %c0_592 = arith.constant 0 : index
    %c0_593 = arith.constant 0 : index
    %1230 = vector.load %arg16[%c0_592, %c0_593] : memref<8x128xf32, #tpu.memory_space<vmem>>, vector<8x128xf32>
    tpu.vector_store %arg16[%c0_592, %c0_593], %1226 {strides = array<i32>} : memref<8x128xf32, #tpu.memory_space<vmem>>, vector<8x128xf32>,
    %1231 = arith.index_cast %c5_i32_579 : i32 to index
    %c0_594 = arith.constant 0 : index
    %c0_595 = arith.constant 0 : index
    %1232 = vector.load %arg13[%1231, %c0_594, %c0_595] : memref<8x8x128xf32, #tpu.memory_space<vmem>>, vector<1x8x128xf32>
    %1233 = vector.shape_cast %1232 : vector<1x8x128xf32> to vector<8x128xf32>
    %1234 = vector.shape_cast %1228 : vector<8x128xf32> to vector<1x8x128xf32>
    tpu.vector_store %arg13[%1231, %c0_594, %c0_595], %1234 {strides = array<i32>} : memref<8x8x128xf32, #tpu.memory_space<vmem>>, vector<1x8x128xf32>,
    %c6_i32_596 = arith.constant 6 : i32
    %c0_597 = arith.constant 0 : index
    %c0_598 = arith.constant 0 : index
    %1235 = vector.load %arg15[%c0_597, %c0_598] : memref<8x128xf32, #tpu.memory_space<vmem>>, vector<8x128xf32>
    %c0_599 = arith.constant 0 : index
    %c0_600 = arith.constant 0 : index
    %1236 = vector.load %arg16[%c0_599, %c0_600] : memref<8x128xf32, #tpu.memory_space<vmem>>, vector<8x128xf32>
    %1237 = arith.index_cast %c6_i32_596 : i32 to index
    %c0_601 = arith.constant 0 : index
    %c0_602 = arith.constant 0 : index
    %1238 = vector.load %arg14[%1237, %c0_601, %c0_602] : memref<8x8x512xf32, #tpu.memory_space<vmem>>, vector<1x8x512xf32>
    %1239 = vector.shape_cast %1238 : vector<1x8x512xf32> to vector<8x512xf32>
    %cst_603 = arith.constant dense<0.000000e+00> : vector<8x512xf32>
    %1240 = tpu.matmul %1235, %992, %cst_603 {dimension_numbers = #tpu.dot_dimension_numbers<[1], [0], [0], [1], [0, 0, 1, 1], [], []>} : vector<8x128xf32>, vector<128x512xf32>, vector<8x512xf32> -> vector<8x512xf32>
    %1241 = arith.addf %1239, %1240 : vector<8x512xf32>
    %1242 = vector.broadcast %994 : vector<1x512xf32> to vector<8x512xf32>
    %1243 = arith.addf %1241, %1242 : vector<8x512xf32>
    %1244 = vector.extract_strided_slice %1243 {offsets = [0, 0], sizes = [8, 128], strides = [1, 1]} : vector<8x512xf32> to vector<8x128xf32>
    %1245 = arith.negf %1244 : vector<8x128xf32>
    %1246 = math.exp %1245 : vector<8x128xf32>
    %cst_604 = arith.constant 1.000000e+00 : f32
    %1247 = vector.broadcast %cst_604 : f32 to vector<8x128xf32>
    %1248 = arith.addf %1247, %1246 : vector<8x128xf32>
    %1249 = arith.divf %1247, %1248 : vector<8x128xf32>
    %1250 = vector.extract_strided_slice %1243 {offsets = [0, 128], sizes = [8, 128], strides = [1, 1]} : vector<8x512xf32> to vector<8x128xf32>
    %1251 = arith.negf %1250 : vector<8x128xf32>
    %1252 = math.exp %1251 : vector<8x128xf32>
    %cst_605 = arith.constant 1.000000e+00 : f32
    %1253 = vector.broadcast %cst_605 : f32 to vector<8x128xf32>
    %1254 = arith.addf %1253, %1252 : vector<8x128xf32>
    %1255 = arith.divf %1253, %1254 : vector<8x128xf32>
    %1256 = vector.extract_strided_slice %1243 {offsets = [0, 256], sizes = [8, 128], strides = [1, 1]} : vector<8x512xf32> to vector<8x128xf32>
    %1257 = math.tanh %1256 : vector<8x128xf32>
    %1258 = vector.extract_strided_slice %1243 {offsets = [0, 384], sizes = [8, 128], strides = [1, 1]} : vector<8x512xf32> to vector<8x128xf32>
    %1259 = arith.negf %1258 : vector<8x128xf32>
    %1260 = math.exp %1259 : vector<8x128xf32>
    %cst_606 = arith.constant 1.000000e+00 : f32
    %1261 = vector.broadcast %cst_606 : f32 to vector<8x128xf32>
    %1262 = arith.addf %1261, %1260 : vector<8x128xf32>
    %1263 = arith.divf %1261, %1262 : vector<8x128xf32>
    %1264 = arith.mulf %1255, %1236 : vector<8x128xf32>
    %1265 = arith.mulf %1249, %1257 : vector<8x128xf32>
    %1266 = arith.addf %1264, %1265 : vector<8x128xf32>
    %1267 = math.tanh %1266 : vector<8x128xf32>
    %1268 = arith.mulf %1263, %1267 : vector<8x128xf32>
    %c0_607 = arith.constant 0 : index
    %c0_608 = arith.constant 0 : index
    %1269 = vector.load %arg15[%c0_607, %c0_608] : memref<8x128xf32, #tpu.memory_space<vmem>>, vector<8x128xf32>
    tpu.vector_store %arg15[%c0_607, %c0_608], %1268 {strides = array<i32>} : memref<8x128xf32, #tpu.memory_space<vmem>>, vector<8x128xf32>,
    %c0_609 = arith.constant 0 : index
    %c0_610 = arith.constant 0 : index
    %1270 = vector.load %arg16[%c0_609, %c0_610] : memref<8x128xf32, #tpu.memory_space<vmem>>, vector<8x128xf32>
    tpu.vector_store %arg16[%c0_609, %c0_610], %1266 {strides = array<i32>} : memref<8x128xf32, #tpu.memory_space<vmem>>, vector<8x128xf32>,
    %1271 = arith.index_cast %c6_i32_596 : i32 to index
    %c0_611 = arith.constant 0 : index
    %c0_612 = arith.constant 0 : index
    %1272 = vector.load %arg13[%1271, %c0_611, %c0_612] : memref<8x8x128xf32, #tpu.memory_space<vmem>>, vector<1x8x128xf32>
    %1273 = vector.shape_cast %1272 : vector<1x8x128xf32> to vector<8x128xf32>
    %1274 = vector.shape_cast %1268 : vector<8x128xf32> to vector<1x8x128xf32>
    tpu.vector_store %arg13[%1271, %c0_611, %c0_612], %1274 {strides = array<i32>} : memref<8x8x128xf32, #tpu.memory_space<vmem>>, vector<1x8x128xf32>,
    %c7_i32_613 = arith.constant 7 : i32
    %c0_614 = arith.constant 0 : index
    %c0_615 = arith.constant 0 : index
    %1275 = vector.load %arg15[%c0_614, %c0_615] : memref<8x128xf32, #tpu.memory_space<vmem>>, vector<8x128xf32>
    %c0_616 = arith.constant 0 : index
    %c0_617 = arith.constant 0 : index
    %1276 = vector.load %arg16[%c0_616, %c0_617] : memref<8x128xf32, #tpu.memory_space<vmem>>, vector<8x128xf32>
    %1277 = arith.index_cast %c7_i32_613 : i32 to index
    %c0_618 = arith.constant 0 : index
    %c0_619 = arith.constant 0 : index
    %1278 = vector.load %arg14[%1277, %c0_618, %c0_619] : memref<8x8x512xf32, #tpu.memory_space<vmem>>, vector<1x8x512xf32>
    %1279 = vector.shape_cast %1278 : vector<1x8x512xf32> to vector<8x512xf32>
    %cst_620 = arith.constant dense<0.000000e+00> : vector<8x512xf32>
    %1280 = tpu.matmul %1275, %992, %cst_620 {dimension_numbers = #tpu.dot_dimension_numbers<[1], [0], [0], [1], [0, 0, 1, 1], [], []>} : vector<8x128xf32>, vector<128x512xf32>, vector<8x512xf32> -> vector<8x512xf32>
    %1281 = arith.addf %1279, %1280 : vector<8x512xf32>
    %1282 = vector.broadcast %994 : vector<1x512xf32> to vector<8x512xf32>
    %1283 = arith.addf %1281, %1282 : vector<8x512xf32>
    %1284 = vector.extract_strided_slice %1283 {offsets = [0, 0], sizes = [8, 128], strides = [1, 1]} : vector<8x512xf32> to vector<8x128xf32>
    %1285 = arith.negf %1284 : vector<8x128xf32>
    %1286 = math.exp %1285 : vector<8x128xf32>
    %cst_621 = arith.constant 1.000000e+00 : f32
    %1287 = vector.broadcast %cst_621 : f32 to vector<8x128xf32>
    %1288 = arith.addf %1287, %1286 : vector<8x128xf32>
    %1289 = arith.divf %1287, %1288 : vector<8x128xf32>
    %1290 = vector.extract_strided_slice %1283 {offsets = [0, 128], sizes = [8, 128], strides = [1, 1]} : vector<8x512xf32> to vector<8x128xf32>
    %1291 = arith.negf %1290 : vector<8x128xf32>
    %1292 = math.exp %1291 : vector<8x128xf32>
    %cst_622 = arith.constant 1.000000e+00 : f32
    %1293 = vector.broadcast %cst_622 : f32 to vector<8x128xf32>
    %1294 = arith.addf %1293, %1292 : vector<8x128xf32>
    %1295 = arith.divf %1293, %1294 : vector<8x128xf32>
    %1296 = vector.extract_strided_slice %1283 {offsets = [0, 256], sizes = [8, 128], strides = [1, 1]} : vector<8x512xf32> to vector<8x128xf32>
    %1297 = math.tanh %1296 : vector<8x128xf32>
    %1298 = vector.extract_strided_slice %1283 {offsets = [0, 384], sizes = [8, 128], strides = [1, 1]} : vector<8x512xf32> to vector<8x128xf32>
    %1299 = arith.negf %1298 : vector<8x128xf32>
    %1300 = math.exp %1299 : vector<8x128xf32>
    %cst_623 = arith.constant 1.000000e+00 : f32
    %1301 = vector.broadcast %cst_623 : f32 to vector<8x128xf32>
    %1302 = arith.addf %1301, %1300 : vector<8x128xf32>
    %1303 = arith.divf %1301, %1302 : vector<8x128xf32>
    %1304 = arith.mulf %1295, %1276 : vector<8x128xf32>
    %1305 = arith.mulf %1289, %1297 : vector<8x128xf32>
    %1306 = arith.addf %1304, %1305 : vector<8x128xf32>
    %1307 = math.tanh %1306 : vector<8x128xf32>
    %1308 = arith.mulf %1303, %1307 : vector<8x128xf32>
    %c0_624 = arith.constant 0 : index
    %c0_625 = arith.constant 0 : index
    %1309 = vector.load %arg15[%c0_624, %c0_625] : memref<8x128xf32, #tpu.memory_space<vmem>>, vector<8x128xf32>
    tpu.vector_store %arg15[%c0_624, %c0_625], %1308 {strides = array<i32>} : memref<8x128xf32, #tpu.memory_space<vmem>>, vector<8x128xf32>,
    %c0_626 = arith.constant 0 : index
    %c0_627 = arith.constant 0 : index
    %1310 = vector.load %arg16[%c0_626, %c0_627] : memref<8x128xf32, #tpu.memory_space<vmem>>, vector<8x128xf32>
    tpu.vector_store %arg16[%c0_626, %c0_627], %1306 {strides = array<i32>} : memref<8x128xf32, #tpu.memory_space<vmem>>, vector<8x128xf32>,
    %1311 = arith.index_cast %c7_i32_613 : i32 to index
    %c0_628 = arith.constant 0 : index
    %c0_629 = arith.constant 0 : index
    %1312 = vector.load %arg13[%1311, %c0_628, %c0_629] : memref<8x8x128xf32, #tpu.memory_space<vmem>>, vector<1x8x128xf32>
    %1313 = vector.shape_cast %1312 : vector<1x8x128xf32> to vector<8x128xf32>
    %1314 = vector.shape_cast %1308 : vector<8x128xf32> to vector<1x8x128xf32>
    tpu.vector_store %arg13[%1311, %c0_628, %c0_629], %1314 {strides = array<i32>} : memref<8x8x128xf32, #tpu.memory_space<vmem>>, vector<1x8x128xf32>,
    %c8_i32_630 = arith.constant 8 : i32
    %c0_631 = arith.constant 0 : index
    %c0_632 = arith.constant 0 : index
    %1315 = vector.load %arg15[%c0_631, %c0_632] : memref<8x128xf32, #tpu.memory_space<vmem>>, vector<8x128xf32>
    %c1_633 = arith.constant 1 : index
    %c0_634 = arith.constant 0 : index
    %c0_635 = arith.constant 0 : index
    %1316 = vector.load %arg11[%c1_633, %c0_634, %c0_635] : memref<2x8x128xf32, #tpu.memory_space<vmem>>, vector<1x8x128xf32>
    %1317 = vector.shape_cast %1316 : vector<1x8x128xf32> to vector<8x128xf32>
    %1318 = vector.shape_cast %1315 : vector<8x128xf32> to vector<1x8x128xf32>
    tpu.vector_store %arg11[%c1_633, %c0_634, %c0_635], %1318 {strides = array<i32>} : memref<2x8x128xf32, #tpu.memory_space<vmem>>, vector<1x8x128xf32>,
    %c0_636 = arith.constant 0 : index
    %c0_637 = arith.constant 0 : index
    %1319 = vector.load %arg16[%c0_636, %c0_637] : memref<8x128xf32, #tpu.memory_space<vmem>>, vector<8x128xf32>
    %c1_638 = arith.constant 1 : index
    %c0_639 = arith.constant 0 : index
    %c0_640 = arith.constant 0 : index
    %1320 = vector.load %arg12[%c1_638, %c0_639, %c0_640] : memref<2x8x128xf32, #tpu.memory_space<vmem>>, vector<1x8x128xf32>
    %1321 = vector.shape_cast %1320 : vector<1x8x128xf32> to vector<8x128xf32>
    %1322 = vector.shape_cast %1319 : vector<8x128xf32> to vector<1x8x128xf32>
    tpu.vector_store %arg12[%c1_638, %c0_639, %c0_640], %1322 {strides = array<i32>} : memref<2x8x128xf32, #tpu.memory_space<vmem>>, vector<1x8x128xf32>,
    %c0_641 = arith.constant 0 : index
    %c0_642 = arith.constant 0 : index
    %c0_643 = arith.constant 0 : index
    %1323 = vector.load %arg13[%c0_641, %c0_642, %c0_643] : memref<8x8x128xf32, #tpu.memory_space<vmem>>, vector<8x8x128xf32>
    %1324 = vector.shape_cast %1323 : vector<8x8x128xf32> to vector<64x128xf32>
    %c0_644 = arith.constant 0 : index
    %c0_645 = arith.constant 0 : index
    %1325 = vector.load %arg8[%c0_644, %c0_645] : memref<128x128xf32, #tpu.memory_space<vmem>>, vector<128x128xf32>
    %cst_646 = arith.constant dense<0.000000e+00> : vector<64x128xf32>
    %1326 = tpu.matmul %1324, %1325, %cst_646 {dimension_numbers = #tpu.dot_dimension_numbers<[1], [0], [0], [1], [0, 0, 1, 1], [], []>} : vector<64x128xf32>, vector<128x128xf32>, vector<64x128xf32> -> vector<64x128xf32>
    %c0_647 = arith.constant 0 : index
    %c0_648 = arith.constant 0 : index
    %1327 = vector.load %arg9[%c0_647, %c0_648] : memref<1x128xf32, #tpu.memory_space<vmem>>, vector<1x128xf32>
    %1328 = vector.broadcast %1327 : vector<1x128xf32> to vector<64x128xf32>
    %1329 = arith.addf %1326, %1328 : vector<64x128xf32>
    %1330 = vector.shape_cast %1329 : vector<64x128xf32> to vector<8x8x128xf32>
    %c0_649 = arith.constant 0 : index
    %c0_650 = arith.constant 0 : index
    %c0_651 = arith.constant 0 : index
    %1331 = vector.load %arg10[%c0_649, %c0_650, %c0_651] : memref<8x8x128xf32, #tpu.memory_space<vmem>>, vector<8x8x128xf32>
    tpu.vector_store %arg10[%c0_649, %c0_650, %c0_651], %1330 {strides = array<i32>} : memref<8x8x128xf32, #tpu.memory_space<vmem>>, vector<8x8x128xf32>,
    return
  }
  func.func @transform_0(%arg0: i32, %arg1: memref<64xi32, #tpu.memory_space<smem>>) -> (i32, i32, i32) {
    %c0_i32 = arith.constant 0 : i32
    %c0_i32_0 = arith.constant 0 : i32
    %c0_i32_1 = arith.constant 0 : i32
    %c0_i32_2 = arith.constant 0 : i32
    return %c0_i32, %c0_i32_0, %c0_i32_1 : i32, i32, i32
  }
  func.func @transform_1(%arg0: i32, %arg1: memref<64xi32, #tpu.memory_space<smem>>) -> (i32, i32, i32) {
    %c0_i32 = arith.constant 0 : i32
    %c0_i32_0 = arith.constant 0 : i32
    %c0_i32_1 = arith.constant 0 : i32
    %c0_i32_2 = arith.constant 0 : i32
    return %c0_i32, %c0_i32_0, %c0_i32_1 : i32, i32, i32
  }
  func.func @transform_2(%arg0: i32, %arg1: memref<64xi32, #tpu.memory_space<smem>>) -> (i32, i32, i32) {
    %c0_i32 = arith.constant 0 : i32
    %c0_i32_0 = arith.constant 0 : i32
    %c0_i32_1 = arith.constant 0 : i32
    %c0_i32_2 = arith.constant 0 : i32
    return %c0_i32, %c0_i32_0, %c0_i32_1 : i32, i32, i32
  }
  func.func @transform_3(%arg0: i32, %arg1: memref<64xi32, #tpu.memory_space<smem>>) -> (i32, i32, i32) {
    %c0_i32 = arith.constant 0 : i32
    %c0_i32_0 = arith.constant 0 : i32
    %c0_i32_1 = arith.constant 0 : i32
    %c0_i32_2 = arith.constant 0 : i32
    return %c0_i32, %c0_i32_0, %c0_i32_1 : i32, i32, i32
  }
  func.func @transform_4(%arg0: i32, %arg1: memref<64xi32, #tpu.memory_space<smem>>) -> (i32, i32, i32) {
    %c0_i32 = arith.constant 0 : i32
    %c0_i32_0 = arith.constant 0 : i32
    %c0_i32_1 = arith.constant 0 : i32
    %c0_i32_2 = arith.constant 0 : i32
    return %c0_i32, %c0_i32_0, %c0_i32_1 : i32, i32, i32
  }
  func.func @transform_5(%arg0: i32, %arg1: memref<64xi32, #tpu.memory_space<smem>>) -> (i32, i32, i32) {
    %c0_i32 = arith.constant 0 : i32
    %c0_i32_0 = arith.constant 0 : i32
    %c0_i32_1 = arith.constant 0 : i32
    %c0_i32_2 = arith.constant 0 : i32
    return %c0_i32, %c0_i32_0, %c0_i32_1 : i32, i32, i32
  }
  func.func @transform_6(%arg0: i32, %arg1: memref<64xi32, #tpu.memory_space<smem>>) -> (i32, i32) {
    %c0_i32 = arith.constant 0 : i32
    %c0_i32_0 = arith.constant 0 : i32
    %c0_i32_1 = arith.constant 0 : i32
    return %c0_i32, %c0_i32_0 : i32, i32
  }
  func.func @transform_7(%arg0: i32, %arg1: memref<64xi32, #tpu.memory_space<smem>>) -> (i32, i32) {
    %c0_i32 = arith.constant 0 : i32
    %c0_i32_0 = arith.constant 0 : i32
    %c0_i32_1 = arith.constant 0 : i32
    return %c0_i32, %c0_i32_0 : i32, i32
  }
  func.func @transform_8(%arg0: i32, %arg1: memref<64xi32, #tpu.memory_space<smem>>) -> (i32, i32, i32) {
    %c0_i32 = arith.constant 0 : i32
    %c0_i32_0 = arith.constant 0 : i32
    %c0_i32_1 = arith.constant 0 : i32
    %c0_i32_2 = arith.constant 0 : i32
    return %c0_i32, %c0_i32_0, %c0_i32_1 : i32, i32, i32
  }
  func.func @transform_9(%arg0: i32, %arg1: memref<64xi32, #tpu.memory_space<smem>>) -> (i32, i32, i32) {
    %c0_i32 = arith.constant 0 : i32
    %c0_i32_0 = arith.constant 0 : i32
    %c0_i32_1 = arith.constant 0 : i32
    %c0_i32_2 = arith.constant 0 : i32
    return %c0_i32, %c0_i32_0, %c0_i32_1 : i32, i32, i32
  }
  func.func @transform_10(%arg0: i32, %arg1: memref<64xi32, #tpu.memory_space<smem>>) -> (i32, i32, i32) {
    %c0_i32 = arith.constant 0 : i32
    %c0_i32_0 = arith.constant 0 : i32
    %c0_i32_1 = arith.constant 0 : i32
    %c0_i32_2 = arith.constant 0 : i32
    return %c0_i32, %c0_i32_0, %c0_i32_1 : i32, i32, i32
  }
}

</mosaic_0001>

<llo_original>
// kernel: tpu_custom_call.1
$region0: #{tpu_custom_call.1}
  #allocation0 [shape = 'u32[]', space=smem, size = 0x4, offset = 0x4, fixed_abs, tag = 'smem constant byte address 0x4 - core index']
  #allocation1 [shape = 'u32[72,128]{1,0:T(1,128)}', space=vmem, size = 0x9000, scoped, tag = 'internal scratch']
  #allocation2 [shape = 'f32[8,8,128]{2,1,0:T(8,128)}', space=vmem, size = 0x8000, scoped, tag = 'scratch operand']
  #allocation3 [shape = 'f32[8,8,512]{2,1,0:T(8,128)}', space=vmem, size = 0x20000, scoped, tag = 'scratch operand']
  #allocation4 [shape = 'f32[8,128]{1,0:T(8,128)}', space=vmem, size = 0x1000, scoped, tag = 'scratch operand']
  #allocation5 [shape = 'f32[8,128]{1,0:T(8,128)}', space=vmem, size = 0x1000, scoped, tag = 'scratch operand']
  #allocation6 [shape = 's32[1]{0}', space=sflag, size = 0x4, scoped, tag = 'scoped memory for tpu_custom_call.1']
  #allocation7 [shape = 'u8[512]{0}', space=smem, size = 0x200, scoped, tag = 'prefetched SMEM operand 0']
  %s0 = inlined_call_operand.hbm [shape: s32[64], index: 0, kind: input, shape index: {}]
  %s1 = inlined_call_operand.hbm [shape: f32[9,1,512], index: 1, kind: input, shape index: {}]
  %s2 = inlined_call_operand.hbm [shape: f32[1,128,512], index: 2, kind: input, shape index: {}]
  %s3 = inlined_call_operand.hbm [shape: f32[2,128,512], index: 3, kind: input, shape index: {}]
  %s4 = inlined_call_operand.hbm [shape: f32[2,1,512], index: 4, kind: input, shape index: {}]
  %s5 = inlined_call_operand.hbm [shape: f32[2,8,128], index: 5, kind: input, shape index: {}]
  %s6 = inlined_call_operand.hbm [shape: f32[2,8,128], index: 6, kind: input, shape index: {}]
  %s7 = inlined_call_operand.hbm [shape: f32[128,128], index: 7, kind: input, shape index: {}]
  %s8 = inlined_call_operand.vmem [shape: f32[1,128], index: 8, kind: input, shape index: {}]
  %s9 = inlined_call_operand.hbm [shape: f32[8,8,128], index: 9, kind: output, shape index: {0}]
  %s10 = inlined_call_operand.hbm [shape: f32[2,8,128], index: 10, kind: output, shape index: {1}]
  %s11 = inlined_call_operand.hbm [shape: f32[2,8,128], index: 11, kind: output, shape index: {2}]
  %12 = xla_tuple %s9, %s10, %s11
  %s13 = sld [smem:[#allocation0]]
  $region86: #{tpu_custom_call.1} parent=0
    _
  %s15 = ssub.s32 1, %s13
  %s16 = scalar_select 0, %s15, %s13
  %s18 = sshll.u32 %s0, 4
  %s19 = int_to_ptr.hbm [resolvable:$true] %s18
  %21 = dma.hbm_to_smem %s19, 16, [#allocation7], [#allocation6]
  %23 = dma.done [#allocation6], 16
  %24 = sfence
  $region1: #{tpu_custom_call.1} parent=0
    #allocation8 [shape = 'u8[18432]{0}', space=vmem, size = 0x4800, scoped, tag = 'input window, operand 1, single buffered']
    #allocation9 [shape = 's32[1]{0}', space=sflag, size = 0x4, scoped, tag = 'scoped memory for tpu_custom_call.1']
    #allocation10 [shape = 's32[1]{0}', space=sflag, size = 0x4, scoped, tag = 'scoped memory for tpu_custom_call.1']
    #allocation11 [shape = 'u8[262144]{0}', space=vmem, size = 0x40000, scoped, tag = 'input window, operand 2, single buffered']
    #allocation12 [shape = 's32[1]{0}', space=sflag, size = 0x4, scoped, tag = 'scoped memory for tpu_custom_call.1']
    #allocation13 [shape = 'u8[524288]{0}', space=vmem, size = 0x80000, scoped, tag = 'input window, operand 3, single buffered']
    #allocation14 [shape = 'u8[4096]{0}', space=vmem, size = 0x1000, scoped, tag = 'input window, operand 4, single buffered']
    #allocation15 [shape = 's32[1]{0}', space=sflag, size = 0x4, scoped, tag = 'scoped memory for tpu_custom_call.1']
    #allocation16 [shape = 'u8[8192]{0}', space=vmem, size = 0x2000, scoped, tag = 'input window, operand 5, single buffered']
    #allocation17 [shape = 'u8[8192]{0}', space=vmem, size = 0x2000, scoped, tag = 'input window, operand 6, single buffered']
    #allocation18 [shape = 's32[1]{0}', space=sflag, size = 0x4, scoped, tag = 'scoped memory for tpu_custom_call.1']
    #allocation19 [shape = 'u8[65536]{0}', space=vmem, size = 0x10000, scoped, tag = 'input window, operand 7, single buffered']
    #allocation20 [shape = 'u8[32768]{0}', space=vmem, size = 0x8000, scoped, tag = 'output window, operand 0, single buffered']
    #allocation21 [shape = 'u8[8192]{0}', space=vmem, size = 0x2000, scoped, tag = 'output window, operand 1, single buffered']
    #allocation22 [shape = 's32[1]{0}', space=sflag, size = 0x4, scoped, tag = 'scoped memory for tpu_custom_call.1']
    #allocation23 [shape = 'u8[8192]{0}', space=vmem, size = 0x2000, scoped, tag = 'output window, operand 2, single buffered']
    %25 = vsyncpa [#allocation9], 0
    %26 = vsyncpa [#allocation12], 0
    %27 = vsyncpa [#allocation15], 0
    %28 = vsyncpa [#allocation18], 0
    %29 = vsyncpa [#allocation10], 0
    %30 = vsyncpa [#allocation22], 0
    // Predicated region
    $region2: #{tpu_custom_call.1} parent=1 // pred_check
      _
    $region3: #{tpu_custom_call.1} parent=1 // pred_check_branch
      %32 = sbr.rel (0) target = $region5
    $region4: #{tpu_custom_call.1} parent=1 // pred_region
      %34 = vsyncadd [#allocation9], 0
      %s35 = sshll.u32 %s1, 4
      %s36 = int_to_ptr.hbm [resolvable:$true] %s35
      %s37 = sshll.u32 [#allocation8], 4
      %s38 = int_to_ptr.vmem [resolvable:$true] %s37
      %43 = dma.hbm_to_vmem [thread:$0]  %s36, 576, %s38, [#allocation9], 64, 64, 4
    $region5: #{tpu_custom_call.1} parent=1 // pred_fallthru
      _
    // Predicated region
    $region6: #{tpu_custom_call.1} parent=1 // pred_check
      _
    $region7: #{tpu_custom_call.1} parent=1 // pred_check_branch
      %45 = sbr.rel (0) target = $region9
    $region8: #{tpu_custom_call.1} parent=1 // pred_region
      %47 = vsyncadd [#allocation12], 0
      %s48 = sshll.u32 %s2, 4
      %s49 = int_to_ptr.hbm [resolvable:$true] %s48
      %s50 = sshll.u32 [#allocation11], 4
      %s51 = int_to_ptr.vmem [resolvable:$true] %s50
      %56 = dma.hbm_to_vmem [thread:$0]  %s49, 8192, %s51, [#allocation12], 512, 512, 32
    $region9: #{tpu_custom_call.1} parent=1 // pred_fallthru
      _
    // Predicated region
    $region10: #{tpu_custom_call.1} parent=1 // pred_check
      _
    $region11: #{tpu_custom_call.1} parent=1 // pred_check_branch
      %58 = sbr.rel (0) target = $region13
    $region12: #{tpu_custom_call.1} parent=1 // pred_region
      %60 = vsyncadd [#allocation12], 0
      %s61 = sshll.u32 %s3, 4
      %s62 = int_to_ptr.hbm [resolvable:$true] %s61
      %s63 = sshll.u32 [#allocation13], 4
      %s64 = int_to_ptr.vmem [resolvable:$true] %s63
      %69 = dma.hbm_to_vmem [thread:$0]  %s62, 16384, %s64, [#allocation12], 512, 512, 32
    $region13: #{tpu_custom_call.1} parent=1 // pred_fallthru
      _
    // Predicated region
    $region14: #{tpu_custom_call.1} parent=1 // pred_check
      _
    $region15: #{tpu_custom_call.1} parent=1 // pred_check_branch
      %71 = sbr.rel (0) target = $region17
    $region16: #{tpu_custom_call.1} parent=1 // pred_region
      %73 = vsyncadd [#allocation15], 0
      %s74 = sshll.u32 %s4, 4
      %s75 = int_to_ptr.hbm [resolvable:$true] %s74
      %s76 = sshll.u32 [#allocation14], 4
      %s77 = int_to_ptr.vmem [resolvable:$true] %s76
      %82 = dma.hbm_to_vmem [thread:$0]  %s75, 128, %s77, [#allocation15], 64, 64, 4
    $region17: #{tpu_custom_call.1} parent=1 // pred_fallthru
      _
    // Predicated region
    $region18: #{tpu_custom_call.1} parent=1 // pred_check
      _
    $region19: #{tpu_custom_call.1} parent=1 // pred_check_branch
      %84 = sbr.rel (0) target = $region21
    $region20: #{tpu_custom_call.1} parent=1 // pred_region
      %86 = vsyncadd [#allocation15], 0
      %s87 = sshll.u32 %s5, 4
      %s88 = int_to_ptr.hbm [resolvable:$true] %s87
      %s89 = sshll.u32 [#allocation16], 4
      %s90 = int_to_ptr.vmem [resolvable:$true] %s89
      %95 = dma.hbm_to_vmem [thread:$0]  %s88, 256, %s90, [#allocation15], 128, 128, 8
    $region21: #{tpu_custom_call.1} parent=1 // pred_fallthru
      _
    // Predicated region
    $region22: #{tpu_custom_call.1} parent=1 // pred_check
      _
    $region23: #{tpu_custom_call.1} parent=1 // pred_check_branch
      %97 = sbr.rel (0) target = $region25
    $region24: #{tpu_custom_call.1} parent=1 // pred_region
      %99 = vsyncadd [#allocation18], 0
      %s100 = sshll.u32 %s6, 4
      %s101 = int_to_ptr.hbm [resolvable:$true] %s100
      %s102 = sshll.u32 [#allocation17], 4
      %s103 = int_to_ptr.vmem [resolvable:$true] %s102
      %108 = dma.hbm_to_vmem [thread:$0]  %s101, 256, %s103, [#allocation18], 128, 128, 8
    $region25: #{tpu_custom_call.1} parent=1 // pred_fallthru
      _
    // Predicated region
    $region26: #{tpu_custom_call.1} parent=1 // pred_check
      _
    $region27: #{tpu_custom_call.1} parent=1 // pred_check_branch
      %110 = sbr.rel (0) target = $region29
    $region28: #{tpu_custom_call.1} parent=1 // pred_region
      %112 = vsyncadd [#allocation18], 0
      %s113 = sshll.u32 %s7, 4
      %s114 = int_to_ptr.hbm [resolvable:$true] %s113
      %s115 = sshll.u32 [#allocation19], 4
      %s116 = int_to_ptr.vmem [resolvable:$true] %s115
      %121 = dma.hbm_to_vmem [thread:$0]  %s114, 2048, %s116, [#allocation18], 128, 128, 8
    $region29: #{tpu_custom_call.1} parent=1 // pred_fallthru
      _
    // Predicated region
    $region30: #{tpu_custom_call.1} parent=1 // pred_check
      _
    $region31: #{tpu_custom_call.1} parent=1 // pred_check_branch
      %123 = sbr.rel (0) target = $region33
    $region32: #{tpu_custom_call.1} parent=1 // pred_region
      _
    $region33: #{tpu_custom_call.1} parent=1 // pred_fallthru
      _
    // Predicated region
    $region34: #{tpu_custom_call.1} parent=1 // pred_check
      _
    $region35: #{tpu_custom_call.1} parent=1 // pred_check_branch
      %125 = sbr.rel (0) target = $region37
    $region36: #{tpu_custom_call.1} parent=1 // pred_region
      %127 = dma.done [#allocation9], 576
    $region37: #{tpu_custom_call.1} parent=1 // pred_fallthru
      _
    // Predicated region
    $region38: #{tpu_custom_call.1} parent=1 // pred_check
      _
    $region39: #{tpu_custom_call.1} parent=1 // pred_check_branch
      %129 = sbr.rel (0) target = $region41
    $region40: #{tpu_custom_call.1} parent=1 // pred_region
      %131 = dma.done [#allocation12], 8192
    $region41: #{tpu_custom_call.1} parent=1 // pred_fallthru
      _
    // Predicated region
    $region42: #{tpu_custom_call.1} parent=1 // pred_check
      _
    $region43: #{tpu_custom_call.1} parent=1 // pred_check_branch
      %133 = sbr.rel (0) target = $region45
    $region44: #{tpu_custom_call.1} parent=1 // pred_region
      %135 = dma.done [#allocation12], 16384
    $region45: #{tpu_custom_call.1} parent=1 // pred_fallthru
      _
    // Predicated region
    $region46: #{tpu_custom_call.1} parent=1 // pred_check
      _
    $region47: #{tpu_custom_call.1} parent=1 // pred_check_branch
      %137 = sbr.rel (0) target = $region49
    $region48: #{tpu_custom_call.1} parent=1 // pred_region
      %139 = dma.done [#allocation15], 128
    $region49: #{tpu_custom_call.1} parent=1 // pred_fallthru
      _
    // Predicated region
    $region50: #{tpu_custom_call.1} parent=1 // pred_check
      _
    $region51: #{tpu_custom_call.1} parent=1 // pred_check_branch
      %141 = sbr.rel (0) target = $region53
    $region52: #{tpu_custom_call.1} parent=1 // pred_region
      %143 = dma.done [#allocation15], 256
    $region53: #{tpu_custom_call.1} parent=1 // pred_fallthru
      _
    // Predicated region
    $region54: #{tpu_custom_call.1} parent=1 // pred_check
      _
    $region55: #{tpu_custom_call.1} parent=1 // pred_check_branch
      %145 = sbr.rel (0) target = $region57
    $region56: #{tpu_custom_call.1} parent=1 // pred_region
      %147 = dma.done [#allocation18], 256
    $region57: #{tpu_custom_call.1} parent=1 // pred_fallthru
      _
    // Predicated region
    $region58: #{tpu_custom_call.1} parent=1 // pred_check
      _
    $region59: #{tpu_custom_call.1} parent=1 // pred_check_branch
      %149 = sbr.rel (0) target = $region61
    $region60: #{tpu_custom_call.1} parent=1 // pred_region
      %151 = dma.done [#allocation18], 2048
    $region61: #{tpu_custom_call.1} parent=1 // pred_fallthru
      _
    %s152 = sld [smem:[#allocation7]]
    %s153 = smul.u32 %s152, 4
    %s154 = scalar_lea.vmem [#allocation8], %s153
    %v155 = vld [vmem:[%s154] sm:$0xf]
    %v156 = vlaneseq
    %vm157 = vcmp.ge.s32.totalorder %v156, 0
    %vm158 = vcmp.lt.s32.totalorder %v156, 512
    %vm159 = vmand %vm157, %vm158
    %160 = vst.msk [vmem:[#allocation3] ss:$8 sm:$0xf] %vm159, %v155
    %161 = vst.msk [vmem:[#allocation3] ss:$8 sm:$0x0] %vm159, %v155
    %s162 = sld [smem:[#allocation7 + $0x8]]
    %s163 = smul.u32 %s162, 4
    %s164 = scalar_lea.vmem [#allocation8], %s163
    %v165 = vld [vmem:[%s164] sm:$0xf]
    %s166 = scalar_lea.vmem [#allocation3], 1
    %167 = vst.msk [vmem:[%s166] ss:$8 sm:$0xf] %vm159, %v165
    %168 = vst.msk [vmem:[%s166] ss:$8 sm:$0x0] %vm159, %v165
    %s169 = sld [smem:[#allocation7 + $0x10]]
    %s170 = smul.u32 %s169, 4
    %s171 = scalar_lea.vmem [#allocation8], %s170
    %v172 = vld [vmem:[%s171] sm:$0xf]
    %s173 = scalar_lea.vmem [#allocation3], 2
    %174 = vst.msk [vmem:[%s173] ss:$8 sm:$0xf] %vm159, %v172
    %175 = vst.msk [vmem:[%s173] ss:$8 sm:$0x0] %vm159, %v172
    %s176 = sld [smem:[#allocation7 + $0x18]]
    %s177 = smul.u32 %s176, 4
    %s178 = scalar_lea.vmem [#allocation8], %s177
    %v179 = vld [vmem:[%s178] sm:$0xf]
    %s180 = scalar_lea.vmem [#allocation3], 3
    %181 = vst.msk [vmem:[%s180] ss:$8 sm:$0xf] %vm159, %v179
    %182 = vst.msk [vmem:[%s180] ss:$8 sm:$0x0] %vm159, %v179
    %s183 = sld [smem:[#allocation7 + $0x20]]
    %s184 = smul.u32 %s183, 4
    %s185 = scalar_lea.vmem [#allocation8], %s184
    %v186 = vld [vmem:[%s185] sm:$0xf]
    %s187 = scalar_lea.vmem [#allocation3], 4
    %188 = vst.msk [vmem:[%s187] ss:$8 sm:$0xf] %vm159, %v186
    %189 = vst.msk [vmem:[%s187] ss:$8 sm:$0x0] %vm159, %v186
    %s190 = sld [smem:[#allocation7 + $0x28]]
    %s191 = smul.u32 %s190, 4
    %s192 = scalar_lea.vmem [#allocation8], %s191
    %v193 = vld [vmem:[%s192] sm:$0xf]
    %s194 = scalar_lea.vmem [#allocation3], 5
    %195 = vst.msk [vmem:[%s194] ss:$8 sm:$0xf] %vm159, %v193
    %196 = vst.msk [vmem:[%s194] ss:$8 sm:$0x0] %vm159, %v193
    %s197 = sld [smem:[#allocation7 + $0x30]]
    %s198 = smul.u32 %s197, 4
    %s199 = scalar_lea.vmem [#allocation8], %s198
    %v200 = vld [vmem:[%s199] sm:$0xf]
    %s201 = scalar_lea.vmem [#allocation3], 6
    %202 = vst.msk [vmem:[%s201] ss:$8 sm:$0xf] %vm159, %v200
    %203 = vst.msk [vmem:[%s201] ss:$8 sm:$0x0] %vm159, %v200
    %s204 = sld [smem:[#allocation7 + $0x38]]
    %s205 = smul.u32 %s204, 4
    %s206 = scalar_lea.vmem [#allocation8], %s205
    %v207 = vld [vmem:[%s206] sm:$0xf]
    %s208 = scalar_lea.vmem [#allocation3], 7
    %209 = vst.msk [vmem:[%s208] ss:$8 sm:$0xf] %vm159, %v207
    %210 = vst.msk [vmem:[%s208] ss:$8 sm:$0x0] %vm159, %v207
    %s211 = sld [smem:[#allocation7 + $0x1]]
    %s212 = smul.u32 %s211, 4
    %s213 = scalar_lea.vmem [#allocation8], %s212
    %v214 = vld [vmem:[%s213] sm:$0xf]
    %s215 = scalar_lea.vmem [#allocation3], 32
    %216 = vst.msk [vmem:[%s215] ss:$8 sm:$0xf] %vm159, %v214
    %217 = vst.msk [vmem:[%s215] ss:$8 sm:$0x0] %vm159, %v214
    %s218 = sld [smem:[#allocation7 + $0x9]]
    %s219 = smul.u32 %s218, 4
    %s220 = scalar_lea.vmem [#allocation8], %s219
    %v221 = vld [vmem:[%s220] sm:$0xf]
    %s222 = scalar_lea.vmem %s215, 1 [#allocation3]
    %223 = vst.msk [vmem:[%s222] ss:$8 sm:$0xf] %vm159, %v221
    %224 = vst.msk [vmem:[%s222] ss:$8 sm:$0x0] %vm159, %v221
    %s225 = sld [smem:[#allocation7 + $0x11]]
    %s226 = smul.u32 %s225, 4
    %s227 = scalar_lea.vmem [#allocation8], %s226
    %v228 = vld [vmem:[%s227] sm:$0xf]
    %s229 = scalar_lea.vmem %s215, 2 [#allocation3]
    %230 = vst.msk [vmem:[%s229] ss:$8 sm:$0xf] %vm159, %v228
    %231 = vst.msk [vmem:[%s229] ss:$8 sm:$0x0] %vm159, %v228
    %s232 = sld [smem:[#allocation7 + $0x19]]
    %s233 = smul.u32 %s232, 4
    %s234 = scalar_lea.vmem [#allocation8], %s233
    %v235 = vld [vmem:[%s234] sm:$0xf]
    %s236 = scalar_lea.vmem %s215, 3 [#allocation3]
    %237 = vst.msk [vmem:[%s236] ss:$8 sm:$0xf] %vm159, %v235
    %238 = vst.msk [vmem:[%s236] ss:$8 sm:$0x0] %vm159, %v235
    %s239 = sld [smem:[#allocation7 + $0x21]]
    %s240 = smul.u32 %s239, 4
    %s241 = scalar_lea.vmem [#allocation8], %s240
    %v242 = vld [vmem:[%s241] sm:$0xf]
    %s243 = scalar_lea.vmem %s215, 4 [#allocation3]
    %244 = vst.msk [vmem:[%s243] ss:$8 sm:$0xf] %vm159, %v242
    %245 = vst.msk [vmem:[%s243] ss:$8 sm:$0x0] %vm159, %v242
    %s246 = sld [smem:[#allocation7 + $0x29]]
    %s247 = smul.u32 %s246, 4
    %s248 = scalar_lea.vmem [#allocation8], %s247
    %v249 = vld [vmem:[%s248] sm:$0xf]
    %s250 = scalar_lea.vmem %s215, 5 [#allocation3]
    %251 = vst.msk [vmem:[%s250] ss:$8 sm:$0xf] %vm159, %v249
    %252 = vst.msk [vmem:[%s250] ss:$8 sm:$0x0] %vm159, %v249
    %s253 = sld [smem:[#allocation7 + $0x31]]
    %s254 = smul.u32 %s253, 4
    %s255 = scalar_lea.vmem [#allocation8], %s254
    %v256 = vld [vmem:[%s255] sm:$0xf]
    %s257 = scalar_lea.vmem %s215, 6 [#allocation3]
    %258 = vst.msk [vmem:[%s257] ss:$8 sm:$0xf] %vm159, %v256
    %259 = vst.msk [vmem:[%s257] ss:$8 sm:$0x0] %vm159, %v256
    %s260 = sld [smem:[#allocation7 + $0x39]]
    %s261 = smul.u32 %s260, 4
    %s262 = scalar_lea.vmem [#allocation8], %s261
    %v263 = vld [vmem:[%s262] sm:$0xf]
    %s264 = scalar_lea.vmem %s215, 7 [#allocation3]
    %265 = vst.msk [vmem:[%s264] ss:$8 sm:$0xf] %vm159, %v263
    %266 = vst.msk [vmem:[%s264] ss:$8 sm:$0x0] %vm159, %v263
    %s267 = sld [smem:[#allocation7 + $0x2]]
    %s268 = smul.u32 %s267, 4
    %s269 = scalar_lea.vmem [#allocation8], %s268
    %v270 = vld [vmem:[%s269] sm:$0xf]
    %s271 = scalar_lea.vmem [#allocation3], 64
    %272 = vst.msk [vmem:[%s271] ss:$8 sm:$0xf] %vm159, %v270
    %273 = vst.msk [vmem:[%s271] ss:$8 sm:$0x0] %vm159, %v270
    %s274 = sld [smem:[#allocation7 + $0xa]]
    %s275 = smul.u32 %s274, 4
    %s276 = scalar_lea.vmem [#allocation8], %s275
    %v277 = vld [vmem:[%s276] sm:$0xf]
    %s278 = scalar_lea.vmem %s271, 1 [#allocation3]
    %279 = vst.msk [vmem:[%s278] ss:$8 sm:$0xf] %vm159, %v277
    %280 = vst.msk [vmem:[%s278] ss:$8 sm:$0x0] %vm159, %v277
    %s281 = sld [smem:[#allocation7 + $0x12]]
    %s282 = smul.u32 %s281, 4
    %s283 = scalar_lea.vmem [#allocation8], %s282
    %v284 = vld [vmem:[%s283] sm:$0xf]
    %s285 = scalar_lea.vmem %s271, 2 [#allocation3]
    %286 = vst.msk [vmem:[%s285] ss:$8 sm:$0xf] %vm159, %v284
    %287 = vst.msk [vmem:[%s285] ss:$8 sm:$0x0] %vm159, %v284
    %s288 = sld [smem:[#allocation7 + $0x1a]]
    %s289 = smul.u32 %s288, 4
    %s290 = scalar_lea.vmem [#allocation8], %s289
    %v291 = vld [vmem:[%s290] sm:$0xf]
    %s292 = scalar_lea.vmem %s271, 3 [#allocation3]
    %293 = vst.msk [vmem:[%s292] ss:$8 sm:$0xf] %vm159, %v291
    %294 = vst.msk [vmem:[%s292] ss:$8 sm:$0x0] %vm159, %v291
    %s295 = sld [smem:[#allocation7 + $0x22]]
    %s296 = smul.u32 %s295, 4
    %s297 = scalar_lea.vmem [#allocation8], %s296
    %v298 = vld [vmem:[%s297] sm:$0xf]
    %s299 = scalar_lea.vmem %s271, 4 [#allocation3]
    %300 = vst.msk [vmem:[%s299] ss:$8 sm:$0xf] %vm159, %v298
    %301 = vst.msk [vmem:[%s299] ss:$8 sm:$0x0] %vm159, %v298
    %s302 = sld [smem:[#allocation7 + $0x2a]]
    %s303 = smul.u32 %s302, 4
    %s304 = scalar_lea.vmem [#allocation8], %s303
    %v305 = vld [vmem:[%s304] sm:$0xf]
    %s306 = scalar_lea.vmem %s271, 5 [#allocation3]
    %307 = vst.msk [vmem:[%s306] ss:$8 sm:$0xf] %vm159, %v305
    %308 = vst.msk [vmem:[%s306] ss:$8 sm:$0x0] %vm159, %v305
    %s309 = sld [smem:[#allocation7 + $0x32]]
    %s310 = smul.u32 %s309, 4
    %s311 = scalar_lea.vmem [#allocation8], %s310
    %v312 = vld [vmem:[%s311] sm:$0xf]
    %s313 = scalar_lea.vmem %s271, 6 [#allocation3]
    %314 = vst.msk [vmem:[%s313] ss:$8 sm:$0xf] %vm159, %v312
    %315 = vst.msk [vmem:[%s313] ss:$8 sm:$0x0] %vm159, %v312
    %s316 = sld [smem:[#allocation7 + $0x3a]]
    %s317 = smul.u32 %s316, 4
    %s318 = scalar_lea.vmem [#allocation8], %s317
    %v319 = vld [vmem:[%s318] sm:$0xf]
    %s320 = scalar_lea.vmem %s271, 7 [#allocation3]
    %321 = vst.msk [vmem:[%s320] ss:$8 sm:$0xf] %vm159, %v319
    %322 = vst.msk [vmem:[%s320] ss:$8 sm:$0x0] %vm159, %v319
    %s323 = sld [smem:[#allocation7 + $0x3]]
    %s324 = smul.u32 %s323, 4
    %s325 = scalar_lea.vmem [#allocation8], %s324
    %v326 = vld [vmem:[%s325] sm:$0xf]
    %s327 = scalar_lea.vmem [#allocation3], 96
    %328 = vst.msk [vmem:[%s327] ss:$8 sm:$0xf] %vm159, %v326
    %329 = vst.msk [vmem:[%s327] ss:$8 sm:$0x0] %vm159, %v326
    %s330 = sld [smem:[#allocation7 + $0xb]]
    %s331 = smul.u32 %s330, 4
    %s332 = scalar_lea.vmem [#allocation8], %s331
    %v333 = vld [vmem:[%s332] sm:$0xf]
    %s334 = scalar_lea.vmem %s327, 1 [#allocation3]
    %335 = vst.msk [vmem:[%s334] ss:$8 sm:$0xf] %vm159, %v333
    %336 = vst.msk [vmem:[%s334] ss:$8 sm:$0x0] %vm159, %v333
    %s337 = sld [smem:[#allocation7 + $0x13]]
    %s338 = smul.u32 %s337, 4
    %s339 = scalar_lea.vmem [#allocation8], %s338
    %v340 = vld [vmem:[%s339] sm:$0xf]
    %s341 = scalar_lea.vmem %s327, 2 [#allocation3]
    %342 = vst.msk [vmem:[%s341] ss:$8 sm:$0xf] %vm159, %v340
    %343 = vst.msk [vmem:[%s341] ss:$8 sm:$0x0] %vm159, %v340
    %s344 = sld [smem:[#allocation7 + $0x1b]]
    %s345 = smul.u32 %s344, 4
    %s346 = scalar_lea.vmem [#allocation8], %s345
    %v347 = vld [vmem:[%s346] sm:$0xf]
    %s348 = scalar_lea.vmem %s327, 3 [#allocation3]
    %349 = vst.msk [vmem:[%s348] ss:$8 sm:$0xf] %vm159, %v347
    %350 = vst.msk [vmem:[%s348] ss:$8 sm:$0x0] %vm159, %v347
    %s351 = sld [smem:[#allocation7 + $0x23]]
    %s352 = smul.u32 %s351, 4
    %s353 = scalar_lea.vmem [#allocation8], %s352
    %v354 = vld [vmem:[%s353] sm:$0xf]
    %s355 = scalar_lea.vmem %s327, 4 [#allocation3]
    %356 = vst.msk [vmem:[%s355] ss:$8 sm:$0xf] %vm159, %v354
    %357 = vst.msk [vmem:[%s355] ss:$8 sm:$0x0] %vm159, %v354
    %s358 = sld [smem:[#allocation7 + $0x2b]]
    %s359 = smul.u32 %s358, 4
    %s360 = scalar_lea.vmem [#allocation8], %s359
    %v361 = vld [vmem:[%s360] sm:$0xf]
    %s362 = scalar_lea.vmem %s327, 5 [#allocation3]
    %363 = vst.msk [vmem:[%s362] ss:$8 sm:$0xf] %vm159, %v361
    %364 = vst.msk [vmem:[%s362] ss:$8 sm:$0x0] %vm159, %v361
    %s365 = sld [smem:[#allocation7 + $0x33]]
    %s366 = smul.u32 %s365, 4
    %s367 = scalar_lea.vmem [#allocation8], %s366
    %v368 = vld [vmem:[%s367] sm:$0xf]
    %s369 = scalar_lea.vmem %s327, 6 [#allocation3]
    %370 = vst.msk [vmem:[%s369] ss:$8 sm:$0xf] %vm159, %v368
    %371 = vst.msk [vmem:[%s369] ss:$8 sm:$0x0] %vm159, %v368
    %s372 = sld [smem:[#allocation7 + $0x3b]]
    %s373 = smul.u32 %s372, 4
    %s374 = scalar_lea.vmem [#allocation8], %s373
    %v375 = vld [vmem:[%s374] sm:$0xf]
    %s376 = scalar_lea.vmem %s327, 7 [#allocation3]
    %377 = vst.msk [vmem:[%s376] ss:$8 sm:$0xf] %vm159, %v375
    %378 = vst.msk [vmem:[%s376] ss:$8 sm:$0x0] %vm159, %v375
    %s379 = sld [smem:[#allocation7 + $0x4]]
    %s380 = smul.u32 %s379, 4
    %s381 = scalar_lea.vmem [#allocation8], %s380
    %v382 = vld [vmem:[%s381] sm:$0xf]
    %s383 = scalar_lea.vmem [#allocation3], 128
    %384 = vst.msk [vmem:[%s383] ss:$8 sm:$0xf] %vm159, %v382
    %385 = vst.msk [vmem:[%s383] ss:$8 sm:$0x0] %vm159, %v382
    %s386 = sld [smem:[#allocation7 + $0xc]]
    %s387 = smul.u32 %s386, 4
    %s388 = scalar_lea.vmem [#allocation8], %s387
    %v389 = vld [vmem:[%s388] sm:$0xf]
    %s390 = scalar_lea.vmem %s383, 1 [#allocation3]
    %391 = vst.msk [vmem:[%s390] ss:$8 sm:$0xf] %vm159, %v389
    %392 = vst.msk [vmem:[%s390] ss:$8 sm:$0x0] %vm159, %v389
    %s393 = sld [smem:[#allocation7 + $0x14]]
    %s394 = smul.u32 %s393, 4
    %s395 = scalar_lea.vmem [#allocation8], %s394
    %v396 = vld [vmem:[%s395] sm:$0xf]
    %s397 = scalar_lea.vmem %s383, 2 [#allocation3]
    %398 = vst.msk [vmem:[%s397] ss:$8 sm:$0xf] %vm159, %v396
    %399 = vst.msk [vmem:[%s397] ss:$8 sm:$0x0] %vm159, %v396
    %s400 = sld [smem:[#allocation7 + $0x1c]]
    %s401 = smul.u32 %s400, 4
    %s402 = scalar_lea.vmem [#allocation8], %s401
    %v403 = vld [vmem:[%s402] sm:$0xf]
    %s404 = scalar_lea.vmem %s383, 3 [#allocation3]
    %405 = vst.msk [vmem:[%s404] ss:$8 sm:$0xf] %vm159, %v403
    %406 = vst.msk [vmem:[%s404] ss:$8 sm:$0x0] %vm159, %v403
    %s407 = sld [smem:[#allocation7 + $0x24]]
    %s408 = smul.u32 %s407, 4
    %s409 = scalar_lea.vmem [#allocation8], %s408
    %v410 = vld [vmem:[%s409] sm:$0xf]
    %s411 = scalar_lea.vmem %s383, 4 [#allocation3]
    %412 = vst.msk [vmem:[%s411] ss:$8 sm:$0xf] %vm159, %v410
    %413 = vst.msk [vmem:[%s411] ss:$8 sm:$0x0] %vm159, %v410
    %s414 = sld [smem:[#allocation7 + $0x2c]]
    %s415 = smul.u32 %s414, 4
    %s416 = scalar_lea.vmem [#allocation8], %s415
    %v417 = vld [vmem:[%s416] sm:$0xf]
    %s418 = scalar_lea.vmem %s383, 5 [#allocation3]
    %419 = vst.msk [vmem:[%s418] ss:$8 sm:$0xf] %vm159, %v417
    %420 = vst.msk [vmem:[%s418] ss:$8 sm:$0x0] %vm159, %v417
    %s421 = sld [smem:[#allocation7 + $0x34]]
    %s422 = smul.u32 %s421, 4
    %s423 = scalar_lea.vmem [#allocation8], %s422
    %v424 = vld [vmem:[%s423] sm:$0xf]
    %s425 = scalar_lea.vmem %s383, 6 [#allocation3]
    %426 = vst.msk [vmem:[%s425] ss:$8 sm:$0xf] %vm159, %v424
    %427 = vst.msk [vmem:[%s425] ss:$8 sm:$0x0] %vm159, %v424
    %s428 = sld [smem:[#allocation7 + $0x3c]]
    %s429 = smul.u32 %s428, 4
    %s430 = scalar_lea.vmem [#allocation8], %s429
    %v431 = vld [vmem:[%s430] sm:$0xf]
    %s432 = scalar_lea.vmem %s383, 7 [#allocation3]
    %433 = vst.msk [vmem:[%s432] ss:$8 sm:$0xf] %vm159, %v431
    %434 = vst.msk [vmem:[%s432] ss:$8 sm:$0x0] %vm159, %v431
    %s435 = sld [smem:[#allocation7 + $0x5]]
    %s436 = smul.u32 %s435, 4
    %s437 = scalar_lea.vmem [#allocation8], %s436
    %v438 = vld [vmem:[%s437] sm:$0xf]
    %s439 = scalar_lea.vmem [#allocation3], 160
    %440 = vst.msk [vmem:[%s439] ss:$8 sm:$0xf] %vm159, %v438
    %441 = vst.msk [vmem:[%s439] ss:$8 sm:$0x0] %vm159, %v438
    %s442 = sld [smem:[#allocation7 + $0xd]]
    %s443 = smul.u32 %s442, 4
    %s444 = scalar_lea.vmem [#allocation8], %s443
    %v445 = vld [vmem:[%s444] sm:$0xf]
    %s446 = scalar_lea.vmem %s439, 1 [#allocation3]
    %447 = vst.msk [vmem:[%s446] ss:$8 sm:$0xf] %vm159, %v445
    %448 = vst.msk [vmem:[%s446] ss:$8 sm:$0x0] %vm159, %v445
    %s449 = sld [smem:[#allocation7 + $0x15]]
    %s450 = smul.u32 %s449, 4
    %s451 = scalar_lea.vmem [#allocation8], %s450
    %v452 = vld [vmem:[%s451] sm:$0xf]
    %s453 = scalar_lea.vmem %s439, 2 [#allocation3]
    %454 = vst.msk [vmem:[%s453] ss:$8 sm:$0xf] %vm159, %v452
    %455 = vst.msk [vmem:[%s453] ss:$8 sm:$0x0] %vm159, %v452
    %s456 = sld [smem:[#allocation7 + $0x1d]]
    %s457 = smul.u32 %s456, 4
    %s458 = scalar_lea.vmem [#allocation8], %s457
    %v459 = vld [vmem:[%s458] sm:$0xf]
    %s460 = scalar_lea.vmem %s439, 3 [#allocation3]
    %461 = vst.msk [vmem:[%s460] ss:$8 sm:$0xf] %vm159, %v459
    %462 = vst.msk [vmem:[%s460] ss:$8 sm:$0x0] %vm159, %v459
    %s463 = sld [smem:[#allocation7 + $0x25]]
    %s464 = smul.u32 %s463, 4
    %s465 = scalar_lea.vmem [#allocation8], %s464
    %v466 = vld [vmem:[%s465] sm:$0xf]
    %s467 = scalar_lea.vmem %s439, 4 [#allocation3]
    %468 = vst.msk [vmem:[%s467] ss:$8 sm:$0xf] %vm159, %v466
    %469 = vst.msk [vmem:[%s467] ss:$8 sm:$0x0] %vm159, %v466
    %s470 = sld [smem:[#allocation7 + $0x2d]]
    %s471 = smul.u32 %s470, 4
    %s472 = scalar_lea.vmem [#allocation8], %s471
    %v473 = vld [vmem:[%s472] sm:$0xf]
    %s474 = scalar_lea.vmem %s439, 5 [#allocation3]
    %475 = vst.msk [vmem:[%s474] ss:$8 sm:$0xf] %vm159, %v473
    %476 = vst.msk [vmem:[%s474] ss:$8 sm:$0x0] %vm159, %v473
    %s477 = sld [smem:[#allocation7 + $0x35]]
    %s478 = smul.u32 %s477, 4
    %s479 = scalar_lea.vmem [#allocation8], %s478
    %v480 = vld [vmem:[%s479] sm:$0xf]
    %s481 = scalar_lea.vmem %s439, 6 [#allocation3]
    %482 = vst.msk [vmem:[%s481] ss:$8 sm:$0xf] %vm159, %v480
    %483 = vst.msk [vmem:[%s481] ss:$8 sm:$0x0] %vm159, %v480
    %s484 = sld [smem:[#allocation7 + $0x3d]]
    %s485 = smul.u32 %s484, 4
    %s486 = scalar_lea.vmem [#allocation8], %s485
    %v487 = vld [vmem:[%s486] sm:$0xf]
    %s488 = scalar_lea.vmem %s439, 7 [#allocation3]
    %489 = vst.msk [vmem:[%s488] ss:$8 sm:$0xf] %vm159, %v487
    %490 = vst.msk [vmem:[%s488] ss:$8 sm:$0x0] %vm159, %v487
    %s491 = sld [smem:[#allocation7 + $0x6]]
    %s492 = smul.u32 %s491, 4
    %s493 = scalar_lea.vmem [#allocation8], %s492
    %v494 = vld [vmem:[%s493] sm:$0xf]
    %s495 = scalar_lea.vmem [#allocation3], 192
    %496 = vst.msk [vmem:[%s495] ss:$8 sm:$0xf] %vm159, %v494
    %497 = vst.msk [vmem:[%s495] ss:$8 sm:$0x0] %vm159, %v494
    %s498 = sld [smem:[#allocation7 + $0xe]]
    %s499 = smul.u32 %s498, 4
    %s500 = scalar_lea.vmem [#allocation8], %s499
    %v501 = vld [vmem:[%s500] sm:$0xf]
    %s502 = scalar_lea.vmem %s495, 1 [#allocation3]
    %503 = vst.msk [vmem:[%s502] ss:$8 sm:$0xf] %vm159, %v501
    %504 = vst.msk [vmem:[%s502] ss:$8 sm:$0x0] %vm159, %v501
    %s505 = sld [smem:[#allocation7 + $0x16]]
    %s506 = smul.u32 %s505, 4
    %s507 = scalar_lea.vmem [#allocation8], %s506
    %v508 = vld [vmem:[%s507] sm:$0xf]
    %s509 = scalar_lea.vmem %s495, 2 [#allocation3]
    %510 = vst.msk [vmem:[%s509] ss:$8 sm:$0xf] %vm159, %v508
    %511 = vst.msk [vmem:[%s509] ss:$8 sm:$0x0] %vm159, %v508
    %s512 = sld [smem:[#allocation7 + $0x1e]]
    %s513 = smul.u32 %s512, 4
    %s514 = scalar_lea.vmem [#allocation8], %s513
    %v515 = vld [vmem:[%s514] sm:$0xf]
    %s516 = scalar_lea.vmem %s495, 3 [#allocation3]
    %517 = vst.msk [vmem:[%s516] ss:$8 sm:$0xf] %vm159, %v515
    %518 = vst.msk [vmem:[%s516] ss:$8 sm:$0x0] %vm159, %v515
    %s519 = sld [smem:[#allocation7 + $0x26]]
    %s520 = smul.u32 %s519, 4
    %s521 = scalar_lea.vmem [#allocation8], %s520
    %v522 = vld [vmem:[%s521] sm:$0xf]
    %s523 = scalar_lea.vmem %s495, 4 [#allocation3]
    %524 = vst.msk [vmem:[%s523] ss:$8 sm:$0xf] %vm159, %v522
    %525 = vst.msk [vmem:[%s523] ss:$8 sm:$0x0] %vm159, %v522
    %s526 = sld [smem:[#allocation7 + $0x2e]]
    %s527 = smul.u32 %s526, 4
    %s528 = scalar_lea.vmem [#allocation8], %s527
    %v529 = vld [vmem:[%s528] sm:$0xf]
    %s530 = scalar_lea.vmem %s495, 5 [#allocation3]
    %531 = vst.msk [vmem:[%s530] ss:$8 sm:$0xf] %vm159, %v529
    %532 = vst.msk [vmem:[%s530] ss:$8 sm:$0x0] %vm159, %v529
    %s533 = sld [smem:[#allocation7 + $0x36]]
    %s534 = smul.u32 %s533, 4
    %s535 = scalar_lea.vmem [#allocation8], %s534
    %v536 = vld [vmem:[%s535] sm:$0xf]
    %s537 = scalar_lea.vmem %s495, 6 [#allocation3]
    %538 = vst.msk [vmem:[%s537] ss:$8 sm:$0xf] %vm159, %v536
    %539 = vst.msk [vmem:[%s537] ss:$8 sm:$0x0] %vm159, %v536
    %s540 = sld [smem:[#allocation7 + $0x3e]]
    %s541 = smul.u32 %s540, 4
    %s542 = scalar_lea.vmem [#allocation8], %s541
    %v543 = vld [vmem:[%s542] sm:$0xf]
    %s544 = scalar_lea.vmem %s495, 7 [#allocation3]
    %545 = vst.msk [vmem:[%s544] ss:$8 sm:$0xf] %vm159, %v543
    %546 = vst.msk [vmem:[%s544] ss:$8 sm:$0x0] %vm159, %v543
    %s547 = sld [smem:[#allocation7 + $0x7]]
    %s548 = smul.u32 %s547, 4
    %s549 = scalar_lea.vmem [#allocation8], %s548
    %v550 = vld [vmem:[%s549] sm:$0xf]
    %s551 = scalar_lea.vmem [#allocation3], 224
    %552 = vst.msk [vmem:[%s551] ss:$8 sm:$0xf] %vm159, %v550
    %553 = vst.msk [vmem:[%s551] ss:$8 sm:$0x0] %vm159, %v550
    %s554 = sld [smem:[#allocation7 + $0xf]]
    %s555 = smul.u32 %s554, 4
    %s556 = scalar_lea.vmem [#allocation8], %s555
    %v557 = vld [vmem:[%s556] sm:$0xf]
    %s558 = scalar_lea.vmem %s551, 1 [#allocation3]
    %559 = vst.msk [vmem:[%s558] ss:$8 sm:$0xf] %vm159, %v557
    %560 = vst.msk [vmem:[%s558] ss:$8 sm:$0x0] %vm159, %v557
    %s561 = sld [smem:[#allocation7 + $0x17]]
    %s562 = smul.u32 %s561, 4
    %s563 = scalar_lea.vmem [#allocation8], %s562
    %v564 = vld [vmem:[%s563] sm:$0xf]
    %s565 = scalar_lea.vmem %s551, 2 [#allocation3]
    %566 = vst.msk [vmem:[%s565] ss:$8 sm:$0xf] %vm159, %v564
    %567 = vst.msk [vmem:[%s565] ss:$8 sm:$0x0] %vm159, %v564
    %s568 = sld [smem:[#allocation7 + $0x1f]]
    %s569 = smul.u32 %s568, 4
    %s570 = scalar_lea.vmem [#allocation8], %s569
    %v571 = vld [vmem:[%s570] sm:$0xf]
    %s572 = scalar_lea.vmem %s551, 3 [#allocation3]
    %573 = vst.msk [vmem:[%s572] ss:$8 sm:$0xf] %vm159, %v571
    %574 = vst.msk [vmem:[%s572] ss:$8 sm:$0x0] %vm159, %v571
    %s575 = sld [smem:[#allocation7 + $0x27]]
    %s576 = smul.u32 %s575, 4
    %s577 = scalar_lea.vmem [#allocation8], %s576
    %v578 = vld [vmem:[%s577] sm:$0xf]
    %s579 = scalar_lea.vmem %s551, 4 [#allocation3]
    %580 = vst.msk [vmem:[%s579] ss:$8 sm:$0xf] %vm159, %v578
    %581 = vst.msk [vmem:[%s579] ss:$8 sm:$0x0] %vm159, %v578
    %s582 = sld [smem:[#allocation7 + $0x2f]]
    %s583 = smul.u32 %s582, 4
    %s584 = scalar_lea.vmem [#allocation8], %s583
    %v585 = vld [vmem:[%s584] sm:$0xf]
    %s586 = scalar_lea.vmem %s551, 5 [#allocation3]
    %587 = vst.msk [vmem:[%s586] ss:$8 sm:$0xf] %vm159, %v585
    %588 = vst.msk [vmem:[%s586] ss:$8 sm:$0x0] %vm159, %v585
    %s589 = sld [smem:[#allocation7 + $0x37]]
    %s590 = smul.u32 %s589, 4
    %s591 = scalar_lea.vmem [#allocation8], %s590
    %v592 = vld [vmem:[%s591] sm:$0xf]
    %s593 = scalar_lea.vmem %s551, 6 [#allocation3]
    %594 = vst.msk [vmem:[%s593] ss:$8 sm:$0xf] %vm159, %v592
    %595 = vst.msk [vmem:[%s593] ss:$8 sm:$0x0] %vm159, %v592
    %s596 = sld [smem:[#allocation7 + $0x3f]]
    %s597 = smul.u32 %s596, 4
    %s598 = scalar_lea.vmem [#allocation8], %s597
    %v599 = vld [vmem:[%s598] sm:$0xf]
    %s600 = scalar_lea.vmem %s551, 7 [#allocation3]
    %601 = vst.msk [vmem:[%s600] ss:$8 sm:$0xf] %vm159, %v599
    %602 = vst.msk [vmem:[%s600] ss:$8 sm:$0x0] %vm159, %v599
    %v603 = vld [vmem:[#allocation16] sm:$0xff]
    %604 = vst [vmem:[#allocation4] sm:$0xff] %v603
    %v605 = vld [vmem:[#allocation17] sm:$0xff]
    %606 = vst [vmem:[#allocation5] sm:$0xff] %v605
    %v607 = vld [vmem:[#allocation13] sm:$0xff]
    %v608 = vld [vmem:[#allocation13 + $0x8] sm:$0xff]
    %v609 = vld [vmem:[#allocation13 + $0x10] sm:$0xff]
    %v610 = vld [vmem:[#allocation13 + $0x18] sm:$0xff]
    %v611 = vld [vmem:[#allocation13 + $0x20] sm:$0xff]
    %v612 = vld [vmem:[#allocation13 + $0x28] sm:$0xff]
    %v613 = vld [vmem:[#allocation13 + $0x30] sm:$0xff]
    %v614 = vld [vmem:[#allocation13 + $0x38] sm:$0xff]
    %v615 = vld [vmem:[#allocation13 + $0x40] sm:$0xff]
    %v616 = vld [vmem:[#allocation13 + $0x48] sm:$0xff]
    %v617 = vld [vmem:[#allocation13 + $0x50] sm:$0xff]
    %v618 = vld [vmem:[#allocation13 + $0x58] sm:$0xff]
    %v619 = vld [vmem:[#allocation13 + $0x60] sm:$0xff]
    %v620 = vld [vmem:[#allocation13 + $0x68] sm:$0xff]
    %v621 = vld [vmem:[#allocation13 + $0x70] sm:$0xff]
    %v622 = vld [vmem:[#allocation13 + $0x78] sm:$0xff]
    %v623 = vld [vmem:[#allocation13 + $0x80] sm:$0xff]
    %v624 = vld [vmem:[#allocation13 + $0x88] sm:$0xff]
    %v625 = vld [vmem:[#allocation13 + $0x90] sm:$0xff]
    %v626 = vld [vmem:[#allocation13 + $0x98] sm:$0xff]
    %v627 = vld [vmem:[#allocation13 + $0xa0] sm:$0xff]
    %v628 = vld [vmem:[#allocation13 + $0xa8] sm:$0xff]
    %v629 = vld [vmem:[#allocation13 + $0xb0] sm:$0xff]
    %v630 = vld [vmem:[#allocation13 + $0xb8] sm:$0xff]
    %v631 = vld [vmem:[#allocation13 + $0xc0] sm:$0xff]
    %v632 = vld [vmem:[#allocation13 + $0xc8] sm:$0xff]
    %v633 = vld [vmem:[#allocation13 + $0xd0] sm:$0xff]
    %v634 = vld [vmem:[#allocation13 + $0xd8] sm:$0xff]
    %v635 = vld [vmem:[#allocation13 + $0xe0] sm:$0xff]
    %v636 = vld [vmem:[#allocation13 + $0xe8] sm:$0xff]
    %v637 = vld [vmem:[#allocation13 + $0xf0] sm:$0xff]
    %v638 = vld [vmem:[#allocation13 + $0xf8] sm:$0xff]
    %v639 = vld [vmem:[#allocation13 + $0x100] sm:$0xff]
    %v640 = vld [vmem:[#allocation13 + $0x108] sm:$0xff]
    %v641 = vld [vmem:[#allocation13 + $0x110] sm:$0xff]
    %v642 = vld [vmem:[#allocation13 + $0x118] sm:$0xff]
    %v643 = vld [vmem:[#allocation13 + $0x120] sm:$0xff]
    %v644 = vld [vmem:[#allocation13 + $0x128] sm:$0xff]
    %v645 = vld [vmem:[#allocation13 + $0x130] sm:$0xff]
    %v646 = vld [vmem:[#allocation13 + $0x138] sm:$0xff]
    %v647 = vld [vmem:[#allocation13 + $0x140] sm:$0xff]
    %v648 = vld [vmem:[#allocation13 + $0x148] sm:$0xff]
    %v649 = vld [vmem:[#allocation13 + $0x150] sm:$0xff]
    %v650 = vld [vmem:[#allocation13 + $0x158] sm:$0xff]
    %v651 = vld [vmem:[#allocation13 + $0x160] sm:$0xff]
    %v652 = vld [vmem:[#allocation13 + $0x168] sm:$0xff]
    %v653 = vld [vmem:[#allocation13 + $0x170] sm:$0xff]
    %v654 = vld [vmem:[#allocation13 + $0x178] sm:$0xff]
    %v655 = vld [vmem:[#allocation13 + $0x180] sm:$0xff]
    %v656 = vld [vmem:[#allocation13 + $0x188] sm:$0xff]
    %v657 = vld [vmem:[#allocation13 + $0x190] sm:$0xff]
    %v658 = vld [vmem:[#allocation13 + $0x198] sm:$0xff]
    %v659 = vld [vmem:[#allocation13 + $0x1a0] sm:$0xff]
    %v660 = vld [vmem:[#allocation13 + $0x1a8] sm:$0xff]
    %v661 = vld [vmem:[#allocation13 + $0x1b0] sm:$0xff]
    %v662 = vld [vmem:[#allocation13 + $0x1b8] sm:$0xff]
    %v663 = vld [vmem:[#allocation13 + $0x1c0] sm:$0xff]
    %v664 = vld [vmem:[#allocation13 + $0x1c8] sm:$0xff]
    %v665 = vld [vmem:[#allocation13 + $0x1d0] sm:$0xff]
    %v666 = vld [vmem:[#allocation13 + $0x1d8] sm:$0xff]
    %v667 = vld [vmem:[#allocation13 + $0x1e0] sm:$0xff]
    %v668 = vld [vmem:[#allocation13 + $0x1e8] sm:$0xff]
    %v669 = vld [vmem:[#allocation13 + $0x1f0] sm:$0xff]
    %v670 = vld [vmem:[#allocation13 + $0x1f8] sm:$0xff]
    %v671 = vld [vmem:[#allocation14] sm:$0xf]
    %v672 = vld [vmem:[#allocation4] sm:$0xff]
    %v673 = vld [vmem:[#allocation5] sm:$0xff]
    %v674 = vld [vmem:[#allocation3] sm:$0xff]
    %v675 = vld [vmem:[#allocation3 + $0x8] sm:$0xff]
    %v676 = vld [vmem:[#allocation3 + $0x10] sm:$0xff]
    %v677 = vld [vmem:[#allocation3 + $0x18] sm:$0xff]
    %678 = vmatpush.msra.mxu0 %v667
    %679 = vmatpush.msra.mxu0 %v663
    %680 = vmatpush.msra.mxu0 %v659
    %681 = vmatpush.msra.mxu0 %v655
    %682 = vmatpush.msra.mxu0 %v651
    %683 = vmatpush.msra.mxu0 %v647
    %684 = vmatpush.msra.mxu0 %v643
    %685 = vmatpush.msra.mxu0 %v639
    %686 = vmatpush.msra.mxu0 %v635
    %687 = vmatpush.msra.mxu0 %v631
    %688 = vmatpush.msra.mxu0 %v627
    %689 = vmatpush.msra.mxu0 %v623
    %690 = vmatpush.msra.mxu0 %v619
    %691 = vmatpush.msra.mxu0 %v615
    %692 = vmatpush.msra.mxu0 %v611
    %693 = vmatpush.msra.mxu0 %v607
    %694 = vmatmul.f32.gmra.mxu0 %v672
    %v695 = vpop.f32.mrf.mxu0
    %v696 = vadd.f32 0.0, %v695
    %697 = vdwg.mxu0
    %698 = vmatpush.msra.mxu0 %v668
    %699 = vmatpush.msra.mxu0 %v664
    %700 = vmatpush.msra.mxu0 %v660
    %701 = vmatpush.msra.mxu0 %v656
    %702 = vmatpush.msra.mxu0 %v652
    %703 = vmatpush.msra.mxu0 %v648
    %704 = vmatpush.msra.mxu0 %v644
    %705 = vmatpush.msra.mxu0 %v640
    %706 = vmatpush.msra.mxu0 %v636
    %707 = vmatpush.msra.mxu0 %v632
    %708 = vmatpush.msra.mxu0 %v628
    %709 = vmatpush.msra.mxu0 %v624
    %710 = vmatpush.msra.mxu0 %v620
    %711 = vmatpush.msra.mxu0 %v616
    %712 = vmatpush.msra.mxu0 %v612
    %713 = vmatpush.msra.mxu0 %v608
    %714 = vmatmul.f32.gmra.mxu0 %v672
    %v715 = vpop.f32.mrf.mxu0
    %v716 = vadd.f32 0.0, %v715
    %717 = vdwg.mxu0
    %718 = vmatpush.msra.mxu0 %v669
    %719 = vmatpush.msra.mxu0 %v665
    %720 = vmatpush.msra.mxu0 %v661
    %721 = vmatpush.msra.mxu0 %v657
    %722 = vmatpush.msra.mxu0 %v653
    %723 = vmatpush.msra.mxu0 %v649
    %724 = vmatpush.msra.mxu0 %v645
    %725 = vmatpush.msra.mxu0 %v641
    %726 = vmatpush.msra.mxu0 %v637
    %727 = vmatpush.msra.mxu0 %v633
    %728 = vmatpush.msra.mxu0 %v629
    %729 = vmatpush.msra.mxu0 %v625
    %730 = vmatpush.msra.mxu0 %v621
    %731 = vmatpush.msra.mxu0 %v617
    %732 = vmatpush.msra.mxu0 %v613
    %733 = vmatpush.msra.mxu0 %v609
    %734 = vmatmul.f32.gmra.mxu0 %v672
    %v735 = vpop.f32.mrf.mxu0
    %v736 = vadd.f32 0.0, %v735
    %737 = vdwg.mxu0
    %738 = vmatpush.msra.mxu0 %v670
    %739 = vmatpush.msra.mxu0 %v666
    %740 = vmatpush.msra.mxu0 %v662
    %741 = vmatpush.msra.mxu0 %v658
    %742 = vmatpush.msra.mxu0 %v654
    %743 = vmatpush.msra.mxu0 %v650
    %744 = vmatpush.msra.mxu0 %v646
    %745 = vmatpush.msra.mxu0 %v642
    %746 = vmatpush.msra.mxu0 %v638
    %747 = vmatpush.msra.mxu0 %v634
    %748 = vmatpush.msra.mxu0 %v630
    %749 = vmatpush.msra.mxu0 %v626
    %750 = vmatpush.msra.mxu0 %v622
    %751 = vmatpush.msra.mxu0 %v618
    %752 = vmatpush.msra.mxu0 %v614
    %753 = vmatpush.msra.mxu0 %v610
    %754 = vmatmul.f32.gmra.mxu0 %v672
    %v755 = vpop.f32.mrf.mxu0
    %v756 = vadd.f32 0.0, %v755
    %757 = vdwg.mxu0
    %v758 = vadd.f32 %v674, %v696
    %v759 = vadd.f32 %v675, %v716
    %v760 = vadd.f32 %v676, %v736
    %v761 = vadd.f32 %v677, %v756
    %v763 = vperm.slane %v671, 0
    %v764 = vperm.slane %v671, 1
    %v765 = vperm.slane %v671, 2
    %v766 = vperm.slane %v671, 3
    %v771 = vadd.f32 %v758, %v763
    %v772 = vadd.f32 %v759, %v764
    %v773 = vadd.f32 %v760, %v765
    %v774 = vadd.f32 %v761, %v766
    %v775 = vxor.u32 %v771, 2147483648
    %v776 = vmul.f32 %v775, 1.442695
    %v777 = vpow.pop %v776
    %v778 = vadd.f32 %v777, 1.0
    %v779 = vrcp.pop %v778
    %v780 = vmul.f32 %v778, %v779
    %v781 = vsub.f32 1.0, %v780
    %v782 = vmul.f32 %v779, %v781
    %v783 = vadd.f32 %v779, %v782
    %vm784 = vweird.f32 %v778
    %vm785 = vweird.f32 %v779
    %vm786 = vmor %vm784, %vm785
    %v787 = vsel %vm786, %v779, %v783
    %v788 = vand.u32 2147483647, %v778
    %vm789 = vcmp.eq.f32.partialorder %v788, 8.507059e+37
    %v790 = vand.u32 %v778, 2147483648
    %v791 = vor.u32 1.1754944e-38, %v790
    %v792 = vsel %vm789, %v791, %v787
    %v793 = vmul.f32 1.0, %v792
    %v794 = vxor.u32 %v772, 2147483648
    %v795 = vmul.f32 %v794, 1.442695
    %v796 = vpow.pop %v795
    %v797 = vadd.f32 %v796, 1.0
    %v798 = vrcp.pop %v797
    %v799 = vmul.f32 %v797, %v798
    %v800 = vsub.f32 1.0, %v799
    %v801 = vmul.f32 %v798, %v800
    %v802 = vadd.f32 %v798, %v801
    %vm803 = vweird.f32 %v797
    %vm804 = vweird.f32 %v798
    %vm805 = vmor %vm803, %vm804
    %v806 = vsel %vm805, %v798, %v802
    %v807 = vand.u32 2147483647, %v797
    %vm808 = vcmp.eq.f32.partialorder %v807, 8.507059e+37
    %v809 = vand.u32 %v797, 2147483648
    %v810 = vor.u32 1.1754944e-38, %v809
    %v811 = vsel %vm808, %v810, %v806
    %v812 = vmul.f32 1.0, %v811
    %v813 = vtanh.pop %v773
    %v814 = vxor.u32 %v774, 2147483648
    %v815 = vmul.f32 %v814, 1.442695
    %v816 = vpow.pop %v815
    %v817 = vadd.f32 %v816, 1.0
    %v818 = vrcp.pop %v817
    %v819 = vmul.f32 %v817, %v818
    %v820 = vsub.f32 1.0, %v819
    %v821 = vmul.f32 %v818, %v820
    %v822 = vadd.f32 %v818, %v821
    %vm823 = vweird.f32 %v817
    %vm824 = vweird.f32 %v818
    %vm825 = vmor %vm823, %vm824
    %v826 = vsel %vm825, %v818, %v822
    %v827 = vand.u32 2147483647, %v817
    %vm828 = vcmp.eq.f32.partialorder %v827, 8.507059e+37
    %v829 = vand.u32 %v817, 2147483648
    %v830 = vor.u32 1.1754944e-38, %v829
    %v831 = vsel %vm828, %v830, %v826
    %v832 = vmul.f32 1.0, %v831
    %v833 = vmul.f32 %v812, %v673
    %v834 = vmul.f32 %v793, %v813
    %v835 = vadd.f32 %v833, %v834
    %v836 = vtanh.pop %v835
    %v837 = vmul.f32 %v832, %v836
    %838 = vst [vmem:[#allocation4] sm:$0xff] %v837
    %839 = vst [vmem:[#allocation5] sm:$0xff] %v835
    %840 = vst [vmem:[#allocation2] sm:$0xff] %v837
    %v841 = vld [vmem:[#allocation4] sm:$0xff]
    %v842 = vld [vmem:[#allocation5] sm:$0xff]
    %v843 = vld [vmem:[%s215] sm:$0xff]
    %v844 = vld [vmem:[%s215 + $0x8] sm:$0xff]
    %v845 = vld [vmem:[%s215 + $0x10] sm:$0xff]
    %v846 = vld [vmem:[%s215 + $0x18] sm:$0xff]
    %847 = vmatpush.msra.mxu0 %v667
    %848 = vmatpush.msra.mxu0 %v663
    %849 = vmatpush.msra.mxu0 %v659
    %850 = vmatpush.msra.mxu0 %v655
    %851 = vmatpush.msra.mxu0 %v651
    %852 = vmatpush.msra.mxu0 %v647
    %853 = vmatpush.msra.mxu0 %v643
    %854 = vmatpush.msra.mxu0 %v639
    %855 = vmatpush.msra.mxu0 %v635
    %856 = vmatpush.msra.mxu0 %v631
    %857 = vmatpush.msra.mxu0 %v627
    %858 = vmatpush.msra.mxu0 %v623
    %859 = vmatpush.msra.mxu0 %v619
    %860 = vmatpush.msra.mxu0 %v615
    %861 = vmatpush.msra.mxu0 %v611
    %862 = vmatpush.msra.mxu0 %v607
    %863 = vmatmul.f32.gmra.mxu0 %v841
    %v864 = vpop.f32.mrf.mxu0
    %v865 = vadd.f32 0.0, %v864
    %866 = vdwg.mxu0
    %867 = vmatpush.msra.mxu0 %v668
    %868 = vmatpush.msra.mxu0 %v664
    %869 = vmatpush.msra.mxu0 %v660
    %870 = vmatpush.msra.mxu0 %v656
    %871 = vmatpush.msra.mxu0 %v652
    %872 = vmatpush.msra.mxu0 %v648
    %873 = vmatpush.msra.mxu0 %v644
    %874 = vmatpush.msra.mxu0 %v640
    %875 = vmatpush.msra.mxu0 %v636
    %876 = vmatpush.msra.mxu0 %v632
    %877 = vmatpush.msra.mxu0 %v628
    %878 = vmatpush.msra.mxu0 %v624
    %879 = vmatpush.msra.mxu0 %v620
    %880 = vmatpush.msra.mxu0 %v616
    %881 = vmatpush.msra.mxu0 %v612
    %882 = vmatpush.msra.mxu0 %v608
    %883 = vmatmul.f32.gmra.mxu0 %v841
    %v884 = vpop.f32.mrf.mxu0
    %v885 = vadd.f32 0.0, %v884
    %886 = vdwg.mxu0
    %887 = vmatpush.msra.mxu0 %v669
    %888 = vmatpush.msra.mxu0 %v665
    %889 = vmatpush.msra.mxu0 %v661
    %890 = vmatpush.msra.mxu0 %v657
    %891 = vmatpush.msra.mxu0 %v653
    %892 = vmatpush.msra.mxu0 %v649
    %893 = vmatpush.msra.mxu0 %v645
    %894 = vmatpush.msra.mxu0 %v641
    %895 = vmatpush.msra.mxu0 %v637
    %896 = vmatpush.msra.mxu0 %v633
    %897 = vmatpush.msra.mxu0 %v629
    %898 = vmatpush.msra.mxu0 %v625
    %899 = vmatpush.msra.mxu0 %v621
    %900 = vmatpush.msra.mxu0 %v617
    %901 = vmatpush.msra.mxu0 %v613
    %902 = vmatpush.msra.mxu0 %v609
    %903 = vmatmul.f32.gmra.mxu0 %v841
    %v904 = vpop.f32.mrf.mxu0
    %v905 = vadd.f32 0.0, %v904
    %906 = vdwg.mxu0
    %907 = vmatpush.msra.mxu0 %v670
    %908 = vmatpush.msra.mxu0 %v666
    %909 = vmatpush.msra.mxu0 %v662
    %910 = vmatpush.msra.mxu0 %v658
    %911 = vmatpush.msra.mxu0 %v654
    %912 = vmatpush.msra.mxu0 %v650
    %913 = vmatpush.msra.mxu0 %v646
    %914 = vmatpush.msra.mxu0 %v642
    %915 = vmatpush.msra.mxu0 %v638
    %916 = vmatpush.msra.mxu0 %v634
    %917 = vmatpush.msra.mxu0 %v630
    %918 = vmatpush.msra.mxu0 %v626
    %919 = vmatpush.msra.mxu0 %v622
    %920 = vmatpush.msra.mxu0 %v618
    %921 = vmatpush.msra.mxu0 %v614
    %922 = vmatpush.msra.mxu0 %v610
    %923 = vmatmul.f32.gmra.mxu0 %v841
    %v924 = vpop.f32.mrf.mxu0
    %v925 = vadd.f32 0.0, %v924
    %926 = vdwg.mxu0
    %v927 = vadd.f32 %v843, %v865
    %v928 = vadd.f32 %v844, %v885
    %v929 = vadd.f32 %v845, %v905
    %v930 = vadd.f32 %v846, %v925
    %v931 = vadd.f32 %v927, %v763
    %v932 = vadd.f32 %v928, %v764
    %v933 = vadd.f32 %v929, %v765
    %v934 = vadd.f32 %v930, %v766
    %v935 = vxor.u32 %v931, 2147483648
    %v936 = vmul.f32 %v935, 1.442695
    %v937 = vpow.pop %v936
    %v938 = vadd.f32 %v937, 1.0
    %v939 = vrcp.pop %v938
    %v940 = vmul.f32 %v938, %v939
    %v941 = vsub.f32 1.0, %v940
    %v942 = vmul.f32 %v939, %v941
    %v943 = vadd.f32 %v939, %v942
    %vm944 = vweird.f32 %v938
    %vm945 = vweird.f32 %v939
    %vm946 = vmor %vm944, %vm945
    %v947 = vsel %vm946, %v939, %v943
    %v948 = vand.u32 2147483647, %v938
    %vm949 = vcmp.eq.f32.partialorder %v948, 8.507059e+37
    %v950 = vand.u32 %v938, 2147483648
    %v951 = vor.u32 1.1754944e-38, %v950
    %v952 = vsel %vm949, %v951, %v947
    %v953 = vmul.f32 1.0, %v952
    %v954 = vxor.u32 %v932, 2147483648
    %v955 = vmul.f32 %v954, 1.442695
    %v956 = vpow.pop %v955
    %v957 = vadd.f32 %v956, 1.0
    %v958 = vrcp.pop %v957
    %v959 = vmul.f32 %v957, %v958
    %v960 = vsub.f32 1.0, %v959
    %v961 = vmul.f32 %v958, %v960
    %v962 = vadd.f32 %v958, %v961
    %vm963 = vweird.f32 %v957
    %vm964 = vweird.f32 %v958
    %vm965 = vmor %vm963, %vm964
    %v966 = vsel %vm965, %v958, %v962
    %v967 = vand.u32 2147483647, %v957
    %vm968 = vcmp.eq.f32.partialorder %v967, 8.507059e+37
    %v969 = vand.u32 %v957, 2147483648
    %v970 = vor.u32 1.1754944e-38, %v969
    %v971 = vsel %vm968, %v970, %v966
    %v972 = vmul.f32 1.0, %v971
    %v973 = vtanh.pop %v933
    %v974 = vxor.u32 %v934, 2147483648
    %v975 = vmul.f32 %v974, 1.442695
    %v976 = vpow.pop %v975
    %v977 = vadd.f32 %v976, 1.0
    %v978 = vrcp.pop %v977
    %v979 = vmul.f32 %v977, %v978
    %v980 = vsub.f32 1.0, %v979
    %v981 = vmul.f32 %v978, %v980
    %v982 = vadd.f32 %v978, %v981
    %vm983 = vweird.f32 %v977
    %vm984 = vweird.f32 %v978
    %vm985 = vmor %vm983, %vm984
    %v986 = vsel %vm985, %v978, %v982
    %v987 = vand.u32 2147483647, %v977
    %vm988 = vcmp.eq.f32.partialorder %v987, 8.507059e+37
    %v989 = vand.u32 %v977, 2147483648
    %v990 = vor.u32 1.1754944e-38, %v989
    %v991 = vsel %vm988, %v990, %v986
    %v992 = vmul.f32 1.0, %v991
    %v993 = vmul.f32 %v972, %v842
    %v994 = vmul.f32 %v953, %v973
    %v995 = vadd.f32 %v993, %v994
    %v996 = vtanh.pop %v995
    %v997 = vmul.f32 %v992, %v996
    %998 = vst [vmem:[#allocation4] sm:$0xff] %v997
    %999 = vst [vmem:[#allocation5] sm:$0xff] %v995
    %s1000 = scalar_lea.vmem [#allocation2], 8
    %1001 = vst [vmem:[%s1000] sm:$0xff] %v997
    %v1002 = vld [vmem:[#allocation4] sm:$0xff]
    %v1003 = vld [vmem:[#allocation5] sm:$0xff]
    %v1004 = vld [vmem:[%s271] sm:$0xff]
    %v1005 = vld [vmem:[%s271 + $0x8] sm:$0xff]
    %v1006 = vld [vmem:[%s271 + $0x10] sm:$0xff]
    %v1007 = vld [vmem:[%s271 + $0x18] sm:$0xff]
    %1008 = vmatpush.msra.mxu0 %v667
    %1009 = vmatpush.msra.mxu0 %v663
    %1010 = vmatpush.msra.mxu0 %v659
    %1011 = vmatpush.msra.mxu0 %v655
    %1012 = vmatpush.msra.mxu0 %v651
    %1013 = vmatpush.msra.mxu0 %v647
    %1014 = vmatpush.msra.mxu0 %v643
    %1015 = vmatpush.msra.mxu0 %v639
    %1016 = vmatpush.msra.mxu0 %v635
    %1017 = vmatpush.msra.mxu0 %v631
    %1018 = vmatpush.msra.mxu0 %v627
    %1019 = vmatpush.msra.mxu0 %v623
    %1020 = vmatpush.msra.mxu0 %v619
    %1021 = vmatpush.msra.mxu0 %v615
    %1022 = vmatpush.msra.mxu0 %v611
    %1023 = vmatpush.msra.mxu0 %v607
    %1024 = vmatmul.f32.gmra.mxu0 %v1002
    %v1025 = vpop.f32.mrf.mxu0
    %v1026 = vadd.f32 0.0, %v1025
    %1027 = vdwg.mxu0
    %1028 = vmatpush.msra.mxu0 %v668
    %1029 = vmatpush.msra.mxu0 %v664
    %1030 = vmatpush.msra.mxu0 %v660
    %1031 = vmatpush.msra.mxu0 %v656
    %1032 = vmatpush.msra.mxu0 %v652
    %1033 = vmatpush.msra.mxu0 %v648
    %1034 = vmatpush.msra.mxu0 %v644
    %1035 = vmatpush.msra.mxu0 %v640
    %1036 = vmatpush.msra.mxu0 %v636
    %1037 = vmatpush.msra.mxu0 %v632
    %1038 = vmatpush.msra.mxu0 %v628
    %1039 = vmatpush.msra.mxu0 %v624
    %1040 = vmatpush.msra.mxu0 %v620
    %1041 = vmatpush.msra.mxu0 %v616
    %1042 = vmatpush.msra.mxu0 %v612
    %1043 = vmatpush.msra.mxu0 %v608
    %1044 = vmatmul.f32.gmra.mxu0 %v1002
    %v1045 = vpop.f32.mrf.mxu0
    %v1046 = vadd.f32 0.0, %v1045
    %1047 = vdwg.mxu0
    %1048 = vmatpush.msra.mxu0 %v669
    %1049 = vmatpush.msra.mxu0 %v665
    %1050 = vmatpush.msra.mxu0 %v661
    %1051 = vmatpush.msra.mxu0 %v657
    %1052 = vmatpush.msra.mxu0 %v653
    %1053 = vmatpush.msra.mxu0 %v649
    %1054 = vmatpush.msra.mxu0 %v645
    %1055 = vmatpush.msra.mxu0 %v641
    %1056 = vmatpush.msra.mxu0 %v637
    %1057 = vmatpush.msra.mxu0 %v633
    %1058 = vmatpush.msra.mxu0 %v629
    %1059 = vmatpush.msra.mxu0 %v625
    %1060 = vmatpush.msra.mxu0 %v621
    %1061 = vmatpush.msra.mxu0 %v617
    %1062 = vmatpush.msra.mxu0 %v613
    %1063 = vmatpush.msra.mxu0 %v609
    %1064 = vmatmul.f32.gmra.mxu0 %v1002
    %v1065 = vpop.f32.mrf.mxu0
    %v1066 = vadd.f32 0.0, %v1065
    %1067 = vdwg.mxu0
    %1068 = vmatpush.msra.mxu0 %v670
    %1069 = vmatpush.msra.mxu0 %v666
    %1070 = vmatpush.msra.mxu0 %v662
    %1071 = vmatpush.msra.mxu0 %v658
    %1072 = vmatpush.msra.mxu0 %v654
    %1073 = vmatpush.msra.mxu0 %v650
    %1074 = vmatpush.msra.mxu0 %v646
    %1075 = vmatpush.msra.mxu0 %v642
    %1076 = vmatpush.msra.mxu0 %v638
    %1077 = vmatpush.msra.mxu0 %v634
    %1078 = vmatpush.msra.mxu0 %v630
    %1079 = vmatpush.msra.mxu0 %v626
    %1080 = vmatpush.msra.mxu0 %v622
    %1081 = vmatpush.msra.mxu0 %v618
    %1082 = vmatpush.msra.mxu0 %v614
    %1083 = vmatpush.msra.mxu0 %v610
    %1084 = vmatmul.f32.gmra.mxu0 %v1002
    %v1085 = vpop.f32.mrf.mxu0
    %v1086 = vadd.f32 0.0, %v1085
    %1087 = vdwg.mxu0
    %v1088 = vadd.f32 %v1004, %v1026
    %v1089 = vadd.f32 %v1005, %v1046
    %v1090 = vadd.f32 %v1006, %v1066
    %v1091 = vadd.f32 %v1007, %v1086
    %v1092 = vadd.f32 %v1088, %v763
    %v1093 = vadd.f32 %v1089, %v764
    %v1094 = vadd.f32 %v1090, %v765
    %v1095 = vadd.f32 %v1091, %v766
    %v1096 = vxor.u32 %v1092, 2147483648
    %v1097 = vmul.f32 %v1096, 1.442695
    %v1098 = vpow.pop %v1097
    %v1099 = vadd.f32 %v1098, 1.0
    %v1100 = vrcp.pop %v1099
    %v1101 = vmul.f32 %v1099, %v1100
    %v1102 = vsub.f32 1.0, %v1101
    %v1103 = vmul.f32 %v1100, %v1102
    %v1104 = vadd.f32 %v1100, %v1103
    %vm1105 = vweird.f32 %v1099
    %vm1106 = vweird.f32 %v1100
    %vm1107 = vmor %vm1105, %vm1106
    %v1108 = vsel %vm1107, %v1100, %v1104
    %v1109 = vand.u32 2147483647, %v1099
    %vm1110 = vcmp.eq.f32.partialorder %v1109, 8.507059e+37
    %v1111 = vand.u32 %v1099, 2147483648
    %v1112 = vor.u32 1.1754944e-38, %v1111
    %v1113 = vsel %vm1110, %v1112, %v1108
    %v1114 = vmul.f32 1.0, %v1113
    %v1115 = vxor.u32 %v1093, 2147483648
    %v1116 = vmul.f32 %v1115, 1.442695
    %v1117 = vpow.pop %v1116
    %v1118 = vadd.f32 %v1117, 1.0
    %v1119 = vrcp.pop %v1118
    %v1120 = vmul.f32 %v1118, %v1119
    %v1121 = vsub.f32 1.0, %v1120
    %v1122 = vmul.f32 %v1119, %v1121
    %v1123 = vadd.f32 %v1119, %v1122
    %vm1124 = vweird.f32 %v1118
    %vm1125 = vweird.f32 %v1119
    %vm1126 = vmor %vm1124, %vm1125
    %v1127 = vsel %vm1126, %v1119, %v1123
    %v1128 = vand.u32 2147483647, %v1118
    %vm1129 = vcmp.eq.f32.partialorder %v1128, 8.507059e+37
    %v1130 = vand.u32 %v1118, 2147483648
    %v1131 = vor.u32 1.1754944e-38, %v1130
    %v1132 = vsel %vm1129, %v1131, %v1127
    %v1133 = vmul.f32 1.0, %v1132
    %v1134 = vtanh.pop %v1094
    %v1135 = vxor.u32 %v1095, 2147483648
    %v1136 = vmul.f32 %v1135, 1.442695
    %v1137 = vpow.pop %v1136
    %v1138 = vadd.f32 %v1137, 1.0
    %v1139 = vrcp.pop %v1138
    %v1140 = vmul.f32 %v1138, %v1139
    %v1141 = vsub.f32 1.0, %v1140
    %v1142 = vmul.f32 %v1139, %v1141
    %v1143 = vadd.f32 %v1139, %v1142
    %vm1144 = vweird.f32 %v1138
    %vm1145 = vweird.f32 %v1139
    %vm1146 = vmor %vm1144, %vm1145
    %v1147 = vsel %vm1146, %v1139, %v1143
    %v1148 = vand.u32 2147483647, %v1138
    %vm1149 = vcmp.eq.f32.partialorder %v1148, 8.507059e+37
    %v1150 = vand.u32 %v1138, 2147483648
    %v1151 = vor.u32 1.1754944e-38, %v1150
    %v1152 = vsel %vm1149, %v1151, %v1147
    %v1153 = vmul.f32 1.0, %v1152
    %v1154 = vmul.f32 %v1133, %v1003
    %v1155 = vmul.f32 %v1114, %v1134
    %v1156 = vadd.f32 %v1154, %v1155
    %v1157 = vtanh.pop %v1156
    %v1158 = vmul.f32 %v1153, %v1157
    %1159 = vst [vmem:[#allocation4] sm:$0xff] %v1158
    %1160 = vst [vmem:[#allocation5] sm:$0xff] %v1156
    %s1161 = scalar_lea.vmem [#allocation2], 16
    %1162 = vst [vmem:[%s1161] sm:$0xff] %v1158
    %v1163 = vld [vmem:[#allocation4] sm:$0xff]
    %v1164 = vld [vmem:[#allocation5] sm:$0xff]
    %v1165 = vld [vmem:[%s327] sm:$0xff]
    %v1166 = vld [vmem:[%s327 + $0x8] sm:$0xff]
    %v1167 = vld [vmem:[%s327 + $0x10] sm:$0xff]
    %v1168 = vld [vmem:[%s327 + $0x18] sm:$0xff]
    %1169 = vmatpush.msra.mxu0 %v667
    %1170 = vmatpush.msra.mxu0 %v663
    %1171 = vmatpush.msra.mxu0 %v659
    %1172 = vmatpush.msra.mxu0 %v655
    %1173 = vmatpush.msra.mxu0 %v651
    %1174 = vmatpush.msra.mxu0 %v647
    %1175 = vmatpush.msra.mxu0 %v643
    %1176 = vmatpush.msra.mxu0 %v639
    %1177 = vmatpush.msra.mxu0 %v635
    %1178 = vmatpush.msra.mxu0 %v631
    %1179 = vmatpush.msra.mxu0 %v627
    %1180 = vmatpush.msra.mxu0 %v623
    %1181 = vmatpush.msra.mxu0 %v619
    %1182 = vmatpush.msra.mxu0 %v615
    %1183 = vmatpush.msra.mxu0 %v611
    %1184 = vmatpush.msra.mxu0 %v607
    %1185 = vmatmul.f32.gmra.mxu0 %v1163
    %v1186 = vpop.f32.mrf.mxu0
    %v1187 = vadd.f32 0.0, %v1186
    %1188 = vdwg.mxu0
    %1189 = vmatpush.msra.mxu0 %v668
    %1190 = vmatpush.msra.mxu0 %v664
    %1191 = vmatpush.msra.mxu0 %v660
    %1192 = vmatpush.msra.mxu0 %v656
    %1193 = vmatpush.msra.mxu0 %v652
    %1194 = vmatpush.msra.mxu0 %v648
    %1195 = vmatpush.msra.mxu0 %v644
    %1196 = vmatpush.msra.mxu0 %v640
    %1197 = vmatpush.msra.mxu0 %v636
    %1198 = vmatpush.msra.mxu0 %v632
    %1199 = vmatpush.msra.mxu0 %v628
    %1200 = vmatpush.msra.mxu0 %v624
    %1201 = vmatpush.msra.mxu0 %v620
    %1202 = vmatpush.msra.mxu0 %v616
    %1203 = vmatpush.msra.mxu0 %v612
    %1204 = vmatpush.msra.mxu0 %v608
    %1205 = vmatmul.f32.gmra.mxu0 %v1163
    %v1206 = vpop.f32.mrf.mxu0
    %v1207 = vadd.f32 0.0, %v1206
    %1208 = vdwg.mxu0
    %1209 = vmatpush.msra.mxu0 %v669
    %1210 = vmatpush.msra.mxu0 %v665
    %1211 = vmatpush.msra.mxu0 %v661
    %1212 = vmatpush.msra.mxu0 %v657
    %1213 = vmatpush.msra.mxu0 %v653
    %1214 = vmatpush.msra.mxu0 %v649
    %1215 = vmatpush.msra.mxu0 %v645
    %1216 = vmatpush.msra.mxu0 %v641
    %1217 = vmatpush.msra.mxu0 %v637
    %1218 = vmatpush.msra.mxu0 %v633
    %1219 = vmatpush.msra.mxu0 %v629
    %1220 = vmatpush.msra.mxu0 %v625
    %1221 = vmatpush.msra.mxu0 %v621
    %1222 = vmatpush.msra.mxu0 %v617
    %1223 = vmatpush.msra.mxu0 %v613
    %1224 = vmatpush.msra.mxu0 %v609
    %1225 = vmatmul.f32.gmra.mxu0 %v1163
    %v1226 = vpop.f32.mrf.mxu0
    %v1227 = vadd.f32 0.0, %v1226
    %1228 = vdwg.mxu0
    %1229 = vmatpush.msra.mxu0 %v670
    %1230 = vmatpush.msra.mxu0 %v666
    %1231 = vmatpush.msra.mxu0 %v662
    %1232 = vmatpush.msra.mxu0 %v658
    %1233 = vmatpush.msra.mxu0 %v654
    %1234 = vmatpush.msra.mxu0 %v650
    %1235 = vmatpush.msra.mxu0 %v646
    %1236 = vmatpush.msra.mxu0 %v642
    %1237 = vmatpush.msra.mxu0 %v638
    %1238 = vmatpush.msra.mxu0 %v634
    %1239 = vmatpush.msra.mxu0 %v630
    %1240 = vmatpush.msra.mxu0 %v626
    %1241 = vmatpush.msra.mxu0 %v622
    %1242 = vmatpush.msra.mxu0 %v618
    %1243 = vmatpush.msra.mxu0 %v614
    %1244 = vmatpush.msra.mxu0 %v610
    %1245 = vmatmul.f32.gmra.mxu0 %v1163
    %v1246 = vpop.f32.mrf.mxu0
    %v1247 = vadd.f32 0.0, %v1246
    %1248 = vdwg.mxu0
    %v1249 = vadd.f32 %v1165, %v1187
    %v1250 = vadd.f32 %v1166, %v1207
    %v1251 = vadd.f32 %v1167, %v1227
    %v1252 = vadd.f32 %v1168, %v1247
    %v1253 = vadd.f32 %v1249, %v763
    %v1254 = vadd.f32 %v1250, %v764
    %v1255 = vadd.f32 %v1251, %v765
    %v1256 = vadd.f32 %v1252, %v766
    %v1257 = vxor.u32 %v1253, 2147483648
    %v1258 = vmul.f32 %v1257, 1.442695
    %v1259 = vpow.pop %v1258
    %v1260 = vadd.f32 %v1259, 1.0
    %v1261 = vrcp.pop %v1260
    %v1262 = vmul.f32 %v1260, %v1261
    %v1263 = vsub.f32 1.0, %v1262
    %v1264 = vmul.f32 %v1261, %v1263
    %v1265 = vadd.f32 %v1261, %v1264
    %vm1266 = vweird.f32 %v1260
    %vm1267 = vweird.f32 %v1261
    %vm1268 = vmor %vm1266, %vm1267
    %v1269 = vsel %vm1268, %v1261, %v1265
    %v1270 = vand.u32 2147483647, %v1260
    %vm1271 = vcmp.eq.f32.partialorder %v1270, 8.507059e+37
    %v1272 = vand.u32 %v1260, 2147483648
    %v1273 = vor.u32 1.1754944e-38, %v1272
    %v1274 = vsel %vm1271, %v1273, %v1269
    %v1275 = vmul.f32 1.0, %v1274
    %v1276 = vxor.u32 %v1254, 2147483648
    %v1277 = vmul.f32 %v1276, 1.442695
    %v1278 = vpow.pop %v1277
    %v1279 = vadd.f32 %v1278, 1.0
    %v1280 = vrcp.pop %v1279
    %v1281 = vmul.f32 %v1279, %v1280
    %v1282 = vsub.f32 1.0, %v1281
    %v1283 = vmul.f32 %v1280, %v1282
    %v1284 = vadd.f32 %v1280, %v1283
    %vm1285 = vweird.f32 %v1279
    %vm1286 = vweird.f32 %v1280
    %vm1287 = vmor %vm1285, %vm1286
    %v1288 = vsel %vm1287, %v1280, %v1284
    %v1289 = vand.u32 2147483647, %v1279
    %vm1290 = vcmp.eq.f32.partialorder %v1289, 8.507059e+37
    %v1291 = vand.u32 %v1279, 2147483648
    %v1292 = vor.u32 1.1754944e-38, %v1291
    %v1293 = vsel %vm1290, %v1292, %v1288
    %v1294 = vmul.f32 1.0, %v1293
    %v1295 = vtanh.pop %v1255
    %v1296 = vxor.u32 %v1256, 2147483648
    %v1297 = vmul.f32 %v1296, 1.442695
    %v1298 = vpow.pop %v1297
    %v1299 = vadd.f32 %v1298, 1.0
    %v1300 = vrcp.pop %v1299
    %v1301 = vmul.f32 %v1299, %v1300
    %v1302 = vsub.f32 1.0, %v1301
    %v1303 = vmul.f32 %v1300, %v1302
    %v1304 = vadd.f32 %v1300, %v1303
    %vm1305 = vweird.f32 %v1299
    %vm1306 = vweird.f32 %v1300
    %vm1307 = vmor %vm1305, %vm1306
    %v1308 = vsel %vm1307, %v1300, %v1304
    %v1309 = vand.u32 2147483647, %v1299
    %vm1310 = vcmp.eq.f32.partialorder %v1309, 8.507059e+37
    %v1311 = vand.u32 %v1299, 2147483648
    %v1312 = vor.u32 1.1754944e-38, %v1311
    %v1313 = vsel %vm1310, %v1312, %v1308
    %v1314 = vmul.f32 1.0, %v1313
    %v1315 = vmul.f32 %v1294, %v1164
    %v1316 = vmul.f32 %v1275, %v1295
    %v1317 = vadd.f32 %v1315, %v1316
    %v1318 = vtanh.pop %v1317
    %v1319 = vmul.f32 %v1314, %v1318
    %1320 = vst [vmem:[#allocation4] sm:$0xff] %v1319
    %1321 = vst [vmem:[#allocation5] sm:$0xff] %v1317
    %s1322 = scalar_lea.vmem [#allocation2], 24
    %1323 = vst [vmem:[%s1322] sm:$0xff] %v1319
    %v1324 = vld [vmem:[#allocation4] sm:$0xff]
    %v1325 = vld [vmem:[#allocation5] sm:$0xff]
    %v1326 = vld [vmem:[%s383] sm:$0xff]
    %v1327 = vld [vmem:[%s383 + $0x8] sm:$0xff]
    %v1328 = vld [vmem:[%s383 + $0x10] sm:$0xff]
    %v1329 = vld [vmem:[%s383 + $0x18] sm:$0xff]
    %1330 = vmatpush.msra.mxu0 %v667
    %1331 = vmatpush.msra.mxu0 %v663
    %1332 = vmatpush.msra.mxu0 %v659
    %1333 = vmatpush.msra.mxu0 %v655
    %1334 = vmatpush.msra.mxu0 %v651
    %1335 = vmatpush.msra.mxu0 %v647
    %1336 = vmatpush.msra.mxu0 %v643
    %1337 = vmatpush.msra.mxu0 %v639
    %1338 = vmatpush.msra.mxu0 %v635
    %1339 = vmatpush.msra.mxu0 %v631
    %1340 = vmatpush.msra.mxu0 %v627
    %1341 = vmatpush.msra.mxu0 %v623
    %1342 = vmatpush.msra.mxu0 %v619
    %1343 = vmatpush.msra.mxu0 %v615
    %1344 = vmatpush.msra.mxu0 %v611
    %1345 = vmatpush.msra.mxu0 %v607
    %1346 = vmatmul.f32.gmra.mxu0 %v1324
    %v1347 = vpop.f32.mrf.mxu0
    %v1348 = vadd.f32 0.0, %v1347
    %1349 = vdwg.mxu0
    %1350 = vmatpush.msra.mxu0 %v668
    %1351 = vmatpush.msra.mxu0 %v664
    %1352 = vmatpush.msra.mxu0 %v660
    %1353 = vmatpush.msra.mxu0 %v656
    %1354 = vmatpush.msra.mxu0 %v652
    %1355 = vmatpush.msra.mxu0 %v648
    %1356 = vmatpush.msra.mxu0 %v644
    %1357 = vmatpush.msra.mxu0 %v640
    %1358 = vmatpush.msra.mxu0 %v636
    %1359 = vmatpush.msra.mxu0 %v632
    %1360 = vmatpush.msra.mxu0 %v628
    %1361 = vmatpush.msra.mxu0 %v624
    %1362 = vmatpush.msra.mxu0 %v620
    %1363 = vmatpush.msra.mxu0 %v616
    %1364 = vmatpush.msra.mxu0 %v612
    %1365 = vmatpush.msra.mxu0 %v608
    %1366 = vmatmul.f32.gmra.mxu0 %v1324
    %v1367 = vpop.f32.mrf.mxu0
    %v1368 = vadd.f32 0.0, %v1367
    %1369 = vdwg.mxu0
    %1370 = vmatpush.msra.mxu0 %v669
    %1371 = vmatpush.msra.mxu0 %v665
    %1372 = vmatpush.msra.mxu0 %v661
    %1373 = vmatpush.msra.mxu0 %v657
    %1374 = vmatpush.msra.mxu0 %v653
    %1375 = vmatpush.msra.mxu0 %v649
    %1376 = vmatpush.msra.mxu0 %v645
    %1377 = vmatpush.msra.mxu0 %v641
    %1378 = vmatpush.msra.mxu0 %v637
    %1379 = vmatpush.msra.mxu0 %v633
    %1380 = vmatpush.msra.mxu0 %v629
    %1381 = vmatpush.msra.mxu0 %v625
    %1382 = vmatpush.msra.mxu0 %v621
    %1383 = vmatpush.msra.mxu0 %v617
    %1384 = vmatpush.msra.mxu0 %v613
    %1385 = vmatpush.msra.mxu0 %v609
    %1386 = vmatmul.f32.gmra.mxu0 %v1324
    %v1387 = vpop.f32.mrf.mxu0
    %v1388 = vadd.f32 0.0, %v1387
    %1389 = vdwg.mxu0
    %1390 = vmatpush.msra.mxu0 %v670
    %1391 = vmatpush.msra.mxu0 %v666
    %1392 = vmatpush.msra.mxu0 %v662
    %1393 = vmatpush.msra.mxu0 %v658
    %1394 = vmatpush.msra.mxu0 %v654
    %1395 = vmatpush.msra.mxu0 %v650
    %1396 = vmatpush.msra.mxu0 %v646
    %1397 = vmatpush.msra.mxu0 %v642
    %1398 = vmatpush.msra.mxu0 %v638
    %1399 = vmatpush.msra.mxu0 %v634
    %1400 = vmatpush.msra.mxu0 %v630
    %1401 = vmatpush.msra.mxu0 %v626
    %1402 = vmatpush.msra.mxu0 %v622
    %1403 = vmatpush.msra.mxu0 %v618
    %1404 = vmatpush.msra.mxu0 %v614
    %1405 = vmatpush.msra.mxu0 %v610
    %1406 = vmatmul.f32.gmra.mxu0 %v1324
    %v1407 = vpop.f32.mrf.mxu0
    %v1408 = vadd.f32 0.0, %v1407
    %1409 = vdwg.mxu0
    %v1410 = vadd.f32 %v1326, %v1348
    %v1411 = vadd.f32 %v1327, %v1368
    %v1412 = vadd.f32 %v1328, %v1388
    %v1413 = vadd.f32 %v1329, %v1408
    %v1414 = vadd.f32 %v1410, %v763
    %v1415 = vadd.f32 %v1411, %v764
    %v1416 = vadd.f32 %v1412, %v765
    %v1417 = vadd.f32 %v1413, %v766
    %v1418 = vxor.u32 %v1414, 2147483648
    %v1419 = vmul.f32 %v1418, 1.442695
    %v1420 = vpow.pop %v1419
    %v1421 = vadd.f32 %v1420, 1.0
    %v1422 = vrcp.pop %v1421
    %v1423 = vmul.f32 %v1421, %v1422
    %v1424 = vsub.f32 1.0, %v1423
    %v1425 = vmul.f32 %v1422, %v1424
    %v1426 = vadd.f32 %v1422, %v1425
    %vm1427 = vweird.f32 %v1421
    %vm1428 = vweird.f32 %v1422
    %vm1429 = vmor %vm1427, %vm1428
    %v1430 = vsel %vm1429, %v1422, %v1426
    %v1431 = vand.u32 2147483647, %v1421
    %vm1432 = vcmp.eq.f32.partialorder %v1431, 8.507059e+37
    %v1433 = vand.u32 %v1421, 2147483648
    %v1434 = vor.u32 1.1754944e-38, %v1433
    %v1435 = vsel %vm1432, %v1434, %v1430
    %v1436 = vmul.f32 1.0, %v1435
    %v1437 = vxor.u32 %v1415, 2147483648
    %v1438 = vmul.f32 %v1437, 1.442695
    %v1439 = vpow.pop %v1438
    %v1440 = vadd.f32 %v1439, 1.0
    %v1441 = vrcp.pop %v1440
    %v1442 = vmul.f32 %v1440, %v1441
    %v1443 = vsub.f32 1.0, %v1442
    %v1444 = vmul.f32 %v1441, %v1443
    %v1445 = vadd.f32 %v1441, %v1444
    %vm1446 = vweird.f32 %v1440
    %vm1447 = vweird.f32 %v1441
    %vm1448 = vmor %vm1446, %vm1447
    %v1449 = vsel %vm1448, %v1441, %v1445
    %v1450 = vand.u32 2147483647, %v1440
    %vm1451 = vcmp.eq.f32.partialorder %v1450, 8.507059e+37
    %v1452 = vand.u32 %v1440, 2147483648
    %v1453 = vor.u32 1.1754944e-38, %v1452
    %v1454 = vsel %vm1451, %v1453, %v1449
    %v1455 = vmul.f32 1.0, %v1454
    %v1456 = vtanh.pop %v1416
    %v1457 = vxor.u32 %v1417, 2147483648
    %v1458 = vmul.f32 %v1457, 1.442695
    %v1459 = vpow.pop %v1458
    %v1460 = vadd.f32 %v1459, 1.0
    %v1461 = vrcp.pop %v1460
    %v1462 = vmul.f32 %v1460, %v1461
    %v1463 = vsub.f32 1.0, %v1462
    %v1464 = vmul.f32 %v1461, %v1463
    %v1465 = vadd.f32 %v1461, %v1464
    %vm1466 = vweird.f32 %v1460
    %vm1467 = vweird.f32 %v1461
    %vm1468 = vmor %vm1466, %vm1467
    %v1469 = vsel %vm1468, %v1461, %v1465
    %v1470 = vand.u32 2147483647, %v1460
    %vm1471 = vcmp.eq.f32.partialorder %v1470, 8.507059e+37
    %v1472 = vand.u32 %v1460, 2147483648
    %v1473 = vor.u32 1.1754944e-38, %v1472
    %v1474 = vsel %vm1471, %v1473, %v1469
    %v1475 = vmul.f32 1.0, %v1474
    %v1476 = vmul.f32 %v1455, %v1325
    %v1477 = vmul.f32 %v1436, %v1456
    %v1478 = vadd.f32 %v1476, %v1477
    %v1479 = vtanh.pop %v1478
    %v1480 = vmul.f32 %v1475, %v1479
    %1481 = vst [vmem:[#allocation4] sm:$0xff] %v1480
    %1482 = vst [vmem:[#allocation5] sm:$0xff] %v1478
    %s1483 = scalar_lea.vmem [#allocation2], 32
    %1484 = vst [vmem:[%s1483] sm:$0xff] %v1480
    %v1485 = vld [vmem:[#allocation4] sm:$0xff]
    %v1486 = vld [vmem:[#allocation5] sm:$0xff]
    %v1487 = vld [vmem:[%s439] sm:$0xff]
    %v1488 = vld [vmem:[%s439 + $0x8] sm:$0xff]
    %v1489 = vld [vmem:[%s439 + $0x10] sm:$0xff]
    %v1490 = vld [vmem:[%s439 + $0x18] sm:$0xff]
    %1491 = vmatpush.msra.mxu0 %v667
    %1492 = vmatpush.msra.mxu0 %v663
    %1493 = vmatpush.msra.mxu0 %v659
    %1494 = vmatpush.msra.mxu0 %v655
    %1495 = vmatpush.msra.mxu0 %v651
    %1496 = vmatpush.msra.mxu0 %v647
    %1497 = vmatpush.msra.mxu0 %v643
    %1498 = vmatpush.msra.mxu0 %v639
    %1499 = vmatpush.msra.mxu0 %v635
    %1500 = vmatpush.msra.mxu0 %v631
    %1501 = vmatpush.msra.mxu0 %v627
    %1502 = vmatpush.msra.mxu0 %v623
    %1503 = vmatpush.msra.mxu0 %v619
    %1504 = vmatpush.msra.mxu0 %v615
    %1505 = vmatpush.msra.mxu0 %v611
    %1506 = vmatpush.msra.mxu0 %v607
    %1507 = vmatmul.f32.gmra.mxu0 %v1485
    %v1508 = vpop.f32.mrf.mxu0
    %v1509 = vadd.f32 0.0, %v1508
    %1510 = vdwg.mxu0
    %1511 = vmatpush.msra.mxu0 %v668
    %1512 = vmatpush.msra.mxu0 %v664
    %1513 = vmatpush.msra.mxu0 %v660
    %1514 = vmatpush.msra.mxu0 %v656
    %1515 = vmatpush.msra.mxu0 %v652
    %1516 = vmatpush.msra.mxu0 %v648
    %1517 = vmatpush.msra.mxu0 %v644
    %1518 = vmatpush.msra.mxu0 %v640
    %1519 = vmatpush.msra.mxu0 %v636
    %1520 = vmatpush.msra.mxu0 %v632
    %1521 = vmatpush.msra.mxu0 %v628
    %1522 = vmatpush.msra.mxu0 %v624
    %1523 = vmatpush.msra.mxu0 %v620
    %1524 = vmatpush.msra.mxu0 %v616
    %1525 = vmatpush.msra.mxu0 %v612
    %1526 = vmatpush.msra.mxu0 %v608
    %1527 = vmatmul.f32.gmra.mxu0 %v1485
    %v1528 = vpop.f32.mrf.mxu0
    %v1529 = vadd.f32 0.0, %v1528
    %1530 = vdwg.mxu0
    %1531 = vmatpush.msra.mxu0 %v669
    %1532 = vmatpush.msra.mxu0 %v665
    %1533 = vmatpush.msra.mxu0 %v661
    %1534 = vmatpush.msra.mxu0 %v657
    %1535 = vmatpush.msra.mxu0 %v653
    %1536 = vmatpush.msra.mxu0 %v649
    %1537 = vmatpush.msra.mxu0 %v645
    %1538 = vmatpush.msra.mxu0 %v641
    %1539 = vmatpush.msra.mxu0 %v637
    %1540 = vmatpush.msra.mxu0 %v633
    %1541 = vmatpush.msra.mxu0 %v629
    %1542 = vmatpush.msra.mxu0 %v625
    %1543 = vmatpush.msra.mxu0 %v621
    %1544 = vmatpush.msra.mxu0 %v617
    %1545 = vmatpush.msra.mxu0 %v613
    %1546 = vmatpush.msra.mxu0 %v609
    %1547 = vmatmul.f32.gmra.mxu0 %v1485
    %v1548 = vpop.f32.mrf.mxu0
    %v1549 = vadd.f32 0.0, %v1548
    %1550 = vdwg.mxu0
    %1551 = vmatpush.msra.mxu0 %v670
    %1552 = vmatpush.msra.mxu0 %v666
    %1553 = vmatpush.msra.mxu0 %v662
    %1554 = vmatpush.msra.mxu0 %v658
    %1555 = vmatpush.msra.mxu0 %v654
    %1556 = vmatpush.msra.mxu0 %v650
    %1557 = vmatpush.msra.mxu0 %v646
    %1558 = vmatpush.msra.mxu0 %v642
    %1559 = vmatpush.msra.mxu0 %v638
    %1560 = vmatpush.msra.mxu0 %v634
    %1561 = vmatpush.msra.mxu0 %v630
    %1562 = vmatpush.msra.mxu0 %v626
    %1563 = vmatpush.msra.mxu0 %v622
    %1564 = vmatpush.msra.mxu0 %v618
    %1565 = vmatpush.msra.mxu0 %v614
    %1566 = vmatpush.msra.mxu0 %v610
    %1567 = vmatmul.f32.gmra.mxu0 %v1485
    %v1568 = vpop.f32.mrf.mxu0
    %v1569 = vadd.f32 0.0, %v1568
    %1570 = vdwg.mxu0
    %v1571 = vadd.f32 %v1487, %v1509
    %v1572 = vadd.f32 %v1488, %v1529
    %v1573 = vadd.f32 %v1489, %v1549
    %v1574 = vadd.f32 %v1490, %v1569
    %v1575 = vadd.f32 %v1571, %v763
    %v1576 = vadd.f32 %v1572, %v764
    %v1577 = vadd.f32 %v1573, %v765
    %v1578 = vadd.f32 %v1574, %v766
    %v1579 = vxor.u32 %v1575, 2147483648
    %v1580 = vmul.f32 %v1579, 1.442695
    %v1581 = vpow.pop %v1580
    %v1582 = vadd.f32 %v1581, 1.0
    %v1583 = vrcp.pop %v1582
    %v1584 = vmul.f32 %v1582, %v1583
    %v1585 = vsub.f32 1.0, %v1584
    %v1586 = vmul.f32 %v1583, %v1585
    %v1587 = vadd.f32 %v1583, %v1586
    %vm1588 = vweird.f32 %v1582
    %vm1589 = vweird.f32 %v1583
    %vm1590 = vmor %vm1588, %vm1589
    %v1591 = vsel %vm1590, %v1583, %v1587
    %v1592 = vand.u32 2147483647, %v1582
    %vm1593 = vcmp.eq.f32.partialorder %v1592, 8.507059e+37
    %v1594 = vand.u32 %v1582, 2147483648
    %v1595 = vor.u32 1.1754944e-38, %v1594
    %v1596 = vsel %vm1593, %v1595, %v1591
    %v1597 = vmul.f32 1.0, %v1596
    %v1598 = vxor.u32 %v1576, 2147483648
    %v1599 = vmul.f32 %v1598, 1.442695
    %v1600 = vpow.pop %v1599
    %v1601 = vadd.f32 %v1600, 1.0
    %v1602 = vrcp.pop %v1601
    %v1603 = vmul.f32 %v1601, %v1602
    %v1604 = vsub.f32 1.0, %v1603
    %v1605 = vmul.f32 %v1602, %v1604
    %v1606 = vadd.f32 %v1602, %v1605
    %vm1607 = vweird.f32 %v1601
    %vm1608 = vweird.f32 %v1602
    %vm1609 = vmor %vm1607, %vm1608
    %v1610 = vsel %vm1609, %v1602, %v1606
    %v1611 = vand.u32 2147483647, %v1601
    %vm1612 = vcmp.eq.f32.partialorder %v1611, 8.507059e+37
    %v1613 = vand.u32 %v1601, 2147483648
    %v1614 = vor.u32 1.1754944e-38, %v1613
    %v1615 = vsel %vm1612, %v1614, %v1610
    %v1616 = vmul.f32 1.0, %v1615
    %v1617 = vtanh.pop %v1577
    %v1618 = vxor.u32 %v1578, 2147483648
    %v1619 = vmul.f32 %v1618, 1.442695
    %v1620 = vpow.pop %v1619
    %v1621 = vadd.f32 %v1620, 1.0
    %v1622 = vrcp.pop %v1621
    %v1623 = vmul.f32 %v1621, %v1622
    %v1624 = vsub.f32 1.0, %v1623
    %v1625 = vmul.f32 %v1622, %v1624
    %v1626 = vadd.f32 %v1622, %v1625
    %vm1627 = vweird.f32 %v1621
    %vm1628 = vweird.f32 %v1622
    %vm1629 = vmor %vm1627, %vm1628
    %v1630 = vsel %vm1629, %v1622, %v1626
    %v1631 = vand.u32 2147483647, %v1621
    %vm1632 = vcmp.eq.f32.partialorder %v1631, 8.507059e+37
    %v1633 = vand.u32 %v1621, 2147483648
    %v1634 = vor.u32 1.1754944e-38, %v1633
    %v1635 = vsel %vm1632, %v1634, %v1630
    %v1636 = vmul.f32 1.0, %v1635
    %v1637 = vmul.f32 %v1616, %v1486
    %v1638 = vmul.f32 %v1597, %v1617
    %v1639 = vadd.f32 %v1637, %v1638
    %v1640 = vtanh.pop %v1639
    %v1641 = vmul.f32 %v1636, %v1640
    %1642 = vst [vmem:[#allocation4] sm:$0xff] %v1641
    %1643 = vst [vmem:[#allocation5] sm:$0xff] %v1639
    %s1644 = scalar_lea.vmem [#allocation2], 40
    %1645 = vst [vmem:[%s1644] sm:$0xff] %v1641
    %v1646 = vld [vmem:[#allocation4] sm:$0xff]
    %v1647 = vld [vmem:[#allocation5] sm:$0xff]
    %v1648 = vld [vmem:[%s495] sm:$0xff]
    %v1649 = vld [vmem:[%s495 + $0x8] sm:$0xff]
    %v1650 = vld [vmem:[%s495 + $0x10] sm:$0xff]
    %v1651 = vld [vmem:[%s495 + $0x18] sm:$0xff]
    %1652 = vmatpush.msra.mxu0 %v667
    %1653 = vmatpush.msra.mxu0 %v663
    %1654 = vmatpush.msra.mxu0 %v659
    %1655 = vmatpush.msra.mxu0 %v655
    %1656 = vmatpush.msra.mxu0 %v651
    %1657 = vmatpush.msra.mxu0 %v647
    %1658 = vmatpush.msra.mxu0 %v643
    %1659 = vmatpush.msra.mxu0 %v639
    %1660 = vmatpush.msra.mxu0 %v635
    %1661 = vmatpush.msra.mxu0 %v631
    %1662 = vmatpush.msra.mxu0 %v627
    %1663 = vmatpush.msra.mxu0 %v623
    %1664 = vmatpush.msra.mxu0 %v619
    %1665 = vmatpush.msra.mxu0 %v615
    %1666 = vmatpush.msra.mxu0 %v611
    %1667 = vmatpush.msra.mxu0 %v607
    %1668 = vmatmul.f32.gmra.mxu0 %v1646
    %v1669 = vpop.f32.mrf.mxu0
    %v1670 = vadd.f32 0.0, %v1669
    %1671 = vdwg.mxu0
    %1672 = vmatpush.msra.mxu0 %v668
    %1673 = vmatpush.msra.mxu0 %v664
    %1674 = vmatpush.msra.mxu0 %v660
    %1675 = vmatpush.msra.mxu0 %v656
    %1676 = vmatpush.msra.mxu0 %v652
    %1677 = vmatpush.msra.mxu0 %v648
    %1678 = vmatpush.msra.mxu0 %v644
    %1679 = vmatpush.msra.mxu0 %v640
    %1680 = vmatpush.msra.mxu0 %v636
    %1681 = vmatpush.msra.mxu0 %v632
    %1682 = vmatpush.msra.mxu0 %v628
    %1683 = vmatpush.msra.mxu0 %v624
    %1684 = vmatpush.msra.mxu0 %v620
    %1685 = vmatpush.msra.mxu0 %v616
    %1686 = vmatpush.msra.mxu0 %v612
    %1687 = vmatpush.msra.mxu0 %v608
    %1688 = vmatmul.f32.gmra.mxu0 %v1646
    %v1689 = vpop.f32.mrf.mxu0
    %v1690 = vadd.f32 0.0, %v1689
    %1691 = vdwg.mxu0
    %1692 = vmatpush.msra.mxu0 %v669
    %1693 = vmatpush.msra.mxu0 %v665
    %1694 = vmatpush.msra.mxu0 %v661
    %1695 = vmatpush.msra.mxu0 %v657
    %1696 = vmatpush.msra.mxu0 %v653
    %1697 = vmatpush.msra.mxu0 %v649
    %1698 = vmatpush.msra.mxu0 %v645
    %1699 = vmatpush.msra.mxu0 %v641
    %1700 = vmatpush.msra.mxu0 %v637
    %1701 = vmatpush.msra.mxu0 %v633
    %1702 = vmatpush.msra.mxu0 %v629
    %1703 = vmatpush.msra.mxu0 %v625
    %1704 = vmatpush.msra.mxu0 %v621
    %1705 = vmatpush.msra.mxu0 %v617
    %1706 = vmatpush.msra.mxu0 %v613
    %1707 = vmatpush.msra.mxu0 %v609
    %1708 = vmatmul.f32.gmra.mxu0 %v1646
    %v1709 = vpop.f32.mrf.mxu0
    %v1710 = vadd.f32 0.0, %v1709
    %1711 = vdwg.mxu0
    %1712 = vmatpush.msra.mxu0 %v670
    %1713 = vmatpush.msra.mxu0 %v666
    %1714 = vmatpush.msra.mxu0 %v662
    %1715 = vmatpush.msra.mxu0 %v658
    %1716 = vmatpush.msra.mxu0 %v654
    %1717 = vmatpush.msra.mxu0 %v650
    %1718 = vmatpush.msra.mxu0 %v646
    %1719 = vmatpush.msra.mxu0 %v642
    %1720 = vmatpush.msra.mxu0 %v638
    %1721 = vmatpush.msra.mxu0 %v634
    %1722 = vmatpush.msra.mxu0 %v630
    %1723 = vmatpush.msra.mxu0 %v626
    %1724 = vmatpush.msra.mxu0 %v622
    %1725 = vmatpush.msra.mxu0 %v618
    %1726 = vmatpush.msra.mxu0 %v614
    %1727 = vmatpush.msra.mxu0 %v610
    %1728 = vmatmul.f32.gmra.mxu0 %v1646
    %v1729 = vpop.f32.mrf.mxu0
    %v1730 = vadd.f32 0.0, %v1729
    %1731 = vdwg.mxu0
    %v1732 = vadd.f32 %v1648, %v1670
    %v1733 = vadd.f32 %v1649, %v1690
    %v1734 = vadd.f32 %v1650, %v1710
    %v1735 = vadd.f32 %v1651, %v1730
    %v1736 = vadd.f32 %v1732, %v763
    %v1737 = vadd.f32 %v1733, %v764
    %v1738 = vadd.f32 %v1734, %v765
    %v1739 = vadd.f32 %v1735, %v766
    %v1740 = vxor.u32 %v1736, 2147483648
    %v1741 = vmul.f32 %v1740, 1.442695
    %v1742 = vpow.pop %v1741
    %v1743 = vadd.f32 %v1742, 1.0
    %v1744 = vrcp.pop %v1743
    %v1745 = vmul.f32 %v1743, %v1744
    %v1746 = vsub.f32 1.0, %v1745
    %v1747 = vmul.f32 %v1744, %v1746
    %v1748 = vadd.f32 %v1744, %v1747
    %vm1749 = vweird.f32 %v1743
    %vm1750 = vweird.f32 %v1744
    %vm1751 = vmor %vm1749, %vm1750
    %v1752 = vsel %vm1751, %v1744, %v1748
    %v1753 = vand.u32 2147483647, %v1743
    %vm1754 = vcmp.eq.f32.partialorder %v1753, 8.507059e+37
    %v1755 = vand.u32 %v1743, 2147483648
    %v1756 = vor.u32 1.1754944e-38, %v1755
    %v1757 = vsel %vm1754, %v1756, %v1752
    %v1758 = vmul.f32 1.0, %v1757
    %v1759 = vxor.u32 %v1737, 2147483648
    %v1760 = vmul.f32 %v1759, 1.442695
    %v1761 = vpow.pop %v1760
    %v1762 = vadd.f32 %v1761, 1.0
    %v1763 = vrcp.pop %v1762
    %v1764 = vmul.f32 %v1762, %v1763
    %v1765 = vsub.f32 1.0, %v1764
    %v1766 = vmul.f32 %v1763, %v1765
    %v1767 = vadd.f32 %v1763, %v1766
    %vm1768 = vweird.f32 %v1762
    %vm1769 = vweird.f32 %v1763
    %vm1770 = vmor %vm1768, %vm1769
    %v1771 = vsel %vm1770, %v1763, %v1767
    %v1772 = vand.u32 2147483647, %v1762
    %vm1773 = vcmp.eq.f32.partialorder %v1772, 8.507059e+37
    %v1774 = vand.u32 %v1762, 2147483648
    %v1775 = vor.u32 1.1754944e-38, %v1774
    %v1776 = vsel %vm1773, %v1775, %v1771
    %v1777 = vmul.f32 1.0, %v1776
    %v1778 = vtanh.pop %v1738
    %v1779 = vxor.u32 %v1739, 2147483648
    %v1780 = vmul.f32 %v1779, 1.442695
    %v1781 = vpow.pop %v1780
    %v1782 = vadd.f32 %v1781, 1.0
    %v1783 = vrcp.pop %v1782
    %v1784 = vmul.f32 %v1782, %v1783
    %v1785 = vsub.f32 1.0, %v1784
    %v1786 = vmul.f32 %v1783, %v1785
    %v1787 = vadd.f32 %v1783, %v1786
    %vm1788 = vweird.f32 %v1782
    %vm1789 = vweird.f32 %v1783
    %vm1790 = vmor %vm1788, %vm1789
    %v1791 = vsel %vm1790, %v1783, %v1787
    %v1792 = vand.u32 2147483647, %v1782
    %vm1793 = vcmp.eq.f32.partialorder %v1792, 8.507059e+37
    %v1794 = vand.u32 %v1782, 2147483648
    %v1795 = vor.u32 1.1754944e-38, %v1794
    %v1796 = vsel %vm1793, %v1795, %v1791
    %v1797 = vmul.f32 1.0, %v1796
    %v1798 = vmul.f32 %v1777, %v1647
    %v1799 = vmul.f32 %v1758, %v1778
    %v1800 = vadd.f32 %v1798, %v1799
    %v1801 = vtanh.pop %v1800
    %v1802 = vmul.f32 %v1797, %v1801
    %1803 = vst [vmem:[#allocation4] sm:$0xff] %v1802
    %1804 = vst [vmem:[#allocation5] sm:$0xff] %v1800
    %s1805 = scalar_lea.vmem [#allocation2], 48
    %1806 = vst [vmem:[%s1805] sm:$0xff] %v1802
    %v1807 = vld [vmem:[#allocation4] sm:$0xff]
    %v1808 = vld [vmem:[#allocation5] sm:$0xff]
    %v1809 = vld [vmem:[%s551] sm:$0xff]
    %v1810 = vld [vmem:[%s551 + $0x8] sm:$0xff]
    %v1811 = vld [vmem:[%s551 + $0x10] sm:$0xff]
    %v1812 = vld [vmem:[%s551 + $0x18] sm:$0xff]
    %1813 = vmatpush.msra.mxu0 %v667
    %1814 = vmatpush.msra.mxu0 %v663
    %1815 = vmatpush.msra.mxu0 %v659
    %1816 = vmatpush.msra.mxu0 %v655
    %1817 = vmatpush.msra.mxu0 %v651
    %1818 = vmatpush.msra.mxu0 %v647
    %1819 = vmatpush.msra.mxu0 %v643
    %1820 = vmatpush.msra.mxu0 %v639
    %1821 = vmatpush.msra.mxu0 %v635
    %1822 = vmatpush.msra.mxu0 %v631
    %1823 = vmatpush.msra.mxu0 %v627
    %1824 = vmatpush.msra.mxu0 %v623
    %1825 = vmatpush.msra.mxu0 %v619
    %1826 = vmatpush.msra.mxu0 %v615
    %1827 = vmatpush.msra.mxu0 %v611
    %1828 = vmatpush.msra.mxu0 %v607
    %1829 = vmatmul.f32.gmra.mxu0 %v1807
    %v1830 = vpop.f32.mrf.mxu0
    %v1831 = vadd.f32 0.0, %v1830
    %1832 = vdwg.mxu0
    %1833 = vmatpush.msra.mxu0 %v668
    %1834 = vmatpush.msra.mxu0 %v664
    %1835 = vmatpush.msra.mxu0 %v660
    %1836 = vmatpush.msra.mxu0 %v656
    %1837 = vmatpush.msra.mxu0 %v652
    %1838 = vmatpush.msra.mxu0 %v648
    %1839 = vmatpush.msra.mxu0 %v644
    %1840 = vmatpush.msra.mxu0 %v640
    %1841 = vmatpush.msra.mxu0 %v636
    %1842 = vmatpush.msra.mxu0 %v632
    %1843 = vmatpush.msra.mxu0 %v628
    %1844 = vmatpush.msra.mxu0 %v624
    %1845 = vmatpush.msra.mxu0 %v620
    %1846 = vmatpush.msra.mxu0 %v616
    %1847 = vmatpush.msra.mxu0 %v612
    %1848 = vmatpush.msra.mxu0 %v608
    %1849 = vmatmul.f32.gmra.mxu0 %v1807
    %v1850 = vpop.f32.mrf.mxu0
    %v1851 = vadd.f32 0.0, %v1850
    %1852 = vdwg.mxu0
    %1853 = vmatpush.msra.mxu0 %v669
    %1854 = vmatpush.msra.mxu0 %v665
    %1855 = vmatpush.msra.mxu0 %v661
    %1856 = vmatpush.msra.mxu0 %v657
    %1857 = vmatpush.msra.mxu0 %v653
    %1858 = vmatpush.msra.mxu0 %v649
    %1859 = vmatpush.msra.mxu0 %v645
    %1860 = vmatpush.msra.mxu0 %v641
    %1861 = vmatpush.msra.mxu0 %v637
    %1862 = vmatpush.msra.mxu0 %v633
    %1863 = vmatpush.msra.mxu0 %v629
    %1864 = vmatpush.msra.mxu0 %v625
    %1865 = vmatpush.msra.mxu0 %v621
    %1866 = vmatpush.msra.mxu0 %v617
    %1867 = vmatpush.msra.mxu0 %v613
    %1868 = vmatpush.msra.mxu0 %v609
    %1869 = vmatmul.f32.gmra.mxu0 %v1807
    %v1870 = vpop.f32.mrf.mxu0
    %v1871 = vadd.f32 0.0, %v1870
    %1872 = vdwg.mxu0
    %1873 = vmatpush.msra.mxu0 %v670
    %1874 = vmatpush.msra.mxu0 %v666
    %1875 = vmatpush.msra.mxu0 %v662
    %1876 = vmatpush.msra.mxu0 %v658
    %1877 = vmatpush.msra.mxu0 %v654
    %1878 = vmatpush.msra.mxu0 %v650
    %1879 = vmatpush.msra.mxu0 %v646
    %1880 = vmatpush.msra.mxu0 %v642
    %1881 = vmatpush.msra.mxu0 %v638
    %1882 = vmatpush.msra.mxu0 %v634
    %1883 = vmatpush.msra.mxu0 %v630
    %1884 = vmatpush.msra.mxu0 %v626
    %1885 = vmatpush.msra.mxu0 %v622
    %1886 = vmatpush.msra.mxu0 %v618
    %1887 = vmatpush.msra.mxu0 %v614
    %1888 = vmatpush.msra.mxu0 %v610
    %1889 = vmatmul.f32.gmra.mxu0 %v1807
    %v1890 = vpop.f32.mrf.mxu0
    %v1891 = vadd.f32 0.0, %v1890
    %1892 = vdwg.mxu0
    %v1893 = vadd.f32 %v1809, %v1831
    %v1894 = vadd.f32 %v1810, %v1851
    %v1895 = vadd.f32 %v1811, %v1871
    %v1896 = vadd.f32 %v1812, %v1891
    %v1897 = vadd.f32 %v1893, %v763
    %v1898 = vadd.f32 %v1894, %v764
    %v1899 = vadd.f32 %v1895, %v765
    %v1900 = vadd.f32 %v1896, %v766
    %v1901 = vxor.u32 %v1897, 2147483648
    %v1902 = vmul.f32 %v1901, 1.442695
    %v1903 = vpow.pop %v1902
    %v1904 = vadd.f32 %v1903, 1.0
    %v1905 = vrcp.pop %v1904
    %v1906 = vmul.f32 %v1904, %v1905
    %v1907 = vsub.f32 1.0, %v1906
    %v1908 = vmul.f32 %v1905, %v1907
    %v1909 = vadd.f32 %v1905, %v1908
    %vm1910 = vweird.f32 %v1904
    %vm1911 = vweird.f32 %v1905
    %vm1912 = vmor %vm1910, %vm1911
    %v1913 = vsel %vm1912, %v1905, %v1909
    %v1914 = vand.u32 2147483647, %v1904
    %vm1915 = vcmp.eq.f32.partialorder %v1914, 8.507059e+37
    %v1916 = vand.u32 %v1904, 2147483648
    %v1917 = vor.u32 1.1754944e-38, %v1916
    %v1918 = vsel %vm1915, %v1917, %v1913
    %v1919 = vmul.f32 1.0, %v1918
    %v1920 = vxor.u32 %v1898, 2147483648
    %v1921 = vmul.f32 %v1920, 1.442695
    %v1922 = vpow.pop %v1921
    %v1923 = vadd.f32 %v1922, 1.0
    %v1924 = vrcp.pop %v1923
    %v1925 = vmul.f32 %v1923, %v1924
    %v1926 = vsub.f32 1.0, %v1925
    %v1927 = vmul.f32 %v1924, %v1926
    %v1928 = vadd.f32 %v1924, %v1927
    %vm1929 = vweird.f32 %v1923
    %vm1930 = vweird.f32 %v1924
    %vm1931 = vmor %vm1929, %vm1930
    %v1932 = vsel %vm1931, %v1924, %v1928
    %v1933 = vand.u32 2147483647, %v1923
    %vm1934 = vcmp.eq.f32.partialorder %v1933, 8.507059e+37
    %v1935 = vand.u32 %v1923, 2147483648
    %v1936 = vor.u32 1.1754944e-38, %v1935
    %v1937 = vsel %vm1934, %v1936, %v1932
    %v1938 = vmul.f32 1.0, %v1937
    %v1939 = vtanh.pop %v1899
    %v1940 = vxor.u32 %v1900, 2147483648
    %v1941 = vmul.f32 %v1940, 1.442695
    %v1942 = vpow.pop %v1941
    %v1943 = vadd.f32 %v1942, 1.0
    %v1944 = vrcp.pop %v1943
    %v1945 = vmul.f32 %v1943, %v1944
    %v1946 = vsub.f32 1.0, %v1945
    %v1947 = vmul.f32 %v1944, %v1946
    %v1948 = vadd.f32 %v1944, %v1947
    %vm1949 = vweird.f32 %v1943
    %vm1950 = vweird.f32 %v1944
    %vm1951 = vmor %vm1949, %vm1950
    %v1952 = vsel %vm1951, %v1944, %v1948
    %v1953 = vand.u32 2147483647, %v1943
    %vm1954 = vcmp.eq.f32.partialorder %v1953, 8.507059e+37
    %v1955 = vand.u32 %v1943, 2147483648
    %v1956 = vor.u32 1.1754944e-38, %v1955
    %v1957 = vsel %vm1954, %v1956, %v1952
    %v1958 = vmul.f32 1.0, %v1957
    %v1959 = vmul.f32 %v1938, %v1808
    %v1960 = vmul.f32 %v1919, %v1939
    %v1961 = vadd.f32 %v1959, %v1960
    %v1962 = vtanh.pop %v1961
    %v1963 = vmul.f32 %v1958, %v1962
    %1964 = vst [vmem:[#allocation4] sm:$0xff] %v1963
    %1965 = vst [vmem:[#allocation5] sm:$0xff] %v1961
    %s1966 = scalar_lea.vmem [#allocation2], 56
    %1967 = vst [vmem:[%s1966] sm:$0xff] %v1963
    %v1968 = vld [vmem:[#allocation4] sm:$0xff]
    %1969 = vst [vmem:[#allocation21] sm:$0xff] %v1968
    %v1970 = vld [vmem:[#allocation5] sm:$0xff]
    %1971 = vst [vmem:[#allocation23] sm:$0xff] %v1970
    %v1972 = vld [vmem:[#allocation2] sm:$0xff]
    %v1973 = vld [vmem:[#allocation2 + $0x8] sm:$0xff]
    %v1974 = vld [vmem:[#allocation2 + $0x10] sm:$0xff]
    %v1975 = vld [vmem:[#allocation2 + $0x18] sm:$0xff]
    %v1976 = vld [vmem:[#allocation2 + $0x20] sm:$0xff]
    %v1977 = vld [vmem:[#allocation2 + $0x28] sm:$0xff]
    %v1978 = vld [vmem:[#allocation2 + $0x30] sm:$0xff]
    %v1979 = vld [vmem:[#allocation2 + $0x38] sm:$0xff]
    %v1980 = vld [vmem:[#allocation11] sm:$0xff]
    %v1981 = vld [vmem:[#allocation11 + $0x8] sm:$0xff]
    %v1982 = vld [vmem:[#allocation11 + $0x10] sm:$0xff]
    %v1983 = vld [vmem:[#allocation11 + $0x18] sm:$0xff]
    %v1984 = vld [vmem:[#allocation11 + $0x20] sm:$0xff]
    %v1985 = vld [vmem:[#allocation11 + $0x28] sm:$0xff]
    %v1986 = vld [vmem:[#allocation11 + $0x30] sm:$0xff]
    %v1987 = vld [vmem:[#allocation11 + $0x38] sm:$0xff]
    %v1988 = vld [vmem:[#allocation11 + $0x40] sm:$0xff]
    %v1989 = vld [vmem:[#allocation11 + $0x48] sm:$0xff]
    %v1990 = vld [vmem:[#allocation11 + $0x50] sm:$0xff]
    %v1991 = vld [vmem:[#allocation11 + $0x58] sm:$0xff]
    %v1992 = vld [vmem:[#allocation11 + $0x60] sm:$0xff]
    %v1993 = vld [vmem:[#allocation11 + $0x68] sm:$0xff]
    %v1994 = vld [vmem:[#allocation11 + $0x70] sm:$0xff]
    %v1995 = vld [vmem:[#allocation11 + $0x78] sm:$0xff]
    %v1996 = vld [vmem:[#allocation11 + $0x80] sm:$0xff]
    %v1997 = vld [vmem:[#allocation11 + $0x88] sm:$0xff]
    %v1998 = vld [vmem:[#allocation11 + $0x90] sm:$0xff]
    %v1999 = vld [vmem:[#allocation11 + $0x98] sm:$0xff]
    %v2000 = vld [vmem:[#allocation11 + $0xa0] sm:$0xff]
    %v2001 = vld [vmem:[#allocation11 + $0xa8] sm:$0xff]
    %v2002 = vld [vmem:[#allocation11 + $0xb0] sm:$0xff]
    %v2003 = vld [vmem:[#allocation11 + $0xb8] sm:$0xff]
    %v2004 = vld [vmem:[#allocation11 + $0xc0] sm:$0xff]
    %v2005 = vld [vmem:[#allocation11 + $0xc8] sm:$0xff]
    %v2006 = vld [vmem:[#allocation11 + $0xd0] sm:$0xff]
    %v2007 = vld [vmem:[#allocation11 + $0xd8] sm:$0xff]
    %v2008 = vld [vmem:[#allocation11 + $0xe0] sm:$0xff]
    %v2009 = vld [vmem:[#allocation11 + $0xe8] sm:$0xff]
    %v2010 = vld [vmem:[#allocation11 + $0xf0] sm:$0xff]
    %v2011 = vld [vmem:[#allocation11 + $0xf8] sm:$0xff]
    %v2012 = vld [vmem:[#allocation11 + $0x100] sm:$0xff]
    %v2013 = vld [vmem:[#allocation11 + $0x108] sm:$0xff]
    %v2014 = vld [vmem:[#allocation11 + $0x110] sm:$0xff]
    %v2015 = vld [vmem:[#allocation11 + $0x118] sm:$0xff]
    %v2016 = vld [vmem:[#allocation11 + $0x120] sm:$0xff]
    %v2017 = vld [vmem:[#allocation11 + $0x128] sm:$0xff]
    %v2018 = vld [vmem:[#allocation11 + $0x130] sm:$0xff]
    %v2019 = vld [vmem:[#allocation11 + $0x138] sm:$0xff]
    %v2020 = vld [vmem:[#allocation11 + $0x140] sm:$0xff]
    %v2021 = vld [vmem:[#allocation11 + $0x148] sm:$0xff]
    %v2022 = vld [vmem:[#allocation11 + $0x150] sm:$0xff]
    %v2023 = vld [vmem:[#allocation11 + $0x158] sm:$0xff]
    %v2024 = vld [vmem:[#allocation11 + $0x160] sm:$0xff]
    %v2025 = vld [vmem:[#allocation11 + $0x168] sm:$0xff]
    %v2026 = vld [vmem:[#allocation11 + $0x170] sm:$0xff]
    %v2027 = vld [vmem:[#allocation11 + $0x178] sm:$0xff]
    %v2028 = vld [vmem:[#allocation11 + $0x180] sm:$0xff]
    %v2029 = vld [vmem:[#allocation11 + $0x188] sm:$0xff]
    %v2030 = vld [vmem:[#allocation11 + $0x190] sm:$0xff]
    %v2031 = vld [vmem:[#allocation11 + $0x198] sm:$0xff]
    %v2032 = vld [vmem:[#allocation11 + $0x1a0] sm:$0xff]
    %v2033 = vld [vmem:[#allocation11 + $0x1a8] sm:$0xff]
    %v2034 = vld [vmem:[#allocation11 + $0x1b0] sm:$0xff]
    %v2035 = vld [vmem:[#allocation11 + $0x1b8] sm:$0xff]
    %v2036 = vld [vmem:[#allocation11 + $0x1c0] sm:$0xff]
    %v2037 = vld [vmem:[#allocation11 + $0x1c8] sm:$0xff]
    %v2038 = vld [vmem:[#allocation11 + $0x1d0] sm:$0xff]
    %v2039 = vld [vmem:[#allocation11 + $0x1d8] sm:$0xff]
    %v2040 = vld [vmem:[#allocation11 + $0x1e0] sm:$0xff]
    %v2041 = vld [vmem:[#allocation11 + $0x1e8] sm:$0xff]
    %v2042 = vld [vmem:[#allocation11 + $0x1f0] sm:$0xff]
    %v2043 = vld [vmem:[#allocation11 + $0x1f8] sm:$0xff]
    %2044 = vmatpush.msra.mxu0 %v2040
    %2045 = vmatpush.msra.mxu0 %v2036
    %2046 = vmatpush.msra.mxu0 %v2032
    %2047 = vmatpush.msra.mxu0 %v2028
    %2048 = vmatpush.msra.mxu0 %v2024
    %2049 = vmatpush.msra.mxu0 %v2020
    %2050 = vmatpush.msra.mxu0 %v2016
    %2051 = vmatpush.msra.mxu0 %v2012
    %2052 = vmatpush.msra.mxu0 %v2008
    %2053 = vmatpush.msra.mxu0 %v2004
    %2054 = vmatpush.msra.mxu0 %v2000
    %2055 = vmatpush.msra.mxu0 %v1996
    %2056 = vmatpush.msra.mxu0 %v1992
    %2057 = vmatpush.msra.mxu0 %v1988
    %2058 = vmatpush.msra.mxu0 %v1984
    %2059 = vmatpush.msra.mxu0 %v1980
    %2060 = vmatmul.f32.gmra.mxu0 %v1972
    %v2061 = vpop.f32.mrf.mxu0
    %v2062 = vadd.f32 0.0, %v2061
    %2063 = vmatmul.f32.gmra.mxu0 %v1973
    %v2064 = vpop.f32.mrf.mxu0
    %v2065 = vadd.f32 0.0, %v2064
    %2066 = vmatmul.f32.gmra.mxu0 %v1974
    %v2067 = vpop.f32.mrf.mxu0
    %v2068 = vadd.f32 0.0, %v2067
    %2069 = vmatmul.f32.gmra.mxu0 %v1975
    %v2070 = vpop.f32.mrf.mxu0
    %v2071 = vadd.f32 0.0, %v2070
    %2072 = vmatmul.f32.gmra.mxu0 %v1976
    %v2073 = vpop.f32.mrf.mxu0
    %v2074 = vadd.f32 0.0, %v2073
    %2075 = vmatmul.f32.gmra.mxu0 %v1977
    %v2076 = vpop.f32.mrf.mxu0
    %v2077 = vadd.f32 0.0, %v2076
    %2078 = vmatmul.f32.gmra.mxu0 %v1978
    %v2079 = vpop.f32.mrf.mxu0
    %v2080 = vadd.f32 0.0, %v2079
    %2081 = vmatmul.f32.gmra.mxu0 %v1979
    %v2082 = vpop.f32.mrf.mxu0
    %v2083 = vadd.f32 0.0, %v2082
    %2084 = vdwg.mxu0
    %2085 = vmatpush.msra.mxu0 %v2041
    %2086 = vmatpush.msra.mxu0 %v2037
    %2087 = vmatpush.msra.mxu0 %v2033
    %2088 = vmatpush.msra.mxu0 %v2029
    %2089 = vmatpush.msra.mxu0 %v2025
    %2090 = vmatpush.msra.mxu0 %v2021
    %2091 = vmatpush.msra.mxu0 %v2017
    %2092 = vmatpush.msra.mxu0 %v2013
    %2093 = vmatpush.msra.mxu0 %v2009
    %2094 = vmatpush.msra.mxu0 %v2005
    %2095 = vmatpush.msra.mxu0 %v2001
    %2096 = vmatpush.msra.mxu0 %v1997
    %2097 = vmatpush.msra.mxu0 %v1993
    %2098 = vmatpush.msra.mxu0 %v1989
    %2099 = vmatpush.msra.mxu0 %v1985
    %2100 = vmatpush.msra.mxu0 %v1981
    %2101 = vmatmul.f32.gmra.mxu0 %v1972
    %v2102 = vpop.f32.mrf.mxu0
    %v2103 = vadd.f32 0.0, %v2102
    %2104 = vmatmul.f32.gmra.mxu0 %v1973
    %v2105 = vpop.f32.mrf.mxu0
    %v2106 = vadd.f32 0.0, %v2105
    %2107 = vmatmul.f32.gmra.mxu0 %v1974
    %v2108 = vpop.f32.mrf.mxu0
    %v2109 = vadd.f32 0.0, %v2108
    %2110 = vmatmul.f32.gmra.mxu0 %v1975
    %v2111 = vpop.f32.mrf.mxu0
    %v2112 = vadd.f32 0.0, %v2111
    %2113 = vmatmul.f32.gmra.mxu0 %v1976
    %v2114 = vpop.f32.mrf.mxu0
    %v2115 = vadd.f32 0.0, %v2114
    %2116 = vmatmul.f32.gmra.mxu0 %v1977
    %v2117 = vpop.f32.mrf.mxu0
    %v2118 = vadd.f32 0.0, %v2117
    %2119 = vmatmul.f32.gmra.mxu0 %v1978
    %v2120 = vpop.f32.mrf.mxu0
    %v2121 = vadd.f32 0.0, %v2120
    %2122 = vmatmul.f32.gmra.mxu0 %v1979
    %v2123 = vpop.f32.mrf.mxu0
    %v2124 = vadd.f32 0.0, %v2123
    %2125 = vdwg.mxu0
    %2126 = vmatpush.msra.mxu0 %v2042
    %2127 = vmatpush.msra.mxu0 %v2038
    %2128 = vmatpush.msra.mxu0 %v2034
    %2129 = vmatpush.msra.mxu0 %v2030
    %2130 = vmatpush.msra.mxu0 %v2026
    %2131 = vmatpush.msra.mxu0 %v2022
    %2132 = vmatpush.msra.mxu0 %v2018
    %2133 = vmatpush.msra.mxu0 %v2014
    %2134 = vmatpush.msra.mxu0 %v2010
    %2135 = vmatpush.msra.mxu0 %v2006
    %2136 = vmatpush.msra.mxu0 %v2002
    %2137 = vmatpush.msra.mxu0 %v1998
    %2138 = vmatpush.msra.mxu0 %v1994
    %2139 = vmatpush.msra.mxu0 %v1990
    %2140 = vmatpush.msra.mxu0 %v1986
    %2141 = vmatpush.msra.mxu0 %v1982
    %2142 = vmatmul.f32.gmra.mxu0 %v1972
    %v2143 = vpop.f32.mrf.mxu0
    %v2144 = vadd.f32 0.0, %v2143
    %2145 = vmatmul.f32.gmra.mxu0 %v1973
    %v2146 = vpop.f32.mrf.mxu0
    %v2147 = vadd.f32 0.0, %v2146
    %2148 = vmatmul.f32.gmra.mxu0 %v1974
    %v2149 = vpop.f32.mrf.mxu0
    %v2150 = vadd.f32 0.0, %v2149
    %2151 = vmatmul.f32.gmra.mxu0 %v1975
    %v2152 = vpop.f32.mrf.mxu0
    %v2153 = vadd.f32 0.0, %v2152
    %2154 = vmatmul.f32.gmra.mxu0 %v1976
    %v2155 = vpop.f32.mrf.mxu0
    %v2156 = vadd.f32 0.0, %v2155
    %2157 = vmatmul.f32.gmra.mxu0 %v1977
    %v2158 = vpop.f32.mrf.mxu0
    %v2159 = vadd.f32 0.0, %v2158
    %2160 = vmatmul.f32.gmra.mxu0 %v1978
    %v2161 = vpop.f32.mrf.mxu0
    %v2162 = vadd.f32 0.0, %v2161
    %2163 = vmatmul.f32.gmra.mxu0 %v1979
    %v2164 = vpop.f32.mrf.mxu0
    %v2165 = vadd.f32 0.0, %v2164
    %2166 = vdwg.mxu0
    %2167 = vmatpush.msra.mxu0 %v2043
    %2168 = vmatpush.msra.mxu0 %v2039
    %2169 = vmatpush.msra.mxu0 %v2035
    %2170 = vmatpush.msra.mxu0 %v2031
    %2171 = vmatpush.msra.mxu0 %v2027
    %2172 = vmatpush.msra.mxu0 %v2023
    %2173 = vmatpush.msra.mxu0 %v2019
    %2174 = vmatpush.msra.mxu0 %v2015
    %2175 = vmatpush.msra.mxu0 %v2011
    %2176 = vmatpush.msra.mxu0 %v2007
    %2177 = vmatpush.msra.mxu0 %v2003
    %2178 = vmatpush.msra.mxu0 %v1999
    %2179 = vmatpush.msra.mxu0 %v1995
    %2180 = vmatpush.msra.mxu0 %v1991
    %2181 = vmatpush.msra.mxu0 %v1987
    %2182 = vmatpush.msra.mxu0 %v1983
    %2183 = vmatmul.f32.gmra.mxu0 %v1972
    %v2184 = vpop.f32.mrf.mxu0
    %v2185 = vadd.f32 0.0, %v2184
    %2186 = vmatmul.f32.gmra.mxu0 %v1973
    %v2187 = vpop.f32.mrf.mxu0
    %v2188 = vadd.f32 0.0, %v2187
    %2189 = vmatmul.f32.gmra.mxu0 %v1974
    %v2190 = vpop.f32.mrf.mxu0
    %v2191 = vadd.f32 0.0, %v2190
    %2192 = vmatmul.f32.gmra.mxu0 %v1975
    %v2193 = vpop.f32.mrf.mxu0
    %v2194 = vadd.f32 0.0, %v2193
    %2195 = vmatmul.f32.gmra.mxu0 %v1976
    %v2196 = vpop.f32.mrf.mxu0
    %v2197 = vadd.f32 0.0, %v2196
    %2198 = vmatmul.f32.gmra.mxu0 %v1977
    %v2199 = vpop.f32.mrf.mxu0
    %v2200 = vadd.f32 0.0, %v2199
    %2201 = vmatmul.f32.gmra.mxu0 %v1978
    %v2202 = vpop.f32.mrf.mxu0
    %v2203 = vadd.f32 0.0, %v2202
    %2204 = vmatmul.f32.gmra.mxu0 %v1979
    %v2205 = vpop.f32.mrf.mxu0
    %v2206 = vadd.f32 0.0, %v2205
    %2207 = vdwg.mxu0
    %2208 = vst [vmem:[#allocation3] sm:$0xff] %v2062
    %2209 = vst [vmem:[#allocation3 + $0x8] sm:$0xff] %v2103
    %2210 = vst [vmem:[#allocation3 + $0x10] sm:$0xff] %v2144
    %2211 = vst [vmem:[#allocation3 + $0x18] sm:$0xff] %v2185
    %2212 = vst [vmem:[#allocation3 + $0x20] sm:$0xff] %v2065
    %2213 = vst [vmem:[#allocation3 + $0x28] sm:$0xff] %v2106
    %2214 = vst [vmem:[#allocation3 + $0x30] sm:$0xff] %v2147
    %2215 = vst [vmem:[#allocation3 + $0x38] sm:$0xff] %v2188
    %2216 = vst [vmem:[#allocation3 + $0x40] sm:$0xff] %v2068
    %2217 = vst [vmem:[#allocation3 + $0x48] sm:$0xff] %v2109
    %2218 = vst [vmem:[#allocation3 + $0x50] sm:$0xff] %v2150
    %2219 = vst [vmem:[#allocation3 + $0x58] sm:$0xff] %v2191
    %2220 = vst [vmem:[#allocation3 + $0x60] sm:$0xff] %v2071
    %2221 = vst [vmem:[#allocation3 + $0x68] sm:$0xff] %v2112
    %2222 = vst [vmem:[#allocation3 + $0x70] sm:$0xff] %v2153
    %2223 = vst [vmem:[#allocation3 + $0x78] sm:$0xff] %v2194
    %2224 = vst [vmem:[#allocation3 + $0x80] sm:$0xff] %v2074
    %2225 = vst [vmem:[#allocation3 + $0x88] sm:$0xff] %v2115
    %2226 = vst [vmem:[#allocation3 + $0x90] sm:$0xff] %v2156
    %2227 = vst [vmem:[#allocation3 + $0x98] sm:$0xff] %v2197
    %2228 = vst [vmem:[#allocation3 + $0xa0] sm:$0xff] %v2077
    %2229 = vst [vmem:[#allocation3 + $0xa8] sm:$0xff] %v2118
    %2230 = vst [vmem:[#allocation3 + $0xb0] sm:$0xff] %v2159
    %2231 = vst [vmem:[#allocation3 + $0xb8] sm:$0xff] %v2200
    %2232 = vst [vmem:[#allocation3 + $0xc0] sm:$0xff] %v2080
    %2233 = vst [vmem:[#allocation3 + $0xc8] sm:$0xff] %v2121
    %2234 = vst [vmem:[#allocation3 + $0xd0] sm:$0xff] %v2162
    %2235 = vst [vmem:[#allocation3 + $0xd8] sm:$0xff] %v2203
    %2236 = vst [vmem:[#allocation3 + $0xe0] sm:$0xff] %v2083
    %2237 = vst [vmem:[#allocation3 + $0xe8] sm:$0xff] %v2124
    %2238 = vst [vmem:[#allocation3 + $0xf0] sm:$0xff] %v2165
    %2239 = vst [vmem:[#allocation3 + $0xf8] sm:$0xff] %v2206
    %s2240 = scalar_lea.vmem [#allocation16], 8
    %v2241 = vld [vmem:[%s2240] sm:$0xff]
    %2242 = vst [vmem:[#allocation4] sm:$0xff] %v2241
    %s2243 = scalar_lea.vmem [#allocation17], 8
    %v2244 = vld [vmem:[%s2243] sm:$0xff]
    %2245 = vst [vmem:[#allocation5] sm:$0xff] %v2244
    %s2246 = scalar_lea.vmem [#allocation13], 512
    %v2247 = vld [vmem:[%s2246] sm:$0xff]
    %v2248 = vld [vmem:[%s2246 + $0x8] sm:$0xff]
    %v2249 = vld [vmem:[%s2246 + $0x10] sm:$0xff]
    %v2250 = vld [vmem:[%s2246 + $0x18] sm:$0xff]
    %v2251 = vld [vmem:[%s2246 + $0x20] sm:$0xff]
    %v2252 = vld [vmem:[%s2246 + $0x28] sm:$0xff]
    %v2253 = vld [vmem:[%s2246 + $0x30] sm:$0xff]
    %v2254 = vld [vmem:[%s2246 + $0x38] sm:$0xff]
    %v2255 = vld [vmem:[%s2246 + $0x40] sm:$0xff]
    %v2256 = vld [vmem:[%s2246 + $0x48] sm:$0xff]
    %v2257 = vld [vmem:[%s2246 + $0x50] sm:$0xff]
    %v2258 = vld [vmem:[%s2246 + $0x58] sm:$0xff]
    %v2259 = vld [vmem:[%s2246 + $0x60] sm:$0xff]
    %v2260 = vld [vmem:[%s2246 + $0x68] sm:$0xff]
    %v2261 = vld [vmem:[%s2246 + $0x70] sm:$0xff]
    %v2262 = vld [vmem:[%s2246 + $0x78] sm:$0xff]
    %v2263 = vld [vmem:[%s2246 + $0x80] sm:$0xff]
    %v2264 = vld [vmem:[%s2246 + $0x88] sm:$0xff]
    %v2265 = vld [vmem:[%s2246 + $0x90] sm:$0xff]
    %v2266 = vld [vmem:[%s2246 + $0x98] sm:$0xff]
    %v2267 = vld [vmem:[%s2246 + $0xa0] sm:$0xff]
    %v2268 = vld [vmem:[%s2246 + $0xa8] sm:$0xff]
    %v2269 = vld [vmem:[%s2246 + $0xb0] sm:$0xff]
    %v2270 = vld [vmem:[%s2246 + $0xb8] sm:$0xff]
    %v2271 = vld [vmem:[%s2246 + $0xc0] sm:$0xff]
    %v2272 = vld [vmem:[%s2246 + $0xc8] sm:$0xff]
    %v2273 = vld [vmem:[%s2246 + $0xd0] sm:$0xff]
    %v2274 = vld [vmem:[%s2246 + $0xd8] sm:$0xff]
    %v2275 = vld [vmem:[%s2246 + $0xe0] sm:$0xff]
    %v2276 = vld [vmem:[%s2246 + $0xe8] sm:$0xff]
    %v2277 = vld [vmem:[%s2246 + $0xf0] sm:$0xff]
    %v2278 = vld [vmem:[%s2246 + $0xf8] sm:$0xff]
    %v2279 = vld [vmem:[%s2246 + $0x100] sm:$0xff]
    %v2280 = vld [vmem:[%s2246 + $0x108] sm:$0xff]
    %v2281 = vld [vmem:[%s2246 + $0x110] sm:$0xff]
    %v2282 = vld [vmem:[%s2246 + $0x118] sm:$0xff]
    %v2283 = vld [vmem:[%s2246 + $0x120] sm:$0xff]
    %v2284 = vld [vmem:[%s2246 + $0x128] sm:$0xff]
    %v2285 = vld [vmem:[%s2246 + $0x130] sm:$0xff]
    %v2286 = vld [vmem:[%s2246 + $0x138] sm:$0xff]
    %v2287 = vld [vmem:[%s2246 + $0x140] sm:$0xff]
    %v2288 = vld [vmem:[%s2246 + $0x148] sm:$0xff]
    %v2289 = vld [vmem:[%s2246 + $0x150] sm:$0xff]
    %v2290 = vld [vmem:[%s2246 + $0x158] sm:$0xff]
    %v2291 = vld [vmem:[%s2246 + $0x160] sm:$0xff]
    %v2292 = vld [vmem:[%s2246 + $0x168] sm:$0xff]
    %v2293 = vld [vmem:[%s2246 + $0x170] sm:$0xff]
    %v2294 = vld [vmem:[%s2246 + $0x178] sm:$0xff]
    %v2295 = vld [vmem:[%s2246 + $0x180] sm:$0xff]
    %v2296 = vld [vmem:[%s2246 + $0x188] sm:$0xff]
    %v2297 = vld [vmem:[%s2246 + $0x190] sm:$0xff]
    %v2298 = vld [vmem:[%s2246 + $0x198] sm:$0xff]
    %v2299 = vld [vmem:[%s2246 + $0x1a0] sm:$0xff]
    %v2300 = vld [vmem:[%s2246 + $0x1a8] sm:$0xff]
    %v2301 = vld [vmem:[%s2246 + $0x1b0] sm:$0xff]
    %v2302 = vld [vmem:[%s2246 + $0x1b8] sm:$0xff]
    %v2303 = vld [vmem:[%s2246 + $0x1c0] sm:$0xff]
    %v2304 = vld [vmem:[%s2246 + $0x1c8] sm:$0xff]
    %v2305 = vld [vmem:[%s2246 + $0x1d0] sm:$0xff]
    %v2306 = vld [vmem:[%s2246 + $0x1d8] sm:$0xff]
    %v2307 = vld [vmem:[%s2246 + $0x1e0] sm:$0xff]
    %v2308 = vld [vmem:[%s2246 + $0x1e8] sm:$0xff]
    %v2309 = vld [vmem:[%s2246 + $0x1f0] sm:$0xff]
    %v2310 = vld [vmem:[%s2246 + $0x1f8] sm:$0xff]
    %s2311 = scalar_lea.vmem [#allocation14], 4
    %v2312 = vld [vmem:[%s2311] sm:$0xf]
    %v2313 = vld [vmem:[#allocation4] sm:$0xff]
    %v2314 = vld [vmem:[#allocation5] sm:$0xff]
    %v2315 = vld [vmem:[#allocation3] sm:$0xff]
    %v2316 = vld [vmem:[#allocation3 + $0x8] sm:$0xff]
    %v2317 = vld [vmem:[#allocation3 + $0x10] sm:$0xff]
    %v2318 = vld [vmem:[#allocation3 + $0x18] sm:$0xff]
    %2319 = vmatpush.msra.mxu0 %v2307
    %2320 = vmatpush.msra.mxu0 %v2303
    %2321 = vmatpush.msra.mxu0 %v2299
    %2322 = vmatpush.msra.mxu0 %v2295
    %2323 = vmatpush.msra.mxu0 %v2291
    %2324 = vmatpush.msra.mxu0 %v2287
    %2325 = vmatpush.msra.mxu0 %v2283
    %2326 = vmatpush.msra.mxu0 %v2279
    %2327 = vmatpush.msra.mxu0 %v2275
    %2328 = vmatpush.msra.mxu0 %v2271
    %2329 = vmatpush.msra.mxu0 %v2267
    %2330 = vmatpush.msra.mxu0 %v2263
    %2331 = vmatpush.msra.mxu0 %v2259
    %2332 = vmatpush.msra.mxu0 %v2255
    %2333 = vmatpush.msra.mxu0 %v2251
    %2334 = vmatpush.msra.mxu0 %v2247
    %2335 = vmatmul.f32.gmra.mxu0 %v2313
    %v2336 = vpop.f32.mrf.mxu0
    %v2337 = vadd.f32 0.0, %v2336
    %2338 = vdwg.mxu0
    %2339 = vmatpush.msra.mxu0 %v2308
    %2340 = vmatpush.msra.mxu0 %v2304
    %2341 = vmatpush.msra.mxu0 %v2300
    %2342 = vmatpush.msra.mxu0 %v2296
    %2343 = vmatpush.msra.mxu0 %v2292
    %2344 = vmatpush.msra.mxu0 %v2288
    %2345 = vmatpush.msra.mxu0 %v2284
    %2346 = vmatpush.msra.mxu0 %v2280
    %2347 = vmatpush.msra.mxu0 %v2276
    %2348 = vmatpush.msra.mxu0 %v2272
    %2349 = vmatpush.msra.mxu0 %v2268
    %2350 = vmatpush.msra.mxu0 %v2264
    %2351 = vmatpush.msra.mxu0 %v2260
    %2352 = vmatpush.msra.mxu0 %v2256
    %2353 = vmatpush.msra.mxu0 %v2252
    %2354 = vmatpush.msra.mxu0 %v2248
    %2355 = vmatmul.f32.gmra.mxu0 %v2313
    %v2356 = vpop.f32.mrf.mxu0
    %v2357 = vadd.f32 0.0, %v2356
    %2358 = vdwg.mxu0
    %2359 = vmatpush.msra.mxu0 %v2309
    %2360 = vmatpush.msra.mxu0 %v2305
    %2361 = vmatpush.msra.mxu0 %v2301
    %2362 = vmatpush.msra.mxu0 %v2297
    %2363 = vmatpush.msra.mxu0 %v2293
    %2364 = vmatpush.msra.mxu0 %v2289
    %2365 = vmatpush.msra.mxu0 %v2285
    %2366 = vmatpush.msra.mxu0 %v2281
    %2367 = vmatpush.msra.mxu0 %v2277
    %2368 = vmatpush.msra.mxu0 %v2273
    %2369 = vmatpush.msra.mxu0 %v2269
    %2370 = vmatpush.msra.mxu0 %v2265
    %2371 = vmatpush.msra.mxu0 %v2261
    %2372 = vmatpush.msra.mxu0 %v2257
    %2373 = vmatpush.msra.mxu0 %v2253
    %2374 = vmatpush.msra.mxu0 %v2249
    %2375 = vmatmul.f32.gmra.mxu0 %v2313
    %v2376 = vpop.f32.mrf.mxu0
    %v2377 = vadd.f32 0.0, %v2376
    %2378 = vdwg.mxu0
    %2379 = vmatpush.msra.mxu0 %v2310
    %2380 = vmatpush.msra.mxu0 %v2306
    %2381 = vmatpush.msra.mxu0 %v2302
    %2382 = vmatpush.msra.mxu0 %v2298
    %2383 = vmatpush.msra.mxu0 %v2294
    %2384 = vmatpush.msra.mxu0 %v2290
    %2385 = vmatpush.msra.mxu0 %v2286
    %2386 = vmatpush.msra.mxu0 %v2282
    %2387 = vmatpush.msra.mxu0 %v2278
    %2388 = vmatpush.msra.mxu0 %v2274
    %2389 = vmatpush.msra.mxu0 %v2270
    %2390 = vmatpush.msra.mxu0 %v2266
    %2391 = vmatpush.msra.mxu0 %v2262
    %2392 = vmatpush.msra.mxu0 %v2258
    %2393 = vmatpush.msra.mxu0 %v2254
    %2394 = vmatpush.msra.mxu0 %v2250
    %2395 = vmatmul.f32.gmra.mxu0 %v2313
    %v2396 = vpop.f32.mrf.mxu0
    %v2397 = vadd.f32 0.0, %v2396
    %2398 = vdwg.mxu0
    %v2399 = vadd.f32 %v2315, %v2337
    %v2400 = vadd.f32 %v2316, %v2357
    %v2401 = vadd.f32 %v2317, %v2377
    %v2402 = vadd.f32 %v2318, %v2397
    %v2404 = vperm.slane %v2312, 0
    %v2405 = vperm.slane %v2312, 1
    %v2406 = vperm.slane %v2312, 2
    %v2407 = vperm.slane %v2312, 3
    %v2412 = vadd.f32 %v2399, %v2404
    %v2413 = vadd.f32 %v2400, %v2405
    %v2414 = vadd.f32 %v2401, %v2406
    %v2415 = vadd.f32 %v2402, %v2407
    %v2416 = vxor.u32 %v2412, 2147483648
    %v2417 = vmul.f32 %v2416, 1.442695
    %v2418 = vpow.pop %v2417
    %v2419 = vadd.f32 %v2418, 1.0
    %v2420 = vrcp.pop %v2419
    %v2421 = vmul.f32 %v2419, %v2420
    %v2422 = vsub.f32 1.0, %v2421
    %v2423 = vmul.f32 %v2420, %v2422
    %v2424 = vadd.f32 %v2420, %v2423
    %vm2425 = vweird.f32 %v2419
    %vm2426 = vweird.f32 %v2420
    %vm2427 = vmor %vm2425, %vm2426
    %v2428 = vsel %vm2427, %v2420, %v2424
    %v2429 = vand.u32 2147483647, %v2419
    %vm2430 = vcmp.eq.f32.partialorder %v2429, 8.507059e+37
    %v2431 = vand.u32 %v2419, 2147483648
    %v2432 = vor.u32 1.1754944e-38, %v2431
    %v2433 = vsel %vm2430, %v2432, %v2428
    %v2434 = vmul.f32 1.0, %v2433
    %v2435 = vxor.u32 %v2413, 2147483648
    %v2436 = vmul.f32 %v2435, 1.442695
    %v2437 = vpow.pop %v2436
    %v2438 = vadd.f32 %v2437, 1.0
    %v2439 = vrcp.pop %v2438
    %v2440 = vmul.f32 %v2438, %v2439
    %v2441 = vsub.f32 1.0, %v2440
    %v2442 = vmul.f32 %v2439, %v2441
    %v2443 = vadd.f32 %v2439, %v2442
    %vm2444 = vweird.f32 %v2438
    %vm2445 = vweird.f32 %v2439
    %vm2446 = vmor %vm2444, %vm2445
    %v2447 = vsel %vm2446, %v2439, %v2443
    %v2448 = vand.u32 2147483647, %v2438
    %vm2449 = vcmp.eq.f32.partialorder %v2448, 8.507059e+37
    %v2450 = vand.u32 %v2438, 2147483648
    %v2451 = vor.u32 1.1754944e-38, %v2450
    %v2452 = vsel %vm2449, %v2451, %v2447
    %v2453 = vmul.f32 1.0, %v2452
    %v2454 = vtanh.pop %v2414
    %v2455 = vxor.u32 %v2415, 2147483648
    %v2456 = vmul.f32 %v2455, 1.442695
    %v2457 = vpow.pop %v2456
    %v2458 = vadd.f32 %v2457, 1.0
    %v2459 = vrcp.pop %v2458
    %v2460 = vmul.f32 %v2458, %v2459
    %v2461 = vsub.f32 1.0, %v2460
    %v2462 = vmul.f32 %v2459, %v2461
    %v2463 = vadd.f32 %v2459, %v2462
    %vm2464 = vweird.f32 %v2458
    %vm2465 = vweird.f32 %v2459
    %vm2466 = vmor %vm2464, %vm2465
    %v2467 = vsel %vm2466, %v2459, %v2463
    %v2468 = vand.u32 2147483647, %v2458
    %vm2469 = vcmp.eq.f32.partialorder %v2468, 8.507059e+37
    %v2470 = vand.u32 %v2458, 2147483648
    %v2471 = vor.u32 1.1754944e-38, %v2470
    %v2472 = vsel %vm2469, %v2471, %v2467
    %v2473 = vmul.f32 1.0, %v2472
    %v2474 = vmul.f32 %v2453, %v2314
    %v2475 = vmul.f32 %v2434, %v2454
    %v2476 = vadd.f32 %v2474, %v2475
    %v2477 = vtanh.pop %v2476
    %v2478 = vmul.f32 %v2473, %v2477
    %2479 = vst [vmem:[#allocation4] sm:$0xff] %v2478
    %2480 = vst [vmem:[#allocation5] sm:$0xff] %v2476
    %2481 = vst [vmem:[#allocation2] sm:$0xff] %v2478
    %v2482 = vld [vmem:[#allocation4] sm:$0xff]
    %v2483 = vld [vmem:[#allocation5] sm:$0xff]
    %v2484 = vld [vmem:[%s215] sm:$0xff]
    %v2485 = vld [vmem:[%s215 + $0x8] sm:$0xff]
    %v2486 = vld [vmem:[%s215 + $0x10] sm:$0xff]
    %v2487 = vld [vmem:[%s215 + $0x18] sm:$0xff]
    %2488 = vmatpush.msra.mxu0 %v2307
    %2489 = vmatpush.msra.mxu0 %v2303
    %2490 = vmatpush.msra.mxu0 %v2299
    %2491 = vmatpush.msra.mxu0 %v2295
    %2492 = vmatpush.msra.mxu0 %v2291
    %2493 = vmatpush.msra.mxu0 %v2287
    %2494 = vmatpush.msra.mxu0 %v2283
    %2495 = vmatpush.msra.mxu0 %v2279
    %2496 = vmatpush.msra.mxu0 %v2275
    %2497 = vmatpush.msra.mxu0 %v2271
    %2498 = vmatpush.msra.mxu0 %v2267
    %2499 = vmatpush.msra.mxu0 %v2263
    %2500 = vmatpush.msra.mxu0 %v2259
    %2501 = vmatpush.msra.mxu0 %v2255
    %2502 = vmatpush.msra.mxu0 %v2251
    %2503 = vmatpush.msra.mxu0 %v2247
    %2504 = vmatmul.f32.gmra.mxu0 %v2482
    %v2505 = vpop.f32.mrf.mxu0
    %v2506 = vadd.f32 0.0, %v2505
    %2507 = vdwg.mxu0
    %2508 = vmatpush.msra.mxu0 %v2308
    %2509 = vmatpush.msra.mxu0 %v2304
    %2510 = vmatpush.msra.mxu0 %v2300
    %2511 = vmatpush.msra.mxu0 %v2296
    %2512 = vmatpush.msra.mxu0 %v2292
    %2513 = vmatpush.msra.mxu0 %v2288
    %2514 = vmatpush.msra.mxu0 %v2284
    %2515 = vmatpush.msra.mxu0 %v2280
    %2516 = vmatpush.msra.mxu0 %v2276
    %2517 = vmatpush.msra.mxu0 %v2272
    %2518 = vmatpush.msra.mxu0 %v2268
    %2519 = vmatpush.msra.mxu0 %v2264
    %2520 = vmatpush.msra.mxu0 %v2260
    %2521 = vmatpush.msra.mxu0 %v2256
    %2522 = vmatpush.msra.mxu0 %v2252
    %2523 = vmatpush.msra.mxu0 %v2248
    %2524 = vmatmul.f32.gmra.mxu0 %v2482
    %v2525 = vpop.f32.mrf.mxu0
    %v2526 = vadd.f32 0.0, %v2525
    %2527 = vdwg.mxu0
    %2528 = vmatpush.msra.mxu0 %v2309
    %2529 = vmatpush.msra.mxu0 %v2305
    %2530 = vmatpush.msra.mxu0 %v2301
    %2531 = vmatpush.msra.mxu0 %v2297
    %2532 = vmatpush.msra.mxu0 %v2293
    %2533 = vmatpush.msra.mxu0 %v2289
    %2534 = vmatpush.msra.mxu0 %v2285
    %2535 = vmatpush.msra.mxu0 %v2281
    %2536 = vmatpush.msra.mxu0 %v2277
    %2537 = vmatpush.msra.mxu0 %v2273
    %2538 = vmatpush.msra.mxu0 %v2269
    %2539 = vmatpush.msra.mxu0 %v2265
    %2540 = vmatpush.msra.mxu0 %v2261
    %2541 = vmatpush.msra.mxu0 %v2257
    %2542 = vmatpush.msra.mxu0 %v2253
    %2543 = vmatpush.msra.mxu0 %v2249
    %2544 = vmatmul.f32.gmra.mxu0 %v2482
    %v2545 = vpop.f32.mrf.mxu0
    %v2546 = vadd.f32 0.0, %v2545
    %2547 = vdwg.mxu0
    %2548 = vmatpush.msra.mxu0 %v2310
    %2549 = vmatpush.msra.mxu0 %v2306
    %2550 = vmatpush.msra.mxu0 %v2302
    %2551 = vmatpush.msra.mxu0 %v2298
    %2552 = vmatpush.msra.mxu0 %v2294
    %2553 = vmatpush.msra.mxu0 %v2290
    %2554 = vmatpush.msra.mxu0 %v2286
    %2555 = vmatpush.msra.mxu0 %v2282
    %2556 = vmatpush.msra.mxu0 %v2278
    %2557 = vmatpush.msra.mxu0 %v2274
    %2558 = vmatpush.msra.mxu0 %v2270
    %2559 = vmatpush.msra.mxu0 %v2266
    %2560 = vmatpush.msra.mxu0 %v2262
    %2561 = vmatpush.msra.mxu0 %v2258
    %2562 = vmatpush.msra.mxu0 %v2254
    %2563 = vmatpush.msra.mxu0 %v2250
    %2564 = vmatmul.f32.gmra.mxu0 %v2482
    %v2565 = vpop.f32.mrf.mxu0
    %v2566 = vadd.f32 0.0, %v2565
    %2567 = vdwg.mxu0
    %v2568 = vadd.f32 %v2484, %v2506
    %v2569 = vadd.f32 %v2485, %v2526
    %v2570 = vadd.f32 %v2486, %v2546
    %v2571 = vadd.f32 %v2487, %v2566
    %v2572 = vadd.f32 %v2568, %v2404
    %v2573 = vadd.f32 %v2569, %v2405
    %v2574 = vadd.f32 %v2570, %v2406
    %v2575 = vadd.f32 %v2571, %v2407
    %v2576 = vxor.u32 %v2572, 2147483648
    %v2577 = vmul.f32 %v2576, 1.442695
    %v2578 = vpow.pop %v2577
    %v2579 = vadd.f32 %v2578, 1.0
    %v2580 = vrcp.pop %v2579
    %v2581 = vmul.f32 %v2579, %v2580
    %v2582 = vsub.f32 1.0, %v2581
    %v2583 = vmul.f32 %v2580, %v2582
    %v2584 = vadd.f32 %v2580, %v2583
    %vm2585 = vweird.f32 %v2579
    %vm2586 = vweird.f32 %v2580
    %vm2587 = vmor %vm2585, %vm2586
    %v2588 = vsel %vm2587, %v2580, %v2584
    %v2589 = vand.u32 2147483647, %v2579
    %vm2590 = vcmp.eq.f32.partialorder %v2589, 8.507059e+37
    %v2591 = vand.u32 %v2579, 2147483648
    %v2592 = vor.u32 1.1754944e-38, %v2591
    %v2593 = vsel %vm2590, %v2592, %v2588
    %v2594 = vmul.f32 1.0, %v2593
    %v2595 = vxor.u32 %v2573, 2147483648
    %v2596 = vmul.f32 %v2595, 1.442695
    %v2597 = vpow.pop %v2596
    %v2598 = vadd.f32 %v2597, 1.0
    %v2599 = vrcp.pop %v2598
    %v2600 = vmul.f32 %v2598, %v2599
    %v2601 = vsub.f32 1.0, %v2600
    %v2602 = vmul.f32 %v2599, %v2601
    %v2603 = vadd.f32 %v2599, %v2602
    %vm2604 = vweird.f32 %v2598
    %vm2605 = vweird.f32 %v2599
    %vm2606 = vmor %vm2604, %vm2605
    %v2607 = vsel %vm2606, %v2599, %v2603
    %v2608 = vand.u32 2147483647, %v2598
    %vm2609 = vcmp.eq.f32.partialorder %v2608, 8.507059e+37
    %v2610 = vand.u32 %v2598, 2147483648
    %v2611 = vor.u32 1.1754944e-38, %v2610
    %v2612 = vsel %vm2609, %v2611, %v2607
    %v2613 = vmul.f32 1.0, %v2612
    %v2614 = vtanh.pop %v2574
    %v2615 = vxor.u32 %v2575, 2147483648
    %v2616 = vmul.f32 %v2615, 1.442695
    %v2617 = vpow.pop %v2616
    %v2618 = vadd.f32 %v2617, 1.0
    %v2619 = vrcp.pop %v2618
    %v2620 = vmul.f32 %v2618, %v2619
    %v2621 = vsub.f32 1.0, %v2620
    %v2622 = vmul.f32 %v2619, %v2621
    %v2623 = vadd.f32 %v2619, %v2622
    %vm2624 = vweird.f32 %v2618
    %vm2625 = vweird.f32 %v2619
    %vm2626 = vmor %vm2624, %vm2625
    %v2627 = vsel %vm2626, %v2619, %v2623
    %v2628 = vand.u32 2147483647, %v2618
    %vm2629 = vcmp.eq.f32.partialorder %v2628, 8.507059e+37
    %v2630 = vand.u32 %v2618, 2147483648
    %v2631 = vor.u32 1.1754944e-38, %v2630
    %v2632 = vsel %vm2629, %v2631, %v2627
    %v2633 = vmul.f32 1.0, %v2632
    %v2634 = vmul.f32 %v2613, %v2483
    %v2635 = vmul.f32 %v2594, %v2614
    %v2636 = vadd.f32 %v2634, %v2635
    %v2637 = vtanh.pop %v2636
    %v2638 = vmul.f32 %v2633, %v2637
    %2639 = vst [vmem:[#allocation4] sm:$0xff] %v2638
    %2640 = vst [vmem:[#allocation5] sm:$0xff] %v2636
    %2641 = vst [vmem:[%s1000] sm:$0xff] %v2638
    %v2642 = vld [vmem:[#allocation4] sm:$0xff]
    %v2643 = vld [vmem:[#allocation5] sm:$0xff]
    %v2644 = vld [vmem:[%s271] sm:$0xff]
    %v2645 = vld [vmem:[%s271 + $0x8] sm:$0xff]
    %v2646 = vld [vmem:[%s271 + $0x10] sm:$0xff]
    %v2647 = vld [vmem:[%s271 + $0x18] sm:$0xff]
    %2648 = vmatpush.msra.mxu0 %v2307
    %2649 = vmatpush.msra.mxu0 %v2303
    %2650 = vmatpush.msra.mxu0 %v2299
    %2651 = vmatpush.msra.mxu0 %v2295
    %2652 = vmatpush.msra.mxu0 %v2291
    %2653 = vmatpush.msra.mxu0 %v2287
    %2654 = vmatpush.msra.mxu0 %v2283
    %2655 = vmatpush.msra.mxu0 %v2279
    %2656 = vmatpush.msra.mxu0 %v2275
    %2657 = vmatpush.msra.mxu0 %v2271
    %2658 = vmatpush.msra.mxu0 %v2267
    %2659 = vmatpush.msra.mxu0 %v2263
    %2660 = vmatpush.msra.mxu0 %v2259
    %2661 = vmatpush.msra.mxu0 %v2255
    %2662 = vmatpush.msra.mxu0 %v2251
    %2663 = vmatpush.msra.mxu0 %v2247
    %2664 = vmatmul.f32.gmra.mxu0 %v2642
    %v2665 = vpop.f32.mrf.mxu0
    %v2666 = vadd.f32 0.0, %v2665
    %2667 = vdwg.mxu0
    %2668 = vmatpush.msra.mxu0 %v2308
    %2669 = vmatpush.msra.mxu0 %v2304
    %2670 = vmatpush.msra.mxu0 %v2300
    %2671 = vmatpush.msra.mxu0 %v2296
    %2672 = vmatpush.msra.mxu0 %v2292
    %2673 = vmatpush.msra.mxu0 %v2288
    %2674 = vmatpush.msra.mxu0 %v2284
    %2675 = vmatpush.msra.mxu0 %v2280
    %2676 = vmatpush.msra.mxu0 %v2276
    %2677 = vmatpush.msra.mxu0 %v2272
    %2678 = vmatpush.msra.mxu0 %v2268
    %2679 = vmatpush.msra.mxu0 %v2264
    %2680 = vmatpush.msra.mxu0 %v2260
    %2681 = vmatpush.msra.mxu0 %v2256
    %2682 = vmatpush.msra.mxu0 %v2252
    %2683 = vmatpush.msra.mxu0 %v2248
    %2684 = vmatmul.f32.gmra.mxu0 %v2642
    %v2685 = vpop.f32.mrf.mxu0
    %v2686 = vadd.f32 0.0, %v2685
    %2687 = vdwg.mxu0
    %2688 = vmatpush.msra.mxu0 %v2309
    %2689 = vmatpush.msra.mxu0 %v2305
    %2690 = vmatpush.msra.mxu0 %v2301
    %2691 = vmatpush.msra.mxu0 %v2297
    %2692 = vmatpush.msra.mxu0 %v2293
    %2693 = vmatpush.msra.mxu0 %v2289
    %2694 = vmatpush.msra.mxu0 %v2285
    %2695 = vmatpush.msra.mxu0 %v2281
    %2696 = vmatpush.msra.mxu0 %v2277
    %2697 = vmatpush.msra.mxu0 %v2273
    %2698 = vmatpush.msra.mxu0 %v2269
    %2699 = vmatpush.msra.mxu0 %v2265
    %2700 = vmatpush.msra.mxu0 %v2261
    %2701 = vmatpush.msra.mxu0 %v2257
    %2702 = vmatpush.msra.mxu0 %v2253
    %2703 = vmatpush.msra.mxu0 %v2249
    %2704 = vmatmul.f32.gmra.mxu0 %v2642
    %v2705 = vpop.f32.mrf.mxu0
    %v2706 = vadd.f32 0.0, %v2705
    %2707 = vdwg.mxu0
    %2708 = vmatpush.msra.mxu0 %v2310
    %2709 = vmatpush.msra.mxu0 %v2306
    %2710 = vmatpush.msra.mxu0 %v2302
    %2711 = vmatpush.msra.mxu0 %v2298
    %2712 = vmatpush.msra.mxu0 %v2294
    %2713 = vmatpush.msra.mxu0 %v2290
    %2714 = vmatpush.msra.mxu0 %v2286
    %2715 = vmatpush.msra.mxu0 %v2282
    %2716 = vmatpush.msra.mxu0 %v2278
    %2717 = vmatpush.msra.mxu0 %v2274
    %2718 = vmatpush.msra.mxu0 %v2270
    %2719 = vmatpush.msra.mxu0 %v2266
    %2720 = vmatpush.msra.mxu0 %v2262
    %2721 = vmatpush.msra.mxu0 %v2258
    %2722 = vmatpush.msra.mxu0 %v2254
    %2723 = vmatpush.msra.mxu0 %v2250
    %2724 = vmatmul.f32.gmra.mxu0 %v2642
    %v2725 = vpop.f32.mrf.mxu0
    %v2726 = vadd.f32 0.0, %v2725
    %2727 = vdwg.mxu0
    %v2728 = vadd.f32 %v2644, %v2666
    %v2729 = vadd.f32 %v2645, %v2686
    %v2730 = vadd.f32 %v2646, %v2706
    %v2731 = vadd.f32 %v2647, %v2726
    %v2732 = vadd.f32 %v2728, %v2404
    %v2733 = vadd.f32 %v2729, %v2405
    %v2734 = vadd.f32 %v2730, %v2406
    %v2735 = vadd.f32 %v2731, %v2407
    %v2736 = vxor.u32 %v2732, 2147483648
    %v2737 = vmul.f32 %v2736, 1.442695
    %v2738 = vpow.pop %v2737
    %v2739 = vadd.f32 %v2738, 1.0
    %v2740 = vrcp.pop %v2739
    %v2741 = vmul.f32 %v2739, %v2740
    %v2742 = vsub.f32 1.0, %v2741
    %v2743 = vmul.f32 %v2740, %v2742
    %v2744 = vadd.f32 %v2740, %v2743
    %vm2745 = vweird.f32 %v2739
    %vm2746 = vweird.f32 %v2740
    %vm2747 = vmor %vm2745, %vm2746
    %v2748 = vsel %vm2747, %v2740, %v2744
    %v2749 = vand.u32 2147483647, %v2739
    %vm2750 = vcmp.eq.f32.partialorder %v2749, 8.507059e+37
    %v2751 = vand.u32 %v2739, 2147483648
    %v2752 = vor.u32 1.1754944e-38, %v2751
    %v2753 = vsel %vm2750, %v2752, %v2748
    %v2754 = vmul.f32 1.0, %v2753
    %v2755 = vxor.u32 %v2733, 2147483648
    %v2756 = vmul.f32 %v2755, 1.442695
    %v2757 = vpow.pop %v2756
    %v2758 = vadd.f32 %v2757, 1.0
    %v2759 = vrcp.pop %v2758
    %v2760 = vmul.f32 %v2758, %v2759
    %v2761 = vsub.f32 1.0, %v2760
    %v2762 = vmul.f32 %v2759, %v2761
    %v2763 = vadd.f32 %v2759, %v2762
    %vm2764 = vweird.f32 %v2758
    %vm2765 = vweird.f32 %v2759
    %vm2766 = vmor %vm2764, %vm2765
    %v2767 = vsel %vm2766, %v2759, %v2763
    %v2768 = vand.u32 2147483647, %v2758
    %vm2769 = vcmp.eq.f32.partialorder %v2768, 8.507059e+37
    %v2770 = vand.u32 %v2758, 2147483648
    %v2771 = vor.u32 1.1754944e-38, %v2770
    %v2772 = vsel %vm2769, %v2771, %v2767
    %v2773 = vmul.f32 1.0, %v2772
    %v2774 = vtanh.pop %v2734
    %v2775 = vxor.u32 %v2735, 2147483648
    %v2776 = vmul.f32 %v2775, 1.442695
    %v2777 = vpow.pop %v2776
    %v2778 = vadd.f32 %v2777, 1.0
    %v2779 = vrcp.pop %v2778
    %v2780 = vmul.f32 %v2778, %v2779
    %v2781 = vsub.f32 1.0, %v2780
    %v2782 = vmul.f32 %v2779, %v2781
    %v2783 = vadd.f32 %v2779, %v2782
    %vm2784 = vweird.f32 %v2778
    %vm2785 = vweird.f32 %v2779
    %vm2786 = vmor %vm2784, %vm2785
    %v2787 = vsel %vm2786, %v2779, %v2783
    %v2788 = vand.u32 2147483647, %v2778
    %vm2789 = vcmp.eq.f32.partialorder %v2788, 8.507059e+37
    %v2790 = vand.u32 %v2778, 2147483648
    %v2791 = vor.u32 1.1754944e-38, %v2790
    %v2792 = vsel %vm2789, %v2791, %v2787
    %v2793 = vmul.f32 1.0, %v2792
    %v2794 = vmul.f32 %v2773, %v2643
    %v2795 = vmul.f32 %v2754, %v2774
    %v2796 = vadd.f32 %v2794, %v2795
    %v2797 = vtanh.pop %v2796
    %v2798 = vmul.f32 %v2793, %v2797
    %2799 = vst [vmem:[#allocation4] sm:$0xff] %v2798
    %2800 = vst [vmem:[#allocation5] sm:$0xff] %v2796
    %2801 = vst [vmem:[%s1161] sm:$0xff] %v2798
    %v2802 = vld [vmem:[#allocation4] sm:$0xff]
    %v2803 = vld [vmem:[#allocation5] sm:$0xff]
    %v2804 = vld [vmem:[%s327] sm:$0xff]
    %v2805 = vld [vmem:[%s327 + $0x8] sm:$0xff]
    %v2806 = vld [vmem:[%s327 + $0x10] sm:$0xff]
    %v2807 = vld [vmem:[%s327 + $0x18] sm:$0xff]
    %2808 = vmatpush.msra.mxu0 %v2307
    %2809 = vmatpush.msra.mxu0 %v2303
    %2810 = vmatpush.msra.mxu0 %v2299
    %2811 = vmatpush.msra.mxu0 %v2295
    %2812 = vmatpush.msra.mxu0 %v2291
    %2813 = vmatpush.msra.mxu0 %v2287
    %2814 = vmatpush.msra.mxu0 %v2283
    %2815 = vmatpush.msra.mxu0 %v2279
    %2816 = vmatpush.msra.mxu0 %v2275
    %2817 = vmatpush.msra.mxu0 %v2271
    %2818 = vmatpush.msra.mxu0 %v2267
    %2819 = vmatpush.msra.mxu0 %v2263
    %2820 = vmatpush.msra.mxu0 %v2259
    %2821 = vmatpush.msra.mxu0 %v2255
    %2822 = vmatpush.msra.mxu0 %v2251
    %2823 = vmatpush.msra.mxu0 %v2247
    %2824 = vmatmul.f32.gmra.mxu0 %v2802
    %v2825 = vpop.f32.mrf.mxu0
    %v2826 = vadd.f32 0.0, %v2825
    %2827 = vdwg.mxu0
    %2828 = vmatpush.msra.mxu0 %v2308
    %2829 = vmatpush.msra.mxu0 %v2304
    %2830 = vmatpush.msra.mxu0 %v2300
    %2831 = vmatpush.msra.mxu0 %v2296
    %2832 = vmatpush.msra.mxu0 %v2292
    %2833 = vmatpush.msra.mxu0 %v2288
    %2834 = vmatpush.msra.mxu0 %v2284
    %2835 = vmatpush.msra.mxu0 %v2280
    %2836 = vmatpush.msra.mxu0 %v2276
    %2837 = vmatpush.msra.mxu0 %v2272
    %2838 = vmatpush.msra.mxu0 %v2268
    %2839 = vmatpush.msra.mxu0 %v2264
    %2840 = vmatpush.msra.mxu0 %v2260
    %2841 = vmatpush.msra.mxu0 %v2256
    %2842 = vmatpush.msra.mxu0 %v2252
    %2843 = vmatpush.msra.mxu0 %v2248
    %2844 = vmatmul.f32.gmra.mxu0 %v2802
    %v2845 = vpop.f32.mrf.mxu0
    %v2846 = vadd.f32 0.0, %v2845
    %2847 = vdwg.mxu0
    %2848 = vmatpush.msra.mxu0 %v2309
    %2849 = vmatpush.msra.mxu0 %v2305
    %2850 = vmatpush.msra.mxu0 %v2301
    %2851 = vmatpush.msra.mxu0 %v2297
    %2852 = vmatpush.msra.mxu0 %v2293
    %2853 = vmatpush.msra.mxu0 %v2289
    %2854 = vmatpush.msra.mxu0 %v2285
    %2855 = vmatpush.msra.mxu0 %v2281
    %2856 = vmatpush.msra.mxu0 %v2277
    %2857 = vmatpush.msra.mxu0 %v2273
    %2858 = vmatpush.msra.mxu0 %v2269
    %2859 = vmatpush.msra.mxu0 %v2265
    %2860 = vmatpush.msra.mxu0 %v2261
    %2861 = vmatpush.msra.mxu0 %v2257
    %2862 = vmatpush.msra.mxu0 %v2253
    %2863 = vmatpush.msra.mxu0 %v2249
    %2864 = vmatmul.f32.gmra.mxu0 %v2802
    %v2865 = vpop.f32.mrf.mxu0
    %v2866 = vadd.f32 0.0, %v2865
    %2867 = vdwg.mxu0
    %2868 = vmatpush.msra.mxu0 %v2310
    %2869 = vmatpush.msra.mxu0 %v2306
    %2870 = vmatpush.msra.mxu0 %v2302
    %2871 = vmatpush.msra.mxu0 %v2298
    %2872 = vmatpush.msra.mxu0 %v2294
    %2873 = vmatpush.msra.mxu0 %v2290
    %2874 = vmatpush.msra.mxu0 %v2286
    %2875 = vmatpush.msra.mxu0 %v2282
    %2876 = vmatpush.msra.mxu0 %v2278
    %2877 = vmatpush.msra.mxu0 %v2274
    %2878 = vmatpush.msra.mxu0 %v2270
    %2879 = vmatpush.msra.mxu0 %v2266
    %2880 = vmatpush.msra.mxu0 %v2262
    %2881 = vmatpush.msra.mxu0 %v2258
    %2882 = vmatpush.msra.mxu0 %v2254
    %2883 = vmatpush.msra.mxu0 %v2250
    %2884 = vmatmul.f32.gmra.mxu0 %v2802
    %v2885 = vpop.f32.mrf.mxu0
    %v2886 = vadd.f32 0.0, %v2885
    %2887 = vdwg.mxu0
    %v2888 = vadd.f32 %v2804, %v2826
    %v2889 = vadd.f32 %v2805, %v2846
    %v2890 = vadd.f32 %v2806, %v2866
    %v2891 = vadd.f32 %v2807, %v2886
    %v2892 = vadd.f32 %v2888, %v2404
    %v2893 = vadd.f32 %v2889, %v2405
    %v2894 = vadd.f32 %v2890, %v2406
    %v2895 = vadd.f32 %v2891, %v2407
    %v2896 = vxor.u32 %v2892, 2147483648
    %v2897 = vmul.f32 %v2896, 1.442695
    %v2898 = vpow.pop %v2897
    %v2899 = vadd.f32 %v2898, 1.0
    %v2900 = vrcp.pop %v2899
    %v2901 = vmul.f32 %v2899, %v2900
    %v2902 = vsub.f32 1.0, %v2901
    %v2903 = vmul.f32 %v2900, %v2902
    %v2904 = vadd.f32 %v2900, %v2903
    %vm2905 = vweird.f32 %v2899
    %vm2906 = vweird.f32 %v2900
    %vm2907 = vmor %vm2905, %vm2906
    %v2908 = vsel %vm2907, %v2900, %v2904
    %v2909 = vand.u32 2147483647, %v2899
    %vm2910 = vcmp.eq.f32.partialorder %v2909, 8.507059e+37
    %v2911 = vand.u32 %v2899, 2147483648
    %v2912 = vor.u32 1.1754944e-38, %v2911
    %v2913 = vsel %vm2910, %v2912, %v2908
    %v2914 = vmul.f32 1.0, %v2913
    %v2915 = vxor.u32 %v2893, 2147483648
    %v2916 = vmul.f32 %v2915, 1.442695
    %v2917 = vpow.pop %v2916
    %v2918 = vadd.f32 %v2917, 1.0
    %v2919 = vrcp.pop %v2918
    %v2920 = vmul.f32 %v2918, %v2919
    %v2921 = vsub.f32 1.0, %v2920
    %v2922 = vmul.f32 %v2919, %v2921
    %v2923 = vadd.f32 %v2919, %v2922
    %vm2924 = vweird.f32 %v2918
    %vm2925 = vweird.f32 %v2919
    %vm2926 = vmor %vm2924, %vm2925
    %v2927 = vsel %vm2926, %v2919, %v2923
    %v2928 = vand.u32 2147483647, %v2918
    %vm2929 = vcmp.eq.f32.partialorder %v2928, 8.507059e+37
    %v2930 = vand.u32 %v2918, 2147483648
    %v2931 = vor.u32 1.1754944e-38, %v2930
    %v2932 = vsel %vm2929, %v2931, %v2927
    %v2933 = vmul.f32 1.0, %v2932
    %v2934 = vtanh.pop %v2894
    %v2935 = vxor.u32 %v2895, 2147483648
    %v2936 = vmul.f32 %v2935, 1.442695
    %v2937 = vpow.pop %v2936
    %v2938 = vadd.f32 %v2937, 1.0
    %v2939 = vrcp.pop %v2938
    %v2940 = vmul.f32 %v2938, %v2939
    %v2941 = vsub.f32 1.0, %v2940
    %v2942 = vmul.f32 %v2939, %v2941
    %v2943 = vadd.f32 %v2939, %v2942
    %vm2944 = vweird.f32 %v2938
    %vm2945 = vweird.f32 %v2939
    %vm2946 = vmor %vm2944, %vm2945
    %v2947 = vsel %vm2946, %v2939, %v2943
    %v2948 = vand.u32 2147483647, %v2938
    %vm2949 = vcmp.eq.f32.partialorder %v2948, 8.507059e+37
    %v2950 = vand.u32 %v2938, 2147483648
    %v2951 = vor.u32 1.1754944e-38, %v2950
    %v2952 = vsel %vm2949, %v2951, %v2947
    %v2953 = vmul.f32 1.0, %v2952
    %v2954 = vmul.f32 %v2933, %v2803
    %v2955 = vmul.f32 %v2914, %v2934
    %v2956 = vadd.f32 %v2954, %v2955
    %v2957 = vtanh.pop %v2956
    %v2958 = vmul.f32 %v2953, %v2957
    %2959 = vst [vmem:[#allocation4] sm:$0xff] %v2958
    %2960 = vst [vmem:[#allocation5] sm:$0xff] %v2956
    %2961 = vst [vmem:[%s1322] sm:$0xff] %v2958
    %v2962 = vld [vmem:[#allocation4] sm:$0xff]
    %v2963 = vld [vmem:[#allocation5] sm:$0xff]
    %v2964 = vld [vmem:[%s383] sm:$0xff]
    %v2965 = vld [vmem:[%s383 + $0x8] sm:$0xff]
    %v2966 = vld [vmem:[%s383 + $0x10] sm:$0xff]
    %v2967 = vld [vmem:[%s383 + $0x18] sm:$0xff]
    %2968 = vmatpush.msra.mxu0 %v2307
    %2969 = vmatpush.msra.mxu0 %v2303
    %2970 = vmatpush.msra.mxu0 %v2299
    %2971 = vmatpush.msra.mxu0 %v2295
    %2972 = vmatpush.msra.mxu0 %v2291
    %2973 = vmatpush.msra.mxu0 %v2287
    %2974 = vmatpush.msra.mxu0 %v2283
    %2975 = vmatpush.msra.mxu0 %v2279
    %2976 = vmatpush.msra.mxu0 %v2275
    %2977 = vmatpush.msra.mxu0 %v2271
    %2978 = vmatpush.msra.mxu0 %v2267
    %2979 = vmatpush.msra.mxu0 %v2263
    %2980 = vmatpush.msra.mxu0 %v2259
    %2981 = vmatpush.msra.mxu0 %v2255
    %2982 = vmatpush.msra.mxu0 %v2251
    %2983 = vmatpush.msra.mxu0 %v2247
    %2984 = vmatmul.f32.gmra.mxu0 %v2962
    %v2985 = vpop.f32.mrf.mxu0
    %v2986 = vadd.f32 0.0, %v2985
    %2987 = vdwg.mxu0
    %2988 = vmatpush.msra.mxu0 %v2308
    %2989 = vmatpush.msra.mxu0 %v2304
    %2990 = vmatpush.msra.mxu0 %v2300
    %2991 = vmatpush.msra.mxu0 %v2296
    %2992 = vmatpush.msra.mxu0 %v2292
    %2993 = vmatpush.msra.mxu0 %v2288
    %2994 = vmatpush.msra.mxu0 %v2284
    %2995 = vmatpush.msra.mxu0 %v2280
    %2996 = vmatpush.msra.mxu0 %v2276
    %2997 = vmatpush.msra.mxu0 %v2272
    %2998 = vmatpush.msra.mxu0 %v2268
    %2999 = vmatpush.msra.mxu0 %v2264
    %3000 = vmatpush.msra.mxu0 %v2260
    %3001 = vmatpush.msra.mxu0 %v2256
    %3002 = vmatpush.msra.mxu0 %v2252
    %3003 = vmatpush.msra.mxu0 %v2248
    %3004 = vmatmul.f32.gmra.mxu0 %v2962
    %v3005 = vpop.f32.mrf.mxu0
    %v3006 = vadd.f32 0.0, %v3005
    %3007 = vdwg.mxu0
    %3008 = vmatpush.msra.mxu0 %v2309
    %3009 = vmatpush.msra.mxu0 %v2305
    %3010 = vmatpush.msra.mxu0 %v2301
    %3011 = vmatpush.msra.mxu0 %v2297
    %3012 = vmatpush.msra.mxu0 %v2293
    %3013 = vmatpush.msra.mxu0 %v2289
    %3014 = vmatpush.msra.mxu0 %v2285
    %3015 = vmatpush.msra.mxu0 %v2281
    %3016 = vmatpush.msra.mxu0 %v2277
    %3017 = vmatpush.msra.mxu0 %v2273
    %3018 = vmatpush.msra.mxu0 %v2269
    %3019 = vmatpush.msra.mxu0 %v2265
    %3020 = vmatpush.msra.mxu0 %v2261
    %3021 = vmatpush.msra.mxu0 %v2257
    %3022 = vmatpush.msra.mxu0 %v2253
    %3023 = vmatpush.msra.mxu0 %v2249
    %3024 = vmatmul.f32.gmra.mxu0 %v2962
    %v3025 = vpop.f32.mrf.mxu0
    %v3026 = vadd.f32 0.0, %v3025
    %3027 = vdwg.mxu0
    %3028 = vmatpush.msra.mxu0 %v2310
    %3029 = vmatpush.msra.mxu0 %v2306
    %3030 = vmatpush.msra.mxu0 %v2302
    %3031 = vmatpush.msra.mxu0 %v2298
    %3032 = vmatpush.msra.mxu0 %v2294
    %3033 = vmatpush.msra.mxu0 %v2290
    %3034 = vmatpush.msra.mxu0 %v2286
    %3035 = vmatpush.msra.mxu0 %v2282
    %3036 = vmatpush.msra.mxu0 %v2278
    %3037 = vmatpush.msra.mxu0 %v2274
    %3038 = vmatpush.msra.mxu0 %v2270
    %3039 = vmatpush.msra.mxu0 %v2266
    %3040 = vmatpush.msra.mxu0 %v2262
    %3041 = vmatpush.msra.mxu0 %v2258
    %3042 = vmatpush.msra.mxu0 %v2254
    %3043 = vmatpush.msra.mxu0 %v2250
    %3044 = vmatmul.f32.gmra.mxu0 %v2962
    %v3045 = vpop.f32.mrf.mxu0
    %v3046 = vadd.f32 0.0, %v3045
    %3047 = vdwg.mxu0
    %v3048 = vadd.f32 %v2964, %v2986
    %v3049 = vadd.f32 %v2965, %v3006
    %v3050 = vadd.f32 %v2966, %v3026
    %v3051 = vadd.f32 %v2967, %v3046
    %v3052 = vadd.f32 %v3048, %v2404
    %v3053 = vadd.f32 %v3049, %v2405
    %v3054 = vadd.f32 %v3050, %v2406
    %v3055 = vadd.f32 %v3051, %v2407
    %v3056 = vxor.u32 %v3052, 2147483648
    %v3057 = vmul.f32 %v3056, 1.442695
    %v3058 = vpow.pop %v3057
    %v3059 = vadd.f32 %v3058, 1.0
    %v3060 = vrcp.pop %v3059
    %v3061 = vmul.f32 %v3059, %v3060
    %v3062 = vsub.f32 1.0, %v3061
    %v3063 = vmul.f32 %v3060, %v3062
    %v3064 = vadd.f32 %v3060, %v3063
    %vm3065 = vweird.f32 %v3059
    %vm3066 = vweird.f32 %v3060
    %vm3067 = vmor %vm3065, %vm3066
    %v3068 = vsel %vm3067, %v3060, %v3064
    %v3069 = vand.u32 2147483647, %v3059
    %vm3070 = vcmp.eq.f32.partialorder %v3069, 8.507059e+37
    %v3071 = vand.u32 %v3059, 2147483648
    %v3072 = vor.u32 1.1754944e-38, %v3071
    %v3073 = vsel %vm3070, %v3072, %v3068
    %v3074 = vmul.f32 1.0, %v3073
    %v3075 = vxor.u32 %v3053, 2147483648
    %v3076 = vmul.f32 %v3075, 1.442695
    %v3077 = vpow.pop %v3076
    %v3078 = vadd.f32 %v3077, 1.0
    %v3079 = vrcp.pop %v3078
    %v3080 = vmul.f32 %v3078, %v3079
    %v3081 = vsub.f32 1.0, %v3080
    %v3082 = vmul.f32 %v3079, %v3081
    %v3083 = vadd.f32 %v3079, %v3082
    %vm3084 = vweird.f32 %v3078
    %vm3085 = vweird.f32 %v3079
    %vm3086 = vmor %vm3084, %vm3085
    %v3087 = vsel %vm3086, %v3079, %v3083
    %v3088 = vand.u32 2147483647, %v3078
    %vm3089 = vcmp.eq.f32.partialorder %v3088, 8.507059e+37
    %v3090 = vand.u32 %v3078, 2147483648
    %v3091 = vor.u32 1.1754944e-38, %v3090
    %v3092 = vsel %vm3089, %v3091, %v3087
    %v3093 = vmul.f32 1.0, %v3092
    %v3094 = vtanh.pop %v3054
    %v3095 = vxor.u32 %v3055, 2147483648
    %v3096 = vmul.f32 %v3095, 1.442695
    %v3097 = vpow.pop %v3096
    %v3098 = vadd.f32 %v3097, 1.0
    %v3099 = vrcp.pop %v3098
    %v3100 = vmul.f32 %v3098, %v3099
    %v3101 = vsub.f32 1.0, %v3100
    %v3102 = vmul.f32 %v3099, %v3101
    %v3103 = vadd.f32 %v3099, %v3102
    %vm3104 = vweird.f32 %v3098
    %vm3105 = vweird.f32 %v3099
    %vm3106 = vmor %vm3104, %vm3105
    %v3107 = vsel %vm3106, %v3099, %v3103
    %v3108 = vand.u32 2147483647, %v3098
    %vm3109 = vcmp.eq.f32.partialorder %v3108, 8.507059e+37
    %v3110 = vand.u32 %v3098, 2147483648
    %v3111 = vor.u32 1.1754944e-38, %v3110
    %v3112 = vsel %vm3109, %v3111, %v3107
    %v3113 = vmul.f32 1.0, %v3112
    %v3114 = vmul.f32 %v3093, %v2963
    %v3115 = vmul.f32 %v3074, %v3094
    %v3116 = vadd.f32 %v3114, %v3115
    %v3117 = vtanh.pop %v3116
    %v3118 = vmul.f32 %v3113, %v3117
    %3119 = vst [vmem:[#allocation4] sm:$0xff] %v3118
    %3120 = vst [vmem:[#allocation5] sm:$0xff] %v3116
    %3121 = vst [vmem:[%s1483] sm:$0xff] %v3118
    %v3122 = vld [vmem:[#allocation4] sm:$0xff]
    %v3123 = vld [vmem:[#allocation5] sm:$0xff]
    %v3124 = vld [vmem:[%s439] sm:$0xff]
    %v3125 = vld [vmem:[%s439 + $0x8] sm:$0xff]
    %v3126 = vld [vmem:[%s439 + $0x10] sm:$0xff]
    %v3127 = vld [vmem:[%s439 + $0x18] sm:$0xff]
    %3128 = vmatpush.msra.mxu0 %v2307
    %3129 = vmatpush.msra.mxu0 %v2303
    %3130 = vmatpush.msra.mxu0 %v2299
    %3131 = vmatpush.msra.mxu0 %v2295
    %3132 = vmatpush.msra.mxu0 %v2291
    %3133 = vmatpush.msra.mxu0 %v2287
    %3134 = vmatpush.msra.mxu0 %v2283
    %3135 = vmatpush.msra.mxu0 %v2279
    %3136 = vmatpush.msra.mxu0 %v2275
    %3137 = vmatpush.msra.mxu0 %v2271
    %3138 = vmatpush.msra.mxu0 %v2267
    %3139 = vmatpush.msra.mxu0 %v2263
    %3140 = vmatpush.msra.mxu0 %v2259
    %3141 = vmatpush.msra.mxu0 %v2255
    %3142 = vmatpush.msra.mxu0 %v2251
    %3143 = vmatpush.msra.mxu0 %v2247
    %3144 = vmatmul.f32.gmra.mxu0 %v3122
    %v3145 = vpop.f32.mrf.mxu0
    %v3146 = vadd.f32 0.0, %v3145
    %3147 = vdwg.mxu0
    %3148 = vmatpush.msra.mxu0 %v2308
    %3149 = vmatpush.msra.mxu0 %v2304
    %3150 = vmatpush.msra.mxu0 %v2300
    %3151 = vmatpush.msra.mxu0 %v2296
    %3152 = vmatpush.msra.mxu0 %v2292
    %3153 = vmatpush.msra.mxu0 %v2288
    %3154 = vmatpush.msra.mxu0 %v2284
    %3155 = vmatpush.msra.mxu0 %v2280
    %3156 = vmatpush.msra.mxu0 %v2276
    %3157 = vmatpush.msra.mxu0 %v2272
    %3158 = vmatpush.msra.mxu0 %v2268
    %3159 = vmatpush.msra.mxu0 %v2264
    %3160 = vmatpush.msra.mxu0 %v2260
    %3161 = vmatpush.msra.mxu0 %v2256
    %3162 = vmatpush.msra.mxu0 %v2252
    %3163 = vmatpush.msra.mxu0 %v2248
    %3164 = vmatmul.f32.gmra.mxu0 %v3122
    %v3165 = vpop.f32.mrf.mxu0
    %v3166 = vadd.f32 0.0, %v3165
    %3167 = vdwg.mxu0
    %3168 = vmatpush.msra.mxu0 %v2309
    %3169 = vmatpush.msra.mxu0 %v2305
    %3170 = vmatpush.msra.mxu0 %v2301
    %3171 = vmatpush.msra.mxu0 %v2297
    %3172 = vmatpush.msra.mxu0 %v2293
    %3173 = vmatpush.msra.mxu0 %v2289
    %3174 = vmatpush.msra.mxu0 %v2285
    %3175 = vmatpush.msra.mxu0 %v2281
    %3176 = vmatpush.msra.mxu0 %v2277
    %3177 = vmatpush.msra.mxu0 %v2273
    %3178 = vmatpush.msra.mxu0 %v2269
    %3179 = vmatpush.msra.mxu0 %v2265
    %3180 = vmatpush.msra.mxu0 %v2261
    %3181 = vmatpush.msra.mxu0 %v2257
    %3182 = vmatpush.msra.mxu0 %v2253
    %3183 = vmatpush.msra.mxu0 %v2249
    %3184 = vmatmul.f32.gmra.mxu0 %v3122
    %v3185 = vpop.f32.mrf.mxu0
    %v3186 = vadd.f32 0.0, %v3185
    %3187 = vdwg.mxu0
    %3188 = vmatpush.msra.mxu0 %v2310
    %3189 = vmatpush.msra.mxu0 %v2306
    %3190 = vmatpush.msra.mxu0 %v2302
    %3191 = vmatpush.msra.mxu0 %v2298
    %3192 = vmatpush.msra.mxu0 %v2294
    %3193 = vmatpush.msra.mxu0 %v2290
    %3194 = vmatpush.msra.mxu0 %v2286
    %3195 = vmatpush.msra.mxu0 %v2282
    %3196 = vmatpush.msra.mxu0 %v2278
    %3197 = vmatpush.msra.mxu0 %v2274
    %3198 = vmatpush.msra.mxu0 %v2270
    %3199 = vmatpush.msra.mxu0 %v2266
    %3200 = vmatpush.msra.mxu0 %v2262
    %3201 = vmatpush.msra.mxu0 %v2258
    %3202 = vmatpush.msra.mxu0 %v2254
    %3203 = vmatpush.msra.mxu0 %v2250
    %3204 = vmatmul.f32.gmra.mxu0 %v3122
    %v3205 = vpop.f32.mrf.mxu0
    %v3206 = vadd.f32 0.0, %v3205
    %3207 = vdwg.mxu0
    %v3208 = vadd.f32 %v3124, %v3146
    %v3209 = vadd.f32 %v3125, %v3166
    %v3210 = vadd.f32 %v3126, %v3186
    %v3211 = vadd.f32 %v3127, %v3206
    %v3212 = vadd.f32 %v3208, %v2404
    %v3213 = vadd.f32 %v3209, %v2405
    %v3214 = vadd.f32 %v3210, %v2406
    %v3215 = vadd.f32 %v3211, %v2407
    %v3216 = vxor.u32 %v3212, 2147483648
    %v3217 = vmul.f32 %v3216, 1.442695
    %v3218 = vpow.pop %v3217
    %v3219 = vadd.f32 %v3218, 1.0
    %v3220 = vrcp.pop %v3219
    %v3221 = vmul.f32 %v3219, %v3220
    %v3222 = vsub.f32 1.0, %v3221
    %v3223 = vmul.f32 %v3220, %v3222
    %v3224 = vadd.f32 %v3220, %v3223
    %vm3225 = vweird.f32 %v3219
    %vm3226 = vweird.f32 %v3220
    %vm3227 = vmor %vm3225, %vm3226
    %v3228 = vsel %vm3227, %v3220, %v3224
    %v3229 = vand.u32 2147483647, %v3219
    %vm3230 = vcmp.eq.f32.partialorder %v3229, 8.507059e+37
    %v3231 = vand.u32 %v3219, 2147483648
    %v3232 = vor.u32 1.1754944e-38, %v3231
    %v3233 = vsel %vm3230, %v3232, %v3228
    %v3234 = vmul.f32 1.0, %v3233
    %v3235 = vxor.u32 %v3213, 2147483648
    %v3236 = vmul.f32 %v3235, 1.442695
    %v3237 = vpow.pop %v3236
    %v3238 = vadd.f32 %v3237, 1.0
    %v3239 = vrcp.pop %v3238
    %v3240 = vmul.f32 %v3238, %v3239
    %v3241 = vsub.f32 1.0, %v3240
    %v3242 = vmul.f32 %v3239, %v3241
    %v3243 = vadd.f32 %v3239, %v3242
    %vm3244 = vweird.f32 %v3238
    %vm3245 = vweird.f32 %v3239
    %vm3246 = vmor %vm3244, %vm3245
    %v3247 = vsel %vm3246, %v3239, %v3243
    %v3248 = vand.u32 2147483647, %v3238
    %vm3249 = vcmp.eq.f32.partialorder %v3248, 8.507059e+37
    %v3250 = vand.u32 %v3238, 2147483648
    %v3251 = vor.u32 1.1754944e-38, %v3250
    %v3252 = vsel %vm3249, %v3251, %v3247
    %v3253 = vmul.f32 1.0, %v3252
    %v3254 = vtanh.pop %v3214
    %v3255 = vxor.u32 %v3215, 2147483648
    %v3256 = vmul.f32 %v3255, 1.442695
    %v3257 = vpow.pop %v3256
    %v3258 = vadd.f32 %v3257, 1.0
    %v3259 = vrcp.pop %v3258
    %v3260 = vmul.f32 %v3258, %v3259
    %v3261 = vsub.f32 1.0, %v3260
    %v3262 = vmul.f32 %v3259, %v3261
    %v3263 = vadd.f32 %v3259, %v3262
    %vm3264 = vweird.f32 %v3258
    %vm3265 = vweird.f32 %v3259
    %vm3266 = vmor %vm3264, %vm3265
    %v3267 = vsel %vm3266, %v3259, %v3263
    %v3268 = vand.u32 2147483647, %v3258
    %vm3269 = vcmp.eq.f32.partialorder %v3268, 8.507059e+37
    %v3270 = vand.u32 %v3258, 2147483648
    %v3271 = vor.u32 1.1754944e-38, %v3270
    %v3272 = vsel %vm3269, %v3271, %v3267
    %v3273 = vmul.f32 1.0, %v3272
    %v3274 = vmul.f32 %v3253, %v3123
    %v3275 = vmul.f32 %v3234, %v3254
    %v3276 = vadd.f32 %v3274, %v3275
    %v3277 = vtanh.pop %v3276
    %v3278 = vmul.f32 %v3273, %v3277
    %3279 = vst [vmem:[#allocation4] sm:$0xff] %v3278
    %3280 = vst [vmem:[#allocation5] sm:$0xff] %v3276
    %3281 = vst [vmem:[%s1644] sm:$0xff] %v3278
    %v3282 = vld [vmem:[#allocation4] sm:$0xff]
    %v3283 = vld [vmem:[#allocation5] sm:$0xff]
    %v3284 = vld [vmem:[%s495] sm:$0xff]
    %v3285 = vld [vmem:[%s495 + $0x8] sm:$0xff]
    %v3286 = vld [vmem:[%s495 + $0x10] sm:$0xff]
    %v3287 = vld [vmem:[%s495 + $0x18] sm:$0xff]
    %3288 = vmatpush.msra.mxu0 %v2307
    %3289 = vmatpush.msra.mxu0 %v2303
    %3290 = vmatpush.msra.mxu0 %v2299
    %3291 = vmatpush.msra.mxu0 %v2295
    %3292 = vmatpush.msra.mxu0 %v2291
    %3293 = vmatpush.msra.mxu0 %v2287
    %3294 = vmatpush.msra.mxu0 %v2283
    %3295 = vmatpush.msra.mxu0 %v2279
    %3296 = vmatpush.msra.mxu0 %v2275
    %3297 = vmatpush.msra.mxu0 %v2271
    %3298 = vmatpush.msra.mxu0 %v2267
    %3299 = vmatpush.msra.mxu0 %v2263
    %3300 = vmatpush.msra.mxu0 %v2259
    %3301 = vmatpush.msra.mxu0 %v2255
    %3302 = vmatpush.msra.mxu0 %v2251
    %3303 = vmatpush.msra.mxu0 %v2247
    %3304 = vmatmul.f32.gmra.mxu0 %v3282
    %v3305 = vpop.f32.mrf.mxu0
    %v3306 = vadd.f32 0.0, %v3305
    %3307 = vdwg.mxu0
    %3308 = vmatpush.msra.mxu0 %v2308
    %3309 = vmatpush.msra.mxu0 %v2304
    %3310 = vmatpush.msra.mxu0 %v2300
    %3311 = vmatpush.msra.mxu0 %v2296
    %3312 = vmatpush.msra.mxu0 %v2292
    %3313 = vmatpush.msra.mxu0 %v2288
    %3314 = vmatpush.msra.mxu0 %v2284
    %3315 = vmatpush.msra.mxu0 %v2280
    %3316 = vmatpush.msra.mxu0 %v2276
    %3317 = vmatpush.msra.mxu0 %v2272
    %3318 = vmatpush.msra.mxu0 %v2268
    %3319 = vmatpush.msra.mxu0 %v2264
    %3320 = vmatpush.msra.mxu0 %v2260
    %3321 = vmatpush.msra.mxu0 %v2256
    %3322 = vmatpush.msra.mxu0 %v2252
    %3323 = vmatpush.msra.mxu0 %v2248
    %3324 = vmatmul.f32.gmra.mxu0 %v3282
    %v3325 = vpop.f32.mrf.mxu0
    %v3326 = vadd.f32 0.0, %v3325
    %3327 = vdwg.mxu0
    %3328 = vmatpush.msra.mxu0 %v2309
    %3329 = vmatpush.msra.mxu0 %v2305
    %3330 = vmatpush.msra.mxu0 %v2301
    %3331 = vmatpush.msra.mxu0 %v2297
    %3332 = vmatpush.msra.mxu0 %v2293
    %3333 = vmatpush.msra.mxu0 %v2289
    %3334 = vmatpush.msra.mxu0 %v2285
    %3335 = vmatpush.msra.mxu0 %v2281
    %3336 = vmatpush.msra.mxu0 %v2277
    %3337 = vmatpush.msra.mxu0 %v2273
    %3338 = vmatpush.msra.mxu0 %v2269
    %3339 = vmatpush.msra.mxu0 %v2265
    %3340 = vmatpush.msra.mxu0 %v2261
    %3341 = vmatpush.msra.mxu0 %v2257
    %3342 = vmatpush.msra.mxu0 %v2253
    %3343 = vmatpush.msra.mxu0 %v2249
    %3344 = vmatmul.f32.gmra.mxu0 %v3282
    %v3345 = vpop.f32.mrf.mxu0
    %v3346 = vadd.f32 0.0, %v3345
    %3347 = vdwg.mxu0
    %3348 = vmatpush.msra.mxu0 %v2310
    %3349 = vmatpush.msra.mxu0 %v2306
    %3350 = vmatpush.msra.mxu0 %v2302
    %3351 = vmatpush.msra.mxu0 %v2298
    %3352 = vmatpush.msra.mxu0 %v2294
    %3353 = vmatpush.msra.mxu0 %v2290
    %3354 = vmatpush.msra.mxu0 %v2286
    %3355 = vmatpush.msra.mxu0 %v2282
    %3356 = vmatpush.msra.mxu0 %v2278
    %3357 = vmatpush.msra.mxu0 %v2274
    %3358 = vmatpush.msra.mxu0 %v2270
    %3359 = vmatpush.msra.mxu0 %v2266
    %3360 = vmatpush.msra.mxu0 %v2262
    %3361 = vmatpush.msra.mxu0 %v2258
    %3362 = vmatpush.msra.mxu0 %v2254
    %3363 = vmatpush.msra.mxu0 %v2250
    %3364 = vmatmul.f32.gmra.mxu0 %v3282
    %v3365 = vpop.f32.mrf.mxu0
    %v3366 = vadd.f32 0.0, %v3365
    %3367 = vdwg.mxu0
    %v3368 = vadd.f32 %v3284, %v3306
    %v3369 = vadd.f32 %v3285, %v3326
    %v3370 = vadd.f32 %v3286, %v3346
    %v3371 = vadd.f32 %v3287, %v3366
    %v3372 = vadd.f32 %v3368, %v2404
    %v3373 = vadd.f32 %v3369, %v2405
    %v3374 = vadd.f32 %v3370, %v2406
    %v3375 = vadd.f32 %v3371, %v2407
    %v3376 = vxor.u32 %v3372, 2147483648
    %v3377 = vmul.f32 %v3376, 1.442695
    %v3378 = vpow.pop %v3377
    %v3379 = vadd.f32 %v3378, 1.0
    %v3380 = vrcp.pop %v3379
    %v3381 = vmul.f32 %v3379, %v3380
    %v3382 = vsub.f32 1.0, %v3381
    %v3383 = vmul.f32 %v3380, %v3382
    %v3384 = vadd.f32 %v3380, %v3383
    %vm3385 = vweird.f32 %v3379
    %vm3386 = vweird.f32 %v3380
    %vm3387 = vmor %vm3385, %vm3386
    %v3388 = vsel %vm3387, %v3380, %v3384
    %v3389 = vand.u32 2147483647, %v3379
    %vm3390 = vcmp.eq.f32.partialorder %v3389, 8.507059e+37
    %v3391 = vand.u32 %v3379, 2147483648
    %v3392 = vor.u32 1.1754944e-38, %v3391
    %v3393 = vsel %vm3390, %v3392, %v3388
    %v3394 = vmul.f32 1.0, %v3393
    %v3395 = vxor.u32 %v3373, 2147483648
    %v3396 = vmul.f32 %v3395, 1.442695
    %v3397 = vpow.pop %v3396
    %v3398 = vadd.f32 %v3397, 1.0
    %v3399 = vrcp.pop %v3398
    %v3400 = vmul.f32 %v3398, %v3399
    %v3401 = vsub.f32 1.0, %v3400
    %v3402 = vmul.f32 %v3399, %v3401
    %v3403 = vadd.f32 %v3399, %v3402
    %vm3404 = vweird.f32 %v3398
    %vm3405 = vweird.f32 %v3399
    %vm3406 = vmor %vm3404, %vm3405
    %v3407 = vsel %vm3406, %v3399, %v3403
    %v3408 = vand.u32 2147483647, %v3398
    %vm3409 = vcmp.eq.f32.partialorder %v3408, 8.507059e+37
    %v3410 = vand.u32 %v3398, 2147483648
    %v3411 = vor.u32 1.1754944e-38, %v3410
    %v3412 = vsel %vm3409, %v3411, %v3407
    %v3413 = vmul.f32 1.0, %v3412
    %v3414 = vtanh.pop %v3374
    %v3415 = vxor.u32 %v3375, 2147483648
    %v3416 = vmul.f32 %v3415, 1.442695
    %v3417 = vpow.pop %v3416
    %v3418 = vadd.f32 %v3417, 1.0
    %v3419 = vrcp.pop %v3418
    %v3420 = vmul.f32 %v3418, %v3419
    %v3421 = vsub.f32 1.0, %v3420
    %v3422 = vmul.f32 %v3419, %v3421
    %v3423 = vadd.f32 %v3419, %v3422
    %vm3424 = vweird.f32 %v3418
    %vm3425 = vweird.f32 %v3419
    %vm3426 = vmor %vm3424, %vm3425
    %v3427 = vsel %vm3426, %v3419, %v3423
    %v3428 = vand.u32 2147483647, %v3418
    %vm3429 = vcmp.eq.f32.partialorder %v3428, 8.507059e+37
    %v3430 = vand.u32 %v3418, 2147483648
    %v3431 = vor.u32 1.1754944e-38, %v3430
    %v3432 = vsel %vm3429, %v3431, %v3427
    %v3433 = vmul.f32 1.0, %v3432
    %v3434 = vmul.f32 %v3413, %v3283
    %v3435 = vmul.f32 %v3394, %v3414
    %v3436 = vadd.f32 %v3434, %v3435
    %v3437 = vtanh.pop %v3436
    %v3438 = vmul.f32 %v3433, %v3437
    %3439 = vst [vmem:[#allocation4] sm:$0xff] %v3438
    %3440 = vst [vmem:[#allocation5] sm:$0xff] %v3436
    %3441 = vst [vmem:[%s1805] sm:$0xff] %v3438
    %v3442 = vld [vmem:[#allocation4] sm:$0xff]
    %v3443 = vld [vmem:[#allocation5] sm:$0xff]
    %v3444 = vld [vmem:[%s551] sm:$0xff]
    %v3445 = vld [vmem:[%s551 + $0x8] sm:$0xff]
    %v3446 = vld [vmem:[%s551 + $0x10] sm:$0xff]
    %v3447 = vld [vmem:[%s551 + $0x18] sm:$0xff]
    %3448 = vmatpush.msra.mxu0 %v2307
    %3449 = vmatpush.msra.mxu0 %v2303
    %3450 = vmatpush.msra.mxu0 %v2299
    %3451 = vmatpush.msra.mxu0 %v2295
    %3452 = vmatpush.msra.mxu0 %v2291
    %3453 = vmatpush.msra.mxu0 %v2287
    %3454 = vmatpush.msra.mxu0 %v2283
    %3455 = vmatpush.msra.mxu0 %v2279
    %3456 = vmatpush.msra.mxu0 %v2275
    %3457 = vmatpush.msra.mxu0 %v2271
    %3458 = vmatpush.msra.mxu0 %v2267
    %3459 = vmatpush.msra.mxu0 %v2263
    %3460 = vmatpush.msra.mxu0 %v2259
    %3461 = vmatpush.msra.mxu0 %v2255
    %3462 = vmatpush.msra.mxu0 %v2251
    %3463 = vmatpush.msra.mxu0 %v2247
    %3464 = vmatmul.f32.gmra.mxu0 %v3442
    %v3465 = vpop.f32.mrf.mxu0
    %v3466 = vadd.f32 0.0, %v3465
    %3467 = vdwg.mxu0
    %3468 = vmatpush.msra.mxu0 %v2308
    %3469 = vmatpush.msra.mxu0 %v2304
    %3470 = vmatpush.msra.mxu0 %v2300
    %3471 = vmatpush.msra.mxu0 %v2296
    %3472 = vmatpush.msra.mxu0 %v2292
    %3473 = vmatpush.msra.mxu0 %v2288
    %3474 = vmatpush.msra.mxu0 %v2284
    %3475 = vmatpush.msra.mxu0 %v2280
    %3476 = vmatpush.msra.mxu0 %v2276
    %3477 = vmatpush.msra.mxu0 %v2272
    %3478 = vmatpush.msra.mxu0 %v2268
    %3479 = vmatpush.msra.mxu0 %v2264
    %3480 = vmatpush.msra.mxu0 %v2260
    %3481 = vmatpush.msra.mxu0 %v2256
    %3482 = vmatpush.msra.mxu0 %v2252
    %3483 = vmatpush.msra.mxu0 %v2248
    %3484 = vmatmul.f32.gmra.mxu0 %v3442
    %v3485 = vpop.f32.mrf.mxu0
    %v3486 = vadd.f32 0.0, %v3485
    %3487 = vdwg.mxu0
    %3488 = vmatpush.msra.mxu0 %v2309
    %3489 = vmatpush.msra.mxu0 %v2305
    %3490 = vmatpush.msra.mxu0 %v2301
    %3491 = vmatpush.msra.mxu0 %v2297
    %3492 = vmatpush.msra.mxu0 %v2293
    %3493 = vmatpush.msra.mxu0 %v2289
    %3494 = vmatpush.msra.mxu0 %v2285
    %3495 = vmatpush.msra.mxu0 %v2281
    %3496 = vmatpush.msra.mxu0 %v2277
    %3497 = vmatpush.msra.mxu0 %v2273
    %3498 = vmatpush.msra.mxu0 %v2269
    %3499 = vmatpush.msra.mxu0 %v2265
    %3500 = vmatpush.msra.mxu0 %v2261
    %3501 = vmatpush.msra.mxu0 %v2257
    %3502 = vmatpush.msra.mxu0 %v2253
    %3503 = vmatpush.msra.mxu0 %v2249
    %3504 = vmatmul.f32.gmra.mxu0 %v3442
    %v3505 = vpop.f32.mrf.mxu0
    %v3506 = vadd.f32 0.0, %v3505
    %3507 = vdwg.mxu0
    %3508 = vmatpush.msra.mxu0 %v2310
    %3509 = vmatpush.msra.mxu0 %v2306
    %3510 = vmatpush.msra.mxu0 %v2302
    %3511 = vmatpush.msra.mxu0 %v2298
    %3512 = vmatpush.msra.mxu0 %v2294
    %3513 = vmatpush.msra.mxu0 %v2290
    %3514 = vmatpush.msra.mxu0 %v2286
    %3515 = vmatpush.msra.mxu0 %v2282
    %3516 = vmatpush.msra.mxu0 %v2278
    %3517 = vmatpush.msra.mxu0 %v2274
    %3518 = vmatpush.msra.mxu0 %v2270
    %3519 = vmatpush.msra.mxu0 %v2266
    %3520 = vmatpush.msra.mxu0 %v2262
    %3521 = vmatpush.msra.mxu0 %v2258
    %3522 = vmatpush.msra.mxu0 %v2254
    %3523 = vmatpush.msra.mxu0 %v2250
    %3524 = vmatmul.f32.gmra.mxu0 %v3442
    %v3525 = vpop.f32.mrf.mxu0
    %v3526 = vadd.f32 0.0, %v3525
    %3527 = vdwg.mxu0
    %v3528 = vadd.f32 %v3444, %v3466
    %v3529 = vadd.f32 %v3445, %v3486
    %v3530 = vadd.f32 %v3446, %v3506
    %v3531 = vadd.f32 %v3447, %v3526
    %v3532 = vadd.f32 %v3528, %v2404
    %v3533 = vadd.f32 %v3529, %v2405
    %v3534 = vadd.f32 %v3530, %v2406
    %v3535 = vadd.f32 %v3531, %v2407
    %v3536 = vxor.u32 %v3532, 2147483648
    %v3537 = vmul.f32 %v3536, 1.442695
    %v3538 = vpow.pop %v3537
    %v3539 = vadd.f32 %v3538, 1.0
    %v3540 = vrcp.pop %v3539
    %v3541 = vmul.f32 %v3539, %v3540
    %v3542 = vsub.f32 1.0, %v3541
    %v3543 = vmul.f32 %v3540, %v3542
    %v3544 = vadd.f32 %v3540, %v3543
    %vm3545 = vweird.f32 %v3539
    %vm3546 = vweird.f32 %v3540
    %vm3547 = vmor %vm3545, %vm3546
    %v3548 = vsel %vm3547, %v3540, %v3544
    %v3549 = vand.u32 2147483647, %v3539
    %vm3550 = vcmp.eq.f32.partialorder %v3549, 8.507059e+37
    %v3551 = vand.u32 %v3539, 2147483648
    %v3552 = vor.u32 1.1754944e-38, %v3551
    %v3553 = vsel %vm3550, %v3552, %v3548
    %v3554 = vmul.f32 1.0, %v3553
    %v3555 = vxor.u32 %v3533, 2147483648
    %v3556 = vmul.f32 %v3555, 1.442695
    %v3557 = vpow.pop %v3556
    %v3558 = vadd.f32 %v3557, 1.0
    %v3559 = vrcp.pop %v3558
    %v3560 = vmul.f32 %v3558, %v3559
    %v3561 = vsub.f32 1.0, %v3560
    %v3562 = vmul.f32 %v3559, %v3561
    %v3563 = vadd.f32 %v3559, %v3562
    %vm3564 = vweird.f32 %v3558
    %vm3565 = vweird.f32 %v3559
    %vm3566 = vmor %vm3564, %vm3565
    %v3567 = vsel %vm3566, %v3559, %v3563
    %v3568 = vand.u32 2147483647, %v3558
    %vm3569 = vcmp.eq.f32.partialorder %v3568, 8.507059e+37
    %v3570 = vand.u32 %v3558, 2147483648
    %v3571 = vor.u32 1.1754944e-38, %v3570
    %v3572 = vsel %vm3569, %v3571, %v3567
    %v3573 = vmul.f32 1.0, %v3572
    %v3574 = vtanh.pop %v3534
    %v3575 = vxor.u32 %v3535, 2147483648
    %v3576 = vmul.f32 %v3575, 1.442695
    %v3577 = vpow.pop %v3576
    %v3578 = vadd.f32 %v3577, 1.0
    %v3579 = vrcp.pop %v3578
    %v3580 = vmul.f32 %v3578, %v3579
    %v3581 = vsub.f32 1.0, %v3580
    %v3582 = vmul.f32 %v3579, %v3581
    %v3583 = vadd.f32 %v3579, %v3582
    %vm3584 = vweird.f32 %v3578
    %vm3585 = vweird.f32 %v3579
    %vm3586 = vmor %vm3584, %vm3585
    %v3587 = vsel %vm3586, %v3579, %v3583
    %v3588 = vand.u32 2147483647, %v3578
    %vm3589 = vcmp.eq.f32.partialorder %v3588, 8.507059e+37
    %v3590 = vand.u32 %v3578, 2147483648
    %v3591 = vor.u32 1.1754944e-38, %v3590
    %v3592 = vsel %vm3589, %v3591, %v3587
    %v3593 = vmul.f32 1.0, %v3592
    %v3594 = vmul.f32 %v3573, %v3443
    %v3595 = vmul.f32 %v3554, %v3574
    %v3596 = vadd.f32 %v3594, %v3595
    %v3597 = vtanh.pop %v3596
    %v3598 = vmul.f32 %v3593, %v3597
    %3599 = vst [vmem:[#allocation4] sm:$0xff] %v3598
    %3600 = vst [vmem:[#allocation5] sm:$0xff] %v3596
    %3601 = vst [vmem:[%s1966] sm:$0xff] %v3598
    %v3602 = vld [vmem:[#allocation4] sm:$0xff]
    %s3603 = scalar_lea.vmem [#allocation21], 8
    %3604 = vst [vmem:[%s3603] sm:$0xff] %v3602
    %v3605 = vld [vmem:[#allocation5] sm:$0xff]
    %s3606 = scalar_lea.vmem [#allocation23], 8
    %3607 = vst [vmem:[%s3606] sm:$0xff] %v3605
    %v3608 = vld [vmem:[#allocation2] sm:$0xff]
    %v3609 = vld [vmem:[#allocation2 + $0x8] sm:$0xff]
    %v3610 = vld [vmem:[#allocation2 + $0x10] sm:$0xff]
    %v3611 = vld [vmem:[#allocation2 + $0x18] sm:$0xff]
    %v3612 = vld [vmem:[#allocation2 + $0x20] sm:$0xff]
    %v3613 = vld [vmem:[#allocation2 + $0x28] sm:$0xff]
    %v3614 = vld [vmem:[#allocation2 + $0x30] sm:$0xff]
    %v3615 = vld [vmem:[#allocation2 + $0x38] sm:$0xff]
    %v3616 = vld [vmem:[#allocation19] sm:$0xff]
    %v3617 = vld [vmem:[#allocation19 + $0x8] sm:$0xff]
    %v3618 = vld [vmem:[#allocation19 + $0x10] sm:$0xff]
    %v3619 = vld [vmem:[#allocation19 + $0x18] sm:$0xff]
    %v3620 = vld [vmem:[#allocation19 + $0x20] sm:$0xff]
    %v3621 = vld [vmem:[#allocation19 + $0x28] sm:$0xff]
    %v3622 = vld [vmem:[#allocation19 + $0x30] sm:$0xff]
    %v3623 = vld [vmem:[#allocation19 + $0x38] sm:$0xff]
    %v3624 = vld [vmem:[#allocation19 + $0x40] sm:$0xff]
    %v3625 = vld [vmem:[#allocation19 + $0x48] sm:$0xff]
    %v3626 = vld [vmem:[#allocation19 + $0x50] sm:$0xff]
    %v3627 = vld [vmem:[#allocation19 + $0x58] sm:$0xff]
    %v3628 = vld [vmem:[#allocation19 + $0x60] sm:$0xff]
    %v3629 = vld [vmem:[#allocation19 + $0x68] sm:$0xff]
    %v3630 = vld [vmem:[#allocation19 + $0x70] sm:$0xff]
    %v3631 = vld [vmem:[#allocation19 + $0x78] sm:$0xff]
    %v3632 = vld [vmem:[%s8] sm:$0x1]
    %v3634 = vperm.slane %v3632, 0
    %3636 = vmatpush.msra.mxu0 %v3631
    %3637 = vmatpush.msra.mxu0 %v3630
    %3638 = vmatpush.msra.mxu0 %v3629
    %3639 = vmatpush.msra.mxu0 %v3628
    %3640 = vmatpush.msra.mxu0 %v3627
    %3641 = vmatpush.msra.mxu0 %v3626
    %3642 = vmatpush.msra.mxu0 %v3625
    %3643 = vmatpush.msra.mxu0 %v3624
    %3644 = vmatpush.msra.mxu0 %v3623
    %3645 = vmatpush.msra.mxu0 %v3622
    %3646 = vmatpush.msra.mxu0 %v3621
    %3647 = vmatpush.msra.mxu0 %v3620
    %3648 = vmatpush.msra.mxu0 %v3619
    %3649 = vmatpush.msra.mxu0 %v3618
    %3650 = vmatpush.msra.mxu0 %v3617
    %3651 = vmatpush.msra.mxu0 %v3616
    %3652 = vmatmul.f32.gmra.mxu0 %v3608
    %v3653 = vpop.f32.mrf.mxu0
    %v3654 = vadd.f32 %v3634, %v3653
    %3655 = vmatmul.f32.gmra.mxu0 %v3609
    %v3656 = vpop.f32.mrf.mxu0
    %v3657 = vadd.f32 %v3634, %v3656
    %3658 = vmatmul.f32.gmra.mxu0 %v3610
    %v3659 = vpop.f32.mrf.mxu0
    %v3660 = vadd.f32 %v3634, %v3659
    %3661 = vmatmul.f32.gmra.mxu0 %v3611
    %v3662 = vpop.f32.mrf.mxu0
    %v3663 = vadd.f32 %v3634, %v3662
    %3664 = vmatmul.f32.gmra.mxu0 %v3612
    %v3665 = vpop.f32.mrf.mxu0
    %v3666 = vadd.f32 %v3634, %v3665
    %3667 = vmatmul.f32.gmra.mxu0 %v3613
    %v3668 = vpop.f32.mrf.mxu0
    %v3669 = vadd.f32 %v3634, %v3668
    %3670 = vmatmul.f32.gmra.mxu0 %v3614
    %v3671 = vpop.f32.mrf.mxu0
    %v3672 = vadd.f32 %v3634, %v3671
    %3673 = vmatmul.f32.gmra.mxu0 %v3615
    %v3674 = vpop.f32.mrf.mxu0
    %v3675 = vadd.f32 %v3634, %v3674
    %3676 = vdwg.mxu0
    %3677 = vst [vmem:[#allocation20] sm:$0xff] %v3654
    %3678 = vst [vmem:[#allocation20 + $0x8] sm:$0xff] %v3657
    %3679 = vst [vmem:[#allocation20 + $0x10] sm:$0xff] %v3660
    %3680 = vst [vmem:[#allocation20 + $0x18] sm:$0xff] %v3663
    %3681 = vst [vmem:[#allocation20 + $0x20] sm:$0xff] %v3666
    %3682 = vst [vmem:[#allocation20 + $0x28] sm:$0xff] %v3669
    %3683 = vst [vmem:[#allocation20 + $0x30] sm:$0xff] %v3672
    %3684 = vst [vmem:[#allocation20 + $0x38] sm:$0xff] %v3675
    // Predicated region
    $region62: #{tpu_custom_call.1} parent=1 // pred_check
      _
    $region63: #{tpu_custom_call.1} parent=1 // pred_check_branch
      %3686 = sbr.rel (0) target = $region65
    $region64: #{tpu_custom_call.1} parent=1 // pred_region
      %3688 = vsyncadd [#allocation10], 0
      %s3689 = sshll.u32 [#allocation20], 4
      %s3690 = int_to_ptr.vmem [resolvable:$true] %s3689
      %s3691 = sshll.u32 %s9, 4
      %s3692 = int_to_ptr.hbm [resolvable:$true] %s3691
      %3697 = dma.vmem_to_hbm [thread:$0]  %s3690, 1024, %s3692, [#allocation10], 128, 128, 8
    $region65: #{tpu_custom_call.1} parent=1 // pred_fallthru
      _
    // Predicated region
    $region66: #{tpu_custom_call.1} parent=1 // pred_check
      _
    $region67: #{tpu_custom_call.1} parent=1 // pred_check_branch
      %3699 = sbr.rel (0) target = $region69
    $region68: #{tpu_custom_call.1} parent=1 // pred_region
      %3701 = vsyncadd [#allocation22], 0
      %s3702 = sshll.u32 [#allocation21], 4
      %s3703 = int_to_ptr.vmem [resolvable:$true] %s3702
      %s3704 = sshll.u32 %s10, 4
      %s3705 = int_to_ptr.hbm [resolvable:$true] %s3704
      %3710 = dma.vmem_to_hbm [thread:$0]  %s3703, 256, %s3705, [#allocation22], 128, 128, 8
    $region69: #{tpu_custom_call.1} parent=1 // pred_fallthru
      _
    // Predicated region
    $region70: #{tpu_custom_call.1} parent=1 // pred_check
      _
    $region71: #{tpu_custom_call.1} parent=1 // pred_check_branch
      %3712 = sbr.rel (0) target = $region73
    $region72: #{tpu_custom_call.1} parent=1 // pred_region
      %3714 = vsyncadd [#allocation22], 0
      %s3715 = sshll.u32 [#allocation23], 4
      %s3716 = int_to_ptr.vmem [resolvable:$true] %s3715
      %s3717 = sshll.u32 %s11, 4
      %s3718 = int_to_ptr.hbm [resolvable:$true] %s3717
      %3723 = dma.vmem_to_hbm [thread:$0]  %s3716, 256, %s3718, [#allocation22], 128, 128, 8
    $region73: #{tpu_custom_call.1} parent=1 // pred_fallthru
      _
    // Predicated region
    $region74: #{tpu_custom_call.1} parent=1 // pred_check
      _
    $region75: #{tpu_custom_call.1} parent=1 // pred_check_branch
      %3725 = sbr.rel (0) target = $region77
    $region76: #{tpu_custom_call.1} parent=1 // pred_region
      %3727 = dma.done [#allocation10], 1024
    $region77: #{tpu_custom_call.1} parent=1 // pred_fallthru
      _
    // Predicated region
    $region78: #{tpu_custom_call.1} parent=1 // pred_check
      _
    $region79: #{tpu_custom_call.1} parent=1 // pred_check_branch
      %3729 = sbr.rel (0) target = $region81
    $region80: #{tpu_custom_call.1} parent=1 // pred_region
      %3731 = dma.done [#allocation22], 256
    $region81: #{tpu_custom_call.1} parent=1 // pred_fallthru
      _
    // Predicated region
    $region82: #{tpu_custom_call.1} parent=1 // pred_check
      _
    $region83: #{tpu_custom_call.1} parent=1 // pred_check_branch
      %3733 = sbr.rel (0) target = $region85
    $region84: #{tpu_custom_call.1} parent=1 // pred_region
      %3735 = dma.done [#allocation22], 256
    $region85: #{tpu_custom_call.1} parent=1 // pred_fallthru
      _
    %3736 = vsyncpa [#allocation9], 1
    %3737 = vsyncpa [#allocation12], 1
    %3738 = vsyncpa [#allocation15], 1
    %3739 = vsyncpa [#allocation18], 1
    %3740 = vsyncpa [#allocation10], 1
    %3741 = vsyncpa [#allocation22], 1

</llo_original>
